<compile_context>
chip_gen: v7x
topology: tpu7x:2x2x1
jax: 0.10.0
libtpu: 0.0.40
codegen_flags: <defaults>
</compile_context>

<pallas_src>
import functools

import jax
import jax.numpy as jnp
from jax import lax
from jax.experimental import pallas as pl
from jax.experimental.pallas import tpu as pltpu

EPS = 1e-5                  # nn.BatchNorm2d default eps
CONV_DTYPE = jnp.float32    # set to jnp.bfloat16 to halve im2col traffic
                            # (re-check the tolerance gate if you do)


# ---------------------------------------------------------------------------
# Fused Pallas kernel:
#   pad(x) -> conv1 -> bn1 -> prelu -> pad -> conv2 -> bn2 -> + identity
# ---------------------------------------------------------------------------
def _res_block_kernel(x_ref, w1_ref, w2_ref, g1_ref, b1_ref, g2_ref, b2_ref,
                      alpha_ref, out_ref, pad_ref, *, N, H, W, C):
    P = N * H * W
    inv_p = jnp.float32(1.0 / P)

    def fill_halo():
        # Replicate-pad the 1-pixel halo of pad_ref from its interior.
        # Rows first (cols 1..W), then columns (all rows -> corners correct).
        pad_ref[:, 0:1, 1:W + 1, :] = pad_ref[:, 1:2, 1:W + 1, :]
        pad_ref[:, H + 1:H + 2, 1:W + 1, :] = pad_ref[:, H:H + 1, 1:W + 1, :]
        pad_ref[:, :, 0:1, :] = pad_ref[:, :, 1:2, :]
        pad_ref[:, :, W + 1:W + 2, :] = pad_ref[:, :, W:W + 1, :]

    def conv3x3(w_ref):
        # Full im2col: one lane-concat of the 9 shifted taps, one MXU push
        # with K = 9*C.  Contraction index order is (dy, dx, cin), matching
        # the weight re-layout done in the wrapper.
        taps = [pad_ref[:, dy:dy + H, dx:dx + W, :]
                for dy in range(3) for dx in range(3)]
        patches = jnp.concatenate(taps, axis=-1).reshape(P, 9 * C)
        return jnp.dot(patches, w_ref[...],
                       preferred_element_type=jnp.float32)

    def bn(acc, g_ref, b_ref):
        # Training-mode BatchNorm2d: biased global batch stats over (N,H,W).
        # Single reduction sweep over [x, x^2] packed to a full 128-lane
        # array, then folded into one per-channel scale/shift FMA.
        stats = jnp.sum(jnp.concatenate([acc, acc * acc], axis=-1),
                        axis=0, keepdims=True)               # (1, 2C)
        mean = stats[:, :C] * inv_p
        ex2 = stats[:, C:] * inv_p
        var = ex2 - mean * mean                              # see note below
        scale = g_ref[...] * lax.rsqrt(var + EPS)
        shift = b_ref[...] - mean * scale
        return acc * scale + shift
        # NOTE: E[x^2]-E[x]^2 in f32 is fine at this scale/tolerance; switch
        # to a two-pass (shifted-mean) variant if tolerances tighten.

    # -- stage 1: pad(x) -> conv1 -> bn1 -> prelu ---------------------------
    pad_ref[:, 1:H + 1, 1:W + 1, :] = x_ref[...].astype(pad_ref.dtype)
    fill_halo()
    h = bn(conv3x3(w1_ref), g1_ref, b1_ref)
    a = alpha_ref[0, 0]                                      # PReLU slope
    h = jnp.where(h > 0, h, a * h)

    # -- stage 2: pad(h) -> conv2 -> bn2 -> + identity ----------------------
    pad_ref[:, 1:H + 1, 1:W + 1, :] = h.astype(pad_ref.dtype).reshape(N, H, W, C)
    fill_halo()
    y = bn(conv3x3(w2_ref), g2_ref, b2_ref)

    out_ref[...] = (x_ref[...] + y.reshape(N, H, W, C)).astype(out_ref.dtype)


# ---------------------------------------------------------------------------
# Wrapper: NCHW <-> NHWC glue and weight re-layout (plain-JAX, fused by XLA).
# ---------------------------------------------------------------------------
@jax.jit
def residual_block(x_nchw, w1, w2, gamma1, beta1, gamma2, beta2, prelu_a):
    N, C, H, W = x_nchw.shape
    x = jnp.transpose(x_nchw, (0, 2, 3, 1)).astype(jnp.float32)   # NHWC

    def taps(w):
        # (Cout, Cin, 3, 3) -> (9*Cin, Cout); row index = dy*3C + dx*C + cin.
        return jnp.transpose(w, (2, 3, 1, 0)).reshape(9 * C, C).astype(CONV_DTYPE)

    g1 = gamma1.reshape(1, C).astype(jnp.float32)
    b1 = beta1.reshape(1, C).astype(jnp.float32)
    g2 = gamma2.reshape(1, C).astype(jnp.float32)
    b2 = beta2.reshape(1, C).astype(jnp.float32)
    alpha = jnp.reshape(prelu_a, (1, 1)).astype(jnp.float32)

    kernel = functools.partial(_res_block_kernel, N=N, H=H, W=W, C=C)
    vmem = pl.BlockSpec(memory_space=pltpu.MemorySpace.VMEM)

    P = N * H * W
    elt = jnp.dtype(jnp.float32).itemsize
    cost = pl.CostEstimate(
        flops=2 * (2 * P * 9 * C * C),          # two 3x3 convs on the MXU
        transcendentals=2 * C,                   # two per-channel rsqrt passes
        bytes_accessed=(2 * P * C + 2 * 9 * C * C + 4 * C + 1) * elt)

    y = pl.pallas_call(
        kernel,
        out_shape=jax.ShapeDtypeStruct((N, H, W, C), jnp.float32),
        in_specs=[
            vmem,                                                # x
            vmem,                                                # w1 taps
            vmem,                                                # w2 taps
            vmem, vmem,                                          # gamma1, beta1
            vmem, vmem,                                          # gamma2, beta2
            pl.BlockSpec(memory_space=pltpu.MemorySpace.SMEM),   # prelu alpha
        ],
        out_specs=vmem,
        scratch_shapes=[pltpu.VMEM((N, H + 2, W + 2, C), CONV_DTYPE)],
        compiler_params=pltpu.CompilerParams(
            vmem_limit_bytes=32 * 1024 * 1024),
        cost_estimate=cost,
    )(x, taps(w1), taps(w2), g1, b1, g2, b2, alpha)

    return jnp.transpose(y, (0, 3, 1, 2))                         # back to NCHW


# ---------------------------------------------------------------------------
# Pure-JAX reference (NCHW, matches PyTorch forward in training mode).
# ---------------------------------------------------------------------------
def reference(x, w1, w2, g1, b1, g2, b2, a):
    def conv(t, w):
        tp = jnp.pad(t, ((0, 0), (0, 0), (1, 1), (1, 1)), mode="edge")
        return lax.conv_general_dilated(
            tp, w, (1, 1), "VALID",
            dimension_numbers=("NCHW", "OIHW", "NCHW"),
            precision=lax.Precision.HIGHEST)

    def bn(t, g, b):
        m = jnp.mean(t, axis=(0, 2, 3), keepdims=True)
        v = jnp.mean((t - m) ** 2, axis=(0, 2, 3), keepdims=True)
        return (t - m) * lax.rsqrt(v + EPS) * g.reshape(1, -1, 1, 1) \
            + b.reshape(1, -1, 1, 1)

    h = bn(conv(x, w1), g1, b1)
    h = jnp.where(h > 0, h, a * h)
    h = bn(conv(h, w2), g2, b2)
    return x + h


if __name__ == "__main__":
    key = jax.random.PRNGKey(0)
    kx, kw1, kw2 = jax.random.split(key, 3)

    N, C, H, W = 2, 64, 16, 16                  # module fixes C = 64
    x = jax.random.normal(kx, (N, C, H, W), jnp.float32)

    # Deterministic synthetic parameters (PyTorch-default-style: BN gamma=1,
    # beta=0, PReLU slope=0.25; conv weights ~ small normal, no bias).
    w1 = 0.05 * jax.random.normal(kw1, (C, C, 3, 3), jnp.float32)
    w2 = 0.05 * jax.random.normal(kw2, (C, C, 3, 3), jnp.float32)
    gamma1 = jnp.ones((C,), jnp.float32)
    beta1 = jnp.zeros((C,), jnp.float32)
    gamma2 = jnp.ones((C,), jnp.float32)
    beta2 = jnp.zeros((C,), jnp.float32)
    prelu_a = jnp.float32(0.25)

    out = residual_block(x, w1, w2, gamma1, beta1, gamma2, beta2, prelu_a)
    out = jax.block_until_ready(out)

    ref = reference(x, w1, w2, gamma1, beta1, gamma2, beta2, prelu_a)
    max_err = float(jnp.max(jnp.abs(out - ref)))
    assert out.shape == x.shape and out.dtype == jnp.float32
    assert max_err < 5e-3, f"max abs error too large: {max_err}"

    print("KERNEL_OK")
</pallas_src>

<mosaic_0001>
module attributes {stable_mosaic.version = 11 : i64} {
  func.func @_res_block_kernel(%arg0: memref<2x16x16x64xf32, #tpu.memory_space<vmem>>, %arg1: memref<576x64xf32, #tpu.memory_space<vmem>>, %arg2: memref<576x64xf32, #tpu.memory_space<vmem>>, %arg3: memref<1x64xf32, #tpu.memory_space<vmem>>, %arg4: memref<1x64xf32, #tpu.memory_space<vmem>>, %arg5: memref<1x64xf32, #tpu.memory_space<vmem>>, %arg6: memref<1x64xf32, #tpu.memory_space<vmem>>, %arg7: memref<1x1xf32, #tpu.memory_space<smem>>, %arg8: memref<2x16x16x64xf32, #tpu.memory_space<vmem>>, %arg9: memref<2x18x18x64xf32, #tpu.memory_space<vmem>>) attributes {dimension_semantics = [], scalar_prefetch = 0 : i64, scratch_operands = 1 : i64, tpu.core_type = #tpu.core_type<tc>} {
    %c0 = arith.constant 0 : index
    %c0_0 = arith.constant 0 : index
    %c0_1 = arith.constant 0 : index
    %c0_2 = arith.constant 0 : index
    %0 = vector.load %arg0[%c0, %c0_0, %c0_1, %c0_2] : memref<2x16x16x64xf32, #tpu.memory_space<vmem>>, vector<2x16x16x64xf32>
    %c0_3 = arith.constant 0 : index
    %c1 = arith.constant 1 : index
    %c1_4 = arith.constant 1 : index
    %c0_5 = arith.constant 0 : index
    %1 = vector.load %arg9[%c0_3, %c1, %c1_4, %c0_5] : memref<2x18x18x64xf32, #tpu.memory_space<vmem>>, vector<2x16x16x64xf32>
    tpu.vector_store %arg9[%c0_3, %c1, %c1_4, %c0_5], %0 {strides = array<i32>} : memref<2x18x18x64xf32, #tpu.memory_space<vmem>>, vector<2x16x16x64xf32>,
    %c0_6 = arith.constant 0 : index
    %c1_7 = arith.constant 1 : index
    %c1_8 = arith.constant 1 : index
    %c0_9 = arith.constant 0 : index
    %2 = vector.load %arg9[%c0_6, %c1_7, %c1_8, %c0_9] : memref<2x18x18x64xf32, #tpu.memory_space<vmem>>, vector<2x1x16x64xf32>
    %c0_10 = arith.constant 0 : index
    %c0_11 = arith.constant 0 : index
    %c1_12 = arith.constant 1 : index
    %c0_13 = arith.constant 0 : index
    %3 = vector.load %arg9[%c0_10, %c0_11, %c1_12, %c0_13] : memref<2x18x18x64xf32, #tpu.memory_space<vmem>>, vector<2x1x16x64xf32>
    tpu.vector_store %arg9[%c0_10, %c0_11, %c1_12, %c0_13], %2 {strides = array<i32>} : memref<2x18x18x64xf32, #tpu.memory_space<vmem>>, vector<2x1x16x64xf32>,
    %c0_14 = arith.constant 0 : index
    %c16 = arith.constant 16 : index
    %c1_15 = arith.constant 1 : index
    %c0_16 = arith.constant 0 : index
    %4 = vector.load %arg9[%c0_14, %c16, %c1_15, %c0_16] : memref<2x18x18x64xf32, #tpu.memory_space<vmem>>, vector<2x1x16x64xf32>
    %c0_17 = arith.constant 0 : index
    %c17 = arith.constant 17 : index
    %c1_18 = arith.constant 1 : index
    %c0_19 = arith.constant 0 : index
    %5 = vector.load %arg9[%c0_17, %c17, %c1_18, %c0_19] : memref<2x18x18x64xf32, #tpu.memory_space<vmem>>, vector<2x1x16x64xf32>
    tpu.vector_store %arg9[%c0_17, %c17, %c1_18, %c0_19], %4 {strides = array<i32>} : memref<2x18x18x64xf32, #tpu.memory_space<vmem>>, vector<2x1x16x64xf32>,
    %c0_20 = arith.constant 0 : index
    %c0_21 = arith.constant 0 : index
    %c1_22 = arith.constant 1 : index
    %c0_23 = arith.constant 0 : index
    %6 = vector.load %arg9[%c0_20, %c0_21, %c1_22, %c0_23] : memref<2x18x18x64xf32, #tpu.memory_space<vmem>>, vector<2x18x1x64xf32>
    %c0_24 = arith.constant 0 : index
    %c0_25 = arith.constant 0 : index
    %c0_26 = arith.constant 0 : index
    %c0_27 = arith.constant 0 : index
    %7 = vector.load %arg9[%c0_24, %c0_25, %c0_26, %c0_27] : memref<2x18x18x64xf32, #tpu.memory_space<vmem>>, vector<2x18x1x64xf32>
    tpu.vector_store %arg9[%c0_24, %c0_25, %c0_26, %c0_27], %6 {strides = array<i32>} : memref<2x18x18x64xf32, #tpu.memory_space<vmem>>, vector<2x18x1x64xf32>,
    %c0_28 = arith.constant 0 : index
    %c0_29 = arith.constant 0 : index
    %c16_30 = arith.constant 16 : index
    %c0_31 = arith.constant 0 : index
    %8 = vector.load %arg9[%c0_28, %c0_29, %c16_30, %c0_31] : memref<2x18x18x64xf32, #tpu.memory_space<vmem>>, vector<2x18x1x64xf32>
    %c0_32 = arith.constant 0 : index
    %c0_33 = arith.constant 0 : index
    %c17_34 = arith.constant 17 : index
    %c0_35 = arith.constant 0 : index
    %9 = vector.load %arg9[%c0_32, %c0_33, %c17_34, %c0_35] : memref<2x18x18x64xf32, #tpu.memory_space<vmem>>, vector<2x18x1x64xf32>
    tpu.vector_store %arg9[%c0_32, %c0_33, %c17_34, %c0_35], %8 {strides = array<i32>} : memref<2x18x18x64xf32, #tpu.memory_space<vmem>>, vector<2x18x1x64xf32>,
    %c0_36 = arith.constant 0 : index
    %c0_37 = arith.constant 0 : index
    %c0_38 = arith.constant 0 : index
    %c0_39 = arith.constant 0 : index
    %10 = vector.load %arg9[%c0_36, %c0_37, %c0_38, %c0_39] : memref<2x18x18x64xf32, #tpu.memory_space<vmem>>, vector<2x16x16x64xf32>
    %c0_40 = arith.constant 0 : index
    %c0_41 = arith.constant 0 : index
    %c1_42 = arith.constant 1 : index
    %c0_43 = arith.constant 0 : index
    %11 = vector.load %arg9[%c0_40, %c0_41, %c1_42, %c0_43] : memref<2x18x18x64xf32, #tpu.memory_space<vmem>>, vector<2x16x16x64xf32>
    %c0_44 = arith.constant 0 : index
    %c0_45 = arith.constant 0 : index
    %c2 = arith.constant 2 : index
    %c0_46 = arith.constant 0 : index
    %12 = vector.load %arg9[%c0_44, %c0_45, %c2, %c0_46] : memref<2x18x18x64xf32, #tpu.memory_space<vmem>>, vector<2x16x16x64xf32>
    %c0_47 = arith.constant 0 : index
    %c1_48 = arith.constant 1 : index
    %c0_49 = arith.constant 0 : index
    %c0_50 = arith.constant 0 : index
    %13 = vector.load %arg9[%c0_47, %c1_48, %c0_49, %c0_50] : memref<2x18x18x64xf32, #tpu.memory_space<vmem>>, vector<2x16x16x64xf32>
    %c0_51 = arith.constant 0 : index
    %c1_52 = arith.constant 1 : index
    %c1_53 = arith.constant 1 : index
    %c0_54 = arith.constant 0 : index
    %14 = vector.load %arg9[%c0_51, %c1_52, %c1_53, %c0_54] : memref<2x18x18x64xf32, #tpu.memory_space<vmem>>, vector<2x16x16x64xf32>
    %c0_55 = arith.constant 0 : index
    %c1_56 = arith.constant 1 : index
    %c2_57 = arith.constant 2 : index
    %c0_58 = arith.constant 0 : index
    %15 = vector.load %arg9[%c0_55, %c1_56, %c2_57, %c0_58] : memref<2x18x18x64xf32, #tpu.memory_space<vmem>>, vector<2x16x16x64xf32>
    %c0_59 = arith.constant 0 : index
    %c2_60 = arith.constant 2 : index
    %c0_61 = arith.constant 0 : index
    %c0_62 = arith.constant 0 : index
    %16 = vector.load %arg9[%c0_59, %c2_60, %c0_61, %c0_62] : memref<2x18x18x64xf32, #tpu.memory_space<vmem>>, vector<2x16x16x64xf32>
    %c0_63 = arith.constant 0 : index
    %c2_64 = arith.constant 2 : index
    %c1_65 = arith.constant 1 : index
    %c0_66 = arith.constant 0 : index
    %17 = vector.load %arg9[%c0_63, %c2_64, %c1_65, %c0_66] : memref<2x18x18x64xf32, #tpu.memory_space<vmem>>, vector<2x16x16x64xf32>
    %c0_67 = arith.constant 0 : index
    %c2_68 = arith.constant 2 : index
    %c2_69 = arith.constant 2 : index
    %c0_70 = arith.constant 0 : index
    %18 = vector.load %arg9[%c0_67, %c2_68, %c2_69, %c0_70] : memref<2x18x18x64xf32, #tpu.memory_space<vmem>>, vector<2x16x16x64xf32>
    %19 = tpu.concatenate %10, %11, %12, %13, %14, %15, %16, %17, %18 in 3 : vector<2x16x16x64xf32>, vector<2x16x16x64xf32>, vector<2x16x16x64xf32>, vector<2x16x16x64xf32>, vector<2x16x16x64xf32>, vector<2x16x16x64xf32>, vector<2x16x16x64xf32>, vector<2x16x16x64xf32>, vector<2x16x16x64xf32> -> vector<2x16x16x576xf32>
    %20 = vector.shape_cast %19 : vector<2x16x16x576xf32> to vector<512x576xf32>
    %c0_71 = arith.constant 0 : index
    %c0_72 = arith.constant 0 : index
    %21 = vector.load %arg1[%c0_71, %c0_72] : memref<576x64xf32, #tpu.memory_space<vmem>>, vector<576x64xf32>
    %cst = arith.constant dense<0.000000e+00> : vector<512x64xf32>
    %22 = tpu.matmul %20, %21, %cst {dimension_numbers = #tpu.dot_dimension_numbers<[1], [0], [0], [1], [0, 0, 1, 1], [], []>} : vector<512x576xf32>, vector<576x64xf32>, vector<512x64xf32> -> vector<512x64xf32>
    %23 = arith.mulf %22, %22 : vector<512x64xf32>
    %24 = tpu.concatenate %22, %23 in 1 : vector<512x64xf32>, vector<512x64xf32> -> vector<512x128xf32>
    %cst_73 = arith.constant dense<0.000000e+00> : vector<128xf32>
    %25 = vector.multi_reduction <add>, %24, %cst_73 [0] : vector<512x128xf32> to vector<128xf32>
    %26 = vector.shape_cast %25 : vector<128xf32> to vector<1x128xf32>
    %27 = vector.extract_strided_slice %26 {offsets = [0, 0], sizes = [1, 64], strides = [1, 1]} : vector<1x128xf32> to vector<1x64xf32>
    %cst_74 = arith.constant 0.001953125 : f32
    %28 = vector.broadcast %cst_74 : f32 to vector<1x64xf32>
    %29 = arith.mulf %27, %28 : vector<1x64xf32>
    %30 = vector.extract_strided_slice %26 {offsets = [0, 64], sizes = [1, 64], strides = [1, 1]} : vector<1x128xf32> to vector<1x64xf32>
    %cst_75 = arith.constant 0.001953125 : f32
    %31 = vector.broadcast %cst_75 : f32 to vector<1x64xf32>
    %32 = arith.mulf %30, %31 : vector<1x64xf32>
    %33 = arith.mulf %29, %29 : vector<1x64xf32>
    %34 = arith.subf %32, %33 : vector<1x64xf32>
    %c0_76 = arith.constant 0 : index
    %c0_77 = arith.constant 0 : index
    %35 = vector.load %arg3[%c0_76, %c0_77] : memref<1x64xf32, #tpu.memory_space<vmem>>, vector<1x64xf32>
    %cst_78 = arith.constant 9.99999974E-6 : f32
    %36 = vector.broadcast %cst_78 : f32 to vector<1x64xf32>
    %37 = arith.addf %34, %36 : vector<1x64xf32>
    %38 = math.rsqrt %37 : vector<1x64xf32>
    %39 = arith.mulf %35, %38 : vector<1x64xf32>
    %c0_79 = arith.constant 0 : index
    %c0_80 = arith.constant 0 : index
    %40 = vector.load %arg4[%c0_79, %c0_80] : memref<1x64xf32, #tpu.memory_space<vmem>>, vector<1x64xf32>
    %41 = arith.mulf %29, %39 : vector<1x64xf32>
    %42 = arith.subf %40, %41 : vector<1x64xf32>
    %43 = vector.broadcast %39 : vector<1x64xf32> to vector<512x64xf32>
    %44 = arith.mulf %22, %43 : vector<512x64xf32>
    %45 = vector.broadcast %42 : vector<1x64xf32> to vector<512x64xf32>
    %46 = arith.addf %44, %45 : vector<512x64xf32>
    %c0_81 = arith.constant 0 : index
    %c0_82 = arith.constant 0 : index
    %47 = memref.load %arg7[%c0_81, %c0_82] : memref<1x1xf32, #tpu.memory_space<smem>>
    %cst_83 = arith.constant 0.000000e+00 : f32
    %48 = vector.broadcast %cst_83 : f32 to vector<512x64xf32>
    %49 = arith.cmpf ogt, %46, %48 : vector<512x64xf32>
    %50 = vector.broadcast %47 : f32 to vector<512x64xf32>
    %51 = arith.mulf %50, %46 : vector<512x64xf32>
    %52 = arith.select %49, %46, %51 : vector<512x64xi1>, vector<512x64xf32>
    %53 = vector.shape_cast %52 : vector<512x64xf32> to vector<2x16x16x64xf32>
    %c0_84 = arith.constant 0 : index
    %c1_85 = arith.constant 1 : index
    %c1_86 = arith.constant 1 : index
    %c0_87 = arith.constant 0 : index
    %54 = vector.load %arg9[%c0_84, %c1_85, %c1_86, %c0_87] : memref<2x18x18x64xf32, #tpu.memory_space<vmem>>, vector<2x16x16x64xf32>
    tpu.vector_store %arg9[%c0_84, %c1_85, %c1_86, %c0_87], %53 {strides = array<i32>} : memref<2x18x18x64xf32, #tpu.memory_space<vmem>>, vector<2x16x16x64xf32>,
    %c0_88 = arith.constant 0 : index
    %c1_89 = arith.constant 1 : index
    %c1_90 = arith.constant 1 : index
    %c0_91 = arith.constant 0 : index
    %55 = vector.load %arg9[%c0_88, %c1_89, %c1_90, %c0_91] : memref<2x18x18x64xf32, #tpu.memory_space<vmem>>, vector<2x1x16x64xf32>
    %c0_92 = arith.constant 0 : index
    %c0_93 = arith.constant 0 : index
    %c1_94 = arith.constant 1 : index
    %c0_95 = arith.constant 0 : index
    %56 = vector.load %arg9[%c0_92, %c0_93, %c1_94, %c0_95] : memref<2x18x18x64xf32, #tpu.memory_space<vmem>>, vector<2x1x16x64xf32>
    tpu.vector_store %arg9[%c0_92, %c0_93, %c1_94, %c0_95], %55 {strides = array<i32>} : memref<2x18x18x64xf32, #tpu.memory_space<vmem>>, vector<2x1x16x64xf32>,
    %c0_96 = arith.constant 0 : index
    %c16_97 = arith.constant 16 : index
    %c1_98 = arith.constant 1 : index
    %c0_99 = arith.constant 0 : index
    %57 = vector.load %arg9[%c0_96, %c16_97, %c1_98, %c0_99] : memref<2x18x18x64xf32, #tpu.memory_space<vmem>>, vector<2x1x16x64xf32>
    %c0_100 = arith.constant 0 : index
    %c17_101 = arith.constant 17 : index
    %c1_102 = arith.constant 1 : index
    %c0_103 = arith.constant 0 : index
    %58 = vector.load %arg9[%c0_100, %c17_101, %c1_102, %c0_103] : memref<2x18x18x64xf32, #tpu.memory_space<vmem>>, vector<2x1x16x64xf32>
    tpu.vector_store %arg9[%c0_100, %c17_101, %c1_102, %c0_103], %57 {strides = array<i32>} : memref<2x18x18x64xf32, #tpu.memory_space<vmem>>, vector<2x1x16x64xf32>,
    %c0_104 = arith.constant 0 : index
    %c0_105 = arith.constant 0 : index
    %c1_106 = arith.constant 1 : index
    %c0_107 = arith.constant 0 : index
    %59 = vector.load %arg9[%c0_104, %c0_105, %c1_106, %c0_107] : memref<2x18x18x64xf32, #tpu.memory_space<vmem>>, vector<2x18x1x64xf32>
    %c0_108 = arith.constant 0 : index
    %c0_109 = arith.constant 0 : index
    %c0_110 = arith.constant 0 : index
    %c0_111 = arith.constant 0 : index
    %60 = vector.load %arg9[%c0_108, %c0_109, %c0_110, %c0_111] : memref<2x18x18x64xf32, #tpu.memory_space<vmem>>, vector<2x18x1x64xf32>
    tpu.vector_store %arg9[%c0_108, %c0_109, %c0_110, %c0_111], %59 {strides = array<i32>} : memref<2x18x18x64xf32, #tpu.memory_space<vmem>>, vector<2x18x1x64xf32>,
    %c0_112 = arith.constant 0 : index
    %c0_113 = arith.constant 0 : index
    %c16_114 = arith.constant 16 : index
    %c0_115 = arith.constant 0 : index
    %61 = vector.load %arg9[%c0_112, %c0_113, %c16_114, %c0_115] : memref<2x18x18x64xf32, #tpu.memory_space<vmem>>, vector<2x18x1x64xf32>
    %c0_116 = arith.constant 0 : index
    %c0_117 = arith.constant 0 : index
    %c17_118 = arith.constant 17 : index
    %c0_119 = arith.constant 0 : index
    %62 = vector.load %arg9[%c0_116, %c0_117, %c17_118, %c0_119] : memref<2x18x18x64xf32, #tpu.memory_space<vmem>>, vector<2x18x1x64xf32>
    tpu.vector_store %arg9[%c0_116, %c0_117, %c17_118, %c0_119], %61 {strides = array<i32>} : memref<2x18x18x64xf32, #tpu.memory_space<vmem>>, vector<2x18x1x64xf32>,
    %c0_120 = arith.constant 0 : index
    %c0_121 = arith.constant 0 : index
    %c0_122 = arith.constant 0 : index
    %c0_123 = arith.constant 0 : index
    %63 = vector.load %arg9[%c0_120, %c0_121, %c0_122, %c0_123] : memref<2x18x18x64xf32, #tpu.memory_space<vmem>>, vector<2x16x16x64xf32>
    %c0_124 = arith.constant 0 : index
    %c0_125 = arith.constant 0 : index
    %c1_126 = arith.constant 1 : index
    %c0_127 = arith.constant 0 : index
    %64 = vector.load %arg9[%c0_124, %c0_125, %c1_126, %c0_127] : memref<2x18x18x64xf32, #tpu.memory_space<vmem>>, vector<2x16x16x64xf32>
    %c0_128 = arith.constant 0 : index
    %c0_129 = arith.constant 0 : index
    %c2_130 = arith.constant 2 : index
    %c0_131 = arith.constant 0 : index
    %65 = vector.load %arg9[%c0_128, %c0_129, %c2_130, %c0_131] : memref<2x18x18x64xf32, #tpu.memory_space<vmem>>, vector<2x16x16x64xf32>
    %c0_132 = arith.constant 0 : index
    %c1_133 = arith.constant 1 : index
    %c0_134 = arith.constant 0 : index
    %c0_135 = arith.constant 0 : index
    %66 = vector.load %arg9[%c0_132, %c1_133, %c0_134, %c0_135] : memref<2x18x18x64xf32, #tpu.memory_space<vmem>>, vector<2x16x16x64xf32>
    %c0_136 = arith.constant 0 : index
    %c1_137 = arith.constant 1 : index
    %c1_138 = arith.constant 1 : index
    %c0_139 = arith.constant 0 : index
    %67 = vector.load %arg9[%c0_136, %c1_137, %c1_138, %c0_139] : memref<2x18x18x64xf32, #tpu.memory_space<vmem>>, vector<2x16x16x64xf32>
    %c0_140 = arith.constant 0 : index
    %c1_141 = arith.constant 1 : index
    %c2_142 = arith.constant 2 : index
    %c0_143 = arith.constant 0 : index
    %68 = vector.load %arg9[%c0_140, %c1_141, %c2_142, %c0_143] : memref<2x18x18x64xf32, #tpu.memory_space<vmem>>, vector<2x16x16x64xf32>
    %c0_144 = arith.constant 0 : index
    %c2_145 = arith.constant 2 : index
    %c0_146 = arith.constant 0 : index
    %c0_147 = arith.constant 0 : index
    %69 = vector.load %arg9[%c0_144, %c2_145, %c0_146, %c0_147] : memref<2x18x18x64xf32, #tpu.memory_space<vmem>>, vector<2x16x16x64xf32>
    %c0_148 = arith.constant 0 : index
    %c2_149 = arith.constant 2 : index
    %c1_150 = arith.constant 1 : index
    %c0_151 = arith.constant 0 : index
    %70 = vector.load %arg9[%c0_148, %c2_149, %c1_150, %c0_151] : memref<2x18x18x64xf32, #tpu.memory_space<vmem>>, vector<2x16x16x64xf32>
    %c0_152 = arith.constant 0 : index
    %c2_153 = arith.constant 2 : index
    %c2_154 = arith.constant 2 : index
    %c0_155 = arith.constant 0 : index
    %71 = vector.load %arg9[%c0_152, %c2_153, %c2_154, %c0_155] : memref<2x18x18x64xf32, #tpu.memory_space<vmem>>, vector<2x16x16x64xf32>
    %72 = tpu.concatenate %63, %64, %65, %66, %67, %68, %69, %70, %71 in 3 : vector<2x16x16x64xf32>, vector<2x16x16x64xf32>, vector<2x16x16x64xf32>, vector<2x16x16x64xf32>, vector<2x16x16x64xf32>, vector<2x16x16x64xf32>, vector<2x16x16x64xf32>, vector<2x16x16x64xf32>, vector<2x16x16x64xf32> -> vector<2x16x16x576xf32>
    %73 = vector.shape_cast %72 : vector<2x16x16x576xf32> to vector<512x576xf32>
    %c0_156 = arith.constant 0 : index
    %c0_157 = arith.constant 0 : index
    %74 = vector.load %arg2[%c0_156, %c0_157] : memref<576x64xf32, #tpu.memory_space<vmem>>, vector<576x64xf32>
    %cst_158 = arith.constant dense<0.000000e+00> : vector<512x64xf32>
    %75 = tpu.matmul %73, %74, %cst_158 {dimension_numbers = #tpu.dot_dimension_numbers<[1], [0], [0], [1], [0, 0, 1, 1], [], []>} : vector<512x576xf32>, vector<576x64xf32>, vector<512x64xf32> -> vector<512x64xf32>
    %76 = arith.mulf %75, %75 : vector<512x64xf32>
    %77 = tpu.concatenate %75, %76 in 1 : vector<512x64xf32>, vector<512x64xf32> -> vector<512x128xf32>
    %cst_159 = arith.constant dense<0.000000e+00> : vector<128xf32>
    %78 = vector.multi_reduction <add>, %77, %cst_159 [0] : vector<512x128xf32> to vector<128xf32>
    %79 = vector.shape_cast %78 : vector<128xf32> to vector<1x128xf32>
    %80 = vector.extract_strided_slice %79 {offsets = [0, 0], sizes = [1, 64], strides = [1, 1]} : vector<1x128xf32> to vector<1x64xf32>
    %cst_160 = arith.constant 0.001953125 : f32
    %81 = vector.broadcast %cst_160 : f32 to vector<1x64xf32>
    %82 = arith.mulf %80, %81 : vector<1x64xf32>
    %83 = vector.extract_strided_slice %79 {offsets = [0, 64], sizes = [1, 64], strides = [1, 1]} : vector<1x128xf32> to vector<1x64xf32>
    %cst_161 = arith.constant 0.001953125 : f32
    %84 = vector.broadcast %cst_161 : f32 to vector<1x64xf32>
    %85 = arith.mulf %83, %84 : vector<1x64xf32>
    %86 = arith.mulf %82, %82 : vector<1x64xf32>
    %87 = arith.subf %85, %86 : vector<1x64xf32>
    %c0_162 = arith.constant 0 : index
    %c0_163 = arith.constant 0 : index
    %88 = vector.load %arg5[%c0_162, %c0_163] : memref<1x64xf32, #tpu.memory_space<vmem>>, vector<1x64xf32>
    %cst_164 = arith.constant 9.99999974E-6 : f32
    %89 = vector.broadcast %cst_164 : f32 to vector<1x64xf32>
    %90 = arith.addf %87, %89 : vector<1x64xf32>
    %91 = math.rsqrt %90 : vector<1x64xf32>
    %92 = arith.mulf %88, %91 : vector<1x64xf32>
    %c0_165 = arith.constant 0 : index
    %c0_166 = arith.constant 0 : index
    %93 = vector.load %arg6[%c0_165, %c0_166] : memref<1x64xf32, #tpu.memory_space<vmem>>, vector<1x64xf32>
    %94 = arith.mulf %82, %92 : vector<1x64xf32>
    %95 = arith.subf %93, %94 : vector<1x64xf32>
    %96 = vector.broadcast %92 : vector<1x64xf32> to vector<512x64xf32>
    %97 = arith.mulf %75, %96 : vector<512x64xf32>
    %98 = vector.broadcast %95 : vector<1x64xf32> to vector<512x64xf32>
    %99 = arith.addf %97, %98 : vector<512x64xf32>
    %c0_167 = arith.constant 0 : index
    %c0_168 = arith.constant 0 : index
    %c0_169 = arith.constant 0 : index
    %c0_170 = arith.constant 0 : index
    %100 = vector.load %arg0[%c0_167, %c0_168, %c0_169, %c0_170] : memref<2x16x16x64xf32, #tpu.memory_space<vmem>>, vector<2x16x16x64xf32>
    %101 = vector.shape_cast %99 : vector<512x64xf32> to vector<2x16x16x64xf32>
    %102 = arith.addf %100, %101 : vector<2x16x16x64xf32>
    %c0_171 = arith.constant 0 : index
    %c0_172 = arith.constant 0 : index
    %c0_173 = arith.constant 0 : index
    %c0_174 = arith.constant 0 : index
    %103 = vector.load %arg8[%c0_171, %c0_172, %c0_173, %c0_174] : memref<2x16x16x64xf32, #tpu.memory_space<vmem>>, vector<2x16x16x64xf32>
    tpu.vector_store %arg8[%c0_171, %c0_172, %c0_173, %c0_174], %102 {strides = array<i32>} : memref<2x16x16x64xf32, #tpu.memory_space<vmem>>, vector<2x16x16x64xf32>,
    return
  }
}

</mosaic_0001>

<llo_original>
// kernel: residual_block.1
$region0: #{residual_block.1}
  #allocation0 [shape = 'u32[]', space=smem, size = 0x4, offset = 0x4, fixed_abs, tag = 'smem constant byte address 0x4 - core index']
  #allocation1 [shape = 'u32[144,128]{1,0:T(1,128)}', space=vmem, size = 0x12000, scoped, tag = 'internal scratch']
  #allocation2 [shape = 'f32[2,18,18,64]{3,2,1,0:T(8,128)}', space=vmem, size = 0x6c000, scoped, tag = 'scratch operand']
  #allocation3 [shape = 'f32[1,1]{1,0:T(1,128)S(6)}', space=smem, size = 0x200, scoped, tag = 'scoped memory for residual_block.1']
  %s0 = inlined_call_operand.vmem [shape: f32[2,16,16,64], index: 0, kind: input, shape index: {}]
  %s1 = inlined_call_operand.vmem [shape: f32[576,64], index: 1, kind: input, shape index: {}]
  %s2 = inlined_call_operand.vmem [shape: f32[576,64], index: 2, kind: input, shape index: {}]
  %s3 = inlined_call_operand.vmem [shape: f32[1,64], index: 3, kind: input, shape index: {}]
  %s4 = inlined_call_operand.vmem [shape: f32[1,64], index: 4, kind: input, shape index: {}]
  %s5 = inlined_call_operand.vmem [shape: f32[1,64], index: 5, kind: input, shape index: {}]
  %s6 = inlined_call_operand.vmem [shape: f32[1,64], index: 6, kind: input, shape index: {}]
  %s7 = inlined_call_operand.<no memory space> [shape: f32[1,1], index: 7, kind: input, shape index: {}]
  %s8 = inlined_call_operand.hbm [shape: f32[2,16,16,64], index: 8, kind: output, shape index: {}]
  %s9 = sld [smem:[#allocation0]]
  $region42: #{residual_block.1} parent=0
    _
  %s11 = ssub.s32 1, %s9
  %s12 = scalar_select 0, %s11, %s9
  %13 = sst [smem:[#allocation3]] %s7
  $region1: #{residual_block.1} parent=0
    #allocation4 [shape = 'u8[262144]{0}', space=vmem, size = 0x40000, scoped, tag = 'output window, operand 0, single buffered']
    #allocation5 [shape = 's32[1]{0}', space=sflag, size = 0x4, scoped, tag = 'scoped memory for residual_block.1']
    %14 = vsyncpa [#allocation5], 0
    // Predicated region
    $region2: #{residual_block.1} parent=1 // pred_check
      _
    $region3: #{residual_block.1} parent=1 // pred_check_branch
      %16 = sbr.rel (0) target = $region5
    $region4: #{residual_block.1} parent=1 // pred_region
      _
    $region5: #{residual_block.1} parent=1 // pred_fallthru
      _
    // Predicated region
    $region6: #{residual_block.1} parent=1 // pred_check
      _
    $region7: #{residual_block.1} parent=1 // pred_check_branch
      %18 = sbr.rel (0) target = $region9
    $region8: #{residual_block.1} parent=1 // pred_region
      _
    $region9: #{residual_block.1} parent=1 // pred_fallthru
      _
    // Predicated region
    $region10: #{residual_block.1} parent=1 // pred_check
      _
    $region11: #{residual_block.1} parent=1 // pred_check_branch
      %20 = sbr.rel (0) target = $region13
    $region12: #{residual_block.1} parent=1 // pred_region
      _
    $region13: #{residual_block.1} parent=1 // pred_fallthru
      _
    // Predicated region
    $region14: #{residual_block.1} parent=1 // pred_check
      _
    $region15: #{residual_block.1} parent=1 // pred_check_branch
      %22 = sbr.rel (0) target = $region17
    $region16: #{residual_block.1} parent=1 // pred_region
      _
    $region17: #{residual_block.1} parent=1 // pred_fallthru
      _
    // Predicated region
    $region18: #{residual_block.1} parent=1 // pred_check
      _
    $region19: #{residual_block.1} parent=1 // pred_check_branch
      %24 = sbr.rel (0) target = $region21
    $region20: #{residual_block.1} parent=1 // pred_region
      _
    $region21: #{residual_block.1} parent=1 // pred_fallthru
      _
    // Predicated region
    $region22: #{residual_block.1} parent=1 // pred_check
      _
    $region23: #{residual_block.1} parent=1 // pred_check_branch
      %26 = sbr.rel (0) target = $region25
    $region24: #{residual_block.1} parent=1 // pred_region
      _
    $region25: #{residual_block.1} parent=1 // pred_fallthru
      _
    // Predicated region
    $region26: #{residual_block.1} parent=1 // pred_check
      _
    $region27: #{residual_block.1} parent=1 // pred_check_branch
      %28 = sbr.rel (0) target = $region29
    $region28: #{residual_block.1} parent=1 // pred_region
      _
    $region29: #{residual_block.1} parent=1 // pred_fallthru
      _
    // Predicated region
    $region30: #{residual_block.1} parent=1 // pred_check
      _
    $region31: #{residual_block.1} parent=1 // pred_check_branch
      %30 = sbr.rel (0) target = $region33
    $region32: #{residual_block.1} parent=1 // pred_region
      _
    $region33: #{residual_block.1} parent=1 // pred_fallthru
      _
    %v31 = vld [vmem:[%s0] sm:$0xff]
    %v32 = vld [vmem:[%s0 + $0x8] sm:$0xff]
    %v33 = vld [vmem:[%s0 + $0x10] sm:$0xff]
    %v34 = vld [vmem:[%s0 + $0x18] sm:$0xff]
    %v35 = vld [vmem:[%s0 + $0x20] sm:$0xff]
    %v36 = vld [vmem:[%s0 + $0x28] sm:$0xff]
    %v37 = vld [vmem:[%s0 + $0x30] sm:$0xff]
    %v38 = vld [vmem:[%s0 + $0x38] sm:$0xff]
    %v39 = vld [vmem:[%s0 + $0x40] sm:$0xff]
    %v40 = vld [vmem:[%s0 + $0x48] sm:$0xff]
    %v41 = vld [vmem:[%s0 + $0x50] sm:$0xff]
    %v42 = vld [vmem:[%s0 + $0x58] sm:$0xff]
    %v43 = vld [vmem:[%s0 + $0x60] sm:$0xff]
    %v44 = vld [vmem:[%s0 + $0x68] sm:$0xff]
    %v45 = vld [vmem:[%s0 + $0x70] sm:$0xff]
    %v46 = vld [vmem:[%s0 + $0x78] sm:$0xff]
    %v47 = vld [vmem:[%s0 + $0x80] sm:$0xff]
    %v48 = vld [vmem:[%s0 + $0x88] sm:$0xff]
    %v49 = vld [vmem:[%s0 + $0x90] sm:$0xff]
    %v50 = vld [vmem:[%s0 + $0x98] sm:$0xff]
    %v51 = vld [vmem:[%s0 + $0xa0] sm:$0xff]
    %v52 = vld [vmem:[%s0 + $0xa8] sm:$0xff]
    %v53 = vld [vmem:[%s0 + $0xb0] sm:$0xff]
    %v54 = vld [vmem:[%s0 + $0xb8] sm:$0xff]
    %v55 = vld [vmem:[%s0 + $0xc0] sm:$0xff]
    %v56 = vld [vmem:[%s0 + $0xc8] sm:$0xff]
    %v57 = vld [vmem:[%s0 + $0xd0] sm:$0xff]
    %v58 = vld [vmem:[%s0 + $0xd8] sm:$0xff]
    %v59 = vld [vmem:[%s0 + $0xe0] sm:$0xff]
    %v60 = vld [vmem:[%s0 + $0xe8] sm:$0xff]
    %v61 = vld [vmem:[%s0 + $0xf0] sm:$0xff]
    %v62 = vld [vmem:[%s0 + $0xf8] sm:$0xff]
    %v63 = vld [vmem:[%s0 + $0x100] sm:$0xff]
    %v64 = vld [vmem:[%s0 + $0x108] sm:$0xff]
    %v65 = vld [vmem:[%s0 + $0x110] sm:$0xff]
    %v66 = vld [vmem:[%s0 + $0x118] sm:$0xff]
    %v67 = vld [vmem:[%s0 + $0x120] sm:$0xff]
    %v68 = vld [vmem:[%s0 + $0x128] sm:$0xff]
    %v69 = vld [vmem:[%s0 + $0x130] sm:$0xff]
    %v70 = vld [vmem:[%s0 + $0x138] sm:$0xff]
    %v71 = vld [vmem:[%s0 + $0x140] sm:$0xff]
    %v72 = vld [vmem:[%s0 + $0x148] sm:$0xff]
    %v73 = vld [vmem:[%s0 + $0x150] sm:$0xff]
    %v74 = vld [vmem:[%s0 + $0x158] sm:$0xff]
    %v75 = vld [vmem:[%s0 + $0x160] sm:$0xff]
    %v76 = vld [vmem:[%s0 + $0x168] sm:$0xff]
    %v77 = vld [vmem:[%s0 + $0x170] sm:$0xff]
    %v78 = vld [vmem:[%s0 + $0x178] sm:$0xff]
    %v79 = vld [vmem:[%s0 + $0x180] sm:$0xff]
    %v80 = vld [vmem:[%s0 + $0x188] sm:$0xff]
    %v81 = vld [vmem:[%s0 + $0x190] sm:$0xff]
    %v82 = vld [vmem:[%s0 + $0x198] sm:$0xff]
    %v83 = vld [vmem:[%s0 + $0x1a0] sm:$0xff]
    %v84 = vld [vmem:[%s0 + $0x1a8] sm:$0xff]
    %v85 = vld [vmem:[%s0 + $0x1b0] sm:$0xff]
    %v86 = vld [vmem:[%s0 + $0x1b8] sm:$0xff]
    %v87 = vld [vmem:[%s0 + $0x1c0] sm:$0xff]
    %v88 = vld [vmem:[%s0 + $0x1c8] sm:$0xff]
    %v89 = vld [vmem:[%s0 + $0x1d0] sm:$0xff]
    %v90 = vld [vmem:[%s0 + $0x1d8] sm:$0xff]
    %v91 = vld [vmem:[%s0 + $0x1e0] sm:$0xff]
    %v92 = vld [vmem:[%s0 + $0x1e8] sm:$0xff]
    %v93 = vld [vmem:[%s0 + $0x1f0] sm:$0xff]
    %v94 = vld [vmem:[%s0 + $0x1f8] sm:$0xff]
    %s95 = scalar_lea.vmem [#allocation2], 24
    %vm96 = vcmask 523264
    %97 = vst.msk [vmem:[%s95 + $0x1] sm:$0xff] %vm96, %v31
    %98 = vst.msk [vmem:[%s95 + $0x9] sm:$0xff] %vm96, %v32
    %99 = vst.msk [vmem:[%s95 + $0x19] sm:$0xff] %vm96, %v33
    %100 = vst.msk [vmem:[%s95 + $0x21] sm:$0xff] %vm96, %v34
    %101 = vst.msk [vmem:[%s95 + $0x31] sm:$0xff] %vm96, %v35
    %102 = vst.msk [vmem:[%s95 + $0x39] sm:$0xff] %vm96, %v36
    %103 = vst.msk [vmem:[%s95 + $0x49] sm:$0xff] %vm96, %v37
    %104 = vst.msk [vmem:[%s95 + $0x51] sm:$0xff] %vm96, %v38
    %105 = vst.msk [vmem:[%s95 + $0x61] sm:$0xff] %vm96, %v39
    %106 = vst.msk [vmem:[%s95 + $0x69] sm:$0xff] %vm96, %v40
    %107 = vst.msk [vmem:[%s95 + $0x79] sm:$0xff] %vm96, %v41
    %108 = vst.msk [vmem:[%s95 + $0x81] sm:$0xff] %vm96, %v42
    %109 = vst.msk [vmem:[%s95 + $0x91] sm:$0xff] %vm96, %v43
    %110 = vst.msk [vmem:[%s95 + $0x99] sm:$0xff] %vm96, %v44
    %111 = vst.msk [vmem:[%s95 + $0xa9] sm:$0xff] %vm96, %v45
    %112 = vst.msk [vmem:[%s95 + $0xb1] sm:$0xff] %vm96, %v46
    %113 = vst.msk [vmem:[%s95 + $0xc1] sm:$0xff] %vm96, %v47
    %114 = vst.msk [vmem:[%s95 + $0xc9] sm:$0xff] %vm96, %v48
    %115 = vst.msk [vmem:[%s95 + $0xd9] sm:$0xff] %vm96, %v49
    %116 = vst.msk [vmem:[%s95 + $0xe1] sm:$0xff] %vm96, %v50
    %117 = vst.msk [vmem:[%s95 + $0xf1] sm:$0xff] %vm96, %v51
    %118 = vst.msk [vmem:[%s95 + $0xf9] sm:$0xff] %vm96, %v52
    %119 = vst.msk [vmem:[%s95 + $0x109] sm:$0xff] %vm96, %v53
    %120 = vst.msk [vmem:[%s95 + $0x111] sm:$0xff] %vm96, %v54
    %121 = vst.msk [vmem:[%s95 + $0x121] sm:$0xff] %vm96, %v55
    %122 = vst.msk [vmem:[%s95 + $0x129] sm:$0xff] %vm96, %v56
    %123 = vst.msk [vmem:[%s95 + $0x139] sm:$0xff] %vm96, %v57
    %124 = vst.msk [vmem:[%s95 + $0x141] sm:$0xff] %vm96, %v58
    %125 = vst.msk [vmem:[%s95 + $0x151] sm:$0xff] %vm96, %v59
    %126 = vst.msk [vmem:[%s95 + $0x159] sm:$0xff] %vm96, %v60
    %127 = vst.msk [vmem:[%s95 + $0x169] sm:$0xff] %vm96, %v61
    %128 = vst.msk [vmem:[%s95 + $0x171] sm:$0xff] %vm96, %v62
    %129 = vst.msk [vmem:[%s95 + $0x1b1] sm:$0xff] %vm96, %v63
    %130 = vst.msk [vmem:[%s95 + $0x1b9] sm:$0xff] %vm96, %v64
    %131 = vst.msk [vmem:[%s95 + $0x1c9] sm:$0xff] %vm96, %v65
    %132 = vst.msk [vmem:[%s95 + $0x1d1] sm:$0xff] %vm96, %v66
    %133 = vst.msk [vmem:[%s95 + $0x1e1] sm:$0xff] %vm96, %v67
    %134 = vst.msk [vmem:[%s95 + $0x1e9] sm:$0xff] %vm96, %v68
    %135 = vst.msk [vmem:[%s95 + $0x1f9] sm:$0xff] %vm96, %v69
    %136 = vst.msk [vmem:[%s95 + $0x201] sm:$0xff] %vm96, %v70
    %137 = vst.msk [vmem:[%s95 + $0x211] sm:$0xff] %vm96, %v71
    %138 = vst.msk [vmem:[%s95 + $0x219] sm:$0xff] %vm96, %v72
    %139 = vst.msk [vmem:[%s95 + $0x229] sm:$0xff] %vm96, %v73
    %140 = vst.msk [vmem:[%s95 + $0x231] sm:$0xff] %vm96, %v74
    %141 = vst.msk [vmem:[%s95 + $0x241] sm:$0xff] %vm96, %v75
    %142 = vst.msk [vmem:[%s95 + $0x249] sm:$0xff] %vm96, %v76
    %143 = vst.msk [vmem:[%s95 + $0x259] sm:$0xff] %vm96, %v77
    %144 = vst.msk [vmem:[%s95 + $0x261] sm:$0xff] %vm96, %v78
    %145 = vst.msk [vmem:[%s95 + $0x271] sm:$0xff] %vm96, %v79
    %146 = vst.msk [vmem:[%s95 + $0x279] sm:$0xff] %vm96, %v80
    %147 = vst.msk [vmem:[%s95 + $0x289] sm:$0xff] %vm96, %v81
    %148 = vst.msk [vmem:[%s95 + $0x291] sm:$0xff] %vm96, %v82
    %149 = vst.msk [vmem:[%s95 + $0x2a1] sm:$0xff] %vm96, %v83
    %150 = vst.msk [vmem:[%s95 + $0x2a9] sm:$0xff] %vm96, %v84
    %151 = vst.msk [vmem:[%s95 + $0x2b9] sm:$0xff] %vm96, %v85
    %152 = vst.msk [vmem:[%s95 + $0x2c1] sm:$0xff] %vm96, %v86
    %153 = vst.msk [vmem:[%s95 + $0x2d1] sm:$0xff] %vm96, %v87
    %154 = vst.msk [vmem:[%s95 + $0x2d9] sm:$0xff] %vm96, %v88
    %155 = vst.msk [vmem:[%s95 + $0x2e9] sm:$0xff] %vm96, %v89
    %156 = vst.msk [vmem:[%s95 + $0x2f1] sm:$0xff] %vm96, %v90
    %157 = vst.msk [vmem:[%s95 + $0x301] sm:$0xff] %vm96, %v91
    %158 = vst.msk [vmem:[%s95 + $0x309] sm:$0xff] %vm96, %v92
    %159 = vst.msk [vmem:[%s95 + $0x319] sm:$0xff] %vm96, %v93
    %160 = vst.msk [vmem:[%s95 + $0x321] sm:$0xff] %vm96, %v94
    %v161 = vld [vmem:[%s95 + $0x1] sm:$0xff]
    %v162 = vld [vmem:[%s95 + $0x9] sm:$0xff]
    %v163 = vld [vmem:[%s95 + $0x1b1] sm:$0xff]
    %v164 = vld [vmem:[%s95 + $0x1b9] sm:$0xff]
    %165 = vst.msk [vmem:[#allocation2 + $0x1] sm:$0xff] %vm96, %v161
    %166 = vst.msk [vmem:[#allocation2 + $0x9] sm:$0xff] %vm96, %v162
    %167 = vst.msk [vmem:[#allocation2 + $0x1b1] sm:$0xff] %vm96, %v163
    %168 = vst.msk [vmem:[#allocation2 + $0x1b9] sm:$0xff] %vm96, %v164
    %s169 = scalar_lea.vmem [#allocation2], 384
    %v170 = vld [vmem:[%s169 + $0x1] sm:$0xff]
    %v171 = vld [vmem:[%s169 + $0x9] sm:$0xff]
    %v172 = vld [vmem:[%s169 + $0x1b1] sm:$0xff]
    %v173 = vld [vmem:[%s169 + $0x1b9] sm:$0xff]
    %s174 = scalar_lea.vmem [#allocation2], 408
    %175 = vst.msk [vmem:[%s174 + $0x1] sm:$0xff] %vm96, %v170
    %176 = vst.msk [vmem:[%s174 + $0x9] sm:$0xff] %vm96, %v171
    %177 = vst.msk [vmem:[%s174 + $0x1b1] sm:$0xff] %vm96, %v172
    %178 = vst.msk [vmem:[%s174 + $0x1b9] sm:$0xff] %vm96, %v173
    %v179 = vld [vmem:[#allocation2 + $0x1] sm:$0x1]
    %v180 = vld [vmem:[#allocation2 + $0x19] sm:$0x1]
    %v181 = vld [vmem:[#allocation2 + $0x31] sm:$0x1]
    %v182 = vld [vmem:[#allocation2 + $0x49] sm:$0x1]
    %v183 = vld [vmem:[#allocation2 + $0x61] sm:$0x1]
    %v184 = vld [vmem:[#allocation2 + $0x79] sm:$0x1]
    %v185 = vld [vmem:[#allocation2 + $0x91] sm:$0x1]
    %v186 = vld [vmem:[#allocation2 + $0xa9] sm:$0x1]
    %v187 = vld [vmem:[#allocation2 + $0xc1] sm:$0x1]
    %v188 = vld [vmem:[#allocation2 + $0xd9] sm:$0x1]
    %v189 = vld [vmem:[#allocation2 + $0xf1] sm:$0x1]
    %v190 = vld [vmem:[#allocation2 + $0x109] sm:$0x1]
    %v191 = vld [vmem:[#allocation2 + $0x121] sm:$0x1]
    %v192 = vld [vmem:[#allocation2 + $0x139] sm:$0x1]
    %v193 = vld [vmem:[#allocation2 + $0x151] sm:$0x1]
    %v194 = vld [vmem:[#allocation2 + $0x169] sm:$0x1]
    %v195 = vld [vmem:[#allocation2 + $0x181] sm:$0x1]
    %v196 = vld [vmem:[#allocation2 + $0x199] sm:$0x1]
    %v197 = vld [vmem:[#allocation2 + $0x1b1] sm:$0x1]
    %v198 = vld [vmem:[#allocation2 + $0x1c9] sm:$0x1]
    %v199 = vld [vmem:[#allocation2 + $0x1e1] sm:$0x1]
    %v200 = vld [vmem:[#allocation2 + $0x1f9] sm:$0x1]
    %v201 = vld [vmem:[#allocation2 + $0x211] sm:$0x1]
    %v202 = vld [vmem:[#allocation2 + $0x229] sm:$0x1]
    %v203 = vld [vmem:[#allocation2 + $0x241] sm:$0x1]
    %v204 = vld [vmem:[#allocation2 + $0x259] sm:$0x1]
    %v205 = vld [vmem:[#allocation2 + $0x271] sm:$0x1]
    %v206 = vld [vmem:[#allocation2 + $0x289] sm:$0x1]
    %v207 = vld [vmem:[#allocation2 + $0x2a1] sm:$0x1]
    %v208 = vld [vmem:[#allocation2 + $0x2b9] sm:$0x1]
    %v209 = vld [vmem:[#allocation2 + $0x2d1] sm:$0x1]
    %v210 = vld [vmem:[#allocation2 + $0x2e9] sm:$0x1]
    %v211 = vld [vmem:[#allocation2 + $0x301] sm:$0x1]
    %v212 = vld [vmem:[#allocation2 + $0x319] sm:$0x1]
    %v213 = vld [vmem:[#allocation2 + $0x331] sm:$0x1]
    %v214 = vld [vmem:[#allocation2 + $0x349] sm:$0x1]
    %vm215 = vcmask 516096
    %216 = vst.msk [vmem:[#allocation2] sm:$0x1] %vm215, %v179
    %217 = vst.msk [vmem:[#allocation2 + $0x18] sm:$0x1] %vm215, %v180
    %218 = vst.msk [vmem:[#allocation2 + $0x30] sm:$0x1] %vm215, %v181
    %219 = vst.msk [vmem:[#allocation2 + $0x48] sm:$0x1] %vm215, %v182
    %220 = vst.msk [vmem:[#allocation2 + $0x60] sm:$0x1] %vm215, %v183
    %221 = vst.msk [vmem:[#allocation2 + $0x78] sm:$0x1] %vm215, %v184
    %222 = vst.msk [vmem:[#allocation2 + $0x90] sm:$0x1] %vm215, %v185
    %223 = vst.msk [vmem:[#allocation2 + $0xa8] sm:$0x1] %vm215, %v186
    %224 = vst.msk [vmem:[#allocation2 + $0xc0] sm:$0x1] %vm215, %v187
    %225 = vst.msk [vmem:[#allocation2 + $0xd8] sm:$0x1] %vm215, %v188
    %226 = vst.msk [vmem:[#allocation2 + $0xf0] sm:$0x1] %vm215, %v189
    %227 = vst.msk [vmem:[#allocation2 + $0x108] sm:$0x1] %vm215, %v190
    %228 = vst.msk [vmem:[#allocation2 + $0x120] sm:$0x1] %vm215, %v191
    %229 = vst.msk [vmem:[#allocation2 + $0x138] sm:$0x1] %vm215, %v192
    %230 = vst.msk [vmem:[#allocation2 + $0x150] sm:$0x1] %vm215, %v193
    %231 = vst.msk [vmem:[#allocation2 + $0x168] sm:$0x1] %vm215, %v194
    %232 = vst.msk [vmem:[#allocation2 + $0x180] sm:$0x1] %vm215, %v195
    %233 = vst.msk [vmem:[#allocation2 + $0x198] sm:$0x1] %vm215, %v196
    %234 = vst.msk [vmem:[#allocation2 + $0x1b0] sm:$0x1] %vm215, %v197
    %235 = vst.msk [vmem:[#allocation2 + $0x1c8] sm:$0x1] %vm215, %v198
    %236 = vst.msk [vmem:[#allocation2 + $0x1e0] sm:$0x1] %vm215, %v199
    %237 = vst.msk [vmem:[#allocation2 + $0x1f8] sm:$0x1] %vm215, %v200
    %238 = vst.msk [vmem:[#allocation2 + $0x210] sm:$0x1] %vm215, %v201
    %239 = vst.msk [vmem:[#allocation2 + $0x228] sm:$0x1] %vm215, %v202
    %240 = vst.msk [vmem:[#allocation2 + $0x240] sm:$0x1] %vm215, %v203
    %241 = vst.msk [vmem:[#allocation2 + $0x258] sm:$0x1] %vm215, %v204
    %242 = vst.msk [vmem:[#allocation2 + $0x270] sm:$0x1] %vm215, %v205
    %243 = vst.msk [vmem:[#allocation2 + $0x288] sm:$0x1] %vm215, %v206
    %244 = vst.msk [vmem:[#allocation2 + $0x2a0] sm:$0x1] %vm215, %v207
    %245 = vst.msk [vmem:[#allocation2 + $0x2b8] sm:$0x1] %vm215, %v208
    %246 = vst.msk [vmem:[#allocation2 + $0x2d0] sm:$0x1] %vm215, %v209
    %247 = vst.msk [vmem:[#allocation2 + $0x2e8] sm:$0x1] %vm215, %v210
    %248 = vst.msk [vmem:[#allocation2 + $0x300] sm:$0x1] %vm215, %v211
    %249 = vst.msk [vmem:[#allocation2 + $0x318] sm:$0x1] %vm215, %v212
    %250 = vst.msk [vmem:[#allocation2 + $0x330] sm:$0x1] %vm215, %v213
    %251 = vst.msk [vmem:[#allocation2 + $0x348] sm:$0x1] %vm215, %v214
    %v252 = vld [vmem:[#allocation2 + $0x10] sm:$0x1]
    %v253 = vld [vmem:[#allocation2 + $0x28] sm:$0x1]
    %v254 = vld [vmem:[#allocation2 + $0x40] sm:$0x1]
    %v255 = vld [vmem:[#allocation2 + $0x58] sm:$0x1]
    %v256 = vld [vmem:[#allocation2 + $0x70] sm:$0x1]
    %v257 = vld [vmem:[#allocation2 + $0x88] sm:$0x1]
    %v258 = vld [vmem:[#allocation2 + $0xa0] sm:$0x1]
    %v259 = vld [vmem:[#allocation2 + $0xb8] sm:$0x1]
    %v260 = vld [vmem:[#allocation2 + $0xd0] sm:$0x1]
    %v261 = vld [vmem:[#allocation2 + $0xe8] sm:$0x1]
    %v262 = vld [vmem:[#allocation2 + $0x100] sm:$0x1]
    %v263 = vld [vmem:[#allocation2 + $0x118] sm:$0x1]
    %v264 = vld [vmem:[#allocation2 + $0x130] sm:$0x1]
    %v265 = vld [vmem:[#allocation2 + $0x148] sm:$0x1]
    %v266 = vld [vmem:[#allocation2 + $0x160] sm:$0x1]
    %v267 = vld [vmem:[#allocation2 + $0x178] sm:$0x1]
    %v268 = vld [vmem:[#allocation2 + $0x190] sm:$0x1]
    %v269 = vld [vmem:[#allocation2 + $0x1a8] sm:$0x1]
    %v270 = vld [vmem:[#allocation2 + $0x1c0] sm:$0x1]
    %v271 = vld [vmem:[#allocation2 + $0x1d8] sm:$0x1]
    %v272 = vld [vmem:[#allocation2 + $0x1f0] sm:$0x1]
    %v273 = vld [vmem:[#allocation2 + $0x208] sm:$0x1]
    %v274 = vld [vmem:[#allocation2 + $0x220] sm:$0x1]
    %v275 = vld [vmem:[#allocation2 + $0x238] sm:$0x1]
    %v276 = vld [vmem:[#allocation2 + $0x250] sm:$0x1]
    %v277 = vld [vmem:[#allocation2 + $0x268] sm:$0x1]
    %v278 = vld [vmem:[#allocation2 + $0x280] sm:$0x1]
    %v279 = vld [vmem:[#allocation2 + $0x298] sm:$0x1]
    %v280 = vld [vmem:[#allocation2 + $0x2b0] sm:$0x1]
    %v281 = vld [vmem:[#allocation2 + $0x2c8] sm:$0x1]
    %v282 = vld [vmem:[#allocation2 + $0x2e0] sm:$0x1]
    %v283 = vld [vmem:[#allocation2 + $0x2f8] sm:$0x1]
    %v284 = vld [vmem:[#allocation2 + $0x310] sm:$0x1]
    %v285 = vld [vmem:[#allocation2 + $0x328] sm:$0x1]
    %v286 = vld [vmem:[#allocation2 + $0x340] sm:$0x1]
    %v287 = vld [vmem:[#allocation2 + $0x358] sm:$0x1]
    %288 = vst.msk [vmem:[#allocation2 + $0x11] sm:$0x1] %vm215, %v252
    %289 = vst.msk [vmem:[#allocation2 + $0x29] sm:$0x1] %vm215, %v253
    %290 = vst.msk [vmem:[#allocation2 + $0x41] sm:$0x1] %vm215, %v254
    %291 = vst.msk [vmem:[#allocation2 + $0x59] sm:$0x1] %vm215, %v255
    %292 = vst.msk [vmem:[#allocation2 + $0x71] sm:$0x1] %vm215, %v256
    %293 = vst.msk [vmem:[#allocation2 + $0x89] sm:$0x1] %vm215, %v257
    %294 = vst.msk [vmem:[#allocation2 + $0xa1] sm:$0x1] %vm215, %v258
    %295 = vst.msk [vmem:[#allocation2 + $0xb9] sm:$0x1] %vm215, %v259
    %296 = vst.msk [vmem:[#allocation2 + $0xd1] sm:$0x1] %vm215, %v260
    %297 = vst.msk [vmem:[#allocation2 + $0xe9] sm:$0x1] %vm215, %v261
    %298 = vst.msk [vmem:[#allocation2 + $0x101] sm:$0x1] %vm215, %v262
    %299 = vst.msk [vmem:[#allocation2 + $0x119] sm:$0x1] %vm215, %v263
    %300 = vst.msk [vmem:[#allocation2 + $0x131] sm:$0x1] %vm215, %v264
    %301 = vst.msk [vmem:[#allocation2 + $0x149] sm:$0x1] %vm215, %v265
    %302 = vst.msk [vmem:[#allocation2 + $0x161] sm:$0x1] %vm215, %v266
    %303 = vst.msk [vmem:[#allocation2 + $0x179] sm:$0x1] %vm215, %v267
    %304 = vst.msk [vmem:[#allocation2 + $0x191] sm:$0x1] %vm215, %v268
    %305 = vst.msk [vmem:[#allocation2 + $0x1a9] sm:$0x1] %vm215, %v269
    %306 = vst.msk [vmem:[#allocation2 + $0x1c1] sm:$0x1] %vm215, %v270
    %307 = vst.msk [vmem:[#allocation2 + $0x1d9] sm:$0x1] %vm215, %v271
    %308 = vst.msk [vmem:[#allocation2 + $0x1f1] sm:$0x1] %vm215, %v272
    %309 = vst.msk [vmem:[#allocation2 + $0x209] sm:$0x1] %vm215, %v273
    %310 = vst.msk [vmem:[#allocation2 + $0x221] sm:$0x1] %vm215, %v274
    %311 = vst.msk [vmem:[#allocation2 + $0x239] sm:$0x1] %vm215, %v275
    %312 = vst.msk [vmem:[#allocation2 + $0x251] sm:$0x1] %vm215, %v276
    %313 = vst.msk [vmem:[#allocation2 + $0x269] sm:$0x1] %vm215, %v277
    %314 = vst.msk [vmem:[#allocation2 + $0x281] sm:$0x1] %vm215, %v278
    %315 = vst.msk [vmem:[#allocation2 + $0x299] sm:$0x1] %vm215, %v279
    %316 = vst.msk [vmem:[#allocation2 + $0x2b1] sm:$0x1] %vm215, %v280
    %317 = vst.msk [vmem:[#allocation2 + $0x2c9] sm:$0x1] %vm215, %v281
    %318 = vst.msk [vmem:[#allocation2 + $0x2e1] sm:$0x1] %vm215, %v282
    %319 = vst.msk [vmem:[#allocation2 + $0x2f9] sm:$0x1] %vm215, %v283
    %320 = vst.msk [vmem:[#allocation2 + $0x311] sm:$0x1] %vm215, %v284
    %321 = vst.msk [vmem:[#allocation2 + $0x329] sm:$0x1] %vm215, %v285
    %322 = vst.msk [vmem:[#allocation2 + $0x341] sm:$0x1] %vm215, %v286
    %323 = vst.msk [vmem:[#allocation2 + $0x359] sm:$0x1] %vm215, %v287
    %v324 = vld [vmem:[#allocation2] sm:$0xff]
    %v325 = vld [vmem:[#allocation2 + $0x8] sm:$0xff]
    %v326 = vld [vmem:[#allocation2 + $0x18] sm:$0xff]
    %v327 = vld [vmem:[#allocation2 + $0x20] sm:$0xff]
    %v328 = vld [vmem:[#allocation2 + $0x30] sm:$0xff]
    %v329 = vld [vmem:[#allocation2 + $0x38] sm:$0xff]
    %v330 = vld [vmem:[#allocation2 + $0x48] sm:$0xff]
    %v331 = vld [vmem:[#allocation2 + $0x50] sm:$0xff]
    %v332 = vld [vmem:[#allocation2 + $0x60] sm:$0xff]
    %v333 = vld [vmem:[#allocation2 + $0x68] sm:$0xff]
    %v334 = vld [vmem:[#allocation2 + $0x78] sm:$0xff]
    %v335 = vld [vmem:[#allocation2 + $0x80] sm:$0xff]
    %v336 = vld [vmem:[#allocation2 + $0x90] sm:$0xff]
    %v337 = vld [vmem:[#allocation2 + $0x98] sm:$0xff]
    %v338 = vld [vmem:[#allocation2 + $0xa8] sm:$0xff]
    %v339 = vld [vmem:[#allocation2 + $0xb0] sm:$0xff]
    %v340 = vld [vmem:[#allocation2 + $0xc0] sm:$0xff]
    %v341 = vld [vmem:[#allocation2 + $0xc8] sm:$0xff]
    %v342 = vld [vmem:[#allocation2 + $0xd8] sm:$0xff]
    %v343 = vld [vmem:[#allocation2 + $0xe0] sm:$0xff]
    %v344 = vld [vmem:[#allocation2 + $0xf0] sm:$0xff]
    %v345 = vld [vmem:[#allocation2 + $0xf8] sm:$0xff]
    %v346 = vld [vmem:[#allocation2 + $0x108] sm:$0xff]
    %v347 = vld [vmem:[#allocation2 + $0x110] sm:$0xff]
    %v348 = vld [vmem:[#allocation2 + $0x120] sm:$0xff]
    %v349 = vld [vmem:[#allocation2 + $0x128] sm:$0xff]
    %v350 = vld [vmem:[#allocation2 + $0x138] sm:$0xff]
    %v351 = vld [vmem:[#allocation2 + $0x140] sm:$0xff]
    %v352 = vld [vmem:[#allocation2 + $0x150] sm:$0xff]
    %v353 = vld [vmem:[#allocation2 + $0x158] sm:$0xff]
    %v354 = vld [vmem:[#allocation2 + $0x168] sm:$0xff]
    %v355 = vld [vmem:[#allocation2 + $0x170] sm:$0xff]
    %v356 = vld [vmem:[#allocation2 + $0x1b0] sm:$0xff]
    %v357 = vld [vmem:[#allocation2 + $0x1b8] sm:$0xff]
    %v358 = vld [vmem:[#allocation2 + $0x1c8] sm:$0xff]
    %v359 = vld [vmem:[#allocation2 + $0x1d0] sm:$0xff]
    %v360 = vld [vmem:[#allocation2 + $0x1e0] sm:$0xff]
    %v361 = vld [vmem:[#allocation2 + $0x1e8] sm:$0xff]
    %v362 = vld [vmem:[#allocation2 + $0x1f8] sm:$0xff]
    %v363 = vld [vmem:[#allocation2 + $0x200] sm:$0xff]
    %v364 = vld [vmem:[#allocation2 + $0x210] sm:$0xff]
    %v365 = vld [vmem:[#allocation2 + $0x218] sm:$0xff]
    %v366 = vld [vmem:[#allocation2 + $0x228] sm:$0xff]
    %v367 = vld [vmem:[#allocation2 + $0x230] sm:$0xff]
    %v368 = vld [vmem:[#allocation2 + $0x240] sm:$0xff]
    %v369 = vld [vmem:[#allocation2 + $0x248] sm:$0xff]
    %v370 = vld [vmem:[#allocation2 + $0x258] sm:$0xff]
    %v371 = vld [vmem:[#allocation2 + $0x260] sm:$0xff]
    %v372 = vld [vmem:[#allocation2 + $0x270] sm:$0xff]
    %v373 = vld [vmem:[#allocation2 + $0x278] sm:$0xff]
    %v374 = vld [vmem:[#allocation2 + $0x288] sm:$0xff]
    %v375 = vld [vmem:[#allocation2 + $0x290] sm:$0xff]
    %v376 = vld [vmem:[#allocation2 + $0x2a0] sm:$0xff]
    %v377 = vld [vmem:[#allocation2 + $0x2a8] sm:$0xff]
    %v378 = vld [vmem:[#allocation2 + $0x2b8] sm:$0xff]
    %v379 = vld [vmem:[#allocation2 + $0x2c0] sm:$0xff]
    %v380 = vld [vmem:[#allocation2 + $0x2d0] sm:$0xff]
    %v381 = vld [vmem:[#allocation2 + $0x2d8] sm:$0xff]
    %v382 = vld [vmem:[#allocation2 + $0x2e8] sm:$0xff]
    %v383 = vld [vmem:[#allocation2 + $0x2f0] sm:$0xff]
    %v384 = vld [vmem:[#allocation2 + $0x300] sm:$0xff]
    %v385 = vld [vmem:[#allocation2 + $0x308] sm:$0xff]
    %v386 = vld [vmem:[#allocation2 + $0x318] sm:$0xff]
    %v387 = vld [vmem:[#allocation2 + $0x320] sm:$0xff]
    %v388 = vld [vmem:[#allocation2 + $0x1] sm:$0xff]
    %v389 = vld [vmem:[#allocation2 + $0x9] sm:$0xff]
    %v390 = vld [vmem:[#allocation2 + $0x19] sm:$0xff]
    %v391 = vld [vmem:[#allocation2 + $0x21] sm:$0xff]
    %v392 = vld [vmem:[#allocation2 + $0x31] sm:$0xff]
    %v393 = vld [vmem:[#allocation2 + $0x39] sm:$0xff]
    %v394 = vld [vmem:[#allocation2 + $0x49] sm:$0xff]
    %v395 = vld [vmem:[#allocation2 + $0x51] sm:$0xff]
    %v396 = vld [vmem:[#allocation2 + $0x61] sm:$0xff]
    %v397 = vld [vmem:[#allocation2 + $0x69] sm:$0xff]
    %v398 = vld [vmem:[#allocation2 + $0x79] sm:$0xff]
    %v399 = vld [vmem:[#allocation2 + $0x81] sm:$0xff]
    %v400 = vld [vmem:[#allocation2 + $0x91] sm:$0xff]
    %v401 = vld [vmem:[#allocation2 + $0x99] sm:$0xff]
    %v402 = vld [vmem:[#allocation2 + $0xa9] sm:$0xff]
    %v403 = vld [vmem:[#allocation2 + $0xb1] sm:$0xff]
    %v404 = vld [vmem:[#allocation2 + $0xc1] sm:$0xff]
    %v405 = vld [vmem:[#allocation2 + $0xc9] sm:$0xff]
    %v406 = vld [vmem:[#allocation2 + $0xd9] sm:$0xff]
    %v407 = vld [vmem:[#allocation2 + $0xe1] sm:$0xff]
    %v408 = vld [vmem:[#allocation2 + $0xf1] sm:$0xff]
    %v409 = vld [vmem:[#allocation2 + $0xf9] sm:$0xff]
    %v410 = vld [vmem:[#allocation2 + $0x109] sm:$0xff]
    %v411 = vld [vmem:[#allocation2 + $0x111] sm:$0xff]
    %v412 = vld [vmem:[#allocation2 + $0x121] sm:$0xff]
    %v413 = vld [vmem:[#allocation2 + $0x129] sm:$0xff]
    %v414 = vld [vmem:[#allocation2 + $0x139] sm:$0xff]
    %v415 = vld [vmem:[#allocation2 + $0x141] sm:$0xff]
    %v416 = vld [vmem:[#allocation2 + $0x151] sm:$0xff]
    %v417 = vld [vmem:[#allocation2 + $0x159] sm:$0xff]
    %v418 = vld [vmem:[#allocation2 + $0x169] sm:$0xff]
    %v419 = vld [vmem:[#allocation2 + $0x171] sm:$0xff]
    %v420 = vld [vmem:[#allocation2 + $0x1b1] sm:$0xff]
    %v421 = vld [vmem:[#allocation2 + $0x1b9] sm:$0xff]
    %v422 = vld [vmem:[#allocation2 + $0x1c9] sm:$0xff]
    %v423 = vld [vmem:[#allocation2 + $0x1d1] sm:$0xff]
    %v424 = vld [vmem:[#allocation2 + $0x1e1] sm:$0xff]
    %v425 = vld [vmem:[#allocation2 + $0x1e9] sm:$0xff]
    %v426 = vld [vmem:[#allocation2 + $0x1f9] sm:$0xff]
    %v427 = vld [vmem:[#allocation2 + $0x201] sm:$0xff]
    %v428 = vld [vmem:[#allocation2 + $0x211] sm:$0xff]
    %v429 = vld [vmem:[#allocation2 + $0x219] sm:$0xff]
    %v430 = vld [vmem:[#allocation2 + $0x229] sm:$0xff]
    %v431 = vld [vmem:[#allocation2 + $0x231] sm:$0xff]
    %v432 = vld [vmem:[#allocation2 + $0x241] sm:$0xff]
    %v433 = vld [vmem:[#allocation2 + $0x249] sm:$0xff]
    %v434 = vld [vmem:[#allocation2 + $0x259] sm:$0xff]
    %v435 = vld [vmem:[#allocation2 + $0x261] sm:$0xff]
    %v436 = vld [vmem:[#allocation2 + $0x271] sm:$0xff]
    %v437 = vld [vmem:[#allocation2 + $0x279] sm:$0xff]
    %v438 = vld [vmem:[#allocation2 + $0x289] sm:$0xff]
    %v439 = vld [vmem:[#allocation2 + $0x291] sm:$0xff]
    %v440 = vld [vmem:[#allocation2 + $0x2a1] sm:$0xff]
    %v441 = vld [vmem:[#allocation2 + $0x2a9] sm:$0xff]
    %v442 = vld [vmem:[#allocation2 + $0x2b9] sm:$0xff]
    %v443 = vld [vmem:[#allocation2 + $0x2c1] sm:$0xff]
    %v444 = vld [vmem:[#allocation2 + $0x2d1] sm:$0xff]
    %v445 = vld [vmem:[#allocation2 + $0x2d9] sm:$0xff]
    %v446 = vld [vmem:[#allocation2 + $0x2e9] sm:$0xff]
    %v447 = vld [vmem:[#allocation2 + $0x2f1] sm:$0xff]
    %v448 = vld [vmem:[#allocation2 + $0x301] sm:$0xff]
    %v449 = vld [vmem:[#allocation2 + $0x309] sm:$0xff]
    %v450 = vld [vmem:[#allocation2 + $0x319] sm:$0xff]
    %v451 = vld [vmem:[#allocation2 + $0x321] sm:$0xff]
    %v452 = vld [vmem:[#allocation2 + $0x2] sm:$0xff]
    %v453 = vld [vmem:[#allocation2 + $0xa] sm:$0xff]
    %v454 = vld [vmem:[#allocation2 + $0x1a] sm:$0xff]
    %v455 = vld [vmem:[#allocation2 + $0x22] sm:$0xff]
    %v456 = vld [vmem:[#allocation2 + $0x32] sm:$0xff]
    %v457 = vld [vmem:[#allocation2 + $0x3a] sm:$0xff]
    %v458 = vld [vmem:[#allocation2 + $0x4a] sm:$0xff]
    %v459 = vld [vmem:[#allocation2 + $0x52] sm:$0xff]
    %v460 = vld [vmem:[#allocation2 + $0x62] sm:$0xff]
    %v461 = vld [vmem:[#allocation2 + $0x6a] sm:$0xff]
    %v462 = vld [vmem:[#allocation2 + $0x7a] sm:$0xff]
    %v463 = vld [vmem:[#allocation2 + $0x82] sm:$0xff]
    %v464 = vld [vmem:[#allocation2 + $0x92] sm:$0xff]
    %v465 = vld [vmem:[#allocation2 + $0x9a] sm:$0xff]
    %v466 = vld [vmem:[#allocation2 + $0xaa] sm:$0xff]
    %v467 = vld [vmem:[#allocation2 + $0xb2] sm:$0xff]
    %v468 = vld [vmem:[#allocation2 + $0xc2] sm:$0xff]
    %v469 = vld [vmem:[#allocation2 + $0xca] sm:$0xff]
    %v470 = vld [vmem:[#allocation2 + $0xda] sm:$0xff]
    %v471 = vld [vmem:[#allocation2 + $0xe2] sm:$0xff]
    %v472 = vld [vmem:[#allocation2 + $0xf2] sm:$0xff]
    %v473 = vld [vmem:[#allocation2 + $0xfa] sm:$0xff]
    %v474 = vld [vmem:[#allocation2 + $0x10a] sm:$0xff]
    %v475 = vld [vmem:[#allocation2 + $0x112] sm:$0xff]
    %v476 = vld [vmem:[#allocation2 + $0x122] sm:$0xff]
    %v477 = vld [vmem:[#allocation2 + $0x12a] sm:$0xff]
    %v478 = vld [vmem:[#allocation2 + $0x13a] sm:$0xff]
    %v479 = vld [vmem:[#allocation2 + $0x142] sm:$0xff]
    %v480 = vld [vmem:[#allocation2 + $0x152] sm:$0xff]
    %v481 = vld [vmem:[#allocation2 + $0x15a] sm:$0xff]
    %v482 = vld [vmem:[#allocation2 + $0x16a] sm:$0xff]
    %v483 = vld [vmem:[#allocation2 + $0x172] sm:$0xff]
    %v484 = vld [vmem:[#allocation2 + $0x1b2] sm:$0xff]
    %v485 = vld [vmem:[#allocation2 + $0x1ba] sm:$0xff]
    %v486 = vld [vmem:[#allocation2 + $0x1ca] sm:$0xff]
    %v487 = vld [vmem:[#allocation2 + $0x1d2] sm:$0xff]
    %v488 = vld [vmem:[#allocation2 + $0x1e2] sm:$0xff]
    %v489 = vld [vmem:[#allocation2 + $0x1ea] sm:$0xff]
    %v490 = vld [vmem:[#allocation2 + $0x1fa] sm:$0xff]
    %v491 = vld [vmem:[#allocation2 + $0x202] sm:$0xff]
    %v492 = vld [vmem:[#allocation2 + $0x212] sm:$0xff]
    %v493 = vld [vmem:[#allocation2 + $0x21a] sm:$0xff]
    %v494 = vld [vmem:[#allocation2 + $0x22a] sm:$0xff]
    %v495 = vld [vmem:[#allocation2 + $0x232] sm:$0xff]
    %v496 = vld [vmem:[#allocation2 + $0x242] sm:$0xff]
    %v497 = vld [vmem:[#allocation2 + $0x24a] sm:$0xff]
    %v498 = vld [vmem:[#allocation2 + $0x25a] sm:$0xff]
    %v499 = vld [vmem:[#allocation2 + $0x262] sm:$0xff]
    %v500 = vld [vmem:[#allocation2 + $0x272] sm:$0xff]
    %v501 = vld [vmem:[#allocation2 + $0x27a] sm:$0xff]
    %v502 = vld [vmem:[#allocation2 + $0x28a] sm:$0xff]
    %v503 = vld [vmem:[#allocation2 + $0x292] sm:$0xff]
    %v504 = vld [vmem:[#allocation2 + $0x2a2] sm:$0xff]
    %v505 = vld [vmem:[#allocation2 + $0x2aa] sm:$0xff]
    %v506 = vld [vmem:[#allocation2 + $0x2ba] sm:$0xff]
    %v507 = vld [vmem:[#allocation2 + $0x2c2] sm:$0xff]
    %v508 = vld [vmem:[#allocation2 + $0x2d2] sm:$0xff]
    %v509 = vld [vmem:[#allocation2 + $0x2da] sm:$0xff]
    %v510 = vld [vmem:[#allocation2 + $0x2ea] sm:$0xff]
    %v511 = vld [vmem:[#allocation2 + $0x2f2] sm:$0xff]
    %v512 = vld [vmem:[#allocation2 + $0x302] sm:$0xff]
    %v513 = vld [vmem:[#allocation2 + $0x30a] sm:$0xff]
    %v514 = vld [vmem:[#allocation2 + $0x31a] sm:$0xff]
    %v515 = vld [vmem:[#allocation2 + $0x322] sm:$0xff]
    %v516 = vld [vmem:[%s95] sm:$0xff]
    %v517 = vld [vmem:[%s95 + $0x8] sm:$0xff]
    %v518 = vld [vmem:[%s95 + $0x18] sm:$0xff]
    %v519 = vld [vmem:[%s95 + $0x20] sm:$0xff]
    %v520 = vld [vmem:[%s95 + $0x30] sm:$0xff]
    %v521 = vld [vmem:[%s95 + $0x38] sm:$0xff]
    %v522 = vld [vmem:[%s95 + $0x48] sm:$0xff]
    %v523 = vld [vmem:[%s95 + $0x50] sm:$0xff]
    %v524 = vld [vmem:[%s95 + $0x60] sm:$0xff]
    %v525 = vld [vmem:[%s95 + $0x68] sm:$0xff]
    %v526 = vld [vmem:[%s95 + $0x78] sm:$0xff]
    %v527 = vld [vmem:[%s95 + $0x80] sm:$0xff]
    %v528 = vld [vmem:[%s95 + $0x90] sm:$0xff]
    %v529 = vld [vmem:[%s95 + $0x98] sm:$0xff]
    %v530 = vld [vmem:[%s95 + $0xa8] sm:$0xff]
    %v531 = vld [vmem:[%s95 + $0xb0] sm:$0xff]
    %v532 = vld [vmem:[%s95 + $0xc0] sm:$0xff]
    %v533 = vld [vmem:[%s95 + $0xc8] sm:$0xff]
    %v534 = vld [vmem:[%s95 + $0xd8] sm:$0xff]
    %v535 = vld [vmem:[%s95 + $0xe0] sm:$0xff]
    %v536 = vld [vmem:[%s95 + $0xf0] sm:$0xff]
    %v537 = vld [vmem:[%s95 + $0xf8] sm:$0xff]
    %v538 = vld [vmem:[%s95 + $0x108] sm:$0xff]
    %v539 = vld [vmem:[%s95 + $0x110] sm:$0xff]
    %v540 = vld [vmem:[%s95 + $0x120] sm:$0xff]
    %v541 = vld [vmem:[%s95 + $0x128] sm:$0xff]
    %v542 = vld [vmem:[%s95 + $0x138] sm:$0xff]
    %v543 = vld [vmem:[%s95 + $0x140] sm:$0xff]
    %v544 = vld [vmem:[%s95 + $0x150] sm:$0xff]
    %v545 = vld [vmem:[%s95 + $0x158] sm:$0xff]
    %v546 = vld [vmem:[%s95 + $0x168] sm:$0xff]
    %v547 = vld [vmem:[%s95 + $0x170] sm:$0xff]
    %v548 = vld [vmem:[%s95 + $0x1b0] sm:$0xff]
    %v549 = vld [vmem:[%s95 + $0x1b8] sm:$0xff]
    %v550 = vld [vmem:[%s95 + $0x1c8] sm:$0xff]
    %v551 = vld [vmem:[%s95 + $0x1d0] sm:$0xff]
    %v552 = vld [vmem:[%s95 + $0x1e0] sm:$0xff]
    %v553 = vld [vmem:[%s95 + $0x1e8] sm:$0xff]
    %v554 = vld [vmem:[%s95 + $0x1f8] sm:$0xff]
    %v555 = vld [vmem:[%s95 + $0x200] sm:$0xff]
    %v556 = vld [vmem:[%s95 + $0x210] sm:$0xff]
    %v557 = vld [vmem:[%s95 + $0x218] sm:$0xff]
    %v558 = vld [vmem:[%s95 + $0x228] sm:$0xff]
    %v559 = vld [vmem:[%s95 + $0x230] sm:$0xff]
    %v560 = vld [vmem:[%s95 + $0x240] sm:$0xff]
    %v561 = vld [vmem:[%s95 + $0x248] sm:$0xff]
    %v562 = vld [vmem:[%s95 + $0x258] sm:$0xff]
    %v563 = vld [vmem:[%s95 + $0x260] sm:$0xff]
    %v564 = vld [vmem:[%s95 + $0x270] sm:$0xff]
    %v565 = vld [vmem:[%s95 + $0x278] sm:$0xff]
    %v566 = vld [vmem:[%s95 + $0x288] sm:$0xff]
    %v567 = vld [vmem:[%s95 + $0x290] sm:$0xff]
    %v568 = vld [vmem:[%s95 + $0x2a0] sm:$0xff]
    %v569 = vld [vmem:[%s95 + $0x2a8] sm:$0xff]
    %v570 = vld [vmem:[%s95 + $0x2b8] sm:$0xff]
    %v571 = vld [vmem:[%s95 + $0x2c0] sm:$0xff]
    %v572 = vld [vmem:[%s95 + $0x2d0] sm:$0xff]
    %v573 = vld [vmem:[%s95 + $0x2d8] sm:$0xff]
    %v574 = vld [vmem:[%s95 + $0x2e8] sm:$0xff]
    %v575 = vld [vmem:[%s95 + $0x2f0] sm:$0xff]
    %v576 = vld [vmem:[%s95 + $0x300] sm:$0xff]
    %v577 = vld [vmem:[%s95 + $0x308] sm:$0xff]
    %v578 = vld [vmem:[%s95 + $0x318] sm:$0xff]
    %v579 = vld [vmem:[%s95 + $0x320] sm:$0xff]
    %v580 = vld [vmem:[%s95 + $0x1] sm:$0xff]
    %v581 = vld [vmem:[%s95 + $0x9] sm:$0xff]
    %v582 = vld [vmem:[%s95 + $0x19] sm:$0xff]
    %v583 = vld [vmem:[%s95 + $0x21] sm:$0xff]
    %v584 = vld [vmem:[%s95 + $0x31] sm:$0xff]
    %v585 = vld [vmem:[%s95 + $0x39] sm:$0xff]
    %v586 = vld [vmem:[%s95 + $0x49] sm:$0xff]
    %v587 = vld [vmem:[%s95 + $0x51] sm:$0xff]
    %v588 = vld [vmem:[%s95 + $0x61] sm:$0xff]
    %v589 = vld [vmem:[%s95 + $0x69] sm:$0xff]
    %v590 = vld [vmem:[%s95 + $0x79] sm:$0xff]
    %v591 = vld [vmem:[%s95 + $0x81] sm:$0xff]
    %v592 = vld [vmem:[%s95 + $0x91] sm:$0xff]
    %v593 = vld [vmem:[%s95 + $0x99] sm:$0xff]
    %v594 = vld [vmem:[%s95 + $0xa9] sm:$0xff]
    %v595 = vld [vmem:[%s95 + $0xb1] sm:$0xff]
    %v596 = vld [vmem:[%s95 + $0xc1] sm:$0xff]
    %v597 = vld [vmem:[%s95 + $0xc9] sm:$0xff]
    %v598 = vld [vmem:[%s95 + $0xd9] sm:$0xff]
    %v599 = vld [vmem:[%s95 + $0xe1] sm:$0xff]
    %v600 = vld [vmem:[%s95 + $0xf1] sm:$0xff]
    %v601 = vld [vmem:[%s95 + $0xf9] sm:$0xff]
    %v602 = vld [vmem:[%s95 + $0x109] sm:$0xff]
    %v603 = vld [vmem:[%s95 + $0x111] sm:$0xff]
    %v604 = vld [vmem:[%s95 + $0x121] sm:$0xff]
    %v605 = vld [vmem:[%s95 + $0x129] sm:$0xff]
    %v606 = vld [vmem:[%s95 + $0x139] sm:$0xff]
    %v607 = vld [vmem:[%s95 + $0x141] sm:$0xff]
    %v608 = vld [vmem:[%s95 + $0x151] sm:$0xff]
    %v609 = vld [vmem:[%s95 + $0x159] sm:$0xff]
    %v610 = vld [vmem:[%s95 + $0x169] sm:$0xff]
    %v611 = vld [vmem:[%s95 + $0x171] sm:$0xff]
    %v612 = vld [vmem:[%s95 + $0x1b1] sm:$0xff]
    %v613 = vld [vmem:[%s95 + $0x1b9] sm:$0xff]
    %v614 = vld [vmem:[%s95 + $0x1c9] sm:$0xff]
    %v615 = vld [vmem:[%s95 + $0x1d1] sm:$0xff]
    %v616 = vld [vmem:[%s95 + $0x1e1] sm:$0xff]
    %v617 = vld [vmem:[%s95 + $0x1e9] sm:$0xff]
    %v618 = vld [vmem:[%s95 + $0x1f9] sm:$0xff]
    %v619 = vld [vmem:[%s95 + $0x201] sm:$0xff]
    %v620 = vld [vmem:[%s95 + $0x211] sm:$0xff]
    %v621 = vld [vmem:[%s95 + $0x219] sm:$0xff]
    %v622 = vld [vmem:[%s95 + $0x229] sm:$0xff]
    %v623 = vld [vmem:[%s95 + $0x231] sm:$0xff]
    %v624 = vld [vmem:[%s95 + $0x241] sm:$0xff]
    %v625 = vld [vmem:[%s95 + $0x249] sm:$0xff]
    %v626 = vld [vmem:[%s95 + $0x259] sm:$0xff]
    %v627 = vld [vmem:[%s95 + $0x261] sm:$0xff]
    %v628 = vld [vmem:[%s95 + $0x271] sm:$0xff]
    %v629 = vld [vmem:[%s95 + $0x279] sm:$0xff]
    %v630 = vld [vmem:[%s95 + $0x289] sm:$0xff]
    %v631 = vld [vmem:[%s95 + $0x291] sm:$0xff]
    %v632 = vld [vmem:[%s95 + $0x2a1] sm:$0xff]
    %v633 = vld [vmem:[%s95 + $0x2a9] sm:$0xff]
    %v634 = vld [vmem:[%s95 + $0x2b9] sm:$0xff]
    %v635 = vld [vmem:[%s95 + $0x2c1] sm:$0xff]
    %v636 = vld [vmem:[%s95 + $0x2d1] sm:$0xff]
    %v637 = vld [vmem:[%s95 + $0x2d9] sm:$0xff]
    %v638 = vld [vmem:[%s95 + $0x2e9] sm:$0xff]
    %v639 = vld [vmem:[%s95 + $0x2f1] sm:$0xff]
    %v640 = vld [vmem:[%s95 + $0x301] sm:$0xff]
    %v641 = vld [vmem:[%s95 + $0x309] sm:$0xff]
    %v642 = vld [vmem:[%s95 + $0x319] sm:$0xff]
    %v643 = vld [vmem:[%s95 + $0x321] sm:$0xff]
    %v644 = vld [vmem:[%s95 + $0x2] sm:$0xff]
    %v645 = vld [vmem:[%s95 + $0xa] sm:$0xff]
    %v646 = vld [vmem:[%s95 + $0x1a] sm:$0xff]
    %v647 = vld [vmem:[%s95 + $0x22] sm:$0xff]
    %v648 = vld [vmem:[%s95 + $0x32] sm:$0xff]
    %v649 = vld [vmem:[%s95 + $0x3a] sm:$0xff]
    %v650 = vld [vmem:[%s95 + $0x4a] sm:$0xff]
    %v651 = vld [vmem:[%s95 + $0x52] sm:$0xff]
    %v652 = vld [vmem:[%s95 + $0x62] sm:$0xff]
    %v653 = vld [vmem:[%s95 + $0x6a] sm:$0xff]
    %v654 = vld [vmem:[%s95 + $0x7a] sm:$0xff]
    %v655 = vld [vmem:[%s95 + $0x82] sm:$0xff]
    %v656 = vld [vmem:[%s95 + $0x92] sm:$0xff]
    %v657 = vld [vmem:[%s95 + $0x9a] sm:$0xff]
    %v658 = vld [vmem:[%s95 + $0xaa] sm:$0xff]
    %v659 = vld [vmem:[%s95 + $0xb2] sm:$0xff]
    %v660 = vld [vmem:[%s95 + $0xc2] sm:$0xff]
    %v661 = vld [vmem:[%s95 + $0xca] sm:$0xff]
    %v662 = vld [vmem:[%s95 + $0xda] sm:$0xff]
    %v663 = vld [vmem:[%s95 + $0xe2] sm:$0xff]
    %v664 = vld [vmem:[%s95 + $0xf2] sm:$0xff]
    %v665 = vld [vmem:[%s95 + $0xfa] sm:$0xff]
    %v666 = vld [vmem:[%s95 + $0x10a] sm:$0xff]
    %v667 = vld [vmem:[%s95 + $0x112] sm:$0xff]
    %v668 = vld [vmem:[%s95 + $0x122] sm:$0xff]
    %v669 = vld [vmem:[%s95 + $0x12a] sm:$0xff]
    %v670 = vld [vmem:[%s95 + $0x13a] sm:$0xff]
    %v671 = vld [vmem:[%s95 + $0x142] sm:$0xff]
    %v672 = vld [vmem:[%s95 + $0x152] sm:$0xff]
    %v673 = vld [vmem:[%s95 + $0x15a] sm:$0xff]
    %v674 = vld [vmem:[%s95 + $0x16a] sm:$0xff]
    %v675 = vld [vmem:[%s95 + $0x172] sm:$0xff]
    %v676 = vld [vmem:[%s95 + $0x1b2] sm:$0xff]
    %v677 = vld [vmem:[%s95 + $0x1ba] sm:$0xff]
    %v678 = vld [vmem:[%s95 + $0x1ca] sm:$0xff]
    %v679 = vld [vmem:[%s95 + $0x1d2] sm:$0xff]
    %v680 = vld [vmem:[%s95 + $0x1e2] sm:$0xff]
    %v681 = vld [vmem:[%s95 + $0x1ea] sm:$0xff]
    %v682 = vld [vmem:[%s95 + $0x1fa] sm:$0xff]
    %v683 = vld [vmem:[%s95 + $0x202] sm:$0xff]
    %v684 = vld [vmem:[%s95 + $0x212] sm:$0xff]
    %v685 = vld [vmem:[%s95 + $0x21a] sm:$0xff]
    %v686 = vld [vmem:[%s95 + $0x22a] sm:$0xff]
    %v687 = vld [vmem:[%s95 + $0x232] sm:$0xff]
    %v688 = vld [vmem:[%s95 + $0x242] sm:$0xff]
    %v689 = vld [vmem:[%s95 + $0x24a] sm:$0xff]
    %v690 = vld [vmem:[%s95 + $0x25a] sm:$0xff]
    %v691 = vld [vmem:[%s95 + $0x262] sm:$0xff]
    %v692 = vld [vmem:[%s95 + $0x272] sm:$0xff]
    %v693 = vld [vmem:[%s95 + $0x27a] sm:$0xff]
    %v694 = vld [vmem:[%s95 + $0x28a] sm:$0xff]
    %v695 = vld [vmem:[%s95 + $0x292] sm:$0xff]
    %v696 = vld [vmem:[%s95 + $0x2a2] sm:$0xff]
    %v697 = vld [vmem:[%s95 + $0x2aa] sm:$0xff]
    %v698 = vld [vmem:[%s95 + $0x2ba] sm:$0xff]
    %v699 = vld [vmem:[%s95 + $0x2c2] sm:$0xff]
    %v700 = vld [vmem:[%s95 + $0x2d2] sm:$0xff]
    %v701 = vld [vmem:[%s95 + $0x2da] sm:$0xff]
    %v702 = vld [vmem:[%s95 + $0x2ea] sm:$0xff]
    %v703 = vld [vmem:[%s95 + $0x2f2] sm:$0xff]
    %v704 = vld [vmem:[%s95 + $0x302] sm:$0xff]
    %v705 = vld [vmem:[%s95 + $0x30a] sm:$0xff]
    %v706 = vld [vmem:[%s95 + $0x31a] sm:$0xff]
    %v707 = vld [vmem:[%s95 + $0x322] sm:$0xff]
    %s708 = scalar_lea.vmem [#allocation2], 48
    %v709 = vld [vmem:[%s708] sm:$0xff]
    %v710 = vld [vmem:[%s708 + $0x8] sm:$0xff]
    %v711 = vld [vmem:[%s708 + $0x18] sm:$0xff]
    %v712 = vld [vmem:[%s708 + $0x20] sm:$0xff]
    %v713 = vld [vmem:[%s708 + $0x30] sm:$0xff]
    %v714 = vld [vmem:[%s708 + $0x38] sm:$0xff]
    %v715 = vld [vmem:[%s708 + $0x48] sm:$0xff]
    %v716 = vld [vmem:[%s708 + $0x50] sm:$0xff]
    %v717 = vld [vmem:[%s708 + $0x60] sm:$0xff]
    %v718 = vld [vmem:[%s708 + $0x68] sm:$0xff]
    %v719 = vld [vmem:[%s708 + $0x78] sm:$0xff]
    %v720 = vld [vmem:[%s708 + $0x80] sm:$0xff]
    %v721 = vld [vmem:[%s708 + $0x90] sm:$0xff]
    %v722 = vld [vmem:[%s708 + $0x98] sm:$0xff]
    %v723 = vld [vmem:[%s708 + $0xa8] sm:$0xff]
    %v724 = vld [vmem:[%s708 + $0xb0] sm:$0xff]
    %v725 = vld [vmem:[%s708 + $0xc0] sm:$0xff]
    %v726 = vld [vmem:[%s708 + $0xc8] sm:$0xff]
    %v727 = vld [vmem:[%s708 + $0xd8] sm:$0xff]
    %v728 = vld [vmem:[%s708 + $0xe0] sm:$0xff]
    %v729 = vld [vmem:[%s708 + $0xf0] sm:$0xff]
    %v730 = vld [vmem:[%s708 + $0xf8] sm:$0xff]
    %v731 = vld [vmem:[%s708 + $0x108] sm:$0xff]
    %v732 = vld [vmem:[%s708 + $0x110] sm:$0xff]
    %v733 = vld [vmem:[%s708 + $0x120] sm:$0xff]
    %v734 = vld [vmem:[%s708 + $0x128] sm:$0xff]
    %v735 = vld [vmem:[%s708 + $0x138] sm:$0xff]
    %v736 = vld [vmem:[%s708 + $0x140] sm:$0xff]
    %v737 = vld [vmem:[%s708 + $0x150] sm:$0xff]
    %v738 = vld [vmem:[%s708 + $0x158] sm:$0xff]
    %v739 = vld [vmem:[%s708 + $0x168] sm:$0xff]
    %v740 = vld [vmem:[%s708 + $0x170] sm:$0xff]
    %v741 = vld [vmem:[%s708 + $0x1b0] sm:$0xff]
    %v742 = vld [vmem:[%s708 + $0x1b8] sm:$0xff]
    %v743 = vld [vmem:[%s708 + $0x1c8] sm:$0xff]
    %v744 = vld [vmem:[%s708 + $0x1d0] sm:$0xff]
    %v745 = vld [vmem:[%s708 + $0x1e0] sm:$0xff]
    %v746 = vld [vmem:[%s708 + $0x1e8] sm:$0xff]
    %v747 = vld [vmem:[%s708 + $0x1f8] sm:$0xff]
    %v748 = vld [vmem:[%s708 + $0x200] sm:$0xff]
    %v749 = vld [vmem:[%s708 + $0x210] sm:$0xff]
    %v750 = vld [vmem:[%s708 + $0x218] sm:$0xff]
    %v751 = vld [vmem:[%s708 + $0x228] sm:$0xff]
    %v752 = vld [vmem:[%s708 + $0x230] sm:$0xff]
    %v753 = vld [vmem:[%s708 + $0x240] sm:$0xff]
    %v754 = vld [vmem:[%s708 + $0x248] sm:$0xff]
    %v755 = vld [vmem:[%s708 + $0x258] sm:$0xff]
    %v756 = vld [vmem:[%s708 + $0x260] sm:$0xff]
    %v757 = vld [vmem:[%s708 + $0x270] sm:$0xff]
    %v758 = vld [vmem:[%s708 + $0x278] sm:$0xff]
    %v759 = vld [vmem:[%s708 + $0x288] sm:$0xff]
    %v760 = vld [vmem:[%s708 + $0x290] sm:$0xff]
    %v761 = vld [vmem:[%s708 + $0x2a0] sm:$0xff]
    %v762 = vld [vmem:[%s708 + $0x2a8] sm:$0xff]
    %v763 = vld [vmem:[%s708 + $0x2b8] sm:$0xff]
    %v764 = vld [vmem:[%s708 + $0x2c0] sm:$0xff]
    %v765 = vld [vmem:[%s708 + $0x2d0] sm:$0xff]
    %v766 = vld [vmem:[%s708 + $0x2d8] sm:$0xff]
    %v767 = vld [vmem:[%s708 + $0x2e8] sm:$0xff]
    %v768 = vld [vmem:[%s708 + $0x2f0] sm:$0xff]
    %v769 = vld [vmem:[%s708 + $0x300] sm:$0xff]
    %v770 = vld [vmem:[%s708 + $0x308] sm:$0xff]
    %v771 = vld [vmem:[%s708 + $0x318] sm:$0xff]
    %v772 = vld [vmem:[%s708 + $0x320] sm:$0xff]
    %v773 = vld [vmem:[%s708 + $0x1] sm:$0xff]
    %v774 = vld [vmem:[%s708 + $0x9] sm:$0xff]
    %v775 = vld [vmem:[%s708 + $0x19] sm:$0xff]
    %v776 = vld [vmem:[%s708 + $0x21] sm:$0xff]
    %v777 = vld [vmem:[%s708 + $0x31] sm:$0xff]
    %v778 = vld [vmem:[%s708 + $0x39] sm:$0xff]
    %v779 = vld [vmem:[%s708 + $0x49] sm:$0xff]
    %v780 = vld [vmem:[%s708 + $0x51] sm:$0xff]
    %v781 = vld [vmem:[%s708 + $0x61] sm:$0xff]
    %v782 = vld [vmem:[%s708 + $0x69] sm:$0xff]
    %v783 = vld [vmem:[%s708 + $0x79] sm:$0xff]
    %v784 = vld [vmem:[%s708 + $0x81] sm:$0xff]
    %v785 = vld [vmem:[%s708 + $0x91] sm:$0xff]
    %v786 = vld [vmem:[%s708 + $0x99] sm:$0xff]
    %v787 = vld [vmem:[%s708 + $0xa9] sm:$0xff]
    %v788 = vld [vmem:[%s708 + $0xb1] sm:$0xff]
    %v789 = vld [vmem:[%s708 + $0xc1] sm:$0xff]
    %v790 = vld [vmem:[%s708 + $0xc9] sm:$0xff]
    %v791 = vld [vmem:[%s708 + $0xd9] sm:$0xff]
    %v792 = vld [vmem:[%s708 + $0xe1] sm:$0xff]
    %v793 = vld [vmem:[%s708 + $0xf1] sm:$0xff]
    %v794 = vld [vmem:[%s708 + $0xf9] sm:$0xff]
    %v795 = vld [vmem:[%s708 + $0x109] sm:$0xff]
    %v796 = vld [vmem:[%s708 + $0x111] sm:$0xff]
    %v797 = vld [vmem:[%s708 + $0x121] sm:$0xff]
    %v798 = vld [vmem:[%s708 + $0x129] sm:$0xff]
    %v799 = vld [vmem:[%s708 + $0x139] sm:$0xff]
    %v800 = vld [vmem:[%s708 + $0x141] sm:$0xff]
    %v801 = vld [vmem:[%s708 + $0x151] sm:$0xff]
    %v802 = vld [vmem:[%s708 + $0x159] sm:$0xff]
    %v803 = vld [vmem:[%s708 + $0x169] sm:$0xff]
    %v804 = vld [vmem:[%s708 + $0x171] sm:$0xff]
    %v805 = vld [vmem:[%s708 + $0x1b1] sm:$0xff]
    %v806 = vld [vmem:[%s708 + $0x1b9] sm:$0xff]
    %v807 = vld [vmem:[%s708 + $0x1c9] sm:$0xff]
    %v808 = vld [vmem:[%s708 + $0x1d1] sm:$0xff]
    %v809 = vld [vmem:[%s708 + $0x1e1] sm:$0xff]
    %v810 = vld [vmem:[%s708 + $0x1e9] sm:$0xff]
    %v811 = vld [vmem:[%s708 + $0x1f9] sm:$0xff]
    %v812 = vld [vmem:[%s708 + $0x201] sm:$0xff]
    %v813 = vld [vmem:[%s708 + $0x211] sm:$0xff]
    %v814 = vld [vmem:[%s708 + $0x219] sm:$0xff]
    %v815 = vld [vmem:[%s708 + $0x229] sm:$0xff]
    %v816 = vld [vmem:[%s708 + $0x231] sm:$0xff]
    %v817 = vld [vmem:[%s708 + $0x241] sm:$0xff]
    %v818 = vld [vmem:[%s708 + $0x249] sm:$0xff]
    %v819 = vld [vmem:[%s708 + $0x259] sm:$0xff]
    %v820 = vld [vmem:[%s708 + $0x261] sm:$0xff]
    %v821 = vld [vmem:[%s708 + $0x271] sm:$0xff]
    %v822 = vld [vmem:[%s708 + $0x279] sm:$0xff]
    %v823 = vld [vmem:[%s708 + $0x289] sm:$0xff]
    %v824 = vld [vmem:[%s708 + $0x291] sm:$0xff]
    %v825 = vld [vmem:[%s708 + $0x2a1] sm:$0xff]
    %v826 = vld [vmem:[%s708 + $0x2a9] sm:$0xff]
    %v827 = vld [vmem:[%s708 + $0x2b9] sm:$0xff]
    %v828 = vld [vmem:[%s708 + $0x2c1] sm:$0xff]
    %v829 = vld [vmem:[%s708 + $0x2d1] sm:$0xff]
    %v830 = vld [vmem:[%s708 + $0x2d9] sm:$0xff]
    %v831 = vld [vmem:[%s708 + $0x2e9] sm:$0xff]
    %v832 = vld [vmem:[%s708 + $0x2f1] sm:$0xff]
    %v833 = vld [vmem:[%s708 + $0x301] sm:$0xff]
    %v834 = vld [vmem:[%s708 + $0x309] sm:$0xff]
    %v835 = vld [vmem:[%s708 + $0x319] sm:$0xff]
    %v836 = vld [vmem:[%s708 + $0x321] sm:$0xff]
    %v837 = vld [vmem:[%s708 + $0x2] sm:$0xff]
    %v838 = vld [vmem:[%s708 + $0xa] sm:$0xff]
    %v839 = vld [vmem:[%s708 + $0x1a] sm:$0xff]
    %v840 = vld [vmem:[%s708 + $0x22] sm:$0xff]
    %v841 = vld [vmem:[%s708 + $0x32] sm:$0xff]
    %v842 = vld [vmem:[%s708 + $0x3a] sm:$0xff]
    %v843 = vld [vmem:[%s708 + $0x4a] sm:$0xff]
    %v844 = vld [vmem:[%s708 + $0x52] sm:$0xff]
    %v845 = vld [vmem:[%s708 + $0x62] sm:$0xff]
    %v846 = vld [vmem:[%s708 + $0x6a] sm:$0xff]
    %v847 = vld [vmem:[%s708 + $0x7a] sm:$0xff]
    %v848 = vld [vmem:[%s708 + $0x82] sm:$0xff]
    %v849 = vld [vmem:[%s708 + $0x92] sm:$0xff]
    %v850 = vld [vmem:[%s708 + $0x9a] sm:$0xff]
    %v851 = vld [vmem:[%s708 + $0xaa] sm:$0xff]
    %v852 = vld [vmem:[%s708 + $0xb2] sm:$0xff]
    %v853 = vld [vmem:[%s708 + $0xc2] sm:$0xff]
    %v854 = vld [vmem:[%s708 + $0xca] sm:$0xff]
    %v855 = vld [vmem:[%s708 + $0xda] sm:$0xff]
    %v856 = vld [vmem:[%s708 + $0xe2] sm:$0xff]
    %v857 = vld [vmem:[%s708 + $0xf2] sm:$0xff]
    %v858 = vld [vmem:[%s708 + $0xfa] sm:$0xff]
    %v859 = vld [vmem:[%s708 + $0x10a] sm:$0xff]
    %v860 = vld [vmem:[%s708 + $0x112] sm:$0xff]
    %v861 = vld [vmem:[%s708 + $0x122] sm:$0xff]
    %v862 = vld [vmem:[%s708 + $0x12a] sm:$0xff]
    %v863 = vld [vmem:[%s708 + $0x13a] sm:$0xff]
    %v864 = vld [vmem:[%s708 + $0x142] sm:$0xff]
    %v865 = vld [vmem:[%s708 + $0x152] sm:$0xff]
    %v866 = vld [vmem:[%s708 + $0x15a] sm:$0xff]
    %v867 = vld [vmem:[%s708 + $0x16a] sm:$0xff]
    %v868 = vld [vmem:[%s708 + $0x172] sm:$0xff]
    %v869 = vld [vmem:[%s708 + $0x1b2] sm:$0xff]
    %v870 = vld [vmem:[%s708 + $0x1ba] sm:$0xff]
    %v871 = vld [vmem:[%s708 + $0x1ca] sm:$0xff]
    %v872 = vld [vmem:[%s708 + $0x1d2] sm:$0xff]
    %v873 = vld [vmem:[%s708 + $0x1e2] sm:$0xff]
    %v874 = vld [vmem:[%s708 + $0x1ea] sm:$0xff]
    %v875 = vld [vmem:[%s708 + $0x1fa] sm:$0xff]
    %v876 = vld [vmem:[%s708 + $0x202] sm:$0xff]
    %v877 = vld [vmem:[%s708 + $0x212] sm:$0xff]
    %v878 = vld [vmem:[%s708 + $0x21a] sm:$0xff]
    %v879 = vld [vmem:[%s708 + $0x22a] sm:$0xff]
    %v880 = vld [vmem:[%s708 + $0x232] sm:$0xff]
    %v881 = vld [vmem:[%s708 + $0x242] sm:$0xff]
    %v882 = vld [vmem:[%s708 + $0x24a] sm:$0xff]
    %v883 = vld [vmem:[%s708 + $0x25a] sm:$0xff]
    %v884 = vld [vmem:[%s708 + $0x262] sm:$0xff]
    %v885 = vld [vmem:[%s708 + $0x272] sm:$0xff]
    %v886 = vld [vmem:[%s708 + $0x27a] sm:$0xff]
    %v887 = vld [vmem:[%s708 + $0x28a] sm:$0xff]
    %v888 = vld [vmem:[%s708 + $0x292] sm:$0xff]
    %v889 = vld [vmem:[%s708 + $0x2a2] sm:$0xff]
    %v890 = vld [vmem:[%s708 + $0x2aa] sm:$0xff]
    %v891 = vld [vmem:[%s708 + $0x2ba] sm:$0xff]
    %v892 = vld [vmem:[%s708 + $0x2c2] sm:$0xff]
    %v893 = vld [vmem:[%s708 + $0x2d2] sm:$0xff]
    %v894 = vld [vmem:[%s708 + $0x2da] sm:$0xff]
    %v895 = vld [vmem:[%s708 + $0x2ea] sm:$0xff]
    %v896 = vld [vmem:[%s708 + $0x2f2] sm:$0xff]
    %v897 = vld [vmem:[%s708 + $0x302] sm:$0xff]
    %v898 = vld [vmem:[%s708 + $0x30a] sm:$0xff]
    %v899 = vld [vmem:[%s708 + $0x31a] sm:$0xff]
    %v900 = vld [vmem:[%s708 + $0x322] sm:$0xff]
    %965 = vrot.lane.b32.xlu0 %v388, 64
    %v966 = vpop.permute.xlu0 %965
    %967 = vrot.lane.b32.xlu0 %v389, 64
    %v968 = vpop.permute.xlu0 %967
    %969 = vrot.lane.b32.xlu0 %v390, 64
    %v970 = vpop.permute.xlu0 %969
    %971 = vrot.lane.b32.xlu0 %v391, 64
    %v972 = vpop.permute.xlu0 %971
    %973 = vrot.lane.b32.xlu0 %v392, 64
    %v974 = vpop.permute.xlu0 %973
    %975 = vrot.lane.b32.xlu0 %v393, 64
    %v976 = vpop.permute.xlu0 %975
    %977 = vrot.lane.b32.xlu0 %v394, 64
    %v978 = vpop.permute.xlu0 %977
    %979 = vrot.lane.b32.xlu0 %v395, 64
    %v980 = vpop.permute.xlu0 %979
    %981 = vrot.lane.b32.xlu0 %v396, 64
    %v982 = vpop.permute.xlu0 %981
    %983 = vrot.lane.b32.xlu0 %v397, 64
    %v984 = vpop.permute.xlu0 %983
    %985 = vrot.lane.b32.xlu0 %v398, 64
    %v986 = vpop.permute.xlu0 %985
    %987 = vrot.lane.b32.xlu0 %v399, 64
    %v988 = vpop.permute.xlu0 %987
    %989 = vrot.lane.b32.xlu0 %v400, 64
    %v990 = vpop.permute.xlu0 %989
    %991 = vrot.lane.b32.xlu0 %v401, 64
    %v992 = vpop.permute.xlu0 %991
    %993 = vrot.lane.b32.xlu0 %v402, 64
    %v994 = vpop.permute.xlu0 %993
    %995 = vrot.lane.b32.xlu0 %v403, 64
    %v996 = vpop.permute.xlu0 %995
    %997 = vrot.lane.b32.xlu0 %v404, 64
    %v998 = vpop.permute.xlu0 %997
    %999 = vrot.lane.b32.xlu0 %v405, 64
    %v1000 = vpop.permute.xlu0 %999
    %1001 = vrot.lane.b32.xlu0 %v406, 64
    %v1002 = vpop.permute.xlu0 %1001
    %1003 = vrot.lane.b32.xlu0 %v407, 64
    %v1004 = vpop.permute.xlu0 %1003
    %1005 = vrot.lane.b32.xlu0 %v408, 64
    %v1006 = vpop.permute.xlu0 %1005
    %1007 = vrot.lane.b32.xlu0 %v409, 64
    %v1008 = vpop.permute.xlu0 %1007
    %1009 = vrot.lane.b32.xlu0 %v410, 64
    %v1010 = vpop.permute.xlu0 %1009
    %1011 = vrot.lane.b32.xlu0 %v411, 64
    %v1012 = vpop.permute.xlu0 %1011
    %1013 = vrot.lane.b32.xlu0 %v412, 64
    %v1014 = vpop.permute.xlu0 %1013
    %1015 = vrot.lane.b32.xlu0 %v413, 64
    %v1016 = vpop.permute.xlu0 %1015
    %1017 = vrot.lane.b32.xlu0 %v414, 64
    %v1018 = vpop.permute.xlu0 %1017
    %1019 = vrot.lane.b32.xlu0 %v415, 64
    %v1020 = vpop.permute.xlu0 %1019
    %1021 = vrot.lane.b32.xlu0 %v416, 64
    %v1022 = vpop.permute.xlu0 %1021
    %1023 = vrot.lane.b32.xlu0 %v417, 64
    %v1024 = vpop.permute.xlu0 %1023
    %1025 = vrot.lane.b32.xlu0 %v418, 64
    %v1026 = vpop.permute.xlu0 %1025
    %1027 = vrot.lane.b32.xlu0 %v419, 64
    %v1028 = vpop.permute.xlu0 %1027
    %1029 = vrot.lane.b32.xlu0 %v420, 64
    %v1030 = vpop.permute.xlu0 %1029
    %1031 = vrot.lane.b32.xlu0 %v421, 64
    %v1032 = vpop.permute.xlu0 %1031
    %1033 = vrot.lane.b32.xlu0 %v422, 64
    %v1034 = vpop.permute.xlu0 %1033
    %1035 = vrot.lane.b32.xlu0 %v423, 64
    %v1036 = vpop.permute.xlu0 %1035
    %1037 = vrot.lane.b32.xlu0 %v424, 64
    %v1038 = vpop.permute.xlu0 %1037
    %1039 = vrot.lane.b32.xlu0 %v425, 64
    %v1040 = vpop.permute.xlu0 %1039
    %1041 = vrot.lane.b32.xlu0 %v426, 64
    %v1042 = vpop.permute.xlu0 %1041
    %1043 = vrot.lane.b32.xlu0 %v427, 64
    %v1044 = vpop.permute.xlu0 %1043
    %1045 = vrot.lane.b32.xlu0 %v428, 64
    %v1046 = vpop.permute.xlu0 %1045
    %1047 = vrot.lane.b32.xlu0 %v429, 64
    %v1048 = vpop.permute.xlu0 %1047
    %1049 = vrot.lane.b32.xlu0 %v430, 64
    %v1050 = vpop.permute.xlu0 %1049
    %1051 = vrot.lane.b32.xlu0 %v431, 64
    %v1052 = vpop.permute.xlu0 %1051
    %1053 = vrot.lane.b32.xlu0 %v432, 64
    %v1054 = vpop.permute.xlu0 %1053
    %1055 = vrot.lane.b32.xlu0 %v433, 64
    %v1056 = vpop.permute.xlu0 %1055
    %1057 = vrot.lane.b32.xlu0 %v434, 64
    %v1058 = vpop.permute.xlu0 %1057
    %1059 = vrot.lane.b32.xlu0 %v435, 64
    %v1060 = vpop.permute.xlu0 %1059
    %1061 = vrot.lane.b32.xlu0 %v436, 64
    %v1062 = vpop.permute.xlu0 %1061
    %1063 = vrot.lane.b32.xlu0 %v437, 64
    %v1064 = vpop.permute.xlu0 %1063
    %1065 = vrot.lane.b32.xlu0 %v438, 64
    %v1066 = vpop.permute.xlu0 %1065
    %1067 = vrot.lane.b32.xlu0 %v439, 64
    %v1068 = vpop.permute.xlu0 %1067
    %1069 = vrot.lane.b32.xlu0 %v440, 64
    %v1070 = vpop.permute.xlu0 %1069
    %1071 = vrot.lane.b32.xlu0 %v441, 64
    %v1072 = vpop.permute.xlu0 %1071
    %1073 = vrot.lane.b32.xlu0 %v442, 64
    %v1074 = vpop.permute.xlu0 %1073
    %1075 = vrot.lane.b32.xlu0 %v443, 64
    %v1076 = vpop.permute.xlu0 %1075
    %1077 = vrot.lane.b32.xlu0 %v444, 64
    %v1078 = vpop.permute.xlu0 %1077
    %1079 = vrot.lane.b32.xlu0 %v445, 64
    %v1080 = vpop.permute.xlu0 %1079
    %1081 = vrot.lane.b32.xlu0 %v446, 64
    %v1082 = vpop.permute.xlu0 %1081
    %1083 = vrot.lane.b32.xlu0 %v447, 64
    %v1084 = vpop.permute.xlu0 %1083
    %1085 = vrot.lane.b32.xlu0 %v448, 64
    %v1086 = vpop.permute.xlu0 %1085
    %1087 = vrot.lane.b32.xlu0 %v449, 64
    %v1088 = vpop.permute.xlu0 %1087
    %1089 = vrot.lane.b32.xlu0 %v450, 64
    %v1090 = vpop.permute.xlu0 %1089
    %1091 = vrot.lane.b32.xlu0 %v451, 64
    %v1092 = vpop.permute.xlu0 %1091
    %1221 = vrot.lane.b32.xlu0 %v516, 64
    %v1222 = vpop.permute.xlu0 %1221
    %1223 = vrot.lane.b32.xlu0 %v517, 64
    %v1224 = vpop.permute.xlu0 %1223
    %1225 = vrot.lane.b32.xlu0 %v518, 64
    %v1226 = vpop.permute.xlu0 %1225
    %1227 = vrot.lane.b32.xlu0 %v519, 64
    %v1228 = vpop.permute.xlu0 %1227
    %1229 = vrot.lane.b32.xlu0 %v520, 64
    %v1230 = vpop.permute.xlu0 %1229
    %1231 = vrot.lane.b32.xlu0 %v521, 64
    %v1232 = vpop.permute.xlu0 %1231
    %1233 = vrot.lane.b32.xlu0 %v522, 64
    %v1234 = vpop.permute.xlu0 %1233
    %1235 = vrot.lane.b32.xlu0 %v523, 64
    %v1236 = vpop.permute.xlu0 %1235
    %1237 = vrot.lane.b32.xlu0 %v524, 64
    %v1238 = vpop.permute.xlu0 %1237
    %1239 = vrot.lane.b32.xlu0 %v525, 64
    %v1240 = vpop.permute.xlu0 %1239
    %1241 = vrot.lane.b32.xlu0 %v526, 64
    %v1242 = vpop.permute.xlu0 %1241
    %1243 = vrot.lane.b32.xlu0 %v527, 64
    %v1244 = vpop.permute.xlu0 %1243
    %1245 = vrot.lane.b32.xlu0 %v528, 64
    %v1246 = vpop.permute.xlu0 %1245
    %1247 = vrot.lane.b32.xlu0 %v529, 64
    %v1248 = vpop.permute.xlu0 %1247
    %1249 = vrot.lane.b32.xlu0 %v530, 64
    %v1250 = vpop.permute.xlu0 %1249
    %1251 = vrot.lane.b32.xlu0 %v531, 64
    %v1252 = vpop.permute.xlu0 %1251
    %1253 = vrot.lane.b32.xlu0 %v532, 64
    %v1254 = vpop.permute.xlu0 %1253
    %1255 = vrot.lane.b32.xlu0 %v533, 64
    %v1256 = vpop.permute.xlu0 %1255
    %1257 = vrot.lane.b32.xlu0 %v534, 64
    %v1258 = vpop.permute.xlu0 %1257
    %1259 = vrot.lane.b32.xlu0 %v535, 64
    %v1260 = vpop.permute.xlu0 %1259
    %1261 = vrot.lane.b32.xlu0 %v536, 64
    %v1262 = vpop.permute.xlu0 %1261
    %1263 = vrot.lane.b32.xlu0 %v537, 64
    %v1264 = vpop.permute.xlu0 %1263
    %1265 = vrot.lane.b32.xlu0 %v538, 64
    %v1266 = vpop.permute.xlu0 %1265
    %1267 = vrot.lane.b32.xlu0 %v539, 64
    %v1268 = vpop.permute.xlu0 %1267
    %1269 = vrot.lane.b32.xlu0 %v540, 64
    %v1270 = vpop.permute.xlu0 %1269
    %1271 = vrot.lane.b32.xlu0 %v541, 64
    %v1272 = vpop.permute.xlu0 %1271
    %1273 = vrot.lane.b32.xlu0 %v542, 64
    %v1274 = vpop.permute.xlu0 %1273
    %1275 = vrot.lane.b32.xlu0 %v543, 64
    %v1276 = vpop.permute.xlu0 %1275
    %1277 = vrot.lane.b32.xlu0 %v544, 64
    %v1278 = vpop.permute.xlu0 %1277
    %1279 = vrot.lane.b32.xlu0 %v545, 64
    %v1280 = vpop.permute.xlu0 %1279
    %1281 = vrot.lane.b32.xlu0 %v546, 64
    %v1282 = vpop.permute.xlu0 %1281
    %1283 = vrot.lane.b32.xlu0 %v547, 64
    %v1284 = vpop.permute.xlu0 %1283
    %1285 = vrot.lane.b32.xlu0 %v548, 64
    %v1286 = vpop.permute.xlu0 %1285
    %1287 = vrot.lane.b32.xlu0 %v549, 64
    %v1288 = vpop.permute.xlu0 %1287
    %1289 = vrot.lane.b32.xlu0 %v550, 64
    %v1290 = vpop.permute.xlu0 %1289
    %1291 = vrot.lane.b32.xlu0 %v551, 64
    %v1292 = vpop.permute.xlu0 %1291
    %1293 = vrot.lane.b32.xlu0 %v552, 64
    %v1294 = vpop.permute.xlu0 %1293
    %1295 = vrot.lane.b32.xlu0 %v553, 64
    %v1296 = vpop.permute.xlu0 %1295
    %1297 = vrot.lane.b32.xlu0 %v554, 64
    %v1298 = vpop.permute.xlu0 %1297
    %1299 = vrot.lane.b32.xlu0 %v555, 64
    %v1300 = vpop.permute.xlu0 %1299
    %1301 = vrot.lane.b32.xlu0 %v556, 64
    %v1302 = vpop.permute.xlu0 %1301
    %1303 = vrot.lane.b32.xlu0 %v557, 64
    %v1304 = vpop.permute.xlu0 %1303
    %1305 = vrot.lane.b32.xlu0 %v558, 64
    %v1306 = vpop.permute.xlu0 %1305
    %1307 = vrot.lane.b32.xlu0 %v559, 64
    %v1308 = vpop.permute.xlu0 %1307
    %1309 = vrot.lane.b32.xlu0 %v560, 64
    %v1310 = vpop.permute.xlu0 %1309
    %1311 = vrot.lane.b32.xlu0 %v561, 64
    %v1312 = vpop.permute.xlu0 %1311
    %1313 = vrot.lane.b32.xlu0 %v562, 64
    %v1314 = vpop.permute.xlu0 %1313
    %1315 = vrot.lane.b32.xlu0 %v563, 64
    %v1316 = vpop.permute.xlu0 %1315
    %1317 = vrot.lane.b32.xlu0 %v564, 64
    %v1318 = vpop.permute.xlu0 %1317
    %1319 = vrot.lane.b32.xlu0 %v565, 64
    %v1320 = vpop.permute.xlu0 %1319
    %1321 = vrot.lane.b32.xlu0 %v566, 64
    %v1322 = vpop.permute.xlu0 %1321
    %1323 = vrot.lane.b32.xlu0 %v567, 64
    %v1324 = vpop.permute.xlu0 %1323
    %1325 = vrot.lane.b32.xlu0 %v568, 64
    %v1326 = vpop.permute.xlu0 %1325
    %1327 = vrot.lane.b32.xlu0 %v569, 64
    %v1328 = vpop.permute.xlu0 %1327
    %1329 = vrot.lane.b32.xlu0 %v570, 64
    %v1330 = vpop.permute.xlu0 %1329
    %1331 = vrot.lane.b32.xlu0 %v571, 64
    %v1332 = vpop.permute.xlu0 %1331
    %1333 = vrot.lane.b32.xlu0 %v572, 64
    %v1334 = vpop.permute.xlu0 %1333
    %1335 = vrot.lane.b32.xlu0 %v573, 64
    %v1336 = vpop.permute.xlu0 %1335
    %1337 = vrot.lane.b32.xlu0 %v574, 64
    %v1338 = vpop.permute.xlu0 %1337
    %1339 = vrot.lane.b32.xlu0 %v575, 64
    %v1340 = vpop.permute.xlu0 %1339
    %1341 = vrot.lane.b32.xlu0 %v576, 64
    %v1342 = vpop.permute.xlu0 %1341
    %1343 = vrot.lane.b32.xlu0 %v577, 64
    %v1344 = vpop.permute.xlu0 %1343
    %1345 = vrot.lane.b32.xlu0 %v578, 64
    %v1346 = vpop.permute.xlu0 %1345
    %1347 = vrot.lane.b32.xlu0 %v579, 64
    %v1348 = vpop.permute.xlu0 %1347
    %1477 = vrot.lane.b32.xlu0 %v644, 64
    %v1478 = vpop.permute.xlu0 %1477
    %1479 = vrot.lane.b32.xlu0 %v645, 64
    %v1480 = vpop.permute.xlu0 %1479
    %1481 = vrot.lane.b32.xlu0 %v646, 64
    %v1482 = vpop.permute.xlu0 %1481
    %1483 = vrot.lane.b32.xlu0 %v647, 64
    %v1484 = vpop.permute.xlu0 %1483
    %1485 = vrot.lane.b32.xlu0 %v648, 64
    %v1486 = vpop.permute.xlu0 %1485
    %1487 = vrot.lane.b32.xlu0 %v649, 64
    %v1488 = vpop.permute.xlu0 %1487
    %1489 = vrot.lane.b32.xlu0 %v650, 64
    %v1490 = vpop.permute.xlu0 %1489
    %1491 = vrot.lane.b32.xlu0 %v651, 64
    %v1492 = vpop.permute.xlu0 %1491
    %1493 = vrot.lane.b32.xlu0 %v652, 64
    %v1494 = vpop.permute.xlu0 %1493
    %1495 = vrot.lane.b32.xlu0 %v653, 64
    %v1496 = vpop.permute.xlu0 %1495
    %1497 = vrot.lane.b32.xlu0 %v654, 64
    %v1498 = vpop.permute.xlu0 %1497
    %1499 = vrot.lane.b32.xlu0 %v655, 64
    %v1500 = vpop.permute.xlu0 %1499
    %1501 = vrot.lane.b32.xlu0 %v656, 64
    %v1502 = vpop.permute.xlu0 %1501
    %1503 = vrot.lane.b32.xlu0 %v657, 64
    %v1504 = vpop.permute.xlu0 %1503
    %1505 = vrot.lane.b32.xlu0 %v658, 64
    %v1506 = vpop.permute.xlu0 %1505
    %1507 = vrot.lane.b32.xlu0 %v659, 64
    %v1508 = vpop.permute.xlu0 %1507
    %1509 = vrot.lane.b32.xlu0 %v660, 64
    %v1510 = vpop.permute.xlu0 %1509
    %1511 = vrot.lane.b32.xlu0 %v661, 64
    %v1512 = vpop.permute.xlu0 %1511
    %1513 = vrot.lane.b32.xlu0 %v662, 64
    %v1514 = vpop.permute.xlu0 %1513
    %1515 = vrot.lane.b32.xlu0 %v663, 64
    %v1516 = vpop.permute.xlu0 %1515
    %1517 = vrot.lane.b32.xlu0 %v664, 64
    %v1518 = vpop.permute.xlu0 %1517
    %1519 = vrot.lane.b32.xlu0 %v665, 64
    %v1520 = vpop.permute.xlu0 %1519
    %1521 = vrot.lane.b32.xlu0 %v666, 64
    %v1522 = vpop.permute.xlu0 %1521
    %1523 = vrot.lane.b32.xlu0 %v667, 64
    %v1524 = vpop.permute.xlu0 %1523
    %1525 = vrot.lane.b32.xlu0 %v668, 64
    %v1526 = vpop.permute.xlu0 %1525
    %1527 = vrot.lane.b32.xlu0 %v669, 64
    %v1528 = vpop.permute.xlu0 %1527
    %1529 = vrot.lane.b32.xlu0 %v670, 64
    %v1530 = vpop.permute.xlu0 %1529
    %1531 = vrot.lane.b32.xlu0 %v671, 64
    %v1532 = vpop.permute.xlu0 %1531
    %1533 = vrot.lane.b32.xlu0 %v672, 64
    %v1534 = vpop.permute.xlu0 %1533
    %1535 = vrot.lane.b32.xlu0 %v673, 64
    %v1536 = vpop.permute.xlu0 %1535
    %1537 = vrot.lane.b32.xlu0 %v674, 64
    %v1538 = vpop.permute.xlu0 %1537
    %1539 = vrot.lane.b32.xlu0 %v675, 64
    %v1540 = vpop.permute.xlu0 %1539
    %1541 = vrot.lane.b32.xlu0 %v676, 64
    %v1542 = vpop.permute.xlu0 %1541
    %1543 = vrot.lane.b32.xlu0 %v677, 64
    %v1544 = vpop.permute.xlu0 %1543
    %1545 = vrot.lane.b32.xlu0 %v678, 64
    %v1546 = vpop.permute.xlu0 %1545
    %1547 = vrot.lane.b32.xlu0 %v679, 64
    %v1548 = vpop.permute.xlu0 %1547
    %1549 = vrot.lane.b32.xlu0 %v680, 64
    %v1550 = vpop.permute.xlu0 %1549
    %1551 = vrot.lane.b32.xlu0 %v681, 64
    %v1552 = vpop.permute.xlu0 %1551
    %1553 = vrot.lane.b32.xlu0 %v682, 64
    %v1554 = vpop.permute.xlu0 %1553
    %1555 = vrot.lane.b32.xlu0 %v683, 64
    %v1556 = vpop.permute.xlu0 %1555
    %1557 = vrot.lane.b32.xlu0 %v684, 64
    %v1558 = vpop.permute.xlu0 %1557
    %1559 = vrot.lane.b32.xlu0 %v685, 64
    %v1560 = vpop.permute.xlu0 %1559
    %1561 = vrot.lane.b32.xlu0 %v686, 64
    %v1562 = vpop.permute.xlu0 %1561
    %1563 = vrot.lane.b32.xlu0 %v687, 64
    %v1564 = vpop.permute.xlu0 %1563
    %1565 = vrot.lane.b32.xlu0 %v688, 64
    %v1566 = vpop.permute.xlu0 %1565
    %1567 = vrot.lane.b32.xlu0 %v689, 64
    %v1568 = vpop.permute.xlu0 %1567
    %1569 = vrot.lane.b32.xlu0 %v690, 64
    %v1570 = vpop.permute.xlu0 %1569
    %1571 = vrot.lane.b32.xlu0 %v691, 64
    %v1572 = vpop.permute.xlu0 %1571
    %1573 = vrot.lane.b32.xlu0 %v692, 64
    %v1574 = vpop.permute.xlu0 %1573
    %1575 = vrot.lane.b32.xlu0 %v693, 64
    %v1576 = vpop.permute.xlu0 %1575
    %1577 = vrot.lane.b32.xlu0 %v694, 64
    %v1578 = vpop.permute.xlu0 %1577
    %1579 = vrot.lane.b32.xlu0 %v695, 64
    %v1580 = vpop.permute.xlu0 %1579
    %1581 = vrot.lane.b32.xlu0 %v696, 64
    %v1582 = vpop.permute.xlu0 %1581
    %1583 = vrot.lane.b32.xlu0 %v697, 64
    %v1584 = vpop.permute.xlu0 %1583
    %1585 = vrot.lane.b32.xlu0 %v698, 64
    %v1586 = vpop.permute.xlu0 %1585
    %1587 = vrot.lane.b32.xlu0 %v699, 64
    %v1588 = vpop.permute.xlu0 %1587
    %1589 = vrot.lane.b32.xlu0 %v700, 64
    %v1590 = vpop.permute.xlu0 %1589
    %1591 = vrot.lane.b32.xlu0 %v701, 64
    %v1592 = vpop.permute.xlu0 %1591
    %1593 = vrot.lane.b32.xlu0 %v702, 64
    %v1594 = vpop.permute.xlu0 %1593
    %1595 = vrot.lane.b32.xlu0 %v703, 64
    %v1596 = vpop.permute.xlu0 %1595
    %1597 = vrot.lane.b32.xlu0 %v704, 64
    %v1598 = vpop.permute.xlu0 %1597
    %1599 = vrot.lane.b32.xlu0 %v705, 64
    %v1600 = vpop.permute.xlu0 %1599
    %1601 = vrot.lane.b32.xlu0 %v706, 64
    %v1602 = vpop.permute.xlu0 %1601
    %1603 = vrot.lane.b32.xlu0 %v707, 64
    %v1604 = vpop.permute.xlu0 %1603
    %1733 = vrot.lane.b32.xlu0 %v773, 64
    %v1734 = vpop.permute.xlu0 %1733
    %1735 = vrot.lane.b32.xlu0 %v774, 64
    %v1736 = vpop.permute.xlu0 %1735
    %1737 = vrot.lane.b32.xlu0 %v775, 64
    %v1738 = vpop.permute.xlu0 %1737
    %1739 = vrot.lane.b32.xlu0 %v776, 64
    %v1740 = vpop.permute.xlu0 %1739
    %1741 = vrot.lane.b32.xlu0 %v777, 64
    %v1742 = vpop.permute.xlu0 %1741
    %1743 = vrot.lane.b32.xlu0 %v778, 64
    %v1744 = vpop.permute.xlu0 %1743
    %1745 = vrot.lane.b32.xlu0 %v779, 64
    %v1746 = vpop.permute.xlu0 %1745
    %1747 = vrot.lane.b32.xlu0 %v780, 64
    %v1748 = vpop.permute.xlu0 %1747
    %1749 = vrot.lane.b32.xlu0 %v781, 64
    %v1750 = vpop.permute.xlu0 %1749
    %1751 = vrot.lane.b32.xlu0 %v782, 64
    %v1752 = vpop.permute.xlu0 %1751
    %1753 = vrot.lane.b32.xlu0 %v783, 64
    %v1754 = vpop.permute.xlu0 %1753
    %1755 = vrot.lane.b32.xlu0 %v784, 64
    %v1756 = vpop.permute.xlu0 %1755
    %1757 = vrot.lane.b32.xlu0 %v785, 64
    %v1758 = vpop.permute.xlu0 %1757
    %1759 = vrot.lane.b32.xlu0 %v786, 64
    %v1760 = vpop.permute.xlu0 %1759
    %1761 = vrot.lane.b32.xlu0 %v787, 64
    %v1762 = vpop.permute.xlu0 %1761
    %1763 = vrot.lane.b32.xlu0 %v788, 64
    %v1764 = vpop.permute.xlu0 %1763
    %1765 = vrot.lane.b32.xlu0 %v789, 64
    %v1766 = vpop.permute.xlu0 %1765
    %1767 = vrot.lane.b32.xlu0 %v790, 64
    %v1768 = vpop.permute.xlu0 %1767
    %1769 = vrot.lane.b32.xlu0 %v791, 64
    %v1770 = vpop.permute.xlu0 %1769
    %1771 = vrot.lane.b32.xlu0 %v792, 64
    %v1772 = vpop.permute.xlu0 %1771
    %1773 = vrot.lane.b32.xlu0 %v793, 64
    %v1774 = vpop.permute.xlu0 %1773
    %1775 = vrot.lane.b32.xlu0 %v794, 64
    %v1776 = vpop.permute.xlu0 %1775
    %1777 = vrot.lane.b32.xlu0 %v795, 64
    %v1778 = vpop.permute.xlu0 %1777
    %1779 = vrot.lane.b32.xlu0 %v796, 64
    %v1780 = vpop.permute.xlu0 %1779
    %1781 = vrot.lane.b32.xlu0 %v797, 64
    %v1782 = vpop.permute.xlu0 %1781
    %1783 = vrot.lane.b32.xlu0 %v798, 64
    %v1784 = vpop.permute.xlu0 %1783
    %1785 = vrot.lane.b32.xlu0 %v799, 64
    %v1786 = vpop.permute.xlu0 %1785
    %1787 = vrot.lane.b32.xlu0 %v800, 64
    %v1788 = vpop.permute.xlu0 %1787
    %1789 = vrot.lane.b32.xlu0 %v801, 64
    %v1790 = vpop.permute.xlu0 %1789
    %1791 = vrot.lane.b32.xlu0 %v802, 64
    %v1792 = vpop.permute.xlu0 %1791
    %1793 = vrot.lane.b32.xlu0 %v803, 64
    %v1794 = vpop.permute.xlu0 %1793
    %1795 = vrot.lane.b32.xlu0 %v804, 64
    %v1796 = vpop.permute.xlu0 %1795
    %1797 = vrot.lane.b32.xlu0 %v805, 64
    %v1798 = vpop.permute.xlu0 %1797
    %1799 = vrot.lane.b32.xlu0 %v806, 64
    %v1800 = vpop.permute.xlu0 %1799
    %1801 = vrot.lane.b32.xlu0 %v807, 64
    %v1802 = vpop.permute.xlu0 %1801
    %1803 = vrot.lane.b32.xlu0 %v808, 64
    %v1804 = vpop.permute.xlu0 %1803
    %1805 = vrot.lane.b32.xlu0 %v809, 64
    %v1806 = vpop.permute.xlu0 %1805
    %1807 = vrot.lane.b32.xlu0 %v810, 64
    %v1808 = vpop.permute.xlu0 %1807
    %1809 = vrot.lane.b32.xlu0 %v811, 64
    %v1810 = vpop.permute.xlu0 %1809
    %1811 = vrot.lane.b32.xlu0 %v812, 64
    %v1812 = vpop.permute.xlu0 %1811
    %1813 = vrot.lane.b32.xlu0 %v813, 64
    %v1814 = vpop.permute.xlu0 %1813
    %1815 = vrot.lane.b32.xlu0 %v814, 64
    %v1816 = vpop.permute.xlu0 %1815
    %1817 = vrot.lane.b32.xlu0 %v815, 64
    %v1818 = vpop.permute.xlu0 %1817
    %1819 = vrot.lane.b32.xlu0 %v816, 64
    %v1820 = vpop.permute.xlu0 %1819
    %1821 = vrot.lane.b32.xlu0 %v817, 64
    %v1822 = vpop.permute.xlu0 %1821
    %1823 = vrot.lane.b32.xlu0 %v818, 64
    %v1824 = vpop.permute.xlu0 %1823
    %1825 = vrot.lane.b32.xlu0 %v819, 64
    %v1826 = vpop.permute.xlu0 %1825
    %1827 = vrot.lane.b32.xlu0 %v820, 64
    %v1828 = vpop.permute.xlu0 %1827
    %1829 = vrot.lane.b32.xlu0 %v821, 64
    %v1830 = vpop.permute.xlu0 %1829
    %1831 = vrot.lane.b32.xlu0 %v822, 64
    %v1832 = vpop.permute.xlu0 %1831
    %1833 = vrot.lane.b32.xlu0 %v823, 64
    %v1834 = vpop.permute.xlu0 %1833
    %1835 = vrot.lane.b32.xlu0 %v824, 64
    %v1836 = vpop.permute.xlu0 %1835
    %1837 = vrot.lane.b32.xlu0 %v825, 64
    %v1838 = vpop.permute.xlu0 %1837
    %1839 = vrot.lane.b32.xlu0 %v826, 64
    %v1840 = vpop.permute.xlu0 %1839
    %1841 = vrot.lane.b32.xlu0 %v827, 64
    %v1842 = vpop.permute.xlu0 %1841
    %1843 = vrot.lane.b32.xlu0 %v828, 64
    %v1844 = vpop.permute.xlu0 %1843
    %1845 = vrot.lane.b32.xlu0 %v829, 64
    %v1846 = vpop.permute.xlu0 %1845
    %1847 = vrot.lane.b32.xlu0 %v830, 64
    %v1848 = vpop.permute.xlu0 %1847
    %1849 = vrot.lane.b32.xlu0 %v831, 64
    %v1850 = vpop.permute.xlu0 %1849
    %1851 = vrot.lane.b32.xlu0 %v832, 64
    %v1852 = vpop.permute.xlu0 %1851
    %1853 = vrot.lane.b32.xlu0 %v833, 64
    %v1854 = vpop.permute.xlu0 %1853
    %1855 = vrot.lane.b32.xlu0 %v834, 64
    %v1856 = vpop.permute.xlu0 %1855
    %1857 = vrot.lane.b32.xlu0 %v835, 64
    %v1858 = vpop.permute.xlu0 %1857
    %1859 = vrot.lane.b32.xlu0 %v836, 64
    %v1860 = vpop.permute.xlu0 %1859
    %v1925 = vsel %vm96, %v324, %v966
    %v1926 = vsel %vm96, %v325, %v968
    %v1927 = vsel %vm96, %v326, %v970
    %v1928 = vsel %vm96, %v327, %v972
    %v1929 = vsel %vm96, %v328, %v974
    %v1930 = vsel %vm96, %v329, %v976
    %v1931 = vsel %vm96, %v330, %v978
    %v1932 = vsel %vm96, %v331, %v980
    %v1933 = vsel %vm96, %v332, %v982
    %v1934 = vsel %vm96, %v333, %v984
    %v1935 = vsel %vm96, %v334, %v986
    %v1936 = vsel %vm96, %v335, %v988
    %v1937 = vsel %vm96, %v336, %v990
    %v1938 = vsel %vm96, %v337, %v992
    %v1939 = vsel %vm96, %v338, %v994
    %v1940 = vsel %vm96, %v339, %v996
    %v1941 = vsel %vm96, %v340, %v998
    %v1942 = vsel %vm96, %v341, %v1000
    %v1943 = vsel %vm96, %v342, %v1002
    %v1944 = vsel %vm96, %v343, %v1004
    %v1945 = vsel %vm96, %v344, %v1006
    %v1946 = vsel %vm96, %v345, %v1008
    %v1947 = vsel %vm96, %v346, %v1010
    %v1948 = vsel %vm96, %v347, %v1012
    %v1949 = vsel %vm96, %v348, %v1014
    %v1950 = vsel %vm96, %v349, %v1016
    %v1951 = vsel %vm96, %v350, %v1018
    %v1952 = vsel %vm96, %v351, %v1020
    %v1953 = vsel %vm96, %v352, %v1022
    %v1954 = vsel %vm96, %v353, %v1024
    %v1955 = vsel %vm96, %v354, %v1026
    %v1956 = vsel %vm96, %v355, %v1028
    %v1957 = vsel %vm96, %v356, %v1030
    %v1958 = vsel %vm96, %v357, %v1032
    %v1959 = vsel %vm96, %v358, %v1034
    %v1960 = vsel %vm96, %v359, %v1036
    %v1961 = vsel %vm96, %v360, %v1038
    %v1962 = vsel %vm96, %v361, %v1040
    %v1963 = vsel %vm96, %v362, %v1042
    %v1964 = vsel %vm96, %v363, %v1044
    %v1965 = vsel %vm96, %v364, %v1046
    %v1966 = vsel %vm96, %v365, %v1048
    %v1967 = vsel %vm96, %v366, %v1050
    %v1968 = vsel %vm96, %v367, %v1052
    %v1969 = vsel %vm96, %v368, %v1054
    %v1970 = vsel %vm96, %v369, %v1056
    %v1971 = vsel %vm96, %v370, %v1058
    %v1972 = vsel %vm96, %v371, %v1060
    %v1973 = vsel %vm96, %v372, %v1062
    %v1974 = vsel %vm96, %v373, %v1064
    %v1975 = vsel %vm96, %v374, %v1066
    %v1976 = vsel %vm96, %v375, %v1068
    %v1977 = vsel %vm96, %v376, %v1070
    %v1978 = vsel %vm96, %v377, %v1072
    %v1979 = vsel %vm96, %v378, %v1074
    %v1980 = vsel %vm96, %v379, %v1076
    %v1981 = vsel %vm96, %v380, %v1078
    %v1982 = vsel %vm96, %v381, %v1080
    %v1983 = vsel %vm96, %v382, %v1082
    %v1984 = vsel %vm96, %v383, %v1084
    %v1985 = vsel %vm96, %v384, %v1086
    %v1986 = vsel %vm96, %v385, %v1088
    %v1987 = vsel %vm96, %v386, %v1090
    %v1988 = vsel %vm96, %v387, %v1092
    %v1989 = vsel %vm96, %v452, %v1222
    %v1990 = vsel %vm96, %v453, %v1224
    %v1991 = vsel %vm96, %v454, %v1226
    %v1992 = vsel %vm96, %v455, %v1228
    %v1993 = vsel %vm96, %v456, %v1230
    %v1994 = vsel %vm96, %v457, %v1232
    %v1995 = vsel %vm96, %v458, %v1234
    %v1996 = vsel %vm96, %v459, %v1236
    %v1997 = vsel %vm96, %v460, %v1238
    %v1998 = vsel %vm96, %v461, %v1240
    %v1999 = vsel %vm96, %v462, %v1242
    %v2000 = vsel %vm96, %v463, %v1244
    %v2001 = vsel %vm96, %v464, %v1246
    %v2002 = vsel %vm96, %v465, %v1248
    %v2003 = vsel %vm96, %v466, %v1250
    %v2004 = vsel %vm96, %v467, %v1252
    %v2005 = vsel %vm96, %v468, %v1254
    %v2006 = vsel %vm96, %v469, %v1256
    %v2007 = vsel %vm96, %v470, %v1258
    %v2008 = vsel %vm96, %v471, %v1260
    %v2009 = vsel %vm96, %v472, %v1262
    %v2010 = vsel %vm96, %v473, %v1264
    %v2011 = vsel %vm96, %v474, %v1266
    %v2012 = vsel %vm96, %v475, %v1268
    %v2013 = vsel %vm96, %v476, %v1270
    %v2014 = vsel %vm96, %v477, %v1272
    %v2015 = vsel %vm96, %v478, %v1274
    %v2016 = vsel %vm96, %v479, %v1276
    %v2017 = vsel %vm96, %v480, %v1278
    %v2018 = vsel %vm96, %v481, %v1280
    %v2019 = vsel %vm96, %v482, %v1282
    %v2020 = vsel %vm96, %v483, %v1284
    %v2021 = vsel %vm96, %v484, %v1286
    %v2022 = vsel %vm96, %v485, %v1288
    %v2023 = vsel %vm96, %v486, %v1290
    %v2024 = vsel %vm96, %v487, %v1292
    %v2025 = vsel %vm96, %v488, %v1294
    %v2026 = vsel %vm96, %v489, %v1296
    %v2027 = vsel %vm96, %v490, %v1298
    %v2028 = vsel %vm96, %v491, %v1300
    %v2029 = vsel %vm96, %v492, %v1302
    %v2030 = vsel %vm96, %v493, %v1304
    %v2031 = vsel %vm96, %v494, %v1306
    %v2032 = vsel %vm96, %v495, %v1308
    %v2033 = vsel %vm96, %v496, %v1310
    %v2034 = vsel %vm96, %v497, %v1312
    %v2035 = vsel %vm96, %v498, %v1314
    %v2036 = vsel %vm96, %v499, %v1316
    %v2037 = vsel %vm96, %v500, %v1318
    %v2038 = vsel %vm96, %v501, %v1320
    %v2039 = vsel %vm96, %v502, %v1322
    %v2040 = vsel %vm96, %v503, %v1324
    %v2041 = vsel %vm96, %v504, %v1326
    %v2042 = vsel %vm96, %v505, %v1328
    %v2043 = vsel %vm96, %v506, %v1330
    %v2044 = vsel %vm96, %v507, %v1332
    %v2045 = vsel %vm96, %v508, %v1334
    %v2046 = vsel %vm96, %v509, %v1336
    %v2047 = vsel %vm96, %v510, %v1338
    %v2048 = vsel %vm96, %v511, %v1340
    %v2049 = vsel %vm96, %v512, %v1342
    %v2050 = vsel %vm96, %v513, %v1344
    %v2051 = vsel %vm96, %v514, %v1346
    %v2052 = vsel %vm96, %v515, %v1348
    %v2053 = vsel %vm96, %v580, %v1478
    %v2054 = vsel %vm96, %v581, %v1480
    %v2055 = vsel %vm96, %v582, %v1482
    %v2056 = vsel %vm96, %v583, %v1484
    %v2057 = vsel %vm96, %v584, %v1486
    %v2058 = vsel %vm96, %v585, %v1488
    %v2059 = vsel %vm96, %v586, %v1490
    %v2060 = vsel %vm96, %v587, %v1492
    %v2061 = vsel %vm96, %v588, %v1494
    %v2062 = vsel %vm96, %v589, %v1496
    %v2063 = vsel %vm96, %v590, %v1498
    %v2064 = vsel %vm96, %v591, %v1500
    %v2065 = vsel %vm96, %v592, %v1502
    %v2066 = vsel %vm96, %v593, %v1504
    %v2067 = vsel %vm96, %v594, %v1506
    %v2068 = vsel %vm96, %v595, %v1508
    %v2069 = vsel %vm96, %v596, %v1510
    %v2070 = vsel %vm96, %v597, %v1512
    %v2071 = vsel %vm96, %v598, %v1514
    %v2072 = vsel %vm96, %v599, %v1516
    %v2073 = vsel %vm96, %v600, %v1518
    %v2074 = vsel %vm96, %v601, %v1520
    %v2075 = vsel %vm96, %v602, %v1522
    %v2076 = vsel %vm96, %v603, %v1524
    %v2077 = vsel %vm96, %v604, %v1526
    %v2078 = vsel %vm96, %v605, %v1528
    %v2079 = vsel %vm96, %v606, %v1530
    %v2080 = vsel %vm96, %v607, %v1532
    %v2081 = vsel %vm96, %v608, %v1534
    %v2082 = vsel %vm96, %v609, %v1536
    %v2083 = vsel %vm96, %v610, %v1538
    %v2084 = vsel %vm96, %v611, %v1540
    %v2085 = vsel %vm96, %v612, %v1542
    %v2086 = vsel %vm96, %v613, %v1544
    %v2087 = vsel %vm96, %v614, %v1546
    %v2088 = vsel %vm96, %v615, %v1548
    %v2089 = vsel %vm96, %v616, %v1550
    %v2090 = vsel %vm96, %v617, %v1552
    %v2091 = vsel %vm96, %v618, %v1554
    %v2092 = vsel %vm96, %v619, %v1556
    %v2093 = vsel %vm96, %v620, %v1558
    %v2094 = vsel %vm96, %v621, %v1560
    %v2095 = vsel %vm96, %v622, %v1562
    %v2096 = vsel %vm96, %v623, %v1564
    %v2097 = vsel %vm96, %v624, %v1566
    %v2098 = vsel %vm96, %v625, %v1568
    %v2099 = vsel %vm96, %v626, %v1570
    %v2100 = vsel %vm96, %v627, %v1572
    %v2101 = vsel %vm96, %v628, %v1574
    %v2102 = vsel %vm96, %v629, %v1576
    %v2103 = vsel %vm96, %v630, %v1578
    %v2104 = vsel %vm96, %v631, %v1580
    %v2105 = vsel %vm96, %v632, %v1582
    %v2106 = vsel %vm96, %v633, %v1584
    %v2107 = vsel %vm96, %v634, %v1586
    %v2108 = vsel %vm96, %v635, %v1588
    %v2109 = vsel %vm96, %v636, %v1590
    %v2110 = vsel %vm96, %v637, %v1592
    %v2111 = vsel %vm96, %v638, %v1594
    %v2112 = vsel %vm96, %v639, %v1596
    %v2113 = vsel %vm96, %v640, %v1598
    %v2114 = vsel %vm96, %v641, %v1600
    %v2115 = vsel %vm96, %v642, %v1602
    %v2116 = vsel %vm96, %v643, %v1604
    %v2117 = vsel %vm96, %v709, %v1734
    %v2118 = vsel %vm96, %v710, %v1736
    %v2119 = vsel %vm96, %v711, %v1738
    %v2120 = vsel %vm96, %v712, %v1740
    %v2121 = vsel %vm96, %v713, %v1742
    %v2122 = vsel %vm96, %v714, %v1744
    %v2123 = vsel %vm96, %v715, %v1746
    %v2124 = vsel %vm96, %v716, %v1748
    %v2125 = vsel %vm96, %v717, %v1750
    %v2126 = vsel %vm96, %v718, %v1752
    %v2127 = vsel %vm96, %v719, %v1754
    %v2128 = vsel %vm96, %v720, %v1756
    %v2129 = vsel %vm96, %v721, %v1758
    %v2130 = vsel %vm96, %v722, %v1760
    %v2131 = vsel %vm96, %v723, %v1762
    %v2132 = vsel %vm96, %v724, %v1764
    %v2133 = vsel %vm96, %v725, %v1766
    %v2134 = vsel %vm96, %v726, %v1768
    %v2135 = vsel %vm96, %v727, %v1770
    %v2136 = vsel %vm96, %v728, %v1772
    %v2137 = vsel %vm96, %v729, %v1774
    %v2138 = vsel %vm96, %v730, %v1776
    %v2139 = vsel %vm96, %v731, %v1778
    %v2140 = vsel %vm96, %v732, %v1780
    %v2141 = vsel %vm96, %v733, %v1782
    %v2142 = vsel %vm96, %v734, %v1784
    %v2143 = vsel %vm96, %v735, %v1786
    %v2144 = vsel %vm96, %v736, %v1788
    %v2145 = vsel %vm96, %v737, %v1790
    %v2146 = vsel %vm96, %v738, %v1792
    %v2147 = vsel %vm96, %v739, %v1794
    %v2148 = vsel %vm96, %v740, %v1796
    %v2149 = vsel %vm96, %v741, %v1798
    %v2150 = vsel %vm96, %v742, %v1800
    %v2151 = vsel %vm96, %v743, %v1802
    %v2152 = vsel %vm96, %v744, %v1804
    %v2153 = vsel %vm96, %v745, %v1806
    %v2154 = vsel %vm96, %v746, %v1808
    %v2155 = vsel %vm96, %v747, %v1810
    %v2156 = vsel %vm96, %v748, %v1812
    %v2157 = vsel %vm96, %v749, %v1814
    %v2158 = vsel %vm96, %v750, %v1816
    %v2159 = vsel %vm96, %v751, %v1818
    %v2160 = vsel %vm96, %v752, %v1820
    %v2161 = vsel %vm96, %v753, %v1822
    %v2162 = vsel %vm96, %v754, %v1824
    %v2163 = vsel %vm96, %v755, %v1826
    %v2164 = vsel %vm96, %v756, %v1828
    %v2165 = vsel %vm96, %v757, %v1830
    %v2166 = vsel %vm96, %v758, %v1832
    %v2167 = vsel %vm96, %v759, %v1834
    %v2168 = vsel %vm96, %v760, %v1836
    %v2169 = vsel %vm96, %v761, %v1838
    %v2170 = vsel %vm96, %v762, %v1840
    %v2171 = vsel %vm96, %v763, %v1842
    %v2172 = vsel %vm96, %v764, %v1844
    %v2173 = vsel %vm96, %v765, %v1846
    %v2174 = vsel %vm96, %v766, %v1848
    %v2175 = vsel %vm96, %v767, %v1850
    %v2176 = vsel %vm96, %v768, %v1852
    %v2177 = vsel %vm96, %v769, %v1854
    %v2178 = vsel %vm96, %v770, %v1856
    %v2179 = vsel %vm96, %v771, %v1858
    %v2180 = vsel %vm96, %v772, %v1860
    %v2181 = vld [vmem:[%s1] sm:$0xff]
    %v2182 = vld [vmem:[%s1 + $0x8] sm:$0xff]
    %v2183 = vld [vmem:[%s1 + $0x10] sm:$0xff]
    %v2184 = vld [vmem:[%s1 + $0x18] sm:$0xff]
    %v2185 = vld [vmem:[%s1 + $0x20] sm:$0xff]
    %v2186 = vld [vmem:[%s1 + $0x28] sm:$0xff]
    %v2187 = vld [vmem:[%s1 + $0x30] sm:$0xff]
    %v2188 = vld [vmem:[%s1 + $0x38] sm:$0xff]
    %v2189 = vld [vmem:[%s1 + $0x40] sm:$0xff]
    %v2190 = vld [vmem:[%s1 + $0x48] sm:$0xff]
    %v2191 = vld [vmem:[%s1 + $0x50] sm:$0xff]
    %v2192 = vld [vmem:[%s1 + $0x58] sm:$0xff]
    %v2193 = vld [vmem:[%s1 + $0x60] sm:$0xff]
    %v2194 = vld [vmem:[%s1 + $0x68] sm:$0xff]
    %v2195 = vld [vmem:[%s1 + $0x70] sm:$0xff]
    %v2196 = vld [vmem:[%s1 + $0x78] sm:$0xff]
    %v2197 = vld [vmem:[%s1 + $0x80] sm:$0xff]
    %v2198 = vld [vmem:[%s1 + $0x88] sm:$0xff]
    %v2199 = vld [vmem:[%s1 + $0x90] sm:$0xff]
    %v2200 = vld [vmem:[%s1 + $0x98] sm:$0xff]
    %v2201 = vld [vmem:[%s1 + $0xa0] sm:$0xff]
    %v2202 = vld [vmem:[%s1 + $0xa8] sm:$0xff]
    %v2203 = vld [vmem:[%s1 + $0xb0] sm:$0xff]
    %v2204 = vld [vmem:[%s1 + $0xb8] sm:$0xff]
    %v2205 = vld [vmem:[%s1 + $0xc0] sm:$0xff]
    %v2206 = vld [vmem:[%s1 + $0xc8] sm:$0xff]
    %v2207 = vld [vmem:[%s1 + $0xd0] sm:$0xff]
    %v2208 = vld [vmem:[%s1 + $0xd8] sm:$0xff]
    %v2209 = vld [vmem:[%s1 + $0xe0] sm:$0xff]
    %v2210 = vld [vmem:[%s1 + $0xe8] sm:$0xff]
    %v2211 = vld [vmem:[%s1 + $0xf0] sm:$0xff]
    %v2212 = vld [vmem:[%s1 + $0xf8] sm:$0xff]
    %v2213 = vld [vmem:[%s1 + $0x100] sm:$0xff]
    %v2214 = vld [vmem:[%s1 + $0x108] sm:$0xff]
    %v2215 = vld [vmem:[%s1 + $0x110] sm:$0xff]
    %v2216 = vld [vmem:[%s1 + $0x118] sm:$0xff]
    %v2217 = vld [vmem:[%s1 + $0x120] sm:$0xff]
    %v2218 = vld [vmem:[%s1 + $0x128] sm:$0xff]
    %v2219 = vld [vmem:[%s1 + $0x130] sm:$0xff]
    %v2220 = vld [vmem:[%s1 + $0x138] sm:$0xff]
    %v2221 = vld [vmem:[%s1 + $0x140] sm:$0xff]
    %v2222 = vld [vmem:[%s1 + $0x148] sm:$0xff]
    %v2223 = vld [vmem:[%s1 + $0x150] sm:$0xff]
    %v2224 = vld [vmem:[%s1 + $0x158] sm:$0xff]
    %v2225 = vld [vmem:[%s1 + $0x160] sm:$0xff]
    %v2226 = vld [vmem:[%s1 + $0x168] sm:$0xff]
    %v2227 = vld [vmem:[%s1 + $0x170] sm:$0xff]
    %v2228 = vld [vmem:[%s1 + $0x178] sm:$0xff]
    %v2229 = vld [vmem:[%s1 + $0x180] sm:$0xff]
    %v2230 = vld [vmem:[%s1 + $0x188] sm:$0xff]
    %v2231 = vld [vmem:[%s1 + $0x190] sm:$0xff]
    %v2232 = vld [vmem:[%s1 + $0x198] sm:$0xff]
    %v2233 = vld [vmem:[%s1 + $0x1a0] sm:$0xff]
    %v2234 = vld [vmem:[%s1 + $0x1a8] sm:$0xff]
    %v2235 = vld [vmem:[%s1 + $0x1b0] sm:$0xff]
    %v2236 = vld [vmem:[%s1 + $0x1b8] sm:$0xff]
    %v2237 = vld [vmem:[%s1 + $0x1c0] sm:$0xff]
    %v2238 = vld [vmem:[%s1 + $0x1c8] sm:$0xff]
    %v2239 = vld [vmem:[%s1 + $0x1d0] sm:$0xff]
    %v2240 = vld [vmem:[%s1 + $0x1d8] sm:$0xff]
    %v2241 = vld [vmem:[%s1 + $0x1e0] sm:$0xff]
    %v2242 = vld [vmem:[%s1 + $0x1e8] sm:$0xff]
    %v2243 = vld [vmem:[%s1 + $0x1f0] sm:$0xff]
    %v2244 = vld [vmem:[%s1 + $0x1f8] sm:$0xff]
    %v2245 = vld [vmem:[%s1 + $0x200] sm:$0xff]
    %v2246 = vld [vmem:[%s1 + $0x208] sm:$0xff]
    %v2247 = vld [vmem:[%s1 + $0x210] sm:$0xff]
    %v2248 = vld [vmem:[%s1 + $0x218] sm:$0xff]
    %v2249 = vld [vmem:[%s1 + $0x220] sm:$0xff]
    %v2250 = vld [vmem:[%s1 + $0x228] sm:$0xff]
    %v2251 = vld [vmem:[%s1 + $0x230] sm:$0xff]
    %v2252 = vld [vmem:[%s1 + $0x238] sm:$0xff]
    %v2254 = vsel %vm96, %v837, 0
    %v2257 = vsel %vm96, %v838, 0
    %v2260 = vsel %vm96, %v839, 0
    %v2263 = vsel %vm96, %v840, 0
    %v2266 = vsel %vm96, %v841, 0
    %v2269 = vsel %vm96, %v842, 0
    %v2272 = vsel %vm96, %v843, 0
    %v2275 = vsel %vm96, %v844, 0
    %v2278 = vsel %vm96, %v845, 0
    %v2281 = vsel %vm96, %v846, 0
    %v2284 = vsel %vm96, %v847, 0
    %v2287 = vsel %vm96, %v848, 0
    %v2290 = vsel %vm96, %v849, 0
    %v2293 = vsel %vm96, %v850, 0
    %v2296 = vsel %vm96, %v851, 0
    %v2299 = vsel %vm96, %v852, 0
    %v2302 = vsel %vm96, %v853, 0
    %v2305 = vsel %vm96, %v854, 0
    %v2308 = vsel %vm96, %v855, 0
    %v2311 = vsel %vm96, %v856, 0
    %v2314 = vsel %vm96, %v857, 0
    %v2317 = vsel %vm96, %v858, 0
    %v2320 = vsel %vm96, %v859, 0
    %v2323 = vsel %vm96, %v860, 0
    %v2326 = vsel %vm96, %v861, 0
    %v2329 = vsel %vm96, %v862, 0
    %v2332 = vsel %vm96, %v863, 0
    %v2335 = vsel %vm96, %v864, 0
    %v2338 = vsel %vm96, %v865, 0
    %v2341 = vsel %vm96, %v866, 0
    %v2344 = vsel %vm96, %v867, 0
    %v2347 = vsel %vm96, %v868, 0
    %v2350 = vsel %vm96, %v869, 0
    %v2353 = vsel %vm96, %v870, 0
    %v2356 = vsel %vm96, %v871, 0
    %v2359 = vsel %vm96, %v872, 0
    %v2362 = vsel %vm96, %v873, 0
    %v2365 = vsel %vm96, %v874, 0
    %v2368 = vsel %vm96, %v875, 0
    %v2371 = vsel %vm96, %v876, 0
    %v2374 = vsel %vm96, %v877, 0
    %v2377 = vsel %vm96, %v878, 0
    %v2380 = vsel %vm96, %v879, 0
    %v2383 = vsel %vm96, %v880, 0
    %v2386 = vsel %vm96, %v881, 0
    %v2389 = vsel %vm96, %v882, 0
    %v2392 = vsel %vm96, %v883, 0
    %v2395 = vsel %vm96, %v884, 0
    %v2398 = vsel %vm96, %v885, 0
    %v2401 = vsel %vm96, %v886, 0
    %v2404 = vsel %vm96, %v887, 0
    %v2407 = vsel %vm96, %v888, 0
    %v2410 = vsel %vm96, %v889, 0
    %v2413 = vsel %vm96, %v890, 0
    %v2416 = vsel %vm96, %v891, 0
    %v2419 = vsel %vm96, %v892, 0
    %v2422 = vsel %vm96, %v893, 0
    %v2425 = vsel %vm96, %v894, 0
    %v2428 = vsel %vm96, %v895, 0
    %v2431 = vsel %vm96, %v896, 0
    %v2434 = vsel %vm96, %v897, 0
    %v2437 = vsel %vm96, %v898, 0
    %v2440 = vsel %vm96, %v899, 0
    %v2443 = vsel %vm96, %v900, 0
    %2445 = vmatprep.subr.mxu0 0.0
    %2446 = vmatpush1.msra.mxu0 %v2181
    %2447 = vmatprep.subr.mxu0 0.0
    %2448 = vmatpush1.msra.mxu0 %v2182
    %2449 = vmatprep.subr.mxu0 0.0
    %2450 = vmatpush1.msra.mxu0 %v2183
    %2451 = vmatprep.subr.mxu0 0.0
    %2452 = vmatpush1.msra.mxu0 %v2184
    %2453 = vmatprep.subr.mxu0 0.0
    %2454 = vmatpush1.msra.mxu0 %v2185
    %2455 = vmatprep.subr.mxu0 0.0
    %2456 = vmatpush1.msra.mxu0 %v2186
    %2457 = vmatprep.subr.mxu0 0.0
    %2458 = vmatpush1.msra.mxu0 %v2187
    %2459 = vmatprep.subr.mxu0 0.0
    %2460 = vmatpush1.msra.mxu0 %v2188
    %2461 = vmatprep.subr.mxu0 0.0
    %2462 = vmatpush1.msra.mxu0 %v2189
    %2463 = vmatprep.subr.mxu0 0.0
    %2464 = vmatpush1.msra.mxu0 %v2190
    %2465 = vmatprep.subr.mxu0 0.0
    %2466 = vmatpush1.msra.mxu0 %v2191
    %2467 = vmatprep.subr.mxu0 0.0
    %2468 = vmatpush1.msra.mxu0 %v2192
    %2469 = vmatprep.subr.mxu0 0.0
    %2470 = vmatpush1.msra.mxu0 %v2193
    %2471 = vmatprep.subr.mxu0 0.0
    %2472 = vmatpush1.msra.mxu0 %v2194
    %2473 = vmatprep.subr.mxu0 0.0
    %2474 = vmatpush1.msra.mxu0 %v2195
    %2475 = vmatprep.subr.mxu0 0.0
    %2476 = vmatpush1.msra.mxu0 %v2196
    %2477 = vmatprep.subr.mxu0 0.0
    %2478 = vmatpush1.msra.mxu0 %v2197
    %2479 = vmatprep.subr.mxu0 0.0
    %2480 = vmatpush1.msra.mxu0 %v2198
    %2481 = vmatprep.subr.mxu0 0.0
    %2482 = vmatpush1.msra.mxu0 %v2199
    %2483 = vmatprep.subr.mxu0 0.0
    %2484 = vmatpush1.msra.mxu0 %v2200
    %2485 = vmatprep.subr.mxu0 0.0
    %2486 = vmatpush1.msra.mxu0 %v2201
    %2487 = vmatprep.subr.mxu0 0.0
    %2488 = vmatpush1.msra.mxu0 %v2202
    %2489 = vmatprep.subr.mxu0 0.0
    %2490 = vmatpush1.msra.mxu0 %v2203
    %2491 = vmatprep.subr.mxu0 0.0
    %2492 = vmatpush1.msra.mxu0 %v2204
    %2493 = vmatprep.subr.mxu0 0.0
    %2494 = vmatpush1.msra.mxu0 %v2205
    %2495 = vmatprep.subr.mxu0 0.0
    %2496 = vmatpush1.msra.mxu0 %v2206
    %2497 = vmatprep.subr.mxu0 0.0
    %2498 = vmatpush1.msra.mxu0 %v2207
    %2499 = vmatprep.subr.mxu0 0.0
    %2500 = vmatpush1.msra.mxu0 %v2208
    %2501 = vmatprep.subr.mxu0 0.0
    %2502 = vmatpush1.msra.mxu0 %v2209
    %2503 = vmatprep.subr.mxu0 0.0
    %2504 = vmatpush1.msra.mxu0 %v2210
    %2505 = vmatprep.subr.mxu0 0.0
    %2506 = vmatpush1.msra.mxu0 %v2211
    %2507 = vmatprep.subr.mxu0 0.0
    %2508 = vmatpush1.msra.mxu0 %v2212
    %2509 = vmatprep.mubr.f32.mxu0 %v1989
    %2510 = vmatmul.mubr.f32.gmra.mrb[0].mxu0 %v1925
    %v2511 = vpop.f32.mrb[0].mxu0
    %v2512 = vadd.f32 0.0, %v2511
    %v2513 = vpop.f32.mrb[0].mxu0
    %2514 = vmatprep.mubr.f32.mxu0 %v1990
    %2515 = vmatmul.mubr.f32.gmra.mrb[0].mxu0 %v1926
    %v2516 = vpop.f32.mrb[0].mxu0
    %v2517 = vadd.f32 0.0, %v2516
    %v2518 = vpop.f32.mrb[0].mxu0
    %2519 = vmatprep.mubr.f32.mxu0 %v1991
    %2520 = vmatmul.mubr.f32.gmra.mrb[0].mxu0 %v1927
    %v2521 = vpop.f32.mrb[0].mxu0
    %v2522 = vadd.f32 0.0, %v2521
    %v2523 = vpop.f32.mrb[0].mxu0
    %2524 = vmatprep.mubr.f32.mxu0 %v1992
    %2525 = vmatmul.mubr.f32.gmra.mrb[0].mxu0 %v1928
    %v2526 = vpop.f32.mrb[0].mxu0
    %v2527 = vadd.f32 0.0, %v2526
    %v2528 = vpop.f32.mrb[0].mxu0
    %2529 = vmatprep.mubr.f32.mxu0 %v1993
    %2530 = vmatmul.mubr.f32.gmra.mrb[0].mxu0 %v1929
    %v2531 = vpop.f32.mrb[0].mxu0
    %v2532 = vadd.f32 0.0, %v2531
    %v2533 = vpop.f32.mrb[0].mxu0
    %2534 = vmatprep.mubr.f32.mxu0 %v1994
    %2535 = vmatmul.mubr.f32.gmra.mrb[0].mxu0 %v1930
    %v2536 = vpop.f32.mrb[0].mxu0
    %v2537 = vadd.f32 0.0, %v2536
    %v2538 = vpop.f32.mrb[0].mxu0
    %2539 = vmatprep.mubr.f32.mxu0 %v1995
    %2540 = vmatmul.mubr.f32.gmra.mrb[0].mxu0 %v1931
    %v2541 = vpop.f32.mrb[0].mxu0
    %v2542 = vadd.f32 0.0, %v2541
    %v2543 = vpop.f32.mrb[0].mxu0
    %2544 = vmatprep.mubr.f32.mxu0 %v1996
    %2545 = vmatmul.mubr.f32.gmra.mrb[0].mxu0 %v1932
    %v2546 = vpop.f32.mrb[0].mxu0
    %v2547 = vadd.f32 0.0, %v2546
    %v2548 = vpop.f32.mrb[0].mxu0
    %2549 = vmatprep.mubr.f32.mxu0 %v1997
    %2550 = vmatmul.mubr.f32.gmra.mrb[0].mxu0 %v1933
    %v2551 = vpop.f32.mrb[0].mxu0
    %v2552 = vadd.f32 0.0, %v2551
    %v2553 = vpop.f32.mrb[0].mxu0
    %2554 = vmatprep.mubr.f32.mxu0 %v1998
    %2555 = vmatmul.mubr.f32.gmra.mrb[0].mxu0 %v1934
    %v2556 = vpop.f32.mrb[0].mxu0
    %v2557 = vadd.f32 0.0, %v2556
    %v2558 = vpop.f32.mrb[0].mxu0
    %2559 = vmatprep.mubr.f32.mxu0 %v1999
    %2560 = vmatmul.mubr.f32.gmra.mrb[0].mxu0 %v1935
    %v2561 = vpop.f32.mrb[0].mxu0
    %v2562 = vadd.f32 0.0, %v2561
    %v2563 = vpop.f32.mrb[0].mxu0
    %2564 = vmatprep.mubr.f32.mxu0 %v2000
    %2565 = vmatmul.mubr.f32.gmra.mrb[0].mxu0 %v1936
    %v2566 = vpop.f32.mrb[0].mxu0
    %v2567 = vadd.f32 0.0, %v2566
    %v2568 = vpop.f32.mrb[0].mxu0
    %2569 = vmatprep.mubr.f32.mxu0 %v2001
    %2570 = vmatmul.mubr.f32.gmra.mrb[0].mxu0 %v1937
    %v2571 = vpop.f32.mrb[0].mxu0
    %v2572 = vadd.f32 0.0, %v2571
    %v2573 = vpop.f32.mrb[0].mxu0
    %2574 = vmatprep.mubr.f32.mxu0 %v2002
    %2575 = vmatmul.mubr.f32.gmra.mrb[0].mxu0 %v1938
    %v2576 = vpop.f32.mrb[0].mxu0
    %v2577 = vadd.f32 0.0, %v2576
    %v2578 = vpop.f32.mrb[0].mxu0
    %2579 = vmatprep.mubr.f32.mxu0 %v2003
    %2580 = vmatmul.mubr.f32.gmra.mrb[0].mxu0 %v1939
    %v2581 = vpop.f32.mrb[0].mxu0
    %v2582 = vadd.f32 0.0, %v2581
    %v2583 = vpop.f32.mrb[0].mxu0
    %2584 = vmatprep.mubr.f32.mxu0 %v2004
    %2585 = vmatmul.mubr.f32.gmra.mrb[0].mxu0 %v1940
    %v2586 = vpop.f32.mrb[0].mxu0
    %v2587 = vadd.f32 0.0, %v2586
    %v2588 = vpop.f32.mrb[0].mxu0
    %2589 = vmatprep.mubr.f32.mxu0 %v2005
    %2590 = vmatmul.mubr.f32.gmra.mrb[0].mxu0 %v1941
    %v2591 = vpop.f32.mrb[0].mxu0
    %v2592 = vadd.f32 0.0, %v2591
    %v2593 = vpop.f32.mrb[0].mxu0
    %2594 = vmatprep.mubr.f32.mxu0 %v2006
    %2595 = vmatmul.mubr.f32.gmra.mrb[0].mxu0 %v1942
    %v2596 = vpop.f32.mrb[0].mxu0
    %v2597 = vadd.f32 0.0, %v2596
    %v2598 = vpop.f32.mrb[0].mxu0
    %2599 = vmatprep.mubr.f32.mxu0 %v2007
    %2600 = vmatmul.mubr.f32.gmra.mrb[0].mxu0 %v1943
    %v2601 = vpop.f32.mrb[0].mxu0
    %v2602 = vadd.f32 0.0, %v2601
    %v2603 = vpop.f32.mrb[0].mxu0
    %2604 = vmatprep.mubr.f32.mxu0 %v2008
    %2605 = vmatmul.mubr.f32.gmra.mrb[0].mxu0 %v1944
    %v2606 = vpop.f32.mrb[0].mxu0
    %v2607 = vadd.f32 0.0, %v2606
    %v2608 = vpop.f32.mrb[0].mxu0
    %2609 = vmatprep.mubr.f32.mxu0 %v2009
    %2610 = vmatmul.mubr.f32.gmra.mrb[0].mxu0 %v1945
    %v2611 = vpop.f32.mrb[0].mxu0
    %v2612 = vadd.f32 0.0, %v2611
    %v2613 = vpop.f32.mrb[0].mxu0
    %2614 = vmatprep.mubr.f32.mxu0 %v2010
    %2615 = vmatmul.mubr.f32.gmra.mrb[0].mxu0 %v1946
    %v2616 = vpop.f32.mrb[0].mxu0
    %v2617 = vadd.f32 0.0, %v2616
    %v2618 = vpop.f32.mrb[0].mxu0
    %2619 = vmatprep.mubr.f32.mxu0 %v2011
    %2620 = vmatmul.mubr.f32.gmra.mrb[0].mxu0 %v1947
    %v2621 = vpop.f32.mrb[0].mxu0
    %v2622 = vadd.f32 0.0, %v2621
    %v2623 = vpop.f32.mrb[0].mxu0
    %2624 = vmatprep.mubr.f32.mxu0 %v2012
    %2625 = vmatmul.mubr.f32.gmra.mrb[0].mxu0 %v1948
    %v2626 = vpop.f32.mrb[0].mxu0
    %v2627 = vadd.f32 0.0, %v2626
    %v2628 = vpop.f32.mrb[0].mxu0
    %2629 = vmatprep.mubr.f32.mxu0 %v2013
    %2630 = vmatmul.mubr.f32.gmra.mrb[0].mxu0 %v1949
    %v2631 = vpop.f32.mrb[0].mxu0
    %v2632 = vadd.f32 0.0, %v2631
    %v2633 = vpop.f32.mrb[0].mxu0
    %2634 = vmatprep.mubr.f32.mxu0 %v2014
    %2635 = vmatmul.mubr.f32.gmra.mrb[0].mxu0 %v1950
    %v2636 = vpop.f32.mrb[0].mxu0
    %v2637 = vadd.f32 0.0, %v2636
    %v2638 = vpop.f32.mrb[0].mxu0
    %2639 = vmatprep.mubr.f32.mxu0 %v2015
    %2640 = vmatmul.mubr.f32.gmra.mrb[0].mxu0 %v1951
    %v2641 = vpop.f32.mrb[0].mxu0
    %v2642 = vadd.f32 0.0, %v2641
    %v2643 = vpop.f32.mrb[0].mxu0
    %2644 = vmatprep.mubr.f32.mxu0 %v2016
    %2645 = vmatmul.mubr.f32.gmra.mrb[0].mxu0 %v1952
    %v2646 = vpop.f32.mrb[0].mxu0
    %v2647 = vadd.f32 0.0, %v2646
    %v2648 = vpop.f32.mrb[0].mxu0
    %2649 = vmatprep.mubr.f32.mxu0 %v2017
    %2650 = vmatmul.mubr.f32.gmra.mrb[0].mxu0 %v1953
    %v2651 = vpop.f32.mrb[0].mxu0
    %v2652 = vadd.f32 0.0, %v2651
    %v2653 = vpop.f32.mrb[0].mxu0
    %2654 = vmatprep.mubr.f32.mxu0 %v2018
    %2655 = vmatmul.mubr.f32.gmra.mrb[0].mxu0 %v1954
    %v2656 = vpop.f32.mrb[0].mxu0
    %v2657 = vadd.f32 0.0, %v2656
    %v2658 = vpop.f32.mrb[0].mxu0
    %2659 = vmatprep.mubr.f32.mxu0 %v2019
    %2660 = vmatmul.mubr.f32.gmra.mrb[0].mxu0 %v1955
    %v2661 = vpop.f32.mrb[0].mxu0
    %v2662 = vadd.f32 0.0, %v2661
    %v2663 = vpop.f32.mrb[0].mxu0
    %2664 = vmatprep.mubr.f32.mxu0 %v2020
    %2665 = vmatmul.mubr.f32.gmra.mrb[0].mxu0 %v1956
    %v2666 = vpop.f32.mrb[0].mxu0
    %v2667 = vadd.f32 0.0, %v2666
    %v2668 = vpop.f32.mrb[0].mxu0
    %2669 = vmatprep.mubr.f32.mxu0 %v2021
    %2670 = vmatmul.mubr.f32.gmra.mrb[0].mxu0 %v1957
    %v2671 = vpop.f32.mrb[0].mxu0
    %v2672 = vadd.f32 0.0, %v2671
    %v2673 = vpop.f32.mrb[0].mxu0
    %2674 = vmatprep.mubr.f32.mxu0 %v2022
    %2675 = vmatmul.mubr.f32.gmra.mrb[0].mxu0 %v1958
    %v2676 = vpop.f32.mrb[0].mxu0
    %v2677 = vadd.f32 0.0, %v2676
    %v2678 = vpop.f32.mrb[0].mxu0
    %2679 = vmatprep.mubr.f32.mxu0 %v2023
    %2680 = vmatmul.mubr.f32.gmra.mrb[0].mxu0 %v1959
    %v2681 = vpop.f32.mrb[0].mxu0
    %v2682 = vadd.f32 0.0, %v2681
    %v2683 = vpop.f32.mrb[0].mxu0
    %2684 = vmatprep.mubr.f32.mxu0 %v2024
    %2685 = vmatmul.mubr.f32.gmra.mrb[0].mxu0 %v1960
    %v2686 = vpop.f32.mrb[0].mxu0
    %v2687 = vadd.f32 0.0, %v2686
    %v2688 = vpop.f32.mrb[0].mxu0
    %2689 = vmatprep.mubr.f32.mxu0 %v2025
    %2690 = vmatmul.mubr.f32.gmra.mrb[0].mxu0 %v1961
    %v2691 = vpop.f32.mrb[0].mxu0
    %v2692 = vadd.f32 0.0, %v2691
    %v2693 = vpop.f32.mrb[0].mxu0
    %2694 = vmatprep.mubr.f32.mxu0 %v2026
    %2695 = vmatmul.mubr.f32.gmra.mrb[0].mxu0 %v1962
    %v2696 = vpop.f32.mrb[0].mxu0
    %v2697 = vadd.f32 0.0, %v2696
    %v2698 = vpop.f32.mrb[0].mxu0
    %2699 = vmatprep.mubr.f32.mxu0 %v2027
    %2700 = vmatmul.mubr.f32.gmra.mrb[0].mxu0 %v1963
    %v2701 = vpop.f32.mrb[0].mxu0
    %v2702 = vadd.f32 0.0, %v2701
    %v2703 = vpop.f32.mrb[0].mxu0
    %2704 = vmatprep.mubr.f32.mxu0 %v2028
    %2705 = vmatmul.mubr.f32.gmra.mrb[0].mxu0 %v1964
    %v2706 = vpop.f32.mrb[0].mxu0
    %v2707 = vadd.f32 0.0, %v2706
    %v2708 = vpop.f32.mrb[0].mxu0
    %2709 = vmatprep.mubr.f32.mxu0 %v2029
    %2710 = vmatmul.mubr.f32.gmra.mrb[0].mxu0 %v1965
    %v2711 = vpop.f32.mrb[0].mxu0
    %v2712 = vadd.f32 0.0, %v2711
    %v2713 = vpop.f32.mrb[0].mxu0
    %2714 = vmatprep.mubr.f32.mxu0 %v2030
    %2715 = vmatmul.mubr.f32.gmra.mrb[0].mxu0 %v1966
    %v2716 = vpop.f32.mrb[0].mxu0
    %v2717 = vadd.f32 0.0, %v2716
    %v2718 = vpop.f32.mrb[0].mxu0
    %2719 = vmatprep.mubr.f32.mxu0 %v2031
    %2720 = vmatmul.mubr.f32.gmra.mrb[0].mxu0 %v1967
    %v2721 = vpop.f32.mrb[0].mxu0
    %v2722 = vadd.f32 0.0, %v2721
    %v2723 = vpop.f32.mrb[0].mxu0
    %2724 = vmatprep.mubr.f32.mxu0 %v2032
    %2725 = vmatmul.mubr.f32.gmra.mrb[0].mxu0 %v1968
    %v2726 = vpop.f32.mrb[0].mxu0
    %v2727 = vadd.f32 0.0, %v2726
    %v2728 = vpop.f32.mrb[0].mxu0
    %2729 = vmatprep.mubr.f32.mxu0 %v2033
    %2730 = vmatmul.mubr.f32.gmra.mrb[0].mxu0 %v1969
    %v2731 = vpop.f32.mrb[0].mxu0
    %v2732 = vadd.f32 0.0, %v2731
    %v2733 = vpop.f32.mrb[0].mxu0
    %2734 = vmatprep.mubr.f32.mxu0 %v2034
    %2735 = vmatmul.mubr.f32.gmra.mrb[0].mxu0 %v1970
    %v2736 = vpop.f32.mrb[0].mxu0
    %v2737 = vadd.f32 0.0, %v2736
    %v2738 = vpop.f32.mrb[0].mxu0
    %2739 = vmatprep.mubr.f32.mxu0 %v2035
    %2740 = vmatmul.mubr.f32.gmra.mrb[0].mxu0 %v1971
    %v2741 = vpop.f32.mrb[0].mxu0
    %v2742 = vadd.f32 0.0, %v2741
    %v2743 = vpop.f32.mrb[0].mxu0
    %2744 = vmatprep.mubr.f32.mxu0 %v2036
    %2745 = vmatmul.mubr.f32.gmra.mrb[0].mxu0 %v1972
    %v2746 = vpop.f32.mrb[0].mxu0
    %v2747 = vadd.f32 0.0, %v2746
    %v2748 = vpop.f32.mrb[0].mxu0
    %2749 = vmatprep.mubr.f32.mxu0 %v2037
    %2750 = vmatmul.mubr.f32.gmra.mrb[0].mxu0 %v1973
    %v2751 = vpop.f32.mrb[0].mxu0
    %v2752 = vadd.f32 0.0, %v2751
    %v2753 = vpop.f32.mrb[0].mxu0
    %2754 = vmatprep.mubr.f32.mxu0 %v2038
    %2755 = vmatmul.mubr.f32.gmra.mrb[0].mxu0 %v1974
    %v2756 = vpop.f32.mrb[0].mxu0
    %v2757 = vadd.f32 0.0, %v2756
    %v2758 = vpop.f32.mrb[0].mxu0
    %2759 = vmatprep.mubr.f32.mxu0 %v2039
    %2760 = vmatmul.mubr.f32.gmra.mrb[0].mxu0 %v1975
    %v2761 = vpop.f32.mrb[0].mxu0
    %v2762 = vadd.f32 0.0, %v2761
    %v2763 = vpop.f32.mrb[0].mxu0
    %2764 = vmatprep.mubr.f32.mxu0 %v2040
    %2765 = vmatmul.mubr.f32.gmra.mrb[0].mxu0 %v1976
    %v2766 = vpop.f32.mrb[0].mxu0
    %v2767 = vadd.f32 0.0, %v2766
    %v2768 = vpop.f32.mrb[0].mxu0
    %2769 = vmatprep.mubr.f32.mxu0 %v2041
    %2770 = vmatmul.mubr.f32.gmra.mrb[0].mxu0 %v1977
    %v2771 = vpop.f32.mrb[0].mxu0
    %v2772 = vadd.f32 0.0, %v2771
    %v2773 = vpop.f32.mrb[0].mxu0
    %2774 = vmatprep.mubr.f32.mxu0 %v2042
    %2775 = vmatmul.mubr.f32.gmra.mrb[0].mxu0 %v1978
    %v2776 = vpop.f32.mrb[0].mxu0
    %v2777 = vadd.f32 0.0, %v2776
    %v2778 = vpop.f32.mrb[0].mxu0
    %2779 = vmatprep.mubr.f32.mxu0 %v2043
    %2780 = vmatmul.mubr.f32.gmra.mrb[0].mxu0 %v1979
    %v2781 = vpop.f32.mrb[0].mxu0
    %v2782 = vadd.f32 0.0, %v2781
    %v2783 = vpop.f32.mrb[0].mxu0
    %2784 = vmatprep.mubr.f32.mxu0 %v2044
    %2785 = vmatmul.mubr.f32.gmra.mrb[0].mxu0 %v1980
    %v2786 = vpop.f32.mrb[0].mxu0
    %v2787 = vadd.f32 0.0, %v2786
    %v2788 = vpop.f32.mrb[0].mxu0
    %2789 = vmatprep.mubr.f32.mxu0 %v2045
    %2790 = vmatmul.mubr.f32.gmra.mrb[0].mxu0 %v1981
    %v2791 = vpop.f32.mrb[0].mxu0
    %v2792 = vadd.f32 0.0, %v2791
    %v2793 = vpop.f32.mrb[0].mxu0
    %2794 = vmatprep.mubr.f32.mxu0 %v2046
    %2795 = vmatmul.mubr.f32.gmra.mrb[0].mxu0 %v1982
    %v2796 = vpop.f32.mrb[0].mxu0
    %v2797 = vadd.f32 0.0, %v2796
    %v2798 = vpop.f32.mrb[0].mxu0
    %2799 = vmatprep.mubr.f32.mxu0 %v2047
    %2800 = vmatmul.mubr.f32.gmra.mrb[0].mxu0 %v1983
    %v2801 = vpop.f32.mrb[0].mxu0
    %v2802 = vadd.f32 0.0, %v2801
    %v2803 = vpop.f32.mrb[0].mxu0
    %2804 = vmatprep.mubr.f32.mxu0 %v2048
    %2805 = vmatmul.mubr.f32.gmra.mrb[0].mxu0 %v1984
    %v2806 = vpop.f32.mrb[0].mxu0
    %v2807 = vadd.f32 0.0, %v2806
    %v2808 = vpop.f32.mrb[0].mxu0
    %2809 = vmatprep.mubr.f32.mxu0 %v2049
    %2810 = vmatmul.mubr.f32.gmra.mrb[0].mxu0 %v1985
    %v2811 = vpop.f32.mrb[0].mxu0
    %v2812 = vadd.f32 0.0, %v2811
    %v2813 = vpop.f32.mrb[0].mxu0
    %2814 = vmatprep.mubr.f32.mxu0 %v2050
    %2815 = vmatmul.mubr.f32.gmra.mrb[0].mxu0 %v1986
    %v2816 = vpop.f32.mrb[0].mxu0
    %v2817 = vadd.f32 0.0, %v2816
    %v2818 = vpop.f32.mrb[0].mxu0
    %2819 = vmatprep.mubr.f32.mxu0 %v2051
    %2820 = vmatmul.mubr.f32.gmra.mrb[0].mxu0 %v1987
    %v2821 = vpop.f32.mrb[0].mxu0
    %v2822 = vadd.f32 0.0, %v2821
    %v2823 = vpop.f32.mrb[0].mxu0
    %2824 = vmatprep.mubr.f32.mxu0 %v2052
    %2825 = vmatmul.mubr.f32.gmra.mrb[0].mxu0 %v1988
    %v2826 = vpop.f32.mrb[0].mxu0
    %v2827 = vadd.f32 0.0, %v2826
    %v2828 = vpop.f32.mrb[0].mxu0
    %2829 = vdwg.mxu0
    %2830 = vmatprep.subr.mxu0 0.0
    %2831 = vmatpush1.msra.mxu0 %v2213
    %2832 = vmatprep.subr.mxu0 0.0
    %2833 = vmatpush1.msra.mxu0 %v2214
    %2834 = vmatprep.subr.mxu0 0.0
    %2835 = vmatpush1.msra.mxu0 %v2215
    %2836 = vmatprep.subr.mxu0 0.0
    %2837 = vmatpush1.msra.mxu0 %v2216
    %2838 = vmatprep.subr.mxu0 0.0
    %2839 = vmatpush1.msra.mxu0 %v2217
    %2840 = vmatprep.subr.mxu0 0.0
    %2841 = vmatpush1.msra.mxu0 %v2218
    %2842 = vmatprep.subr.mxu0 0.0
    %2843 = vmatpush1.msra.mxu0 %v2219
    %2844 = vmatprep.subr.mxu0 0.0
    %2845 = vmatpush1.msra.mxu0 %v2220
    %2846 = vmatprep.subr.mxu0 0.0
    %2847 = vmatpush1.msra.mxu0 %v2221
    %2848 = vmatprep.subr.mxu0 0.0
    %2849 = vmatpush1.msra.mxu0 %v2222
    %2850 = vmatprep.subr.mxu0 0.0
    %2851 = vmatpush1.msra.mxu0 %v2223
    %2852 = vmatprep.subr.mxu0 0.0
    %2853 = vmatpush1.msra.mxu0 %v2224
    %2854 = vmatprep.subr.mxu0 0.0
    %2855 = vmatpush1.msra.mxu0 %v2225
    %2856 = vmatprep.subr.mxu0 0.0
    %2857 = vmatpush1.msra.mxu0 %v2226
    %2858 = vmatprep.subr.mxu0 0.0
    %2859 = vmatpush1.msra.mxu0 %v2227
    %2860 = vmatprep.subr.mxu0 0.0
    %2861 = vmatpush1.msra.mxu0 %v2228
    %2862 = vmatprep.subr.mxu0 0.0
    %2863 = vmatpush1.msra.mxu0 %v2229
    %2864 = vmatprep.subr.mxu0 0.0
    %2865 = vmatpush1.msra.mxu0 %v2230
    %2866 = vmatprep.subr.mxu0 0.0
    %2867 = vmatpush1.msra.mxu0 %v2231
    %2868 = vmatprep.subr.mxu0 0.0
    %2869 = vmatpush1.msra.mxu0 %v2232
    %2870 = vmatprep.subr.mxu0 0.0
    %2871 = vmatpush1.msra.mxu0 %v2233
    %2872 = vmatprep.subr.mxu0 0.0
    %2873 = vmatpush1.msra.mxu0 %v2234
    %2874 = vmatprep.subr.mxu0 0.0
    %2875 = vmatpush1.msra.mxu0 %v2235
    %2876 = vmatprep.subr.mxu0 0.0
    %2877 = vmatpush1.msra.mxu0 %v2236
    %2878 = vmatprep.subr.mxu0 0.0
    %2879 = vmatpush1.msra.mxu0 %v2237
    %2880 = vmatprep.subr.mxu0 0.0
    %2881 = vmatpush1.msra.mxu0 %v2238
    %2882 = vmatprep.subr.mxu0 0.0
    %2883 = vmatpush1.msra.mxu0 %v2239
    %2884 = vmatprep.subr.mxu0 0.0
    %2885 = vmatpush1.msra.mxu0 %v2240
    %2886 = vmatprep.subr.mxu0 0.0
    %2887 = vmatpush1.msra.mxu0 %v2241
    %2888 = vmatprep.subr.mxu0 0.0
    %2889 = vmatpush1.msra.mxu0 %v2242
    %2890 = vmatprep.subr.mxu0 0.0
    %2891 = vmatpush1.msra.mxu0 %v2243
    %2892 = vmatprep.subr.mxu0 0.0
    %2893 = vmatpush1.msra.mxu0 %v2244
    %2894 = vmatprep.mubr.f32.mxu0 %v2117
    %2895 = vmatmul.mubr.f32.gmra.mrb[0].mxu0 %v2053
    %v2896 = vpop.f32.mrb[0].mxu0
    %v2897 = vadd.f32 %v2512, %v2896
    %v2898 = vpop.f32.mrb[0].mxu0
    %2899 = vmatprep.mubr.f32.mxu0 %v2118
    %2900 = vmatmul.mubr.f32.gmra.mrb[0].mxu0 %v2054
    %v2901 = vpop.f32.mrb[0].mxu0
    %v2902 = vadd.f32 %v2517, %v2901
    %v2903 = vpop.f32.mrb[0].mxu0
    %2904 = vmatprep.mubr.f32.mxu0 %v2119
    %2905 = vmatmul.mubr.f32.gmra.mrb[0].mxu0 %v2055
    %v2906 = vpop.f32.mrb[0].mxu0
    %v2907 = vadd.f32 %v2522, %v2906
    %v2908 = vpop.f32.mrb[0].mxu0
    %2909 = vmatprep.mubr.f32.mxu0 %v2120
    %2910 = vmatmul.mubr.f32.gmra.mrb[0].mxu0 %v2056
    %v2911 = vpop.f32.mrb[0].mxu0
    %v2912 = vadd.f32 %v2527, %v2911
    %v2913 = vpop.f32.mrb[0].mxu0
    %2914 = vmatprep.mubr.f32.mxu0 %v2121
    %2915 = vmatmul.mubr.f32.gmra.mrb[0].mxu0 %v2057
    %v2916 = vpop.f32.mrb[0].mxu0
    %v2917 = vadd.f32 %v2532, %v2916
    %v2918 = vpop.f32.mrb[0].mxu0
    %2919 = vmatprep.mubr.f32.mxu0 %v2122
    %2920 = vmatmul.mubr.f32.gmra.mrb[0].mxu0 %v2058
    %v2921 = vpop.f32.mrb[0].mxu0
    %v2922 = vadd.f32 %v2537, %v2921
    %v2923 = vpop.f32.mrb[0].mxu0
    %2924 = vmatprep.mubr.f32.mxu0 %v2123
    %2925 = vmatmul.mubr.f32.gmra.mrb[0].mxu0 %v2059
    %v2926 = vpop.f32.mrb[0].mxu0
    %v2927 = vadd.f32 %v2542, %v2926
    %v2928 = vpop.f32.mrb[0].mxu0
    %2929 = vmatprep.mubr.f32.mxu0 %v2124
    %2930 = vmatmul.mubr.f32.gmra.mrb[0].mxu0 %v2060
    %v2931 = vpop.f32.mrb[0].mxu0
    %v2932 = vadd.f32 %v2547, %v2931
    %v2933 = vpop.f32.mrb[0].mxu0
    %2934 = vmatprep.mubr.f32.mxu0 %v2125
    %2935 = vmatmul.mubr.f32.gmra.mrb[0].mxu0 %v2061
    %v2936 = vpop.f32.mrb[0].mxu0
    %v2937 = vadd.f32 %v2552, %v2936
    %v2938 = vpop.f32.mrb[0].mxu0
    %2939 = vmatprep.mubr.f32.mxu0 %v2126
    %2940 = vmatmul.mubr.f32.gmra.mrb[0].mxu0 %v2062
    %v2941 = vpop.f32.mrb[0].mxu0
    %v2942 = vadd.f32 %v2557, %v2941
    %v2943 = vpop.f32.mrb[0].mxu0
    %2944 = vmatprep.mubr.f32.mxu0 %v2127
    %2945 = vmatmul.mubr.f32.gmra.mrb[0].mxu0 %v2063
    %v2946 = vpop.f32.mrb[0].mxu0
    %v2947 = vadd.f32 %v2562, %v2946
    %v2948 = vpop.f32.mrb[0].mxu0
    %2949 = vmatprep.mubr.f32.mxu0 %v2128
    %2950 = vmatmul.mubr.f32.gmra.mrb[0].mxu0 %v2064
    %v2951 = vpop.f32.mrb[0].mxu0
    %v2952 = vadd.f32 %v2567, %v2951
    %v2953 = vpop.f32.mrb[0].mxu0
    %2954 = vmatprep.mubr.f32.mxu0 %v2129
    %2955 = vmatmul.mubr.f32.gmra.mrb[0].mxu0 %v2065
    %v2956 = vpop.f32.mrb[0].mxu0
    %v2957 = vadd.f32 %v2572, %v2956
    %v2958 = vpop.f32.mrb[0].mxu0
    %2959 = vmatprep.mubr.f32.mxu0 %v2130
    %2960 = vmatmul.mubr.f32.gmra.mrb[0].mxu0 %v2066
    %v2961 = vpop.f32.mrb[0].mxu0
    %v2962 = vadd.f32 %v2577, %v2961
    %v2963 = vpop.f32.mrb[0].mxu0
    %2964 = vmatprep.mubr.f32.mxu0 %v2131
    %2965 = vmatmul.mubr.f32.gmra.mrb[0].mxu0 %v2067
    %v2966 = vpop.f32.mrb[0].mxu0
    %v2967 = vadd.f32 %v2582, %v2966
    %v2968 = vpop.f32.mrb[0].mxu0
    %2969 = vmatprep.mubr.f32.mxu0 %v2132
    %2970 = vmatmul.mubr.f32.gmra.mrb[0].mxu0 %v2068
    %v2971 = vpop.f32.mrb[0].mxu0
    %v2972 = vadd.f32 %v2587, %v2971
    %v2973 = vpop.f32.mrb[0].mxu0
    %2974 = vmatprep.mubr.f32.mxu0 %v2133
    %2975 = vmatmul.mubr.f32.gmra.mrb[0].mxu0 %v2069
    %v2976 = vpop.f32.mrb[0].mxu0
    %v2977 = vadd.f32 %v2592, %v2976
    %v2978 = vpop.f32.mrb[0].mxu0
    %2979 = vmatprep.mubr.f32.mxu0 %v2134
    %2980 = vmatmul.mubr.f32.gmra.mrb[0].mxu0 %v2070
    %v2981 = vpop.f32.mrb[0].mxu0
    %v2982 = vadd.f32 %v2597, %v2981
    %v2983 = vpop.f32.mrb[0].mxu0
    %2984 = vmatprep.mubr.f32.mxu0 %v2135
    %2985 = vmatmul.mubr.f32.gmra.mrb[0].mxu0 %v2071
    %v2986 = vpop.f32.mrb[0].mxu0
    %v2987 = vadd.f32 %v2602, %v2986
    %v2988 = vpop.f32.mrb[0].mxu0
    %2989 = vmatprep.mubr.f32.mxu0 %v2136
    %2990 = vmatmul.mubr.f32.gmra.mrb[0].mxu0 %v2072
    %v2991 = vpop.f32.mrb[0].mxu0
    %v2992 = vadd.f32 %v2607, %v2991
    %v2993 = vpop.f32.mrb[0].mxu0
    %2994 = vmatprep.mubr.f32.mxu0 %v2137
    %2995 = vmatmul.mubr.f32.gmra.mrb[0].mxu0 %v2073
    %v2996 = vpop.f32.mrb[0].mxu0
    %v2997 = vadd.f32 %v2612, %v2996
    %v2998 = vpop.f32.mrb[0].mxu0
    %2999 = vmatprep.mubr.f32.mxu0 %v2138
    %3000 = vmatmul.mubr.f32.gmra.mrb[0].mxu0 %v2074
    %v3001 = vpop.f32.mrb[0].mxu0
    %v3002 = vadd.f32 %v2617, %v3001
    %v3003 = vpop.f32.mrb[0].mxu0
    %3004 = vmatprep.mubr.f32.mxu0 %v2139
    %3005 = vmatmul.mubr.f32.gmra.mrb[0].mxu0 %v2075
    %v3006 = vpop.f32.mrb[0].mxu0
    %v3007 = vadd.f32 %v2622, %v3006
    %v3008 = vpop.f32.mrb[0].mxu0
    %3009 = vmatprep.mubr.f32.mxu0 %v2140
    %3010 = vmatmul.mubr.f32.gmra.mrb[0].mxu0 %v2076
    %v3011 = vpop.f32.mrb[0].mxu0
    %v3012 = vadd.f32 %v2627, %v3011
    %v3013 = vpop.f32.mrb[0].mxu0
    %3014 = vmatprep.mubr.f32.mxu0 %v2141
    %3015 = vmatmul.mubr.f32.gmra.mrb[0].mxu0 %v2077
    %v3016 = vpop.f32.mrb[0].mxu0
    %v3017 = vadd.f32 %v2632, %v3016
    %v3018 = vpop.f32.mrb[0].mxu0
    %3019 = vmatprep.mubr.f32.mxu0 %v2142
    %3020 = vmatmul.mubr.f32.gmra.mrb[0].mxu0 %v2078
    %v3021 = vpop.f32.mrb[0].mxu0
    %v3022 = vadd.f32 %v2637, %v3021
    %v3023 = vpop.f32.mrb[0].mxu0
    %3024 = vmatprep.mubr.f32.mxu0 %v2143
    %3025 = vmatmul.mubr.f32.gmra.mrb[0].mxu0 %v2079
    %v3026 = vpop.f32.mrb[0].mxu0
    %v3027 = vadd.f32 %v2642, %v3026
    %v3028 = vpop.f32.mrb[0].mxu0
    %3029 = vmatprep.mubr.f32.mxu0 %v2144
    %3030 = vmatmul.mubr.f32.gmra.mrb[0].mxu0 %v2080
    %v3031 = vpop.f32.mrb[0].mxu0
    %v3032 = vadd.f32 %v2647, %v3031
    %v3033 = vpop.f32.mrb[0].mxu0
    %3034 = vmatprep.mubr.f32.mxu0 %v2145
    %3035 = vmatmul.mubr.f32.gmra.mrb[0].mxu0 %v2081
    %v3036 = vpop.f32.mrb[0].mxu0
    %v3037 = vadd.f32 %v2652, %v3036
    %v3038 = vpop.f32.mrb[0].mxu0
    %3039 = vmatprep.mubr.f32.mxu0 %v2146
    %3040 = vmatmul.mubr.f32.gmra.mrb[0].mxu0 %v2082
    %v3041 = vpop.f32.mrb[0].mxu0
    %v3042 = vadd.f32 %v2657, %v3041
    %v3043 = vpop.f32.mrb[0].mxu0
    %3044 = vmatprep.mubr.f32.mxu0 %v2147
    %3045 = vmatmul.mubr.f32.gmra.mrb[0].mxu0 %v2083
    %v3046 = vpop.f32.mrb[0].mxu0
    %v3047 = vadd.f32 %v2662, %v3046
    %v3048 = vpop.f32.mrb[0].mxu0
    %3049 = vmatprep.mubr.f32.mxu0 %v2148
    %3050 = vmatmul.mubr.f32.gmra.mrb[0].mxu0 %v2084
    %v3051 = vpop.f32.mrb[0].mxu0
    %v3052 = vadd.f32 %v2667, %v3051
    %v3053 = vpop.f32.mrb[0].mxu0
    %3054 = vmatprep.mubr.f32.mxu0 %v2149
    %3055 = vmatmul.mubr.f32.gmra.mrb[0].mxu0 %v2085
    %v3056 = vpop.f32.mrb[0].mxu0
    %v3057 = vadd.f32 %v2672, %v3056
    %v3058 = vpop.f32.mrb[0].mxu0
    %3059 = vmatprep.mubr.f32.mxu0 %v2150
    %3060 = vmatmul.mubr.f32.gmra.mrb[0].mxu0 %v2086
    %v3061 = vpop.f32.mrb[0].mxu0
    %v3062 = vadd.f32 %v2677, %v3061
    %v3063 = vpop.f32.mrb[0].mxu0
    %3064 = vmatprep.mubr.f32.mxu0 %v2151
    %3065 = vmatmul.mubr.f32.gmra.mrb[0].mxu0 %v2087
    %v3066 = vpop.f32.mrb[0].mxu0
    %v3067 = vadd.f32 %v2682, %v3066
    %v3068 = vpop.f32.mrb[0].mxu0
    %3069 = vmatprep.mubr.f32.mxu0 %v2152
    %3070 = vmatmul.mubr.f32.gmra.mrb[0].mxu0 %v2088
    %v3071 = vpop.f32.mrb[0].mxu0
    %v3072 = vadd.f32 %v2687, %v3071
    %v3073 = vpop.f32.mrb[0].mxu0
    %3074 = vmatprep.mubr.f32.mxu0 %v2153
    %3075 = vmatmul.mubr.f32.gmra.mrb[0].mxu0 %v2089
    %v3076 = vpop.f32.mrb[0].mxu0
    %v3077 = vadd.f32 %v2692, %v3076
    %v3078 = vpop.f32.mrb[0].mxu0
    %3079 = vmatprep.mubr.f32.mxu0 %v2154
    %3080 = vmatmul.mubr.f32.gmra.mrb[0].mxu0 %v2090
    %v3081 = vpop.f32.mrb[0].mxu0
    %v3082 = vadd.f32 %v2697, %v3081
    %v3083 = vpop.f32.mrb[0].mxu0
    %3084 = vmatprep.mubr.f32.mxu0 %v2155
    %3085 = vmatmul.mubr.f32.gmra.mrb[0].mxu0 %v2091
    %v3086 = vpop.f32.mrb[0].mxu0
    %v3087 = vadd.f32 %v2702, %v3086
    %v3088 = vpop.f32.mrb[0].mxu0
    %3089 = vmatprep.mubr.f32.mxu0 %v2156
    %3090 = vmatmul.mubr.f32.gmra.mrb[0].mxu0 %v2092
    %v3091 = vpop.f32.mrb[0].mxu0
    %v3092 = vadd.f32 %v2707, %v3091
    %v3093 = vpop.f32.mrb[0].mxu0
    %3094 = vmatprep.mubr.f32.mxu0 %v2157
    %3095 = vmatmul.mubr.f32.gmra.mrb[0].mxu0 %v2093
    %v3096 = vpop.f32.mrb[0].mxu0
    %v3097 = vadd.f32 %v2712, %v3096
    %v3098 = vpop.f32.mrb[0].mxu0
    %3099 = vmatprep.mubr.f32.mxu0 %v2158
    %3100 = vmatmul.mubr.f32.gmra.mrb[0].mxu0 %v2094
    %v3101 = vpop.f32.mrb[0].mxu0
    %v3102 = vadd.f32 %v2717, %v3101
    %v3103 = vpop.f32.mrb[0].mxu0
    %3104 = vmatprep.mubr.f32.mxu0 %v2159
    %3105 = vmatmul.mubr.f32.gmra.mrb[0].mxu0 %v2095
    %v3106 = vpop.f32.mrb[0].mxu0
    %v3107 = vadd.f32 %v2722, %v3106
    %v3108 = vpop.f32.mrb[0].mxu0
    %3109 = vmatprep.mubr.f32.mxu0 %v2160
    %3110 = vmatmul.mubr.f32.gmra.mrb[0].mxu0 %v2096
    %v3111 = vpop.f32.mrb[0].mxu0
    %v3112 = vadd.f32 %v2727, %v3111
    %v3113 = vpop.f32.mrb[0].mxu0
    %3114 = vmatprep.mubr.f32.mxu0 %v2161
    %3115 = vmatmul.mubr.f32.gmra.mrb[0].mxu0 %v2097
    %v3116 = vpop.f32.mrb[0].mxu0
    %v3117 = vadd.f32 %v2732, %v3116
    %v3118 = vpop.f32.mrb[0].mxu0
    %3119 = vmatprep.mubr.f32.mxu0 %v2162
    %3120 = vmatmul.mubr.f32.gmra.mrb[0].mxu0 %v2098
    %v3121 = vpop.f32.mrb[0].mxu0
    %v3122 = vadd.f32 %v2737, %v3121
    %v3123 = vpop.f32.mrb[0].mxu0
    %3124 = vmatprep.mubr.f32.mxu0 %v2163
    %3125 = vmatmul.mubr.f32.gmra.mrb[0].mxu0 %v2099
    %v3126 = vpop.f32.mrb[0].mxu0
    %v3127 = vadd.f32 %v2742, %v3126
    %v3128 = vpop.f32.mrb[0].mxu0
    %3129 = vmatprep.mubr.f32.mxu0 %v2164
    %3130 = vmatmul.mubr.f32.gmra.mrb[0].mxu0 %v2100
    %v3131 = vpop.f32.mrb[0].mxu0
    %v3132 = vadd.f32 %v2747, %v3131
    %v3133 = vpop.f32.mrb[0].mxu0
    %3134 = vmatprep.mubr.f32.mxu0 %v2165
    %3135 = vmatmul.mubr.f32.gmra.mrb[0].mxu0 %v2101
    %v3136 = vpop.f32.mrb[0].mxu0
    %v3137 = vadd.f32 %v2752, %v3136
    %v3138 = vpop.f32.mrb[0].mxu0
    %3139 = vmatprep.mubr.f32.mxu0 %v2166
    %3140 = vmatmul.mubr.f32.gmra.mrb[0].mxu0 %v2102
    %v3141 = vpop.f32.mrb[0].mxu0
    %v3142 = vadd.f32 %v2757, %v3141
    %v3143 = vpop.f32.mrb[0].mxu0
    %3144 = vmatprep.mubr.f32.mxu0 %v2167
    %3145 = vmatmul.mubr.f32.gmra.mrb[0].mxu0 %v2103
    %v3146 = vpop.f32.mrb[0].mxu0
    %v3147 = vadd.f32 %v2762, %v3146
    %v3148 = vpop.f32.mrb[0].mxu0
    %3149 = vmatprep.mubr.f32.mxu0 %v2168
    %3150 = vmatmul.mubr.f32.gmra.mrb[0].mxu0 %v2104
    %v3151 = vpop.f32.mrb[0].mxu0
    %v3152 = vadd.f32 %v2767, %v3151
    %v3153 = vpop.f32.mrb[0].mxu0
    %3154 = vmatprep.mubr.f32.mxu0 %v2169
    %3155 = vmatmul.mubr.f32.gmra.mrb[0].mxu0 %v2105
    %v3156 = vpop.f32.mrb[0].mxu0
    %v3157 = vadd.f32 %v2772, %v3156
    %v3158 = vpop.f32.mrb[0].mxu0
    %3159 = vmatprep.mubr.f32.mxu0 %v2170
    %3160 = vmatmul.mubr.f32.gmra.mrb[0].mxu0 %v2106
    %v3161 = vpop.f32.mrb[0].mxu0
    %v3162 = vadd.f32 %v2777, %v3161
    %v3163 = vpop.f32.mrb[0].mxu0
    %3164 = vmatprep.mubr.f32.mxu0 %v2171
    %3165 = vmatmul.mubr.f32.gmra.mrb[0].mxu0 %v2107
    %v3166 = vpop.f32.mrb[0].mxu0
    %v3167 = vadd.f32 %v2782, %v3166
    %v3168 = vpop.f32.mrb[0].mxu0
    %3169 = vmatprep.mubr.f32.mxu0 %v2172
    %3170 = vmatmul.mubr.f32.gmra.mrb[0].mxu0 %v2108
    %v3171 = vpop.f32.mrb[0].mxu0
    %v3172 = vadd.f32 %v2787, %v3171
    %v3173 = vpop.f32.mrb[0].mxu0
    %3174 = vmatprep.mubr.f32.mxu0 %v2173
    %3175 = vmatmul.mubr.f32.gmra.mrb[0].mxu0 %v2109
    %v3176 = vpop.f32.mrb[0].mxu0
    %v3177 = vadd.f32 %v2792, %v3176
    %v3178 = vpop.f32.mrb[0].mxu0
    %3179 = vmatprep.mubr.f32.mxu0 %v2174
    %3180 = vmatmul.mubr.f32.gmra.mrb[0].mxu0 %v2110
    %v3181 = vpop.f32.mrb[0].mxu0
    %v3182 = vadd.f32 %v2797, %v3181
    %v3183 = vpop.f32.mrb[0].mxu0
    %3184 = vmatprep.mubr.f32.mxu0 %v2175
    %3185 = vmatmul.mubr.f32.gmra.mrb[0].mxu0 %v2111
    %v3186 = vpop.f32.mrb[0].mxu0
    %v3187 = vadd.f32 %v2802, %v3186
    %v3188 = vpop.f32.mrb[0].mxu0
    %3189 = vmatprep.mubr.f32.mxu0 %v2176
    %3190 = vmatmul.mubr.f32.gmra.mrb[0].mxu0 %v2112
    %v3191 = vpop.f32.mrb[0].mxu0
    %v3192 = vadd.f32 %v2807, %v3191
    %v3193 = vpop.f32.mrb[0].mxu0
    %3194 = vmatprep.mubr.f32.mxu0 %v2177
    %3195 = vmatmul.mubr.f32.gmra.mrb[0].mxu0 %v2113
    %v3196 = vpop.f32.mrb[0].mxu0
    %v3197 = vadd.f32 %v2812, %v3196
    %v3198 = vpop.f32.mrb[0].mxu0
    %3199 = vmatprep.mubr.f32.mxu0 %v2178
    %3200 = vmatmul.mubr.f32.gmra.mrb[0].mxu0 %v2114
    %v3201 = vpop.f32.mrb[0].mxu0
    %v3202 = vadd.f32 %v2817, %v3201
    %v3203 = vpop.f32.mrb[0].mxu0
    %3204 = vmatprep.mubr.f32.mxu0 %v2179
    %3205 = vmatmul.mubr.f32.gmra.mrb[0].mxu0 %v2115
    %v3206 = vpop.f32.mrb[0].mxu0
    %v3207 = vadd.f32 %v2822, %v3206
    %v3208 = vpop.f32.mrb[0].mxu0
    %3209 = vmatprep.mubr.f32.mxu0 %v2180
    %3210 = vmatmul.mubr.f32.gmra.mrb[0].mxu0 %v2116
    %v3211 = vpop.f32.mrb[0].mxu0
    %v3212 = vadd.f32 %v2827, %v3211
    %v3213 = vpop.f32.mrb[0].mxu0
    %3214 = vdwg.mxu0
    %3215 = vmatprep.subr.mxu0 0.0
    %3216 = vmatpush1.msra.mxu0 %v2245
    %3217 = vmatprep.subr.mxu0 0.0
    %3218 = vmatpush1.msra.mxu0 %v2246
    %3219 = vmatprep.subr.mxu0 0.0
    %3220 = vmatpush1.msra.mxu0 %v2247
    %3221 = vmatprep.subr.mxu0 0.0
    %3222 = vmatpush1.msra.mxu0 %v2248
    %3223 = vmatprep.subr.mxu0 0.0
    %3224 = vmatpush1.msra.mxu0 %v2249
    %3225 = vmatprep.subr.mxu0 0.0
    %3226 = vmatpush1.msra.mxu0 %v2250
    %3227 = vmatprep.subr.mxu0 0.0
    %3228 = vmatpush1.msra.mxu0 %v2251
    %3229 = vmatprep.subr.mxu0 0.0
    %3230 = vmatpush1.msra.mxu0 %v2252
    %3231 = vmatprep.subr.mxu0 0.0
    %3232 = vmatpush1.msra.mxu0 0.0
    %3233 = vmatprep.subr.mxu0 0.0
    %3234 = vmatpush1.msra.mxu0 0.0
    %3235 = vmatprep.subr.mxu0 0.0
    %3236 = vmatpush1.msra.mxu0 0.0
    %3237 = vmatprep.subr.mxu0 0.0
    %3238 = vmatpush1.msra.mxu0 0.0
    %3239 = vmatprep.subr.mxu0 0.0
    %3240 = vmatpush1.msra.mxu0 0.0
    %3241 = vmatprep.subr.mxu0 0.0
    %3242 = vmatpush1.msra.mxu0 0.0
    %3243 = vmatprep.subr.mxu0 0.0
    %3244 = vmatpush1.msra.mxu0 0.0
    %3245 = vmatprep.subr.mxu0 0.0
    %3246 = vmatpush1.msra.mxu0 0.0
    %3247 = vmatprep.subr.mxu0 0.0
    %3248 = vmatpush1.msra.mxu0 0.0
    %3249 = vmatprep.subr.mxu0 0.0
    %3250 = vmatpush1.msra.mxu0 0.0
    %3251 = vmatprep.subr.mxu0 0.0
    %3252 = vmatpush1.msra.mxu0 0.0
    %3253 = vmatprep.subr.mxu0 0.0
    %3254 = vmatpush1.msra.mxu0 0.0
    %3255 = vmatprep.subr.mxu0 0.0
    %3256 = vmatpush1.msra.mxu0 0.0
    %3257 = vmatprep.subr.mxu0 0.0
    %3258 = vmatpush1.msra.mxu0 0.0
    %3259 = vmatprep.subr.mxu0 0.0
    %3260 = vmatpush1.msra.mxu0 0.0
    %3261 = vmatprep.subr.mxu0 0.0
    %3262 = vmatpush1.msra.mxu0 0.0
    %3263 = vmatprep.subr.mxu0 0.0
    %3264 = vmatpush1.msra.mxu0 0.0
    %3265 = vmatprep.subr.mxu0 0.0
    %3266 = vmatpush1.msra.mxu0 0.0
    %3267 = vmatprep.subr.mxu0 0.0
    %3268 = vmatpush1.msra.mxu0 0.0
    %3269 = vmatprep.subr.mxu0 0.0
    %3270 = vmatpush1.msra.mxu0 0.0
    %3271 = vmatprep.subr.mxu0 0.0
    %3272 = vmatpush1.msra.mxu0 0.0
    %3273 = vmatprep.subr.mxu0 0.0
    %3274 = vmatpush1.msra.mxu0 0.0
    %3275 = vmatprep.subr.mxu0 0.0
    %3276 = vmatpush1.msra.mxu0 0.0
    %3277 = vmatprep.subr.mxu0 0.0
    %3278 = vmatpush1.msra.mxu0 0.0
    %3279 = vmatprep.mubr.f32.mxu0 0.0
    %3280 = vmatmul.mubr.f32.gmra.mrb[0].mxu0 %v2254
    %v3281 = vpop.f32.mrb[0].mxu0
    %v3282 = vadd.f32 %v2897, %v3281
    %v3283 = vpop.f32.mrb[0].mxu0
    %3284 = vmatprep.mubr.f32.mxu0 0.0
    %3285 = vmatmul.mubr.f32.gmra.mrb[0].mxu0 %v2257
    %v3286 = vpop.f32.mrb[0].mxu0
    %v3287 = vadd.f32 %v2902, %v3286
    %v3288 = vpop.f32.mrb[0].mxu0
    %3289 = vmatprep.mubr.f32.mxu0 0.0
    %3290 = vmatmul.mubr.f32.gmra.mrb[0].mxu0 %v2260
    %v3291 = vpop.f32.mrb[0].mxu0
    %v3292 = vadd.f32 %v2907, %v3291
    %v3293 = vpop.f32.mrb[0].mxu0
    %3294 = vmatprep.mubr.f32.mxu0 0.0
    %3295 = vmatmul.mubr.f32.gmra.mrb[0].mxu0 %v2263
    %v3296 = vpop.f32.mrb[0].mxu0
    %v3297 = vadd.f32 %v2912, %v3296
    %v3298 = vpop.f32.mrb[0].mxu0
    %3299 = vmatprep.mubr.f32.mxu0 0.0
    %3300 = vmatmul.mubr.f32.gmra.mrb[0].mxu0 %v2266
    %v3301 = vpop.f32.mrb[0].mxu0
    %v3302 = vadd.f32 %v2917, %v3301
    %v3303 = vpop.f32.mrb[0].mxu0
    %3304 = vmatprep.mubr.f32.mxu0 0.0
    %3305 = vmatmul.mubr.f32.gmra.mrb[0].mxu0 %v2269
    %v3306 = vpop.f32.mrb[0].mxu0
    %v3307 = vadd.f32 %v2922, %v3306
    %v3308 = vpop.f32.mrb[0].mxu0
    %3309 = vmatprep.mubr.f32.mxu0 0.0
    %3310 = vmatmul.mubr.f32.gmra.mrb[0].mxu0 %v2272
    %v3311 = vpop.f32.mrb[0].mxu0
    %v3312 = vadd.f32 %v2927, %v3311
    %v3313 = vpop.f32.mrb[0].mxu0
    %3314 = vmatprep.mubr.f32.mxu0 0.0
    %3315 = vmatmul.mubr.f32.gmra.mrb[0].mxu0 %v2275
    %v3316 = vpop.f32.mrb[0].mxu0
    %v3317 = vadd.f32 %v2932, %v3316
    %v3318 = vpop.f32.mrb[0].mxu0
    %3319 = vmatprep.mubr.f32.mxu0 0.0
    %3320 = vmatmul.mubr.f32.gmra.mrb[0].mxu0 %v2278
    %v3321 = vpop.f32.mrb[0].mxu0
    %v3322 = vadd.f32 %v2937, %v3321
    %v3323 = vpop.f32.mrb[0].mxu0
    %3324 = vmatprep.mubr.f32.mxu0 0.0
    %3325 = vmatmul.mubr.f32.gmra.mrb[0].mxu0 %v2281
    %v3326 = vpop.f32.mrb[0].mxu0
    %v3327 = vadd.f32 %v2942, %v3326
    %v3328 = vpop.f32.mrb[0].mxu0
    %3329 = vmatprep.mubr.f32.mxu0 0.0
    %3330 = vmatmul.mubr.f32.gmra.mrb[0].mxu0 %v2284
    %v3331 = vpop.f32.mrb[0].mxu0
    %v3332 = vadd.f32 %v2947, %v3331
    %v3333 = vpop.f32.mrb[0].mxu0
    %3334 = vmatprep.mubr.f32.mxu0 0.0
    %3335 = vmatmul.mubr.f32.gmra.mrb[0].mxu0 %v2287
    %v3336 = vpop.f32.mrb[0].mxu0
    %v3337 = vadd.f32 %v2952, %v3336
    %v3338 = vpop.f32.mrb[0].mxu0
    %3339 = vmatprep.mubr.f32.mxu0 0.0
    %3340 = vmatmul.mubr.f32.gmra.mrb[0].mxu0 %v2290
    %v3341 = vpop.f32.mrb[0].mxu0
    %v3342 = vadd.f32 %v2957, %v3341
    %v3343 = vpop.f32.mrb[0].mxu0
    %3344 = vmatprep.mubr.f32.mxu0 0.0
    %3345 = vmatmul.mubr.f32.gmra.mrb[0].mxu0 %v2293
    %v3346 = vpop.f32.mrb[0].mxu0
    %v3347 = vadd.f32 %v2962, %v3346
    %v3348 = vpop.f32.mrb[0].mxu0
    %3349 = vmatprep.mubr.f32.mxu0 0.0
    %3350 = vmatmul.mubr.f32.gmra.mrb[0].mxu0 %v2296
    %v3351 = vpop.f32.mrb[0].mxu0
    %v3352 = vadd.f32 %v2967, %v3351
    %v3353 = vpop.f32.mrb[0].mxu0
    %3354 = vmatprep.mubr.f32.mxu0 0.0
    %3355 = vmatmul.mubr.f32.gmra.mrb[0].mxu0 %v2299
    %v3356 = vpop.f32.mrb[0].mxu0
    %v3357 = vadd.f32 %v2972, %v3356
    %v3358 = vpop.f32.mrb[0].mxu0
    %3359 = vmatprep.mubr.f32.mxu0 0.0
    %3360 = vmatmul.mubr.f32.gmra.mrb[0].mxu0 %v2302
    %v3361 = vpop.f32.mrb[0].mxu0
    %v3362 = vadd.f32 %v2977, %v3361
    %v3363 = vpop.f32.mrb[0].mxu0
    %3364 = vmatprep.mubr.f32.mxu0 0.0
    %3365 = vmatmul.mubr.f32.gmra.mrb[0].mxu0 %v2305
    %v3366 = vpop.f32.mrb[0].mxu0
    %v3367 = vadd.f32 %v2982, %v3366
    %v3368 = vpop.f32.mrb[0].mxu0
    %3369 = vmatprep.mubr.f32.mxu0 0.0
    %3370 = vmatmul.mubr.f32.gmra.mrb[0].mxu0 %v2308
    %v3371 = vpop.f32.mrb[0].mxu0
    %v3372 = vadd.f32 %v2987, %v3371
    %v3373 = vpop.f32.mrb[0].mxu0
    %3374 = vmatprep.mubr.f32.mxu0 0.0
    %3375 = vmatmul.mubr.f32.gmra.mrb[0].mxu0 %v2311
    %v3376 = vpop.f32.mrb[0].mxu0
    %v3377 = vadd.f32 %v2992, %v3376
    %v3378 = vpop.f32.mrb[0].mxu0
    %3379 = vmatprep.mubr.f32.mxu0 0.0
    %3380 = vmatmul.mubr.f32.gmra.mrb[0].mxu0 %v2314
    %v3381 = vpop.f32.mrb[0].mxu0
    %v3382 = vadd.f32 %v2997, %v3381
    %v3383 = vpop.f32.mrb[0].mxu0
    %3384 = vmatprep.mubr.f32.mxu0 0.0
    %3385 = vmatmul.mubr.f32.gmra.mrb[0].mxu0 %v2317
    %v3386 = vpop.f32.mrb[0].mxu0
    %v3387 = vadd.f32 %v3002, %v3386
    %v3388 = vpop.f32.mrb[0].mxu0
    %3389 = vmatprep.mubr.f32.mxu0 0.0
    %3390 = vmatmul.mubr.f32.gmra.mrb[0].mxu0 %v2320
    %v3391 = vpop.f32.mrb[0].mxu0
    %v3392 = vadd.f32 %v3007, %v3391
    %v3393 = vpop.f32.mrb[0].mxu0
    %3394 = vmatprep.mubr.f32.mxu0 0.0
    %3395 = vmatmul.mubr.f32.gmra.mrb[0].mxu0 %v2323
    %v3396 = vpop.f32.mrb[0].mxu0
    %v3397 = vadd.f32 %v3012, %v3396
    %v3398 = vpop.f32.mrb[0].mxu0
    %3399 = vmatprep.mubr.f32.mxu0 0.0
    %3400 = vmatmul.mubr.f32.gmra.mrb[0].mxu0 %v2326
    %v3401 = vpop.f32.mrb[0].mxu0
    %v3402 = vadd.f32 %v3017, %v3401
    %v3403 = vpop.f32.mrb[0].mxu0
    %3404 = vmatprep.mubr.f32.mxu0 0.0
    %3405 = vmatmul.mubr.f32.gmra.mrb[0].mxu0 %v2329
    %v3406 = vpop.f32.mrb[0].mxu0
    %v3407 = vadd.f32 %v3022, %v3406
    %v3408 = vpop.f32.mrb[0].mxu0
    %3409 = vmatprep.mubr.f32.mxu0 0.0
    %3410 = vmatmul.mubr.f32.gmra.mrb[0].mxu0 %v2332
    %v3411 = vpop.f32.mrb[0].mxu0
    %v3412 = vadd.f32 %v3027, %v3411
    %v3413 = vpop.f32.mrb[0].mxu0
    %3414 = vmatprep.mubr.f32.mxu0 0.0
    %3415 = vmatmul.mubr.f32.gmra.mrb[0].mxu0 %v2335
    %v3416 = vpop.f32.mrb[0].mxu0
    %v3417 = vadd.f32 %v3032, %v3416
    %v3418 = vpop.f32.mrb[0].mxu0
    %3419 = vmatprep.mubr.f32.mxu0 0.0
    %3420 = vmatmul.mubr.f32.gmra.mrb[0].mxu0 %v2338
    %v3421 = vpop.f32.mrb[0].mxu0
    %v3422 = vadd.f32 %v3037, %v3421
    %v3423 = vpop.f32.mrb[0].mxu0
    %3424 = vmatprep.mubr.f32.mxu0 0.0
    %3425 = vmatmul.mubr.f32.gmra.mrb[0].mxu0 %v2341
    %v3426 = vpop.f32.mrb[0].mxu0
    %v3427 = vadd.f32 %v3042, %v3426
    %v3428 = vpop.f32.mrb[0].mxu0
    %3429 = vmatprep.mubr.f32.mxu0 0.0
    %3430 = vmatmul.mubr.f32.gmra.mrb[0].mxu0 %v2344
    %v3431 = vpop.f32.mrb[0].mxu0
    %v3432 = vadd.f32 %v3047, %v3431
    %v3433 = vpop.f32.mrb[0].mxu0
    %3434 = vmatprep.mubr.f32.mxu0 0.0
    %3435 = vmatmul.mubr.f32.gmra.mrb[0].mxu0 %v2347
    %v3436 = vpop.f32.mrb[0].mxu0
    %v3437 = vadd.f32 %v3052, %v3436
    %v3438 = vpop.f32.mrb[0].mxu0
    %3439 = vmatprep.mubr.f32.mxu0 0.0
    %3440 = vmatmul.mubr.f32.gmra.mrb[0].mxu0 %v2350
    %v3441 = vpop.f32.mrb[0].mxu0
    %v3442 = vadd.f32 %v3057, %v3441
    %v3443 = vpop.f32.mrb[0].mxu0
    %3444 = vmatprep.mubr.f32.mxu0 0.0
    %3445 = vmatmul.mubr.f32.gmra.mrb[0].mxu0 %v2353
    %v3446 = vpop.f32.mrb[0].mxu0
    %v3447 = vadd.f32 %v3062, %v3446
    %v3448 = vpop.f32.mrb[0].mxu0
    %3449 = vmatprep.mubr.f32.mxu0 0.0
    %3450 = vmatmul.mubr.f32.gmra.mrb[0].mxu0 %v2356
    %v3451 = vpop.f32.mrb[0].mxu0
    %v3452 = vadd.f32 %v3067, %v3451
    %v3453 = vpop.f32.mrb[0].mxu0
    %3454 = vmatprep.mubr.f32.mxu0 0.0
    %3455 = vmatmul.mubr.f32.gmra.mrb[0].mxu0 %v2359
    %v3456 = vpop.f32.mrb[0].mxu0
    %v3457 = vadd.f32 %v3072, %v3456
    %v3458 = vpop.f32.mrb[0].mxu0
    %3459 = vmatprep.mubr.f32.mxu0 0.0
    %3460 = vmatmul.mubr.f32.gmra.mrb[0].mxu0 %v2362
    %v3461 = vpop.f32.mrb[0].mxu0
    %v3462 = vadd.f32 %v3077, %v3461
    %v3463 = vpop.f32.mrb[0].mxu0
    %3464 = vmatprep.mubr.f32.mxu0 0.0
    %3465 = vmatmul.mubr.f32.gmra.mrb[0].mxu0 %v2365
    %v3466 = vpop.f32.mrb[0].mxu0
    %v3467 = vadd.f32 %v3082, %v3466
    %v3468 = vpop.f32.mrb[0].mxu0
    %3469 = vmatprep.mubr.f32.mxu0 0.0
    %3470 = vmatmul.mubr.f32.gmra.mrb[0].mxu0 %v2368
    %v3471 = vpop.f32.mrb[0].mxu0
    %v3472 = vadd.f32 %v3087, %v3471
    %v3473 = vpop.f32.mrb[0].mxu0
    %3474 = vmatprep.mubr.f32.mxu0 0.0
    %3475 = vmatmul.mubr.f32.gmra.mrb[0].mxu0 %v2371
    %v3476 = vpop.f32.mrb[0].mxu0
    %v3477 = vadd.f32 %v3092, %v3476
    %v3478 = vpop.f32.mrb[0].mxu0
    %3479 = vmatprep.mubr.f32.mxu0 0.0
    %3480 = vmatmul.mubr.f32.gmra.mrb[0].mxu0 %v2374
    %v3481 = vpop.f32.mrb[0].mxu0
    %v3482 = vadd.f32 %v3097, %v3481
    %v3483 = vpop.f32.mrb[0].mxu0
    %3484 = vmatprep.mubr.f32.mxu0 0.0
    %3485 = vmatmul.mubr.f32.gmra.mrb[0].mxu0 %v2377
    %v3486 = vpop.f32.mrb[0].mxu0
    %v3487 = vadd.f32 %v3102, %v3486
    %v3488 = vpop.f32.mrb[0].mxu0
    %3489 = vmatprep.mubr.f32.mxu0 0.0
    %3490 = vmatmul.mubr.f32.gmra.mrb[0].mxu0 %v2380
    %v3491 = vpop.f32.mrb[0].mxu0
    %v3492 = vadd.f32 %v3107, %v3491
    %v3493 = vpop.f32.mrb[0].mxu0
    %3494 = vmatprep.mubr.f32.mxu0 0.0
    %3495 = vmatmul.mubr.f32.gmra.mrb[0].mxu0 %v2383
    %v3496 = vpop.f32.mrb[0].mxu0
    %v3497 = vadd.f32 %v3112, %v3496
    %v3498 = vpop.f32.mrb[0].mxu0
    %3499 = vmatprep.mubr.f32.mxu0 0.0
    %3500 = vmatmul.mubr.f32.gmra.mrb[0].mxu0 %v2386
    %v3501 = vpop.f32.mrb[0].mxu0
    %v3502 = vadd.f32 %v3117, %v3501
    %v3503 = vpop.f32.mrb[0].mxu0
    %3504 = vmatprep.mubr.f32.mxu0 0.0
    %3505 = vmatmul.mubr.f32.gmra.mrb[0].mxu0 %v2389
    %v3506 = vpop.f32.mrb[0].mxu0
    %v3507 = vadd.f32 %v3122, %v3506
    %v3508 = vpop.f32.mrb[0].mxu0
    %3509 = vmatprep.mubr.f32.mxu0 0.0
    %3510 = vmatmul.mubr.f32.gmra.mrb[0].mxu0 %v2392
    %v3511 = vpop.f32.mrb[0].mxu0
    %v3512 = vadd.f32 %v3127, %v3511
    %v3513 = vpop.f32.mrb[0].mxu0
    %3514 = vmatprep.mubr.f32.mxu0 0.0
    %3515 = vmatmul.mubr.f32.gmra.mrb[0].mxu0 %v2395
    %v3516 = vpop.f32.mrb[0].mxu0
    %v3517 = vadd.f32 %v3132, %v3516
    %v3518 = vpop.f32.mrb[0].mxu0
    %3519 = vmatprep.mubr.f32.mxu0 0.0
    %3520 = vmatmul.mubr.f32.gmra.mrb[0].mxu0 %v2398
    %v3521 = vpop.f32.mrb[0].mxu0
    %v3522 = vadd.f32 %v3137, %v3521
    %v3523 = vpop.f32.mrb[0].mxu0
    %3524 = vmatprep.mubr.f32.mxu0 0.0
    %3525 = vmatmul.mubr.f32.gmra.mrb[0].mxu0 %v2401
    %v3526 = vpop.f32.mrb[0].mxu0
    %v3527 = vadd.f32 %v3142, %v3526
    %v3528 = vpop.f32.mrb[0].mxu0
    %3529 = vmatprep.mubr.f32.mxu0 0.0
    %3530 = vmatmul.mubr.f32.gmra.mrb[0].mxu0 %v2404
    %v3531 = vpop.f32.mrb[0].mxu0
    %v3532 = vadd.f32 %v3147, %v3531
    %v3533 = vpop.f32.mrb[0].mxu0
    %3534 = vmatprep.mubr.f32.mxu0 0.0
    %3535 = vmatmul.mubr.f32.gmra.mrb[0].mxu0 %v2407
    %v3536 = vpop.f32.mrb[0].mxu0
    %v3537 = vadd.f32 %v3152, %v3536
    %v3538 = vpop.f32.mrb[0].mxu0
    %3539 = vmatprep.mubr.f32.mxu0 0.0
    %3540 = vmatmul.mubr.f32.gmra.mrb[0].mxu0 %v2410
    %v3541 = vpop.f32.mrb[0].mxu0
    %v3542 = vadd.f32 %v3157, %v3541
    %v3543 = vpop.f32.mrb[0].mxu0
    %3544 = vmatprep.mubr.f32.mxu0 0.0
    %3545 = vmatmul.mubr.f32.gmra.mrb[0].mxu0 %v2413
    %v3546 = vpop.f32.mrb[0].mxu0
    %v3547 = vadd.f32 %v3162, %v3546
    %v3548 = vpop.f32.mrb[0].mxu0
    %3549 = vmatprep.mubr.f32.mxu0 0.0
    %3550 = vmatmul.mubr.f32.gmra.mrb[0].mxu0 %v2416
    %v3551 = vpop.f32.mrb[0].mxu0
    %v3552 = vadd.f32 %v3167, %v3551
    %v3553 = vpop.f32.mrb[0].mxu0
    %3554 = vmatprep.mubr.f32.mxu0 0.0
    %3555 = vmatmul.mubr.f32.gmra.mrb[0].mxu0 %v2419
    %v3556 = vpop.f32.mrb[0].mxu0
    %v3557 = vadd.f32 %v3172, %v3556
    %v3558 = vpop.f32.mrb[0].mxu0
    %3559 = vmatprep.mubr.f32.mxu0 0.0
    %3560 = vmatmul.mubr.f32.gmra.mrb[0].mxu0 %v2422
    %v3561 = vpop.f32.mrb[0].mxu0
    %v3562 = vadd.f32 %v3177, %v3561
    %v3563 = vpop.f32.mrb[0].mxu0
    %3564 = vmatprep.mubr.f32.mxu0 0.0
    %3565 = vmatmul.mubr.f32.gmra.mrb[0].mxu0 %v2425
    %v3566 = vpop.f32.mrb[0].mxu0
    %v3567 = vadd.f32 %v3182, %v3566
    %v3568 = vpop.f32.mrb[0].mxu0
    %3569 = vmatprep.mubr.f32.mxu0 0.0
    %3570 = vmatmul.mubr.f32.gmra.mrb[0].mxu0 %v2428
    %v3571 = vpop.f32.mrb[0].mxu0
    %v3572 = vadd.f32 %v3187, %v3571
    %v3573 = vpop.f32.mrb[0].mxu0
    %3574 = vmatprep.mubr.f32.mxu0 0.0
    %3575 = vmatmul.mubr.f32.gmra.mrb[0].mxu0 %v2431
    %v3576 = vpop.f32.mrb[0].mxu0
    %v3577 = vadd.f32 %v3192, %v3576
    %v3578 = vpop.f32.mrb[0].mxu0
    %3579 = vmatprep.mubr.f32.mxu0 0.0
    %3580 = vmatmul.mubr.f32.gmra.mrb[0].mxu0 %v2434
    %v3581 = vpop.f32.mrb[0].mxu0
    %v3582 = vadd.f32 %v3197, %v3581
    %v3583 = vpop.f32.mrb[0].mxu0
    %3584 = vmatprep.mubr.f32.mxu0 0.0
    %3585 = vmatmul.mubr.f32.gmra.mrb[0].mxu0 %v2437
    %v3586 = vpop.f32.mrb[0].mxu0
    %v3587 = vadd.f32 %v3202, %v3586
    %v3588 = vpop.f32.mrb[0].mxu0
    %3589 = vmatprep.mubr.f32.mxu0 0.0
    %3590 = vmatmul.mubr.f32.gmra.mrb[0].mxu0 %v2440
    %v3591 = vpop.f32.mrb[0].mxu0
    %v3592 = vadd.f32 %v3207, %v3591
    %v3593 = vpop.f32.mrb[0].mxu0
    %3594 = vmatprep.mubr.f32.mxu0 0.0
    %3595 = vmatmul.mubr.f32.gmra.mrb[0].mxu0 %v2443
    %v3596 = vpop.f32.mrb[0].mxu0
    %v3597 = vadd.f32 %v3212, %v3596
    %v3598 = vpop.f32.mrb[0].mxu0
    %3599 = vdwg.mxu0
    %v3600 = vmul.f32 %v3282, %v3282
    %v3601 = vmul.f32 %v3287, %v3287
    %v3602 = vmul.f32 %v3292, %v3292
    %v3603 = vmul.f32 %v3297, %v3297
    %v3604 = vmul.f32 %v3302, %v3302
    %v3605 = vmul.f32 %v3307, %v3307
    %v3606 = vmul.f32 %v3312, %v3312
    %v3607 = vmul.f32 %v3317, %v3317
    %v3608 = vmul.f32 %v3322, %v3322
    %v3609 = vmul.f32 %v3327, %v3327
    %v3610 = vmul.f32 %v3332, %v3332
    %v3611 = vmul.f32 %v3337, %v3337
    %v3612 = vmul.f32 %v3342, %v3342
    %v3613 = vmul.f32 %v3347, %v3347
    %v3614 = vmul.f32 %v3352, %v3352
    %v3615 = vmul.f32 %v3357, %v3357
    %v3616 = vmul.f32 %v3362, %v3362
    %v3617 = vmul.f32 %v3367, %v3367
    %v3618 = vmul.f32 %v3372, %v3372
    %v3619 = vmul.f32 %v3377, %v3377
    %v3620 = vmul.f32 %v3382, %v3382
    %v3621 = vmul.f32 %v3387, %v3387
    %v3622 = vmul.f32 %v3392, %v3392
    %v3623 = vmul.f32 %v3397, %v3397
    %v3624 = vmul.f32 %v3402, %v3402
    %v3625 = vmul.f32 %v3407, %v3407
    %v3626 = vmul.f32 %v3412, %v3412
    %v3627 = vmul.f32 %v3417, %v3417
    %v3628 = vmul.f32 %v3422, %v3422
    %v3629 = vmul.f32 %v3427, %v3427
    %v3630 = vmul.f32 %v3432, %v3432
    %v3631 = vmul.f32 %v3437, %v3437
    %v3632 = vmul.f32 %v3442, %v3442
    %v3633 = vmul.f32 %v3447, %v3447
    %v3634 = vmul.f32 %v3452, %v3452
    %v3635 = vmul.f32 %v3457, %v3457
    %v3636 = vmul.f32 %v3462, %v3462
    %v3637 = vmul.f32 %v3467, %v3467
    %v3638 = vmul.f32 %v3472, %v3472
    %v3639 = vmul.f32 %v3477, %v3477
    %v3640 = vmul.f32 %v3482, %v3482
    %v3641 = vmul.f32 %v3487, %v3487
    %v3642 = vmul.f32 %v3492, %v3492
    %v3643 = vmul.f32 %v3497, %v3497
    %v3644 = vmul.f32 %v3502, %v3502
    %v3645 = vmul.f32 %v3507, %v3507
    %v3646 = vmul.f32 %v3512, %v3512
    %v3647 = vmul.f32 %v3517, %v3517
    %v3648 = vmul.f32 %v3522, %v3522
    %v3649 = vmul.f32 %v3527, %v3527
    %v3650 = vmul.f32 %v3532, %v3532
    %v3651 = vmul.f32 %v3537, %v3537
    %v3652 = vmul.f32 %v3542, %v3542
    %v3653 = vmul.f32 %v3547, %v3547
    %v3654 = vmul.f32 %v3552, %v3552
    %v3655 = vmul.f32 %v3557, %v3557
    %v3656 = vmul.f32 %v3562, %v3562
    %v3657 = vmul.f32 %v3567, %v3567
    %v3658 = vmul.f32 %v3572, %v3572
    %v3659 = vmul.f32 %v3577, %v3577
    %v3660 = vmul.f32 %v3582, %v3582
    %v3661 = vmul.f32 %v3587, %v3587
    %v3662 = vmul.f32 %v3592, %v3592
    %v3663 = vmul.f32 %v3597, %v3597
    %3728 = vrot.lane.b32.xlu0 %v3600, 64
    %v3729 = vpop.permute.xlu0 %3728
    %3730 = vrot.lane.b32.xlu0 %v3601, 64
    %v3731 = vpop.permute.xlu0 %3730
    %3732 = vrot.lane.b32.xlu0 %v3602, 64
    %v3733 = vpop.permute.xlu0 %3732
    %3734 = vrot.lane.b32.xlu0 %v3603, 64
    %v3735 = vpop.permute.xlu0 %3734
    %3736 = vrot.lane.b32.xlu0 %v3604, 64
    %v3737 = vpop.permute.xlu0 %3736
    %3738 = vrot.lane.b32.xlu0 %v3605, 64
    %v3739 = vpop.permute.xlu0 %3738
    %3740 = vrot.lane.b32.xlu0 %v3606, 64
    %v3741 = vpop.permute.xlu0 %3740
    %3742 = vrot.lane.b32.xlu0 %v3607, 64
    %v3743 = vpop.permute.xlu0 %3742
    %3744 = vrot.lane.b32.xlu0 %v3608, 64
    %v3745 = vpop.permute.xlu0 %3744
    %3746 = vrot.lane.b32.xlu0 %v3609, 64
    %v3747 = vpop.permute.xlu0 %3746
    %3748 = vrot.lane.b32.xlu0 %v3610, 64
    %v3749 = vpop.permute.xlu0 %3748
    %3750 = vrot.lane.b32.xlu0 %v3611, 64
    %v3751 = vpop.permute.xlu0 %3750
    %3752 = vrot.lane.b32.xlu0 %v3612, 64
    %v3753 = vpop.permute.xlu0 %3752
    %3754 = vrot.lane.b32.xlu0 %v3613, 64
    %v3755 = vpop.permute.xlu0 %3754
    %3756 = vrot.lane.b32.xlu0 %v3614, 64
    %v3757 = vpop.permute.xlu0 %3756
    %3758 = vrot.lane.b32.xlu0 %v3615, 64
    %v3759 = vpop.permute.xlu0 %3758
    %3760 = vrot.lane.b32.xlu0 %v3616, 64
    %v3761 = vpop.permute.xlu0 %3760
    %3762 = vrot.lane.b32.xlu0 %v3617, 64
    %v3763 = vpop.permute.xlu0 %3762
    %3764 = vrot.lane.b32.xlu0 %v3618, 64
    %v3765 = vpop.permute.xlu0 %3764
    %3766 = vrot.lane.b32.xlu0 %v3619, 64
    %v3767 = vpop.permute.xlu0 %3766
    %3768 = vrot.lane.b32.xlu0 %v3620, 64
    %v3769 = vpop.permute.xlu0 %3768
    %3770 = vrot.lane.b32.xlu0 %v3621, 64
    %v3771 = vpop.permute.xlu0 %3770
    %3772 = vrot.lane.b32.xlu0 %v3622, 64
    %v3773 = vpop.permute.xlu0 %3772
    %3774 = vrot.lane.b32.xlu0 %v3623, 64
    %v3775 = vpop.permute.xlu0 %3774
    %3776 = vrot.lane.b32.xlu0 %v3624, 64
    %v3777 = vpop.permute.xlu0 %3776
    %3778 = vrot.lane.b32.xlu0 %v3625, 64
    %v3779 = vpop.permute.xlu0 %3778
    %3780 = vrot.lane.b32.xlu0 %v3626, 64
    %v3781 = vpop.permute.xlu0 %3780
    %3782 = vrot.lane.b32.xlu0 %v3627, 64
    %v3783 = vpop.permute.xlu0 %3782
    %3784 = vrot.lane.b32.xlu0 %v3628, 64
    %v3785 = vpop.permute.xlu0 %3784
    %3786 = vrot.lane.b32.xlu0 %v3629, 64
    %v3787 = vpop.permute.xlu0 %3786
    %3788 = vrot.lane.b32.xlu0 %v3630, 64
    %v3789 = vpop.permute.xlu0 %3788
    %3790 = vrot.lane.b32.xlu0 %v3631, 64
    %v3791 = vpop.permute.xlu0 %3790
    %3792 = vrot.lane.b32.xlu0 %v3632, 64
    %v3793 = vpop.permute.xlu0 %3792
    %3794 = vrot.lane.b32.xlu0 %v3633, 64
    %v3795 = vpop.permute.xlu0 %3794
    %3796 = vrot.lane.b32.xlu0 %v3634, 64
    %v3797 = vpop.permute.xlu0 %3796
    %3798 = vrot.lane.b32.xlu0 %v3635, 64
    %v3799 = vpop.permute.xlu0 %3798
    %3800 = vrot.lane.b32.xlu0 %v3636, 64
    %v3801 = vpop.permute.xlu0 %3800
    %3802 = vrot.lane.b32.xlu0 %v3637, 64
    %v3803 = vpop.permute.xlu0 %3802
    %3804 = vrot.lane.b32.xlu0 %v3638, 64
    %v3805 = vpop.permute.xlu0 %3804
    %3806 = vrot.lane.b32.xlu0 %v3639, 64
    %v3807 = vpop.permute.xlu0 %3806
    %3808 = vrot.lane.b32.xlu0 %v3640, 64
    %v3809 = vpop.permute.xlu0 %3808
    %3810 = vrot.lane.b32.xlu0 %v3641, 64
    %v3811 = vpop.permute.xlu0 %3810
    %3812 = vrot.lane.b32.xlu0 %v3642, 64
    %v3813 = vpop.permute.xlu0 %3812
    %3814 = vrot.lane.b32.xlu0 %v3643, 64
    %v3815 = vpop.permute.xlu0 %3814
    %3816 = vrot.lane.b32.xlu0 %v3644, 64
    %v3817 = vpop.permute.xlu0 %3816
    %3818 = vrot.lane.b32.xlu0 %v3645, 64
    %v3819 = vpop.permute.xlu0 %3818
    %3820 = vrot.lane.b32.xlu0 %v3646, 64
    %v3821 = vpop.permute.xlu0 %3820
    %3822 = vrot.lane.b32.xlu0 %v3647, 64
    %v3823 = vpop.permute.xlu0 %3822
    %3824 = vrot.lane.b32.xlu0 %v3648, 64
    %v3825 = vpop.permute.xlu0 %3824
    %3826 = vrot.lane.b32.xlu0 %v3649, 64
    %v3827 = vpop.permute.xlu0 %3826
    %3828 = vrot.lane.b32.xlu0 %v3650, 64
    %v3829 = vpop.permute.xlu0 %3828
    %3830 = vrot.lane.b32.xlu0 %v3651, 64
    %v3831 = vpop.permute.xlu0 %3830
    %3832 = vrot.lane.b32.xlu0 %v3652, 64
    %v3833 = vpop.permute.xlu0 %3832
    %3834 = vrot.lane.b32.xlu0 %v3653, 64
    %v3835 = vpop.permute.xlu0 %3834
    %3836 = vrot.lane.b32.xlu0 %v3654, 64
    %v3837 = vpop.permute.xlu0 %3836
    %3838 = vrot.lane.b32.xlu0 %v3655, 64
    %v3839 = vpop.permute.xlu0 %3838
    %3840 = vrot.lane.b32.xlu0 %v3656, 64
    %v3841 = vpop.permute.xlu0 %3840
    %3842 = vrot.lane.b32.xlu0 %v3657, 64
    %v3843 = vpop.permute.xlu0 %3842
    %3844 = vrot.lane.b32.xlu0 %v3658, 64
    %v3845 = vpop.permute.xlu0 %3844
    %3846 = vrot.lane.b32.xlu0 %v3659, 64
    %v3847 = vpop.permute.xlu0 %3846
    %3848 = vrot.lane.b32.xlu0 %v3660, 64
    %v3849 = vpop.permute.xlu0 %3848
    %3850 = vrot.lane.b32.xlu0 %v3661, 64
    %v3851 = vpop.permute.xlu0 %3850
    %3852 = vrot.lane.b32.xlu0 %v3662, 64
    %v3853 = vpop.permute.xlu0 %3852
    %3854 = vrot.lane.b32.xlu0 %v3663, 64
    %v3855 = vpop.permute.xlu0 %3854
    %v3920 = vsel %vm96, %v3282, %v3729
    %v3921 = vsel %vm96, %v3287, %v3731
    %v3922 = vsel %vm96, %v3292, %v3733
    %v3923 = vsel %vm96, %v3297, %v3735
    %v3924 = vsel %vm96, %v3302, %v3737
    %v3925 = vsel %vm96, %v3307, %v3739
    %v3926 = vsel %vm96, %v3312, %v3741
    %v3927 = vsel %vm96, %v3317, %v3743
    %v3928 = vsel %vm96, %v3322, %v3745
    %v3929 = vsel %vm96, %v3327, %v3747
    %v3930 = vsel %vm96, %v3332, %v3749
    %v3931 = vsel %vm96, %v3337, %v3751
    %v3932 = vsel %vm96, %v3342, %v3753
    %v3933 = vsel %vm96, %v3347, %v3755
    %v3934 = vsel %vm96, %v3352, %v3757
    %v3935 = vsel %vm96, %v3357, %v3759
    %v3936 = vsel %vm96, %v3362, %v3761
    %v3937 = vsel %vm96, %v3367, %v3763
    %v3938 = vsel %vm96, %v3372, %v3765
    %v3939 = vsel %vm96, %v3377, %v3767
    %v3940 = vsel %vm96, %v3382, %v3769
    %v3941 = vsel %vm96, %v3387, %v3771
    %v3942 = vsel %vm96, %v3392, %v3773
    %v3943 = vsel %vm96, %v3397, %v3775
    %v3944 = vsel %vm96, %v3402, %v3777
    %v3945 = vsel %vm96, %v3407, %v3779
    %v3946 = vsel %vm96, %v3412, %v3781
    %v3947 = vsel %vm96, %v3417, %v3783
    %v3948 = vsel %vm96, %v3422, %v3785
    %v3949 = vsel %vm96, %v3427, %v3787
    %v3950 = vsel %vm96, %v3432, %v3789
    %v3951 = vsel %vm96, %v3437, %v3791
    %v3952 = vsel %vm96, %v3442, %v3793
    %v3953 = vsel %vm96, %v3447, %v3795
    %v3954 = vsel %vm96, %v3452, %v3797
    %v3955 = vsel %vm96, %v3457, %v3799
    %v3956 = vsel %vm96, %v3462, %v3801
    %v3957 = vsel %vm96, %v3467, %v3803
    %v3958 = vsel %vm96, %v3472, %v3805
    %v3959 = vsel %vm96, %v3477, %v3807
    %v3960 = vsel %vm96, %v3482, %v3809
    %v3961 = vsel %vm96, %v3487, %v3811
    %v3962 = vsel %vm96, %v3492, %v3813
    %v3963 = vsel %vm96, %v3497, %v3815
    %v3964 = vsel %vm96, %v3502, %v3817
    %v3965 = vsel %vm96, %v3507, %v3819
    %v3966 = vsel %vm96, %v3512, %v3821
    %v3967 = vsel %vm96, %v3517, %v3823
    %v3968 = vsel %vm96, %v3522, %v3825
    %v3969 = vsel %vm96, %v3527, %v3827
    %v3970 = vsel %vm96, %v3532, %v3829
    %v3971 = vsel %vm96, %v3537, %v3831
    %v3972 = vsel %vm96, %v3542, %v3833
    %v3973 = vsel %vm96, %v3547, %v3835
    %v3974 = vsel %vm96, %v3552, %v3837
    %v3975 = vsel %vm96, %v3557, %v3839
    %v3976 = vsel %vm96, %v3562, %v3841
    %v3977 = vsel %vm96, %v3567, %v3843
    %v3978 = vsel %vm96, %v3572, %v3845
    %v3979 = vsel %vm96, %v3577, %v3847
    %v3980 = vsel %vm96, %v3582, %v3849
    %v3981 = vsel %vm96, %v3587, %v3851
    %v3982 = vsel %vm96, %v3592, %v3853
    %v3983 = vsel %vm96, %v3597, %v3855
    %v3984 = vadd.f32 %v3920, %v3921
    %v3985 = vadd.f32 %v3984, %v3922
    %v3986 = vadd.f32 %v3985, %v3923
    %v3987 = vadd.f32 %v3986, %v3924
    %v3988 = vadd.f32 %v3987, %v3925
    %v3989 = vadd.f32 %v3988, %v3926
    %v3990 = vadd.f32 %v3989, %v3927
    %v3991 = vadd.f32 %v3990, %v3928
    %v3992 = vadd.f32 %v3991, %v3929
    %v3993 = vadd.f32 %v3992, %v3930
    %v3994 = vadd.f32 %v3993, %v3931
    %v3995 = vadd.f32 %v3994, %v3932
    %v3996 = vadd.f32 %v3995, %v3933
    %v3997 = vadd.f32 %v3996, %v3934
    %v3998 = vadd.f32 %v3997, %v3935
    %v3999 = vadd.f32 %v3998, %v3936
    %v4000 = vadd.f32 %v3999, %v3937
    %v4001 = vadd.f32 %v4000, %v3938
    %v4002 = vadd.f32 %v4001, %v3939
    %v4003 = vadd.f32 %v4002, %v3940
    %v4004 = vadd.f32 %v4003, %v3941
    %v4005 = vadd.f32 %v4004, %v3942
    %v4006 = vadd.f32 %v4005, %v3943
    %v4007 = vadd.f32 %v4006, %v3944
    %v4008 = vadd.f32 %v4007, %v3945
    %v4009 = vadd.f32 %v4008, %v3946
    %v4010 = vadd.f32 %v4009, %v3947
    %v4011 = vadd.f32 %v4010, %v3948
    %v4012 = vadd.f32 %v4011, %v3949
    %v4013 = vadd.f32 %v4012, %v3950
    %v4014 = vadd.f32 %v4013, %v3951
    %v4015 = vadd.f32 %v4014, %v3952
    %v4016 = vadd.f32 %v4015, %v3953
    %v4017 = vadd.f32 %v4016, %v3954
    %v4018 = vadd.f32 %v4017, %v3955
    %v4019 = vadd.f32 %v4018, %v3956
    %v4020 = vadd.f32 %v4019, %v3957
    %v4021 = vadd.f32 %v4020, %v3958
    %v4022 = vadd.f32 %v4021, %v3959
    %v4023 = vadd.f32 %v4022, %v3960
    %v4024 = vadd.f32 %v4023, %v3961
    %v4025 = vadd.f32 %v4024, %v3962
    %v4026 = vadd.f32 %v4025, %v3963
    %v4027 = vadd.f32 %v4026, %v3964
    %v4028 = vadd.f32 %v4027, %v3965
    %v4029 = vadd.f32 %v4028, %v3966
    %v4030 = vadd.f32 %v4029, %v3967
    %v4031 = vadd.f32 %v4030, %v3968
    %v4032 = vadd.f32 %v4031, %v3969
    %v4033 = vadd.f32 %v4032, %v3970
    %v4034 = vadd.f32 %v4033, %v3971
    %v4035 = vadd.f32 %v4034, %v3972
    %v4036 = vadd.f32 %v4035, %v3973
    %v4037 = vadd.f32 %v4036, %v3974
    %v4038 = vadd.f32 %v4037, %v3975
    %v4039 = vadd.f32 %v4038, %v3976
    %v4040 = vadd.f32 %v4039, %v3977
    %v4041 = vadd.f32 %v4040, %v3978
    %v4042 = vadd.f32 %v4041, %v3979
    %v4043 = vadd.f32 %v4042, %v3980
    %v4044 = vadd.f32 %v4043, %v3981
    %v4045 = vadd.f32 %v4044, %v3982
    %v4046 = vadd.f32 %v4045, %v3983
    %v4047 = vrot.slane %v4046, 4
    %v4048 = vadd.f32 %v4046, %v4047
    %v4049 = vrot.slane %v4048, 2
    %v4050 = vadd.f32 %v4048, %v4049
    %v4051 = vrot.slane %v4050, 1
    %v4052 = vadd.f32 %v4050, %v4051
    %v4053 = vmul.f32 %v4052, 0.001953125
    %v4054 = vmul.f32 %v4053, %v4053
    %4056 = vrot.lane.b32.xlu0 %v4054, 64
    %v4057 = vpop.permute.xlu0 %4056
    %v4059 = vsub.f32 %v4053, %v4057
    %v4060 = vld [vmem:[%s3] sm:$0x1]
    %v4061 = vadd.f32 %v4059, 1e-05
    %v4062 = vrsqrt.pop %v4061
    %v4065 = vunpack.c.l.s4 1966171168
    %v4066 = vunpack.c.0.s8 %v4065
    %v4067 = vlaneseq
    %v4068 = vshrl.u32 %v4067, 7
    %v4069 = vsub.s32 %v4066, %v4068
    %v4070 = vrot.slane %v4062, %v4069
    %v4072 = vunpack.c.l.s4 1966171168
    %v4073 = vunpack.c.0.s8 %v4072
    %v4074 = vlaneseq
    %v4075 = vshrl.u32 %v4074, 7
    %v4076 = vsub.s32 %v4073, %v4075
    %v4077 = vrot.slane %v4070, %v4076
    %4078 = vrot.lane.b32.xlu0 %v4077, 64
    %v4079 = vpop.permute.xlu0 %4078
    %v4081 = vmul.f32 %v4060, %v4079
    %v4082 = vld [vmem:[%s4] sm:$0x1]
    %v4083 = vmul.f32 %v4053, %v4081
    %v4084 = vsub.f32 %v4082, %v4083
    %v4086 = vlaneseq
    %v4087 = vshrl.u32 %v4086, 7
    %v4088 = vsub.s32 0, %v4087
    %v4089 = vrot.slane %v4081, %v4088
    %v4091 = vmul.f32 %v3282, %v4089
    %v4092 = vmul.f32 %v3287, %v4089
    %v4093 = vmul.f32 %v3292, %v4089
    %v4094 = vmul.f32 %v3297, %v4089
    %v4095 = vmul.f32 %v3302, %v4089
    %v4096 = vmul.f32 %v3307, %v4089
    %v4097 = vmul.f32 %v3312, %v4089
    %v4098 = vmul.f32 %v3317, %v4089
    %v4099 = vmul.f32 %v3322, %v4089
    %v4100 = vmul.f32 %v3327, %v4089
    %v4101 = vmul.f32 %v3332, %v4089
    %v4102 = vmul.f32 %v3337, %v4089
    %v4103 = vmul.f32 %v3342, %v4089
    %v4104 = vmul.f32 %v3347, %v4089
    %v4105 = vmul.f32 %v3352, %v4089
    %v4106 = vmul.f32 %v3357, %v4089
    %v4107 = vmul.f32 %v3362, %v4089
    %v4108 = vmul.f32 %v3367, %v4089
    %v4109 = vmul.f32 %v3372, %v4089
    %v4110 = vmul.f32 %v3377, %v4089
    %v4111 = vmul.f32 %v3382, %v4089
    %v4112 = vmul.f32 %v3387, %v4089
    %v4113 = vmul.f32 %v3392, %v4089
    %v4114 = vmul.f32 %v3397, %v4089
    %v4115 = vmul.f32 %v3402, %v4089
    %v4116 = vmul.f32 %v3407, %v4089
    %v4117 = vmul.f32 %v3412, %v4089
    %v4118 = vmul.f32 %v3417, %v4089
    %v4119 = vmul.f32 %v3422, %v4089
    %v4120 = vmul.f32 %v3427, %v4089
    %v4121 = vmul.f32 %v3432, %v4089
    %v4122 = vmul.f32 %v3437, %v4089
    %v4123 = vmul.f32 %v3442, %v4089
    %v4124 = vmul.f32 %v3447, %v4089
    %v4125 = vmul.f32 %v3452, %v4089
    %v4126 = vmul.f32 %v3457, %v4089
    %v4127 = vmul.f32 %v3462, %v4089
    %v4128 = vmul.f32 %v3467, %v4089
    %v4129 = vmul.f32 %v3472, %v4089
    %v4130 = vmul.f32 %v3477, %v4089
    %v4131 = vmul.f32 %v3482, %v4089
    %v4132 = vmul.f32 %v3487, %v4089
    %v4133 = vmul.f32 %v3492, %v4089
    %v4134 = vmul.f32 %v3497, %v4089
    %v4135 = vmul.f32 %v3502, %v4089
    %v4136 = vmul.f32 %v3507, %v4089
    %v4137 = vmul.f32 %v3512, %v4089
    %v4138 = vmul.f32 %v3517, %v4089
    %v4139 = vmul.f32 %v3522, %v4089
    %v4140 = vmul.f32 %v3527, %v4089
    %v4141 = vmul.f32 %v3532, %v4089
    %v4142 = vmul.f32 %v3537, %v4089
    %v4143 = vmul.f32 %v3542, %v4089
    %v4144 = vmul.f32 %v3547, %v4089
    %v4145 = vmul.f32 %v3552, %v4089
    %v4146 = vmul.f32 %v3557, %v4089
    %v4147 = vmul.f32 %v3562, %v4089
    %v4148 = vmul.f32 %v3567, %v4089
    %v4149 = vmul.f32 %v3572, %v4089
    %v4150 = vmul.f32 %v3577, %v4089
    %v4151 = vmul.f32 %v3582, %v4089
    %v4152 = vmul.f32 %v3587, %v4089
    %v4153 = vmul.f32 %v3592, %v4089
    %v4154 = vmul.f32 %v3597, %v4089
    %v4156 = vlaneseq
    %v4157 = vshrl.u32 %v4156, 7
    %v4158 = vsub.s32 0, %v4157
    %v4159 = vrot.slane %v4084, %v4158
    %v4161 = vadd.f32 %v4091, %v4159
    %v4162 = vadd.f32 %v4092, %v4159
    %v4163 = vadd.f32 %v4093, %v4159
    %v4164 = vadd.f32 %v4094, %v4159
    %v4165 = vadd.f32 %v4095, %v4159
    %v4166 = vadd.f32 %v4096, %v4159
    %v4167 = vadd.f32 %v4097, %v4159
    %v4168 = vadd.f32 %v4098, %v4159
    %v4169 = vadd.f32 %v4099, %v4159
    %v4170 = vadd.f32 %v4100, %v4159
    %v4171 = vadd.f32 %v4101, %v4159
    %v4172 = vadd.f32 %v4102, %v4159
    %v4173 = vadd.f32 %v4103, %v4159
    %v4174 = vadd.f32 %v4104, %v4159
    %v4175 = vadd.f32 %v4105, %v4159
    %v4176 = vadd.f32 %v4106, %v4159
    %v4177 = vadd.f32 %v4107, %v4159
    %v4178 = vadd.f32 %v4108, %v4159
    %v4179 = vadd.f32 %v4109, %v4159
    %v4180 = vadd.f32 %v4110, %v4159
    %v4181 = vadd.f32 %v4111, %v4159
    %v4182 = vadd.f32 %v4112, %v4159
    %v4183 = vadd.f32 %v4113, %v4159
    %v4184 = vadd.f32 %v4114, %v4159
    %v4185 = vadd.f32 %v4115, %v4159
    %v4186 = vadd.f32 %v4116, %v4159
    %v4187 = vadd.f32 %v4117, %v4159
    %v4188 = vadd.f32 %v4118, %v4159
    %v4189 = vadd.f32 %v4119, %v4159
    %v4190 = vadd.f32 %v4120, %v4159
    %v4191 = vadd.f32 %v4121, %v4159
    %v4192 = vadd.f32 %v4122, %v4159
    %v4193 = vadd.f32 %v4123, %v4159
    %v4194 = vadd.f32 %v4124, %v4159
    %v4195 = vadd.f32 %v4125, %v4159
    %v4196 = vadd.f32 %v4126, %v4159
    %v4197 = vadd.f32 %v4127, %v4159
    %v4198 = vadd.f32 %v4128, %v4159
    %v4199 = vadd.f32 %v4129, %v4159
    %v4200 = vadd.f32 %v4130, %v4159
    %v4201 = vadd.f32 %v4131, %v4159
    %v4202 = vadd.f32 %v4132, %v4159
    %v4203 = vadd.f32 %v4133, %v4159
    %v4204 = vadd.f32 %v4134, %v4159
    %v4205 = vadd.f32 %v4135, %v4159
    %v4206 = vadd.f32 %v4136, %v4159
    %v4207 = vadd.f32 %v4137, %v4159
    %v4208 = vadd.f32 %v4138, %v4159
    %v4209 = vadd.f32 %v4139, %v4159
    %v4210 = vadd.f32 %v4140, %v4159
    %v4211 = vadd.f32 %v4141, %v4159
    %v4212 = vadd.f32 %v4142, %v4159
    %v4213 = vadd.f32 %v4143, %v4159
    %v4214 = vadd.f32 %v4144, %v4159
    %v4215 = vadd.f32 %v4145, %v4159
    %v4216 = vadd.f32 %v4146, %v4159
    %v4217 = vadd.f32 %v4147, %v4159
    %v4218 = vadd.f32 %v4148, %v4159
    %v4219 = vadd.f32 %v4149, %v4159
    %v4220 = vadd.f32 %v4150, %v4159
    %v4221 = vadd.f32 %v4151, %v4159
    %v4222 = vadd.f32 %v4152, %v4159
    %v4223 = vadd.f32 %v4153, %v4159
    %v4224 = vadd.f32 %v4154, %v4159
    %s4225 = sld [smem:[#allocation3]]
    %vm4226 = vcmp.gt.f32.partialorder %v4161, 0.0
    %vm4227 = vcmp.gt.f32.partialorder %v4162, 0.0
    %vm4228 = vcmp.gt.f32.partialorder %v4163, 0.0
    %vm4229 = vcmp.gt.f32.partialorder %v4164, 0.0
    %vm4230 = vcmp.gt.f32.partialorder %v4165, 0.0
    %vm4231 = vcmp.gt.f32.partialorder %v4166, 0.0
    %vm4232 = vcmp.gt.f32.partialorder %v4167, 0.0
    %vm4233 = vcmp.gt.f32.partialorder %v4168, 0.0
    %vm4234 = vcmp.gt.f32.partialorder %v4169, 0.0
    %vm4235 = vcmp.gt.f32.partialorder %v4170, 0.0
    %vm4236 = vcmp.gt.f32.partialorder %v4171, 0.0
    %vm4237 = vcmp.gt.f32.partialorder %v4172, 0.0
    %vm4238 = vcmp.gt.f32.partialorder %v4173, 0.0
    %vm4239 = vcmp.gt.f32.partialorder %v4174, 0.0
    %vm4240 = vcmp.gt.f32.partialorder %v4175, 0.0
    %vm4241 = vcmp.gt.f32.partialorder %v4176, 0.0
    %vm4242 = vcmp.gt.f32.partialorder %v4177, 0.0
    %vm4243 = vcmp.gt.f32.partialorder %v4178, 0.0
    %vm4244 = vcmp.gt.f32.partialorder %v4179, 0.0
    %vm4245 = vcmp.gt.f32.partialorder %v4180, 0.0
    %vm4246 = vcmp.gt.f32.partialorder %v4181, 0.0
    %vm4247 = vcmp.gt.f32.partialorder %v4182, 0.0
    %vm4248 = vcmp.gt.f32.partialorder %v4183, 0.0
    %vm4249 = vcmp.gt.f32.partialorder %v4184, 0.0
    %vm4250 = vcmp.gt.f32.partialorder %v4185, 0.0
    %vm4251 = vcmp.gt.f32.partialorder %v4186, 0.0
    %vm4252 = vcmp.gt.f32.partialorder %v4187, 0.0
    %vm4253 = vcmp.gt.f32.partialorder %v4188, 0.0
    %vm4254 = vcmp.gt.f32.partialorder %v4189, 0.0
    %vm4255 = vcmp.gt.f32.partialorder %v4190, 0.0
    %vm4256 = vcmp.gt.f32.partialorder %v4191, 0.0
    %vm4257 = vcmp.gt.f32.partialorder %v4192, 0.0
    %vm4258 = vcmp.gt.f32.partialorder %v4193, 0.0
    %vm4259 = vcmp.gt.f32.partialorder %v4194, 0.0
    %vm4260 = vcmp.gt.f32.partialorder %v4195, 0.0
    %vm4261 = vcmp.gt.f32.partialorder %v4196, 0.0
    %vm4262 = vcmp.gt.f32.partialorder %v4197, 0.0
    %vm4263 = vcmp.gt.f32.partialorder %v4198, 0.0
    %vm4264 = vcmp.gt.f32.partialorder %v4199, 0.0
    %vm4265 = vcmp.gt.f32.partialorder %v4200, 0.0
    %vm4266 = vcmp.gt.f32.partialorder %v4201, 0.0
    %vm4267 = vcmp.gt.f32.partialorder %v4202, 0.0
    %vm4268 = vcmp.gt.f32.partialorder %v4203, 0.0
    %vm4269 = vcmp.gt.f32.partialorder %v4204, 0.0
    %vm4270 = vcmp.gt.f32.partialorder %v4205, 0.0
    %vm4271 = vcmp.gt.f32.partialorder %v4206, 0.0
    %vm4272 = vcmp.gt.f32.partialorder %v4207, 0.0
    %vm4273 = vcmp.gt.f32.partialorder %v4208, 0.0
    %vm4274 = vcmp.gt.f32.partialorder %v4209, 0.0
    %vm4275 = vcmp.gt.f32.partialorder %v4210, 0.0
    %vm4276 = vcmp.gt.f32.partialorder %v4211, 0.0
    %vm4277 = vcmp.gt.f32.partialorder %v4212, 0.0
    %vm4278 = vcmp.gt.f32.partialorder %v4213, 0.0
    %vm4279 = vcmp.gt.f32.partialorder %v4214, 0.0
    %vm4280 = vcmp.gt.f32.partialorder %v4215, 0.0
    %vm4281 = vcmp.gt.f32.partialorder %v4216, 0.0
    %vm4282 = vcmp.gt.f32.partialorder %v4217, 0.0
    %vm4283 = vcmp.gt.f32.partialorder %v4218, 0.0
    %vm4284 = vcmp.gt.f32.partialorder %v4219, 0.0
    %vm4285 = vcmp.gt.f32.partialorder %v4220, 0.0
    %vm4286 = vcmp.gt.f32.partialorder %v4221, 0.0
    %vm4287 = vcmp.gt.f32.partialorder %v4222, 0.0
    %vm4288 = vcmp.gt.f32.partialorder %v4223, 0.0
    %vm4289 = vcmp.gt.f32.partialorder %v4224, 0.0
    %v4290 = vstv %s4225
    %v4291 = vmul.f32 %v4290, %v4161
    %v4292 = vmul.f32 %v4290, %v4162
    %v4293 = vmul.f32 %v4290, %v4163
    %v4294 = vmul.f32 %v4290, %v4164
    %v4295 = vmul.f32 %v4290, %v4165
    %v4296 = vmul.f32 %v4290, %v4166
    %v4297 = vmul.f32 %v4290, %v4167
    %v4298 = vmul.f32 %v4290, %v4168
    %v4299 = vmul.f32 %v4290, %v4169
    %v4300 = vmul.f32 %v4290, %v4170
    %v4301 = vmul.f32 %v4290, %v4171
    %v4302 = vmul.f32 %v4290, %v4172
    %v4303 = vmul.f32 %v4290, %v4173
    %v4304 = vmul.f32 %v4290, %v4174
    %v4305 = vmul.f32 %v4290, %v4175
    %v4306 = vmul.f32 %v4290, %v4176
    %v4307 = vmul.f32 %v4290, %v4177
    %v4308 = vmul.f32 %v4290, %v4178
    %v4309 = vmul.f32 %v4290, %v4179
    %v4310 = vmul.f32 %v4290, %v4180
    %v4311 = vmul.f32 %v4290, %v4181
    %v4312 = vmul.f32 %v4290, %v4182
    %v4313 = vmul.f32 %v4290, %v4183
    %v4314 = vmul.f32 %v4290, %v4184
    %v4315 = vmul.f32 %v4290, %v4185
    %v4316 = vmul.f32 %v4290, %v4186
    %v4317 = vmul.f32 %v4290, %v4187
    %v4318 = vmul.f32 %v4290, %v4188
    %v4319 = vmul.f32 %v4290, %v4189
    %v4320 = vmul.f32 %v4290, %v4190
    %v4321 = vmul.f32 %v4290, %v4191
    %v4322 = vmul.f32 %v4290, %v4192
    %v4323 = vmul.f32 %v4290, %v4193
    %v4324 = vmul.f32 %v4290, %v4194
    %v4325 = vmul.f32 %v4290, %v4195
    %v4326 = vmul.f32 %v4290, %v4196
    %v4327 = vmul.f32 %v4290, %v4197
    %v4328 = vmul.f32 %v4290, %v4198
    %v4329 = vmul.f32 %v4290, %v4199
    %v4330 = vmul.f32 %v4290, %v4200
    %v4331 = vmul.f32 %v4290, %v4201
    %v4332 = vmul.f32 %v4290, %v4202
    %v4333 = vmul.f32 %v4290, %v4203
    %v4334 = vmul.f32 %v4290, %v4204
    %v4335 = vmul.f32 %v4290, %v4205
    %v4336 = vmul.f32 %v4290, %v4206
    %v4337 = vmul.f32 %v4290, %v4207
    %v4338 = vmul.f32 %v4290, %v4208
    %v4339 = vmul.f32 %v4290, %v4209
    %v4340 = vmul.f32 %v4290, %v4210
    %v4341 = vmul.f32 %v4290, %v4211
    %v4342 = vmul.f32 %v4290, %v4212
    %v4343 = vmul.f32 %v4290, %v4213
    %v4344 = vmul.f32 %v4290, %v4214
    %v4345 = vmul.f32 %v4290, %v4215
    %v4346 = vmul.f32 %v4290, %v4216
    %v4347 = vmul.f32 %v4290, %v4217
    %v4348 = vmul.f32 %v4290, %v4218
    %v4349 = vmul.f32 %v4290, %v4219
    %v4350 = vmul.f32 %v4290, %v4220
    %v4351 = vmul.f32 %v4290, %v4221
    %v4352 = vmul.f32 %v4290, %v4222
    %v4353 = vmul.f32 %v4290, %v4223
    %v4354 = vmul.f32 %v4290, %v4224
    %v4355 = vsel %vm4226, %v4161, %v4291
    %v4356 = vsel %vm4227, %v4162, %v4292
    %v4357 = vsel %vm4228, %v4163, %v4293
    %v4358 = vsel %vm4229, %v4164, %v4294
    %v4359 = vsel %vm4230, %v4165, %v4295
    %v4360 = vsel %vm4231, %v4166, %v4296
    %v4361 = vsel %vm4232, %v4167, %v4297
    %v4362 = vsel %vm4233, %v4168, %v4298
    %v4363 = vsel %vm4234, %v4169, %v4299
    %v4364 = vsel %vm4235, %v4170, %v4300
    %v4365 = vsel %vm4236, %v4171, %v4301
    %v4366 = vsel %vm4237, %v4172, %v4302
    %v4367 = vsel %vm4238, %v4173, %v4303
    %v4368 = vsel %vm4239, %v4174, %v4304
    %v4369 = vsel %vm4240, %v4175, %v4305
    %v4370 = vsel %vm4241, %v4176, %v4306
    %v4371 = vsel %vm4242, %v4177, %v4307
    %v4372 = vsel %vm4243, %v4178, %v4308
    %v4373 = vsel %vm4244, %v4179, %v4309
    %v4374 = vsel %vm4245, %v4180, %v4310
    %v4375 = vsel %vm4246, %v4181, %v4311
    %v4376 = vsel %vm4247, %v4182, %v4312
    %v4377 = vsel %vm4248, %v4183, %v4313
    %v4378 = vsel %vm4249, %v4184, %v4314
    %v4379 = vsel %vm4250, %v4185, %v4315
    %v4380 = vsel %vm4251, %v4186, %v4316
    %v4381 = vsel %vm4252, %v4187, %v4317
    %v4382 = vsel %vm4253, %v4188, %v4318
    %v4383 = vsel %vm4254, %v4189, %v4319
    %v4384 = vsel %vm4255, %v4190, %v4320
    %v4385 = vsel %vm4256, %v4191, %v4321
    %v4386 = vsel %vm4257, %v4192, %v4322
    %v4387 = vsel %vm4258, %v4193, %v4323
    %v4388 = vsel %vm4259, %v4194, %v4324
    %v4389 = vsel %vm4260, %v4195, %v4325
    %v4390 = vsel %vm4261, %v4196, %v4326
    %v4391 = vsel %vm4262, %v4197, %v4327
    %v4392 = vsel %vm4263, %v4198, %v4328
    %v4393 = vsel %vm4264, %v4199, %v4329
    %v4394 = vsel %vm4265, %v4200, %v4330
    %v4395 = vsel %vm4266, %v4201, %v4331
    %v4396 = vsel %vm4267, %v4202, %v4332
    %v4397 = vsel %vm4268, %v4203, %v4333
    %v4398 = vsel %vm4269, %v4204, %v4334
    %v4399 = vsel %vm4270, %v4205, %v4335
    %v4400 = vsel %vm4271, %v4206, %v4336
    %v4401 = vsel %vm4272, %v4207, %v4337
    %v4402 = vsel %vm4273, %v4208, %v4338
    %v4403 = vsel %vm4274, %v4209, %v4339
    %v4404 = vsel %vm4275, %v4210, %v4340
    %v4405 = vsel %vm4276, %v4211, %v4341
    %v4406 = vsel %vm4277, %v4212, %v4342
    %v4407 = vsel %vm4278, %v4213, %v4343
    %v4408 = vsel %vm4279, %v4214, %v4344
    %v4409 = vsel %vm4280, %v4215, %v4345
    %v4410 = vsel %vm4281, %v4216, %v4346
    %v4411 = vsel %vm4282, %v4217, %v4347
    %v4412 = vsel %vm4283, %v4218, %v4348
    %v4413 = vsel %vm4284, %v4219, %v4349
    %v4414 = vsel %vm4285, %v4220, %v4350
    %v4415 = vsel %vm4286, %v4221, %v4351
    %v4416 = vsel %vm4287, %v4222, %v4352
    %v4417 = vsel %vm4288, %v4223, %v4353
    %v4418 = vsel %vm4289, %v4224, %v4354
    %4419 = vst.msk [vmem:[%s95 + $0x1] sm:$0xff] %vm96, %v4355
    %4420 = vst.msk [vmem:[%s95 + $0x9] sm:$0xff] %vm96, %v4356
    %4421 = vst.msk [vmem:[%s95 + $0x19] sm:$0xff] %vm96, %v4357
    %4422 = vst.msk [vmem:[%s95 + $0x21] sm:$0xff] %vm96, %v4358
    %4423 = vst.msk [vmem:[%s95 + $0x31] sm:$0xff] %vm96, %v4359
    %4424 = vst.msk [vmem:[%s95 + $0x39] sm:$0xff] %vm96, %v4360
    %4425 = vst.msk [vmem:[%s95 + $0x49] sm:$0xff] %vm96, %v4361
    %4426 = vst.msk [vmem:[%s95 + $0x51] sm:$0xff] %vm96, %v4362
    %4427 = vst.msk [vmem:[%s95 + $0x61] sm:$0xff] %vm96, %v4363
    %4428 = vst.msk [vmem:[%s95 + $0x69] sm:$0xff] %vm96, %v4364
    %4429 = vst.msk [vmem:[%s95 + $0x79] sm:$0xff] %vm96, %v4365
    %4430 = vst.msk [vmem:[%s95 + $0x81] sm:$0xff] %vm96, %v4366
    %4431 = vst.msk [vmem:[%s95 + $0x91] sm:$0xff] %vm96, %v4367
    %4432 = vst.msk [vmem:[%s95 + $0x99] sm:$0xff] %vm96, %v4368
    %4433 = vst.msk [vmem:[%s95 + $0xa9] sm:$0xff] %vm96, %v4369
    %4434 = vst.msk [vmem:[%s95 + $0xb1] sm:$0xff] %vm96, %v4370
    %4435 = vst.msk [vmem:[%s95 + $0xc1] sm:$0xff] %vm96, %v4371
    %4436 = vst.msk [vmem:[%s95 + $0xc9] sm:$0xff] %vm96, %v4372
    %4437 = vst.msk [vmem:[%s95 + $0xd9] sm:$0xff] %vm96, %v4373
    %4438 = vst.msk [vmem:[%s95 + $0xe1] sm:$0xff] %vm96, %v4374
    %4439 = vst.msk [vmem:[%s95 + $0xf1] sm:$0xff] %vm96, %v4375
    %4440 = vst.msk [vmem:[%s95 + $0xf9] sm:$0xff] %vm96, %v4376
    %4441 = vst.msk [vmem:[%s95 + $0x109] sm:$0xff] %vm96, %v4377
    %4442 = vst.msk [vmem:[%s95 + $0x111] sm:$0xff] %vm96, %v4378
    %4443 = vst.msk [vmem:[%s95 + $0x121] sm:$0xff] %vm96, %v4379
    %4444 = vst.msk [vmem:[%s95 + $0x129] sm:$0xff] %vm96, %v4380
    %4445 = vst.msk [vmem:[%s95 + $0x139] sm:$0xff] %vm96, %v4381
    %4446 = vst.msk [vmem:[%s95 + $0x141] sm:$0xff] %vm96, %v4382
    %4447 = vst.msk [vmem:[%s95 + $0x151] sm:$0xff] %vm96, %v4383
    %4448 = vst.msk [vmem:[%s95 + $0x159] sm:$0xff] %vm96, %v4384
    %4449 = vst.msk [vmem:[%s95 + $0x169] sm:$0xff] %vm96, %v4385
    %4450 = vst.msk [vmem:[%s95 + $0x171] sm:$0xff] %vm96, %v4386
    %4451 = vst.msk [vmem:[%s95 + $0x1b1] sm:$0xff] %vm96, %v4387
    %4452 = vst.msk [vmem:[%s95 + $0x1b9] sm:$0xff] %vm96, %v4388
    %4453 = vst.msk [vmem:[%s95 + $0x1c9] sm:$0xff] %vm96, %v4389
    %4454 = vst.msk [vmem:[%s95 + $0x1d1] sm:$0xff] %vm96, %v4390
    %4455 = vst.msk [vmem:[%s95 + $0x1e1] sm:$0xff] %vm96, %v4391
    %4456 = vst.msk [vmem:[%s95 + $0x1e9] sm:$0xff] %vm96, %v4392
    %4457 = vst.msk [vmem:[%s95 + $0x1f9] sm:$0xff] %vm96, %v4393
    %4458 = vst.msk [vmem:[%s95 + $0x201] sm:$0xff] %vm96, %v4394
    %4459 = vst.msk [vmem:[%s95 + $0x211] sm:$0xff] %vm96, %v4395
    %4460 = vst.msk [vmem:[%s95 + $0x219] sm:$0xff] %vm96, %v4396
    %4461 = vst.msk [vmem:[%s95 + $0x229] sm:$0xff] %vm96, %v4397
    %4462 = vst.msk [vmem:[%s95 + $0x231] sm:$0xff] %vm96, %v4398
    %4463 = vst.msk [vmem:[%s95 + $0x241] sm:$0xff] %vm96, %v4399
    %4464 = vst.msk [vmem:[%s95 + $0x249] sm:$0xff] %vm96, %v4400
    %4465 = vst.msk [vmem:[%s95 + $0x259] sm:$0xff] %vm96, %v4401
    %4466 = vst.msk [vmem:[%s95 + $0x261] sm:$0xff] %vm96, %v4402
    %4467 = vst.msk [vmem:[%s95 + $0x271] sm:$0xff] %vm96, %v4403
    %4468 = vst.msk [vmem:[%s95 + $0x279] sm:$0xff] %vm96, %v4404
    %4469 = vst.msk [vmem:[%s95 + $0x289] sm:$0xff] %vm96, %v4405
    %4470 = vst.msk [vmem:[%s95 + $0x291] sm:$0xff] %vm96, %v4406
    %4471 = vst.msk [vmem:[%s95 + $0x2a1] sm:$0xff] %vm96, %v4407
    %4472 = vst.msk [vmem:[%s95 + $0x2a9] sm:$0xff] %vm96, %v4408
    %4473 = vst.msk [vmem:[%s95 + $0x2b9] sm:$0xff] %vm96, %v4409
    %4474 = vst.msk [vmem:[%s95 + $0x2c1] sm:$0xff] %vm96, %v4410
    %4475 = vst.msk [vmem:[%s95 + $0x2d1] sm:$0xff] %vm96, %v4411
    %4476 = vst.msk [vmem:[%s95 + $0x2d9] sm:$0xff] %vm96, %v4412
    %4477 = vst.msk [vmem:[%s95 + $0x2e9] sm:$0xff] %vm96, %v4413
    %4478 = vst.msk [vmem:[%s95 + $0x2f1] sm:$0xff] %vm96, %v4414
    %4479 = vst.msk [vmem:[%s95 + $0x301] sm:$0xff] %vm96, %v4415
    %4480 = vst.msk [vmem:[%s95 + $0x309] sm:$0xff] %vm96, %v4416
    %4481 = vst.msk [vmem:[%s95 + $0x319] sm:$0xff] %vm96, %v4417
    %4482 = vst.msk [vmem:[%s95 + $0x321] sm:$0xff] %vm96, %v4418
    %v4483 = vld [vmem:[%s95 + $0x1] sm:$0xff]
    %v4484 = vld [vmem:[%s95 + $0x9] sm:$0xff]
    %v4485 = vld [vmem:[%s95 + $0x1b1] sm:$0xff]
    %v4486 = vld [vmem:[%s95 + $0x1b9] sm:$0xff]
    %4487 = vst.msk [vmem:[#allocation2 + $0x1] sm:$0xff] %vm96, %v4483
    %4488 = vst.msk [vmem:[#allocation2 + $0x9] sm:$0xff] %vm96, %v4484
    %4489 = vst.msk [vmem:[#allocation2 + $0x1b1] sm:$0xff] %vm96, %v4485
    %4490 = vst.msk [vmem:[#allocation2 + $0x1b9] sm:$0xff] %vm96, %v4486
    %v4491 = vld [vmem:[%s169 + $0x1] sm:$0xff]
    %v4492 = vld [vmem:[%s169 + $0x9] sm:$0xff]
    %v4493 = vld [vmem:[%s169 + $0x1b1] sm:$0xff]
    %v4494 = vld [vmem:[%s169 + $0x1b9] sm:$0xff]
    %4495 = vst.msk [vmem:[%s174 + $0x1] sm:$0xff] %vm96, %v4491
    %4496 = vst.msk [vmem:[%s174 + $0x9] sm:$0xff] %vm96, %v4492
    %4497 = vst.msk [vmem:[%s174 + $0x1b1] sm:$0xff] %vm96, %v4493
    %4498 = vst.msk [vmem:[%s174 + $0x1b9] sm:$0xff] %vm96, %v4494
    %v4499 = vld [vmem:[#allocation2 + $0x1] sm:$0x1]
    %v4500 = vld [vmem:[#allocation2 + $0x19] sm:$0x1]
    %v4501 = vld [vmem:[#allocation2 + $0x31] sm:$0x1]
    %v4502 = vld [vmem:[#allocation2 + $0x49] sm:$0x1]
    %v4503 = vld [vmem:[#allocation2 + $0x61] sm:$0x1]
    %v4504 = vld [vmem:[#allocation2 + $0x79] sm:$0x1]
    %v4505 = vld [vmem:[#allocation2 + $0x91] sm:$0x1]
    %v4506 = vld [vmem:[#allocation2 + $0xa9] sm:$0x1]
    %v4507 = vld [vmem:[#allocation2 + $0xc1] sm:$0x1]
    %v4508 = vld [vmem:[#allocation2 + $0xd9] sm:$0x1]
    %v4509 = vld [vmem:[#allocation2 + $0xf1] sm:$0x1]
    %v4510 = vld [vmem:[#allocation2 + $0x109] sm:$0x1]
    %v4511 = vld [vmem:[#allocation2 + $0x121] sm:$0x1]
    %v4512 = vld [vmem:[#allocation2 + $0x139] sm:$0x1]
    %v4513 = vld [vmem:[#allocation2 + $0x151] sm:$0x1]
    %v4514 = vld [vmem:[#allocation2 + $0x169] sm:$0x1]
    %v4515 = vld [vmem:[#allocation2 + $0x181] sm:$0x1]
    %v4516 = vld [vmem:[#allocation2 + $0x199] sm:$0x1]
    %v4517 = vld [vmem:[#allocation2 + $0x1b1] sm:$0x1]
    %v4518 = vld [vmem:[#allocation2 + $0x1c9] sm:$0x1]
    %v4519 = vld [vmem:[#allocation2 + $0x1e1] sm:$0x1]
    %v4520 = vld [vmem:[#allocation2 + $0x1f9] sm:$0x1]
    %v4521 = vld [vmem:[#allocation2 + $0x211] sm:$0x1]
    %v4522 = vld [vmem:[#allocation2 + $0x229] sm:$0x1]
    %v4523 = vld [vmem:[#allocation2 + $0x241] sm:$0x1]
    %v4524 = vld [vmem:[#allocation2 + $0x259] sm:$0x1]
    %v4525 = vld [vmem:[#allocation2 + $0x271] sm:$0x1]
    %v4526 = vld [vmem:[#allocation2 + $0x289] sm:$0x1]
    %v4527 = vld [vmem:[#allocation2 + $0x2a1] sm:$0x1]
    %v4528 = vld [vmem:[#allocation2 + $0x2b9] sm:$0x1]
    %v4529 = vld [vmem:[#allocation2 + $0x2d1] sm:$0x1]
    %v4530 = vld [vmem:[#allocation2 + $0x2e9] sm:$0x1]
    %v4531 = vld [vmem:[#allocation2 + $0x301] sm:$0x1]
    %v4532 = vld [vmem:[#allocation2 + $0x319] sm:$0x1]
    %v4533 = vld [vmem:[#allocation2 + $0x331] sm:$0x1]
    %v4534 = vld [vmem:[#allocation2 + $0x349] sm:$0x1]
    %4535 = vst.msk [vmem:[#allocation2] sm:$0x1] %vm215, %v4499
    %4536 = vst.msk [vmem:[#allocation2 + $0x18] sm:$0x1] %vm215, %v4500
    %4537 = vst.msk [vmem:[#allocation2 + $0x30] sm:$0x1] %vm215, %v4501
    %4538 = vst.msk [vmem:[#allocation2 + $0x48] sm:$0x1] %vm215, %v4502
    %4539 = vst.msk [vmem:[#allocation2 + $0x60] sm:$0x1] %vm215, %v4503
    %4540 = vst.msk [vmem:[#allocation2 + $0x78] sm:$0x1] %vm215, %v4504
    %4541 = vst.msk [vmem:[#allocation2 + $0x90] sm:$0x1] %vm215, %v4505
    %4542 = vst.msk [vmem:[#allocation2 + $0xa8] sm:$0x1] %vm215, %v4506
    %4543 = vst.msk [vmem:[#allocation2 + $0xc0] sm:$0x1] %vm215, %v4507
    %4544 = vst.msk [vmem:[#allocation2 + $0xd8] sm:$0x1] %vm215, %v4508
    %4545 = vst.msk [vmem:[#allocation2 + $0xf0] sm:$0x1] %vm215, %v4509
    %4546 = vst.msk [vmem:[#allocation2 + $0x108] sm:$0x1] %vm215, %v4510
    %4547 = vst.msk [vmem:[#allocation2 + $0x120] sm:$0x1] %vm215, %v4511
    %4548 = vst.msk [vmem:[#allocation2 + $0x138] sm:$0x1] %vm215, %v4512
    %4549 = vst.msk [vmem:[#allocation2 + $0x150] sm:$0x1] %vm215, %v4513
    %4550 = vst.msk [vmem:[#allocation2 + $0x168] sm:$0x1] %vm215, %v4514
    %4551 = vst.msk [vmem:[#allocation2 + $0x180] sm:$0x1] %vm215, %v4515
    %4552 = vst.msk [vmem:[#allocation2 + $0x198] sm:$0x1] %vm215, %v4516
    %4553 = vst.msk [vmem:[#allocation2 + $0x1b0] sm:$0x1] %vm215, %v4517
    %4554 = vst.msk [vmem:[#allocation2 + $0x1c8] sm:$0x1] %vm215, %v4518
    %4555 = vst.msk [vmem:[#allocation2 + $0x1e0] sm:$0x1] %vm215, %v4519
    %4556 = vst.msk [vmem:[#allocation2 + $0x1f8] sm:$0x1] %vm215, %v4520
    %4557 = vst.msk [vmem:[#allocation2 + $0x210] sm:$0x1] %vm215, %v4521
    %4558 = vst.msk [vmem:[#allocation2 + $0x228] sm:$0x1] %vm215, %v4522
    %4559 = vst.msk [vmem:[#allocation2 + $0x240] sm:$0x1] %vm215, %v4523
    %4560 = vst.msk [vmem:[#allocation2 + $0x258] sm:$0x1] %vm215, %v4524
    %4561 = vst.msk [vmem:[#allocation2 + $0x270] sm:$0x1] %vm215, %v4525
    %4562 = vst.msk [vmem:[#allocation2 + $0x288] sm:$0x1] %vm215, %v4526
    %4563 = vst.msk [vmem:[#allocation2 + $0x2a0] sm:$0x1] %vm215, %v4527
    %4564 = vst.msk [vmem:[#allocation2 + $0x2b8] sm:$0x1] %vm215, %v4528
    %4565 = vst.msk [vmem:[#allocation2 + $0x2d0] sm:$0x1] %vm215, %v4529
    %4566 = vst.msk [vmem:[#allocation2 + $0x2e8] sm:$0x1] %vm215, %v4530
    %4567 = vst.msk [vmem:[#allocation2 + $0x300] sm:$0x1] %vm215, %v4531
    %4568 = vst.msk [vmem:[#allocation2 + $0x318] sm:$0x1] %vm215, %v4532
    %4569 = vst.msk [vmem:[#allocation2 + $0x330] sm:$0x1] %vm215, %v4533
    %4570 = vst.msk [vmem:[#allocation2 + $0x348] sm:$0x1] %vm215, %v4534
    %v4571 = vld [vmem:[#allocation2 + $0x10] sm:$0x1]
    %v4572 = vld [vmem:[#allocation2 + $0x28] sm:$0x1]
    %v4573 = vld [vmem:[#allocation2 + $0x40] sm:$0x1]
    %v4574 = vld [vmem:[#allocation2 + $0x58] sm:$0x1]
    %v4575 = vld [vmem:[#allocation2 + $0x70] sm:$0x1]
    %v4576 = vld [vmem:[#allocation2 + $0x88] sm:$0x1]
    %v4577 = vld [vmem:[#allocation2 + $0xa0] sm:$0x1]
    %v4578 = vld [vmem:[#allocation2 + $0xb8] sm:$0x1]
    %v4579 = vld [vmem:[#allocation2 + $0xd0] sm:$0x1]
    %v4580 = vld [vmem:[#allocation2 + $0xe8] sm:$0x1]
    %v4581 = vld [vmem:[#allocation2 + $0x100] sm:$0x1]
    %v4582 = vld [vmem:[#allocation2 + $0x118] sm:$0x1]
    %v4583 = vld [vmem:[#allocation2 + $0x130] sm:$0x1]
    %v4584 = vld [vmem:[#allocation2 + $0x148] sm:$0x1]
    %v4585 = vld [vmem:[#allocation2 + $0x160] sm:$0x1]
    %v4586 = vld [vmem:[#allocation2 + $0x178] sm:$0x1]
    %v4587 = vld [vmem:[#allocation2 + $0x190] sm:$0x1]
    %v4588 = vld [vmem:[#allocation2 + $0x1a8] sm:$0x1]
    %v4589 = vld [vmem:[#allocation2 + $0x1c0] sm:$0x1]
    %v4590 = vld [vmem:[#allocation2 + $0x1d8] sm:$0x1]
    %v4591 = vld [vmem:[#allocation2 + $0x1f0] sm:$0x1]
    %v4592 = vld [vmem:[#allocation2 + $0x208] sm:$0x1]
    %v4593 = vld [vmem:[#allocation2 + $0x220] sm:$0x1]
    %v4594 = vld [vmem:[#allocation2 + $0x238] sm:$0x1]
    %v4595 = vld [vmem:[#allocation2 + $0x250] sm:$0x1]
    %v4596 = vld [vmem:[#allocation2 + $0x268] sm:$0x1]
    %v4597 = vld [vmem:[#allocation2 + $0x280] sm:$0x1]
    %v4598 = vld [vmem:[#allocation2 + $0x298] sm:$0x1]
    %v4599 = vld [vmem:[#allocation2 + $0x2b0] sm:$0x1]
    %v4600 = vld [vmem:[#allocation2 + $0x2c8] sm:$0x1]
    %v4601 = vld [vmem:[#allocation2 + $0x2e0] sm:$0x1]
    %v4602 = vld [vmem:[#allocation2 + $0x2f8] sm:$0x1]
    %v4603 = vld [vmem:[#allocation2 + $0x310] sm:$0x1]
    %v4604 = vld [vmem:[#allocation2 + $0x328] sm:$0x1]
    %v4605 = vld [vmem:[#allocation2 + $0x340] sm:$0x1]
    %v4606 = vld [vmem:[#allocation2 + $0x358] sm:$0x1]
    %4607 = vst.msk [vmem:[#allocation2 + $0x11] sm:$0x1] %vm215, %v4571
    %4608 = vst.msk [vmem:[#allocation2 + $0x29] sm:$0x1] %vm215, %v4572
    %4609 = vst.msk [vmem:[#allocation2 + $0x41] sm:$0x1] %vm215, %v4573
    %4610 = vst.msk [vmem:[#allocation2 + $0x59] sm:$0x1] %vm215, %v4574
    %4611 = vst.msk [vmem:[#allocation2 + $0x71] sm:$0x1] %vm215, %v4575
    %4612 = vst.msk [vmem:[#allocation2 + $0x89] sm:$0x1] %vm215, %v4576
    %4613 = vst.msk [vmem:[#allocation2 + $0xa1] sm:$0x1] %vm215, %v4577
    %4614 = vst.msk [vmem:[#allocation2 + $0xb9] sm:$0x1] %vm215, %v4578
    %4615 = vst.msk [vmem:[#allocation2 + $0xd1] sm:$0x1] %vm215, %v4579
    %4616 = vst.msk [vmem:[#allocation2 + $0xe9] sm:$0x1] %vm215, %v4580
    %4617 = vst.msk [vmem:[#allocation2 + $0x101] sm:$0x1] %vm215, %v4581
    %4618 = vst.msk [vmem:[#allocation2 + $0x119] sm:$0x1] %vm215, %v4582
    %4619 = vst.msk [vmem:[#allocation2 + $0x131] sm:$0x1] %vm215, %v4583
    %4620 = vst.msk [vmem:[#allocation2 + $0x149] sm:$0x1] %vm215, %v4584
    %4621 = vst.msk [vmem:[#allocation2 + $0x161] sm:$0x1] %vm215, %v4585
    %4622 = vst.msk [vmem:[#allocation2 + $0x179] sm:$0x1] %vm215, %v4586
    %4623 = vst.msk [vmem:[#allocation2 + $0x191] sm:$0x1] %vm215, %v4587
    %4624 = vst.msk [vmem:[#allocation2 + $0x1a9] sm:$0x1] %vm215, %v4588
    %4625 = vst.msk [vmem:[#allocation2 + $0x1c1] sm:$0x1] %vm215, %v4589
    %4626 = vst.msk [vmem:[#allocation2 + $0x1d9] sm:$0x1] %vm215, %v4590
    %4627 = vst.msk [vmem:[#allocation2 + $0x1f1] sm:$0x1] %vm215, %v4591
    %4628 = vst.msk [vmem:[#allocation2 + $0x209] sm:$0x1] %vm215, %v4592
    %4629 = vst.msk [vmem:[#allocation2 + $0x221] sm:$0x1] %vm215, %v4593
    %4630 = vst.msk [vmem:[#allocation2 + $0x239] sm:$0x1] %vm215, %v4594
    %4631 = vst.msk [vmem:[#allocation2 + $0x251] sm:$0x1] %vm215, %v4595
    %4632 = vst.msk [vmem:[#allocation2 + $0x269] sm:$0x1] %vm215, %v4596
    %4633 = vst.msk [vmem:[#allocation2 + $0x281] sm:$0x1] %vm215, %v4597
    %4634 = vst.msk [vmem:[#allocation2 + $0x299] sm:$0x1] %vm215, %v4598
    %4635 = vst.msk [vmem:[#allocation2 + $0x2b1] sm:$0x1] %vm215, %v4599
    %4636 = vst.msk [vmem:[#allocation2 + $0x2c9] sm:$0x1] %vm215, %v4600
    %4637 = vst.msk [vmem:[#allocation2 + $0x2e1] sm:$0x1] %vm215, %v4601
    %4638 = vst.msk [vmem:[#allocation2 + $0x2f9] sm:$0x1] %vm215, %v4602
    %4639 = vst.msk [vmem:[#allocation2 + $0x311] sm:$0x1] %vm215, %v4603
    %4640 = vst.msk [vmem:[#allocation2 + $0x329] sm:$0x1] %vm215, %v4604
    %4641 = vst.msk [vmem:[#allocation2 + $0x341] sm:$0x1] %vm215, %v4605
    %4642 = vst.msk [vmem:[#allocation2 + $0x359] sm:$0x1] %vm215, %v4606
    %v4643 = vld [vmem:[#allocation2] sm:$0xff]
    %v4644 = vld [vmem:[#allocation2 + $0x8] sm:$0xff]
    %v4645 = vld [vmem:[#allocation2 + $0x18] sm:$0xff]
    %v4646 = vld [vmem:[#allocation2 + $0x20] sm:$0xff]
    %v4647 = vld [vmem:[#allocation2 + $0x30] sm:$0xff]
    %v4648 = vld [vmem:[#allocation2 + $0x38] sm:$0xff]
    %v4649 = vld [vmem:[#allocation2 + $0x48] sm:$0xff]
    %v4650 = vld [vmem:[#allocation2 + $0x50] sm:$0xff]
    %v4651 = vld [vmem:[#allocation2 + $0x60] sm:$0xff]
    %v4652 = vld [vmem:[#allocation2 + $0x68] sm:$0xff]
    %v4653 = vld [vmem:[#allocation2 + $0x78] sm:$0xff]
    %v4654 = vld [vmem:[#allocation2 + $0x80] sm:$0xff]
    %v4655 = vld [vmem:[#allocation2 + $0x90] sm:$0xff]
    %v4656 = vld [vmem:[#allocation2 + $0x98] sm:$0xff]
    %v4657 = vld [vmem:[#allocation2 + $0xa8] sm:$0xff]
    %v4658 = vld [vmem:[#allocation2 + $0xb0] sm:$0xff]
    %v4659 = vld [vmem:[#allocation2 + $0xc0] sm:$0xff]
    %v4660 = vld [vmem:[#allocation2 + $0xc8] sm:$0xff]
    %v4661 = vld [vmem:[#allocation2 + $0xd8] sm:$0xff]
    %v4662 = vld [vmem:[#allocation2 + $0xe0] sm:$0xff]
    %v4663 = vld [vmem:[#allocation2 + $0xf0] sm:$0xff]
    %v4664 = vld [vmem:[#allocation2 + $0xf8] sm:$0xff]
    %v4665 = vld [vmem:[#allocation2 + $0x108] sm:$0xff]
    %v4666 = vld [vmem:[#allocation2 + $0x110] sm:$0xff]
    %v4667 = vld [vmem:[#allocation2 + $0x120] sm:$0xff]
    %v4668 = vld [vmem:[#allocation2 + $0x128] sm:$0xff]
    %v4669 = vld [vmem:[#allocation2 + $0x138] sm:$0xff]
    %v4670 = vld [vmem:[#allocation2 + $0x140] sm:$0xff]
    %v4671 = vld [vmem:[#allocation2 + $0x150] sm:$0xff]
    %v4672 = vld [vmem:[#allocation2 + $0x158] sm:$0xff]
    %v4673 = vld [vmem:[#allocation2 + $0x168] sm:$0xff]
    %v4674 = vld [vmem:[#allocation2 + $0x170] sm:$0xff]
    %v4675 = vld [vmem:[#allocation2 + $0x1b0] sm:$0xff]
    %v4676 = vld [vmem:[#allocation2 + $0x1b8] sm:$0xff]
    %v4677 = vld [vmem:[#allocation2 + $0x1c8] sm:$0xff]
    %v4678 = vld [vmem:[#allocation2 + $0x1d0] sm:$0xff]
    %v4679 = vld [vmem:[#allocation2 + $0x1e0] sm:$0xff]
    %v4680 = vld [vmem:[#allocation2 + $0x1e8] sm:$0xff]
    %v4681 = vld [vmem:[#allocation2 + $0x1f8] sm:$0xff]
    %v4682 = vld [vmem:[#allocation2 + $0x200] sm:$0xff]
    %v4683 = vld [vmem:[#allocation2 + $0x210] sm:$0xff]
    %v4684 = vld [vmem:[#allocation2 + $0x218] sm:$0xff]
    %v4685 = vld [vmem:[#allocation2 + $0x228] sm:$0xff]
    %v4686 = vld [vmem:[#allocation2 + $0x230] sm:$0xff]
    %v4687 = vld [vmem:[#allocation2 + $0x240] sm:$0xff]
    %v4688 = vld [vmem:[#allocation2 + $0x248] sm:$0xff]
    %v4689 = vld [vmem:[#allocation2 + $0x258] sm:$0xff]
    %v4690 = vld [vmem:[#allocation2 + $0x260] sm:$0xff]
    %v4691 = vld [vmem:[#allocation2 + $0x270] sm:$0xff]
    %v4692 = vld [vmem:[#allocation2 + $0x278] sm:$0xff]
    %v4693 = vld [vmem:[#allocation2 + $0x288] sm:$0xff]
    %v4694 = vld [vmem:[#allocation2 + $0x290] sm:$0xff]
    %v4695 = vld [vmem:[#allocation2 + $0x2a0] sm:$0xff]
    %v4696 = vld [vmem:[#allocation2 + $0x2a8] sm:$0xff]
    %v4697 = vld [vmem:[#allocation2 + $0x2b8] sm:$0xff]
    %v4698 = vld [vmem:[#allocation2 + $0x2c0] sm:$0xff]
    %v4699 = vld [vmem:[#allocation2 + $0x2d0] sm:$0xff]
    %v4700 = vld [vmem:[#allocation2 + $0x2d8] sm:$0xff]
    %v4701 = vld [vmem:[#allocation2 + $0x2e8] sm:$0xff]
    %v4702 = vld [vmem:[#allocation2 + $0x2f0] sm:$0xff]
    %v4703 = vld [vmem:[#allocation2 + $0x300] sm:$0xff]
    %v4704 = vld [vmem:[#allocation2 + $0x308] sm:$0xff]
    %v4705 = vld [vmem:[#allocation2 + $0x318] sm:$0xff]
    %v4706 = vld [vmem:[#allocation2 + $0x320] sm:$0xff]
    %v4707 = vld [vmem:[#allocation2 + $0x1] sm:$0xff]
    %v4708 = vld [vmem:[#allocation2 + $0x9] sm:$0xff]
    %v4709 = vld [vmem:[#allocation2 + $0x19] sm:$0xff]
    %v4710 = vld [vmem:[#allocation2 + $0x21] sm:$0xff]
    %v4711 = vld [vmem:[#allocation2 + $0x31] sm:$0xff]
    %v4712 = vld [vmem:[#allocation2 + $0x39] sm:$0xff]
    %v4713 = vld [vmem:[#allocation2 + $0x49] sm:$0xff]
    %v4714 = vld [vmem:[#allocation2 + $0x51] sm:$0xff]
    %v4715 = vld [vmem:[#allocation2 + $0x61] sm:$0xff]
    %v4716 = vld [vmem:[#allocation2 + $0x69] sm:$0xff]
    %v4717 = vld [vmem:[#allocation2 + $0x79] sm:$0xff]
    %v4718 = vld [vmem:[#allocation2 + $0x81] sm:$0xff]
    %v4719 = vld [vmem:[#allocation2 + $0x91] sm:$0xff]
    %v4720 = vld [vmem:[#allocation2 + $0x99] sm:$0xff]
    %v4721 = vld [vmem:[#allocation2 + $0xa9] sm:$0xff]
    %v4722 = vld [vmem:[#allocation2 + $0xb1] sm:$0xff]
    %v4723 = vld [vmem:[#allocation2 + $0xc1] sm:$0xff]
    %v4724 = vld [vmem:[#allocation2 + $0xc9] sm:$0xff]
    %v4725 = vld [vmem:[#allocation2 + $0xd9] sm:$0xff]
    %v4726 = vld [vmem:[#allocation2 + $0xe1] sm:$0xff]
    %v4727 = vld [vmem:[#allocation2 + $0xf1] sm:$0xff]
    %v4728 = vld [vmem:[#allocation2 + $0xf9] sm:$0xff]
    %v4729 = vld [vmem:[#allocation2 + $0x109] sm:$0xff]
    %v4730 = vld [vmem:[#allocation2 + $0x111] sm:$0xff]
    %v4731 = vld [vmem:[#allocation2 + $0x121] sm:$0xff]
    %v4732 = vld [vmem:[#allocation2 + $0x129] sm:$0xff]
    %v4733 = vld [vmem:[#allocation2 + $0x139] sm:$0xff]
    %v4734 = vld [vmem:[#allocation2 + $0x141] sm:$0xff]
    %v4735 = vld [vmem:[#allocation2 + $0x151] sm:$0xff]
    %v4736 = vld [vmem:[#allocation2 + $0x159] sm:$0xff]
    %v4737 = vld [vmem:[#allocation2 + $0x169] sm:$0xff]
    %v4738 = vld [vmem:[#allocation2 + $0x171] sm:$0xff]
    %v4739 = vld [vmem:[#allocation2 + $0x1b1] sm:$0xff]
    %v4740 = vld [vmem:[#allocation2 + $0x1b9] sm:$0xff]
    %v4741 = vld [vmem:[#allocation2 + $0x1c9] sm:$0xff]
    %v4742 = vld [vmem:[#allocation2 + $0x1d1] sm:$0xff]
    %v4743 = vld [vmem:[#allocation2 + $0x1e1] sm:$0xff]
    %v4744 = vld [vmem:[#allocation2 + $0x1e9] sm:$0xff]
    %v4745 = vld [vmem:[#allocation2 + $0x1f9] sm:$0xff]
    %v4746 = vld [vmem:[#allocation2 + $0x201] sm:$0xff]
    %v4747 = vld [vmem:[#allocation2 + $0x211] sm:$0xff]
    %v4748 = vld [vmem:[#allocation2 + $0x219] sm:$0xff]
    %v4749 = vld [vmem:[#allocation2 + $0x229] sm:$0xff]
    %v4750 = vld [vmem:[#allocation2 + $0x231] sm:$0xff]
    %v4751 = vld [vmem:[#allocation2 + $0x241] sm:$0xff]
    %v4752 = vld [vmem:[#allocation2 + $0x249] sm:$0xff]
    %v4753 = vld [vmem:[#allocation2 + $0x259] sm:$0xff]
    %v4754 = vld [vmem:[#allocation2 + $0x261] sm:$0xff]
    %v4755 = vld [vmem:[#allocation2 + $0x271] sm:$0xff]
    %v4756 = vld [vmem:[#allocation2 + $0x279] sm:$0xff]
    %v4757 = vld [vmem:[#allocation2 + $0x289] sm:$0xff]
    %v4758 = vld [vmem:[#allocation2 + $0x291] sm:$0xff]
    %v4759 = vld [vmem:[#allocation2 + $0x2a1] sm:$0xff]
    %v4760 = vld [vmem:[#allocation2 + $0x2a9] sm:$0xff]
    %v4761 = vld [vmem:[#allocation2 + $0x2b9] sm:$0xff]
    %v4762 = vld [vmem:[#allocation2 + $0x2c1] sm:$0xff]
    %v4763 = vld [vmem:[#allocation2 + $0x2d1] sm:$0xff]
    %v4764 = vld [vmem:[#allocation2 + $0x2d9] sm:$0xff]
    %v4765 = vld [vmem:[#allocation2 + $0x2e9] sm:$0xff]
    %v4766 = vld [vmem:[#allocation2 + $0x2f1] sm:$0xff]
    %v4767 = vld [vmem:[#allocation2 + $0x301] sm:$0xff]
    %v4768 = vld [vmem:[#allocation2 + $0x309] sm:$0xff]
    %v4769 = vld [vmem:[#allocation2 + $0x319] sm:$0xff]
    %v4770 = vld [vmem:[#allocation2 + $0x321] sm:$0xff]
    %v4771 = vld [vmem:[#allocation2 + $0x2] sm:$0xff]
    %v4772 = vld [vmem:[#allocation2 + $0xa] sm:$0xff]
    %v4773 = vld [vmem:[#allocation2 + $0x1a] sm:$0xff]
    %v4774 = vld [vmem:[#allocation2 + $0x22] sm:$0xff]
    %v4775 = vld [vmem:[#allocation2 + $0x32] sm:$0xff]
    %v4776 = vld [vmem:[#allocation2 + $0x3a] sm:$0xff]
    %v4777 = vld [vmem:[#allocation2 + $0x4a] sm:$0xff]
    %v4778 = vld [vmem:[#allocation2 + $0x52] sm:$0xff]
    %v4779 = vld [vmem:[#allocation2 + $0x62] sm:$0xff]
    %v4780 = vld [vmem:[#allocation2 + $0x6a] sm:$0xff]
    %v4781 = vld [vmem:[#allocation2 + $0x7a] sm:$0xff]
    %v4782 = vld [vmem:[#allocation2 + $0x82] sm:$0xff]
    %v4783 = vld [vmem:[#allocation2 + $0x92] sm:$0xff]
    %v4784 = vld [vmem:[#allocation2 + $0x9a] sm:$0xff]
    %v4785 = vld [vmem:[#allocation2 + $0xaa] sm:$0xff]
    %v4786 = vld [vmem:[#allocation2 + $0xb2] sm:$0xff]
    %v4787 = vld [vmem:[#allocation2 + $0xc2] sm:$0xff]
    %v4788 = vld [vmem:[#allocation2 + $0xca] sm:$0xff]
    %v4789 = vld [vmem:[#allocation2 + $0xda] sm:$0xff]
    %v4790 = vld [vmem:[#allocation2 + $0xe2] sm:$0xff]
    %v4791 = vld [vmem:[#allocation2 + $0xf2] sm:$0xff]
    %v4792 = vld [vmem:[#allocation2 + $0xfa] sm:$0xff]
    %v4793 = vld [vmem:[#allocation2 + $0x10a] sm:$0xff]
    %v4794 = vld [vmem:[#allocation2 + $0x112] sm:$0xff]
    %v4795 = vld [vmem:[#allocation2 + $0x122] sm:$0xff]
    %v4796 = vld [vmem:[#allocation2 + $0x12a] sm:$0xff]
    %v4797 = vld [vmem:[#allocation2 + $0x13a] sm:$0xff]
    %v4798 = vld [vmem:[#allocation2 + $0x142] sm:$0xff]
    %v4799 = vld [vmem:[#allocation2 + $0x152] sm:$0xff]
    %v4800 = vld [vmem:[#allocation2 + $0x15a] sm:$0xff]
    %v4801 = vld [vmem:[#allocation2 + $0x16a] sm:$0xff]
    %v4802 = vld [vmem:[#allocation2 + $0x172] sm:$0xff]
    %v4803 = vld [vmem:[#allocation2 + $0x1b2] sm:$0xff]
    %v4804 = vld [vmem:[#allocation2 + $0x1ba] sm:$0xff]
    %v4805 = vld [vmem:[#allocation2 + $0x1ca] sm:$0xff]
    %v4806 = vld [vmem:[#allocation2 + $0x1d2] sm:$0xff]
    %v4807 = vld [vmem:[#allocation2 + $0x1e2] sm:$0xff]
    %v4808 = vld [vmem:[#allocation2 + $0x1ea] sm:$0xff]
    %v4809 = vld [vmem:[#allocation2 + $0x1fa] sm:$0xff]
    %v4810 = vld [vmem:[#allocation2 + $0x202] sm:$0xff]
    %v4811 = vld [vmem:[#allocation2 + $0x212] sm:$0xff]
    %v4812 = vld [vmem:[#allocation2 + $0x21a] sm:$0xff]
    %v4813 = vld [vmem:[#allocation2 + $0x22a] sm:$0xff]
    %v4814 = vld [vmem:[#allocation2 + $0x232] sm:$0xff]
    %v4815 = vld [vmem:[#allocation2 + $0x242] sm:$0xff]
    %v4816 = vld [vmem:[#allocation2 + $0x24a] sm:$0xff]
    %v4817 = vld [vmem:[#allocation2 + $0x25a] sm:$0xff]
    %v4818 = vld [vmem:[#allocation2 + $0x262] sm:$0xff]
    %v4819 = vld [vmem:[#allocation2 + $0x272] sm:$0xff]
    %v4820 = vld [vmem:[#allocation2 + $0x27a] sm:$0xff]
    %v4821 = vld [vmem:[#allocation2 + $0x28a] sm:$0xff]
    %v4822 = vld [vmem:[#allocation2 + $0x292] sm:$0xff]
    %v4823 = vld [vmem:[#allocation2 + $0x2a2] sm:$0xff]
    %v4824 = vld [vmem:[#allocation2 + $0x2aa] sm:$0xff]
    %v4825 = vld [vmem:[#allocation2 + $0x2ba] sm:$0xff]
    %v4826 = vld [vmem:[#allocation2 + $0x2c2] sm:$0xff]
    %v4827 = vld [vmem:[#allocation2 + $0x2d2] sm:$0xff]
    %v4828 = vld [vmem:[#allocation2 + $0x2da] sm:$0xff]
    %v4829 = vld [vmem:[#allocation2 + $0x2ea] sm:$0xff]
    %v4830 = vld [vmem:[#allocation2 + $0x2f2] sm:$0xff]
    %v4831 = vld [vmem:[#allocation2 + $0x302] sm:$0xff]
    %v4832 = vld [vmem:[#allocation2 + $0x30a] sm:$0xff]
    %v4833 = vld [vmem:[#allocation2 + $0x31a] sm:$0xff]
    %v4834 = vld [vmem:[#allocation2 + $0x322] sm:$0xff]
    %v4835 = vld [vmem:[%s95] sm:$0xff]
    %v4836 = vld [vmem:[%s95 + $0x8] sm:$0xff]
    %v4837 = vld [vmem:[%s95 + $0x18] sm:$0xff]
    %v4838 = vld [vmem:[%s95 + $0x20] sm:$0xff]
    %v4839 = vld [vmem:[%s95 + $0x30] sm:$0xff]
    %v4840 = vld [vmem:[%s95 + $0x38] sm:$0xff]
    %v4841 = vld [vmem:[%s95 + $0x48] sm:$0xff]
    %v4842 = vld [vmem:[%s95 + $0x50] sm:$0xff]
    %v4843 = vld [vmem:[%s95 + $0x60] sm:$0xff]
    %v4844 = vld [vmem:[%s95 + $0x68] sm:$0xff]
    %v4845 = vld [vmem:[%s95 + $0x78] sm:$0xff]
    %v4846 = vld [vmem:[%s95 + $0x80] sm:$0xff]
    %v4847 = vld [vmem:[%s95 + $0x90] sm:$0xff]
    %v4848 = vld [vmem:[%s95 + $0x98] sm:$0xff]
    %v4849 = vld [vmem:[%s95 + $0xa8] sm:$0xff]
    %v4850 = vld [vmem:[%s95 + $0xb0] sm:$0xff]
    %v4851 = vld [vmem:[%s95 + $0xc0] sm:$0xff]
    %v4852 = vld [vmem:[%s95 + $0xc8] sm:$0xff]
    %v4853 = vld [vmem:[%s95 + $0xd8] sm:$0xff]
    %v4854 = vld [vmem:[%s95 + $0xe0] sm:$0xff]
    %v4855 = vld [vmem:[%s95 + $0xf0] sm:$0xff]
    %v4856 = vld [vmem:[%s95 + $0xf8] sm:$0xff]
    %v4857 = vld [vmem:[%s95 + $0x108] sm:$0xff]
    %v4858 = vld [vmem:[%s95 + $0x110] sm:$0xff]
    %v4859 = vld [vmem:[%s95 + $0x120] sm:$0xff]
    %v4860 = vld [vmem:[%s95 + $0x128] sm:$0xff]
    %v4861 = vld [vmem:[%s95 + $0x138] sm:$0xff]
    %v4862 = vld [vmem:[%s95 + $0x140] sm:$0xff]
    %v4863 = vld [vmem:[%s95 + $0x150] sm:$0xff]
    %v4864 = vld [vmem:[%s95 + $0x158] sm:$0xff]
    %v4865 = vld [vmem:[%s95 + $0x168] sm:$0xff]
    %v4866 = vld [vmem:[%s95 + $0x170] sm:$0xff]
    %v4867 = vld [vmem:[%s95 + $0x1b0] sm:$0xff]
    %v4868 = vld [vmem:[%s95 + $0x1b8] sm:$0xff]
    %v4869 = vld [vmem:[%s95 + $0x1c8] sm:$0xff]
    %v4870 = vld [vmem:[%s95 + $0x1d0] sm:$0xff]
    %v4871 = vld [vmem:[%s95 + $0x1e0] sm:$0xff]
    %v4872 = vld [vmem:[%s95 + $0x1e8] sm:$0xff]
    %v4873 = vld [vmem:[%s95 + $0x1f8] sm:$0xff]
    %v4874 = vld [vmem:[%s95 + $0x200] sm:$0xff]
    %v4875 = vld [vmem:[%s95 + $0x210] sm:$0xff]
    %v4876 = vld [vmem:[%s95 + $0x218] sm:$0xff]
    %v4877 = vld [vmem:[%s95 + $0x228] sm:$0xff]
    %v4878 = vld [vmem:[%s95 + $0x230] sm:$0xff]
    %v4879 = vld [vmem:[%s95 + $0x240] sm:$0xff]
    %v4880 = vld [vmem:[%s95 + $0x248] sm:$0xff]
    %v4881 = vld [vmem:[%s95 + $0x258] sm:$0xff]
    %v4882 = vld [vmem:[%s95 + $0x260] sm:$0xff]
    %v4883 = vld [vmem:[%s95 + $0x270] sm:$0xff]
    %v4884 = vld [vmem:[%s95 + $0x278] sm:$0xff]
    %v4885 = vld [vmem:[%s95 + $0x288] sm:$0xff]
    %v4886 = vld [vmem:[%s95 + $0x290] sm:$0xff]
    %v4887 = vld [vmem:[%s95 + $0x2a0] sm:$0xff]
    %v4888 = vld [vmem:[%s95 + $0x2a8] sm:$0xff]
    %v4889 = vld [vmem:[%s95 + $0x2b8] sm:$0xff]
    %v4890 = vld [vmem:[%s95 + $0x2c0] sm:$0xff]
    %v4891 = vld [vmem:[%s95 + $0x2d0] sm:$0xff]
    %v4892 = vld [vmem:[%s95 + $0x2d8] sm:$0xff]
    %v4893 = vld [vmem:[%s95 + $0x2e8] sm:$0xff]
    %v4894 = vld [vmem:[%s95 + $0x2f0] sm:$0xff]
    %v4895 = vld [vmem:[%s95 + $0x300] sm:$0xff]
    %v4896 = vld [vmem:[%s95 + $0x308] sm:$0xff]
    %v4897 = vld [vmem:[%s95 + $0x318] sm:$0xff]
    %v4898 = vld [vmem:[%s95 + $0x320] sm:$0xff]
    %v4899 = vld [vmem:[%s95 + $0x1] sm:$0xff]
    %v4900 = vld [vmem:[%s95 + $0x9] sm:$0xff]
    %v4901 = vld [vmem:[%s95 + $0x19] sm:$0xff]
    %v4902 = vld [vmem:[%s95 + $0x21] sm:$0xff]
    %v4903 = vld [vmem:[%s95 + $0x31] sm:$0xff]
    %v4904 = vld [vmem:[%s95 + $0x39] sm:$0xff]
    %v4905 = vld [vmem:[%s95 + $0x49] sm:$0xff]
    %v4906 = vld [vmem:[%s95 + $0x51] sm:$0xff]
    %v4907 = vld [vmem:[%s95 + $0x61] sm:$0xff]
    %v4908 = vld [vmem:[%s95 + $0x69] sm:$0xff]
    %v4909 = vld [vmem:[%s95 + $0x79] sm:$0xff]
    %v4910 = vld [vmem:[%s95 + $0x81] sm:$0xff]
    %v4911 = vld [vmem:[%s95 + $0x91] sm:$0xff]
    %v4912 = vld [vmem:[%s95 + $0x99] sm:$0xff]
    %v4913 = vld [vmem:[%s95 + $0xa9] sm:$0xff]
    %v4914 = vld [vmem:[%s95 + $0xb1] sm:$0xff]
    %v4915 = vld [vmem:[%s95 + $0xc1] sm:$0xff]
    %v4916 = vld [vmem:[%s95 + $0xc9] sm:$0xff]
    %v4917 = vld [vmem:[%s95 + $0xd9] sm:$0xff]
    %v4918 = vld [vmem:[%s95 + $0xe1] sm:$0xff]
    %v4919 = vld [vmem:[%s95 + $0xf1] sm:$0xff]
    %v4920 = vld [vmem:[%s95 + $0xf9] sm:$0xff]
    %v4921 = vld [vmem:[%s95 + $0x109] sm:$0xff]
    %v4922 = vld [vmem:[%s95 + $0x111] sm:$0xff]
    %v4923 = vld [vmem:[%s95 + $0x121] sm:$0xff]
    %v4924 = vld [vmem:[%s95 + $0x129] sm:$0xff]
    %v4925 = vld [vmem:[%s95 + $0x139] sm:$0xff]
    %v4926 = vld [vmem:[%s95 + $0x141] sm:$0xff]
    %v4927 = vld [vmem:[%s95 + $0x151] sm:$0xff]
    %v4928 = vld [vmem:[%s95 + $0x159] sm:$0xff]
    %v4929 = vld [vmem:[%s95 + $0x169] sm:$0xff]
    %v4930 = vld [vmem:[%s95 + $0x171] sm:$0xff]
    %v4931 = vld [vmem:[%s95 + $0x1b1] sm:$0xff]
    %v4932 = vld [vmem:[%s95 + $0x1b9] sm:$0xff]
    %v4933 = vld [vmem:[%s95 + $0x1c9] sm:$0xff]
    %v4934 = vld [vmem:[%s95 + $0x1d1] sm:$0xff]
    %v4935 = vld [vmem:[%s95 + $0x1e1] sm:$0xff]
    %v4936 = vld [vmem:[%s95 + $0x1e9] sm:$0xff]
    %v4937 = vld [vmem:[%s95 + $0x1f9] sm:$0xff]
    %v4938 = vld [vmem:[%s95 + $0x201] sm:$0xff]
    %v4939 = vld [vmem:[%s95 + $0x211] sm:$0xff]
    %v4940 = vld [vmem:[%s95 + $0x219] sm:$0xff]
    %v4941 = vld [vmem:[%s95 + $0x229] sm:$0xff]
    %v4942 = vld [vmem:[%s95 + $0x231] sm:$0xff]
    %v4943 = vld [vmem:[%s95 + $0x241] sm:$0xff]
    %v4944 = vld [vmem:[%s95 + $0x249] sm:$0xff]
    %v4945 = vld [vmem:[%s95 + $0x259] sm:$0xff]
    %v4946 = vld [vmem:[%s95 + $0x261] sm:$0xff]
    %v4947 = vld [vmem:[%s95 + $0x271] sm:$0xff]
    %v4948 = vld [vmem:[%s95 + $0x279] sm:$0xff]
    %v4949 = vld [vmem:[%s95 + $0x289] sm:$0xff]
    %v4950 = vld [vmem:[%s95 + $0x291] sm:$0xff]
    %v4951 = vld [vmem:[%s95 + $0x2a1] sm:$0xff]
    %v4952 = vld [vmem:[%s95 + $0x2a9] sm:$0xff]
    %v4953 = vld [vmem:[%s95 + $0x2b9] sm:$0xff]
    %v4954 = vld [vmem:[%s95 + $0x2c1] sm:$0xff]
    %v4955 = vld [vmem:[%s95 + $0x2d1] sm:$0xff]
    %v4956 = vld [vmem:[%s95 + $0x2d9] sm:$0xff]
    %v4957 = vld [vmem:[%s95 + $0x2e9] sm:$0xff]
    %v4958 = vld [vmem:[%s95 + $0x2f1] sm:$0xff]
    %v4959 = vld [vmem:[%s95 + $0x301] sm:$0xff]
    %v4960 = vld [vmem:[%s95 + $0x309] sm:$0xff]
    %v4961 = vld [vmem:[%s95 + $0x319] sm:$0xff]
    %v4962 = vld [vmem:[%s95 + $0x321] sm:$0xff]
    %v4963 = vld [vmem:[%s95 + $0x2] sm:$0xff]
    %v4964 = vld [vmem:[%s95 + $0xa] sm:$0xff]
    %v4965 = vld [vmem:[%s95 + $0x1a] sm:$0xff]
    %v4966 = vld [vmem:[%s95 + $0x22] sm:$0xff]
    %v4967 = vld [vmem:[%s95 + $0x32] sm:$0xff]
    %v4968 = vld [vmem:[%s95 + $0x3a] sm:$0xff]
    %v4969 = vld [vmem:[%s95 + $0x4a] sm:$0xff]
    %v4970 = vld [vmem:[%s95 + $0x52] sm:$0xff]
    %v4971 = vld [vmem:[%s95 + $0x62] sm:$0xff]
    %v4972 = vld [vmem:[%s95 + $0x6a] sm:$0xff]
    %v4973 = vld [vmem:[%s95 + $0x7a] sm:$0xff]
    %v4974 = vld [vmem:[%s95 + $0x82] sm:$0xff]
    %v4975 = vld [vmem:[%s95 + $0x92] sm:$0xff]
    %v4976 = vld [vmem:[%s95 + $0x9a] sm:$0xff]
    %v4977 = vld [vmem:[%s95 + $0xaa] sm:$0xff]
    %v4978 = vld [vmem:[%s95 + $0xb2] sm:$0xff]
    %v4979 = vld [vmem:[%s95 + $0xc2] sm:$0xff]
    %v4980 = vld [vmem:[%s95 + $0xca] sm:$0xff]
    %v4981 = vld [vmem:[%s95 + $0xda] sm:$0xff]
    %v4982 = vld [vmem:[%s95 + $0xe2] sm:$0xff]
    %v4983 = vld [vmem:[%s95 + $0xf2] sm:$0xff]
    %v4984 = vld [vmem:[%s95 + $0xfa] sm:$0xff]
    %v4985 = vld [vmem:[%s95 + $0x10a] sm:$0xff]
    %v4986 = vld [vmem:[%s95 + $0x112] sm:$0xff]
    %v4987 = vld [vmem:[%s95 + $0x122] sm:$0xff]
    %v4988 = vld [vmem:[%s95 + $0x12a] sm:$0xff]
    %v4989 = vld [vmem:[%s95 + $0x13a] sm:$0xff]
    %v4990 = vld [vmem:[%s95 + $0x142] sm:$0xff]
    %v4991 = vld [vmem:[%s95 + $0x152] sm:$0xff]
    %v4992 = vld [vmem:[%s95 + $0x15a] sm:$0xff]
    %v4993 = vld [vmem:[%s95 + $0x16a] sm:$0xff]
    %v4994 = vld [vmem:[%s95 + $0x172] sm:$0xff]
    %v4995 = vld [vmem:[%s95 + $0x1b2] sm:$0xff]
    %v4996 = vld [vmem:[%s95 + $0x1ba] sm:$0xff]
    %v4997 = vld [vmem:[%s95 + $0x1ca] sm:$0xff]
    %v4998 = vld [vmem:[%s95 + $0x1d2] sm:$0xff]
    %v4999 = vld [vmem:[%s95 + $0x1e2] sm:$0xff]
    %v5000 = vld [vmem:[%s95 + $0x1ea] sm:$0xff]
    %v5001 = vld [vmem:[%s95 + $0x1fa] sm:$0xff]
    %v5002 = vld [vmem:[%s95 + $0x202] sm:$0xff]
    %v5003 = vld [vmem:[%s95 + $0x212] sm:$0xff]
    %v5004 = vld [vmem:[%s95 + $0x21a] sm:$0xff]
    %v5005 = vld [vmem:[%s95 + $0x22a] sm:$0xff]
    %v5006 = vld [vmem:[%s95 + $0x232] sm:$0xff]
    %v5007 = vld [vmem:[%s95 + $0x242] sm:$0xff]
    %v5008 = vld [vmem:[%s95 + $0x24a] sm:$0xff]
    %v5009 = vld [vmem:[%s95 + $0x25a] sm:$0xff]
    %v5010 = vld [vmem:[%s95 + $0x262] sm:$0xff]
    %v5011 = vld [vmem:[%s95 + $0x272] sm:$0xff]
    %v5012 = vld [vmem:[%s95 + $0x27a] sm:$0xff]
    %v5013 = vld [vmem:[%s95 + $0x28a] sm:$0xff]
    %v5014 = vld [vmem:[%s95 + $0x292] sm:$0xff]
    %v5015 = vld [vmem:[%s95 + $0x2a2] sm:$0xff]
    %v5016 = vld [vmem:[%s95 + $0x2aa] sm:$0xff]
    %v5017 = vld [vmem:[%s95 + $0x2ba] sm:$0xff]
    %v5018 = vld [vmem:[%s95 + $0x2c2] sm:$0xff]
    %v5019 = vld [vmem:[%s95 + $0x2d2] sm:$0xff]
    %v5020 = vld [vmem:[%s95 + $0x2da] sm:$0xff]
    %v5021 = vld [vmem:[%s95 + $0x2ea] sm:$0xff]
    %v5022 = vld [vmem:[%s95 + $0x2f2] sm:$0xff]
    %v5023 = vld [vmem:[%s95 + $0x302] sm:$0xff]
    %v5024 = vld [vmem:[%s95 + $0x30a] sm:$0xff]
    %v5025 = vld [vmem:[%s95 + $0x31a] sm:$0xff]
    %v5026 = vld [vmem:[%s95 + $0x322] sm:$0xff]
    %v5027 = vld [vmem:[%s708] sm:$0xff]
    %v5028 = vld [vmem:[%s708 + $0x8] sm:$0xff]
    %v5029 = vld [vmem:[%s708 + $0x18] sm:$0xff]
    %v5030 = vld [vmem:[%s708 + $0x20] sm:$0xff]
    %v5031 = vld [vmem:[%s708 + $0x30] sm:$0xff]
    %v5032 = vld [vmem:[%s708 + $0x38] sm:$0xff]
    %v5033 = vld [vmem:[%s708 + $0x48] sm:$0xff]
    %v5034 = vld [vmem:[%s708 + $0x50] sm:$0xff]
    %v5035 = vld [vmem:[%s708 + $0x60] sm:$0xff]
    %v5036 = vld [vmem:[%s708 + $0x68] sm:$0xff]
    %v5037 = vld [vmem:[%s708 + $0x78] sm:$0xff]
    %v5038 = vld [vmem:[%s708 + $0x80] sm:$0xff]
    %v5039 = vld [vmem:[%s708 + $0x90] sm:$0xff]
    %v5040 = vld [vmem:[%s708 + $0x98] sm:$0xff]
    %v5041 = vld [vmem:[%s708 + $0xa8] sm:$0xff]
    %v5042 = vld [vmem:[%s708 + $0xb0] sm:$0xff]
    %v5043 = vld [vmem:[%s708 + $0xc0] sm:$0xff]
    %v5044 = vld [vmem:[%s708 + $0xc8] sm:$0xff]
    %v5045 = vld [vmem:[%s708 + $0xd8] sm:$0xff]
    %v5046 = vld [vmem:[%s708 + $0xe0] sm:$0xff]
    %v5047 = vld [vmem:[%s708 + $0xf0] sm:$0xff]
    %v5048 = vld [vmem:[%s708 + $0xf8] sm:$0xff]
    %v5049 = vld [vmem:[%s708 + $0x108] sm:$0xff]
    %v5050 = vld [vmem:[%s708 + $0x110] sm:$0xff]
    %v5051 = vld [vmem:[%s708 + $0x120] sm:$0xff]
    %v5052 = vld [vmem:[%s708 + $0x128] sm:$0xff]
    %v5053 = vld [vmem:[%s708 + $0x138] sm:$0xff]
    %v5054 = vld [vmem:[%s708 + $0x140] sm:$0xff]
    %v5055 = vld [vmem:[%s708 + $0x150] sm:$0xff]
    %v5056 = vld [vmem:[%s708 + $0x158] sm:$0xff]
    %v5057 = vld [vmem:[%s708 + $0x168] sm:$0xff]
    %v5058 = vld [vmem:[%s708 + $0x170] sm:$0xff]
    %v5059 = vld [vmem:[%s708 + $0x1b0] sm:$0xff]
    %v5060 = vld [vmem:[%s708 + $0x1b8] sm:$0xff]
    %v5061 = vld [vmem:[%s708 + $0x1c8] sm:$0xff]
    %v5062 = vld [vmem:[%s708 + $0x1d0] sm:$0xff]
    %v5063 = vld [vmem:[%s708 + $0x1e0] sm:$0xff]
    %v5064 = vld [vmem:[%s708 + $0x1e8] sm:$0xff]
    %v5065 = vld [vmem:[%s708 + $0x1f8] sm:$0xff]
    %v5066 = vld [vmem:[%s708 + $0x200] sm:$0xff]
    %v5067 = vld [vmem:[%s708 + $0x210] sm:$0xff]
    %v5068 = vld [vmem:[%s708 + $0x218] sm:$0xff]
    %v5069 = vld [vmem:[%s708 + $0x228] sm:$0xff]
    %v5070 = vld [vmem:[%s708 + $0x230] sm:$0xff]
    %v5071 = vld [vmem:[%s708 + $0x240] sm:$0xff]
    %v5072 = vld [vmem:[%s708 + $0x248] sm:$0xff]
    %v5073 = vld [vmem:[%s708 + $0x258] sm:$0xff]
    %v5074 = vld [vmem:[%s708 + $0x260] sm:$0xff]
    %v5075 = vld [vmem:[%s708 + $0x270] sm:$0xff]
    %v5076 = vld [vmem:[%s708 + $0x278] sm:$0xff]
    %v5077 = vld [vmem:[%s708 + $0x288] sm:$0xff]
    %v5078 = vld [vmem:[%s708 + $0x290] sm:$0xff]
    %v5079 = vld [vmem:[%s708 + $0x2a0] sm:$0xff]
    %v5080 = vld [vmem:[%s708 + $0x2a8] sm:$0xff]
    %v5081 = vld [vmem:[%s708 + $0x2b8] sm:$0xff]
    %v5082 = vld [vmem:[%s708 + $0x2c0] sm:$0xff]
    %v5083 = vld [vmem:[%s708 + $0x2d0] sm:$0xff]
    %v5084 = vld [vmem:[%s708 + $0x2d8] sm:$0xff]
    %v5085 = vld [vmem:[%s708 + $0x2e8] sm:$0xff]
    %v5086 = vld [vmem:[%s708 + $0x2f0] sm:$0xff]
    %v5087 = vld [vmem:[%s708 + $0x300] sm:$0xff]
    %v5088 = vld [vmem:[%s708 + $0x308] sm:$0xff]
    %v5089 = vld [vmem:[%s708 + $0x318] sm:$0xff]
    %v5090 = vld [vmem:[%s708 + $0x320] sm:$0xff]
    %v5091 = vld [vmem:[%s708 + $0x1] sm:$0xff]
    %v5092 = vld [vmem:[%s708 + $0x9] sm:$0xff]
    %v5093 = vld [vmem:[%s708 + $0x19] sm:$0xff]
    %v5094 = vld [vmem:[%s708 + $0x21] sm:$0xff]
    %v5095 = vld [vmem:[%s708 + $0x31] sm:$0xff]
    %v5096 = vld [vmem:[%s708 + $0x39] sm:$0xff]
    %v5097 = vld [vmem:[%s708 + $0x49] sm:$0xff]
    %v5098 = vld [vmem:[%s708 + $0x51] sm:$0xff]
    %v5099 = vld [vmem:[%s708 + $0x61] sm:$0xff]
    %v5100 = vld [vmem:[%s708 + $0x69] sm:$0xff]
    %v5101 = vld [vmem:[%s708 + $0x79] sm:$0xff]
    %v5102 = vld [vmem:[%s708 + $0x81] sm:$0xff]
    %v5103 = vld [vmem:[%s708 + $0x91] sm:$0xff]
    %v5104 = vld [vmem:[%s708 + $0x99] sm:$0xff]
    %v5105 = vld [vmem:[%s708 + $0xa9] sm:$0xff]
    %v5106 = vld [vmem:[%s708 + $0xb1] sm:$0xff]
    %v5107 = vld [vmem:[%s708 + $0xc1] sm:$0xff]
    %v5108 = vld [vmem:[%s708 + $0xc9] sm:$0xff]
    %v5109 = vld [vmem:[%s708 + $0xd9] sm:$0xff]
    %v5110 = vld [vmem:[%s708 + $0xe1] sm:$0xff]
    %v5111 = vld [vmem:[%s708 + $0xf1] sm:$0xff]
    %v5112 = vld [vmem:[%s708 + $0xf9] sm:$0xff]
    %v5113 = vld [vmem:[%s708 + $0x109] sm:$0xff]
    %v5114 = vld [vmem:[%s708 + $0x111] sm:$0xff]
    %v5115 = vld [vmem:[%s708 + $0x121] sm:$0xff]
    %v5116 = vld [vmem:[%s708 + $0x129] sm:$0xff]
    %v5117 = vld [vmem:[%s708 + $0x139] sm:$0xff]
    %v5118 = vld [vmem:[%s708 + $0x141] sm:$0xff]
    %v5119 = vld [vmem:[%s708 + $0x151] sm:$0xff]
    %v5120 = vld [vmem:[%s708 + $0x159] sm:$0xff]
    %v5121 = vld [vmem:[%s708 + $0x169] sm:$0xff]
    %v5122 = vld [vmem:[%s708 + $0x171] sm:$0xff]
    %v5123 = vld [vmem:[%s708 + $0x1b1] sm:$0xff]
    %v5124 = vld [vmem:[%s708 + $0x1b9] sm:$0xff]
    %v5125 = vld [vmem:[%s708 + $0x1c9] sm:$0xff]
    %v5126 = vld [vmem:[%s708 + $0x1d1] sm:$0xff]
    %v5127 = vld [vmem:[%s708 + $0x1e1] sm:$0xff]
    %v5128 = vld [vmem:[%s708 + $0x1e9] sm:$0xff]
    %v5129 = vld [vmem:[%s708 + $0x1f9] sm:$0xff]
    %v5130 = vld [vmem:[%s708 + $0x201] sm:$0xff]
    %v5131 = vld [vmem:[%s708 + $0x211] sm:$0xff]
    %v5132 = vld [vmem:[%s708 + $0x219] sm:$0xff]
    %v5133 = vld [vmem:[%s708 + $0x229] sm:$0xff]
    %v5134 = vld [vmem:[%s708 + $0x231] sm:$0xff]
    %v5135 = vld [vmem:[%s708 + $0x241] sm:$0xff]
    %v5136 = vld [vmem:[%s708 + $0x249] sm:$0xff]
    %v5137 = vld [vmem:[%s708 + $0x259] sm:$0xff]
    %v5138 = vld [vmem:[%s708 + $0x261] sm:$0xff]
    %v5139 = vld [vmem:[%s708 + $0x271] sm:$0xff]
    %v5140 = vld [vmem:[%s708 + $0x279] sm:$0xff]
    %v5141 = vld [vmem:[%s708 + $0x289] sm:$0xff]
    %v5142 = vld [vmem:[%s708 + $0x291] sm:$0xff]
    %v5143 = vld [vmem:[%s708 + $0x2a1] sm:$0xff]
    %v5144 = vld [vmem:[%s708 + $0x2a9] sm:$0xff]
    %v5145 = vld [vmem:[%s708 + $0x2b9] sm:$0xff]
    %v5146 = vld [vmem:[%s708 + $0x2c1] sm:$0xff]
    %v5147 = vld [vmem:[%s708 + $0x2d1] sm:$0xff]
    %v5148 = vld [vmem:[%s708 + $0x2d9] sm:$0xff]
    %v5149 = vld [vmem:[%s708 + $0x2e9] sm:$0xff]
    %v5150 = vld [vmem:[%s708 + $0x2f1] sm:$0xff]
    %v5151 = vld [vmem:[%s708 + $0x301] sm:$0xff]
    %v5152 = vld [vmem:[%s708 + $0x309] sm:$0xff]
    %v5153 = vld [vmem:[%s708 + $0x319] sm:$0xff]
    %v5154 = vld [vmem:[%s708 + $0x321] sm:$0xff]
    %v5155 = vld [vmem:[%s708 + $0x2] sm:$0xff]
    %v5156 = vld [vmem:[%s708 + $0xa] sm:$0xff]
    %v5157 = vld [vmem:[%s708 + $0x1a] sm:$0xff]
    %v5158 = vld [vmem:[%s708 + $0x22] sm:$0xff]
    %v5159 = vld [vmem:[%s708 + $0x32] sm:$0xff]
    %v5160 = vld [vmem:[%s708 + $0x3a] sm:$0xff]
    %v5161 = vld [vmem:[%s708 + $0x4a] sm:$0xff]
    %v5162 = vld [vmem:[%s708 + $0x52] sm:$0xff]
    %v5163 = vld [vmem:[%s708 + $0x62] sm:$0xff]
    %v5164 = vld [vmem:[%s708 + $0x6a] sm:$0xff]
    %v5165 = vld [vmem:[%s708 + $0x7a] sm:$0xff]
    %v5166 = vld [vmem:[%s708 + $0x82] sm:$0xff]
    %v5167 = vld [vmem:[%s708 + $0x92] sm:$0xff]
    %v5168 = vld [vmem:[%s708 + $0x9a] sm:$0xff]
    %v5169 = vld [vmem:[%s708 + $0xaa] sm:$0xff]
    %v5170 = vld [vmem:[%s708 + $0xb2] sm:$0xff]
    %v5171 = vld [vmem:[%s708 + $0xc2] sm:$0xff]
    %v5172 = vld [vmem:[%s708 + $0xca] sm:$0xff]
    %v5173 = vld [vmem:[%s708 + $0xda] sm:$0xff]
    %v5174 = vld [vmem:[%s708 + $0xe2] sm:$0xff]
    %v5175 = vld [vmem:[%s708 + $0xf2] sm:$0xff]
    %v5176 = vld [vmem:[%s708 + $0xfa] sm:$0xff]
    %v5177 = vld [vmem:[%s708 + $0x10a] sm:$0xff]
    %v5178 = vld [vmem:[%s708 + $0x112] sm:$0xff]
    %v5179 = vld [vmem:[%s708 + $0x122] sm:$0xff]
    %v5180 = vld [vmem:[%s708 + $0x12a] sm:$0xff]
    %v5181 = vld [vmem:[%s708 + $0x13a] sm:$0xff]
    %v5182 = vld [vmem:[%s708 + $0x142] sm:$0xff]
    %v5183 = vld [vmem:[%s708 + $0x152] sm:$0xff]
    %v5184 = vld [vmem:[%s708 + $0x15a] sm:$0xff]
    %v5185 = vld [vmem:[%s708 + $0x16a] sm:$0xff]
    %v5186 = vld [vmem:[%s708 + $0x172] sm:$0xff]
    %v5187 = vld [vmem:[%s708 + $0x1b2] sm:$0xff]
    %v5188 = vld [vmem:[%s708 + $0x1ba] sm:$0xff]
    %v5189 = vld [vmem:[%s708 + $0x1ca] sm:$0xff]
    %v5190 = vld [vmem:[%s708 + $0x1d2] sm:$0xff]
    %v5191 = vld [vmem:[%s708 + $0x1e2] sm:$0xff]
    %v5192 = vld [vmem:[%s708 + $0x1ea] sm:$0xff]
    %v5193 = vld [vmem:[%s708 + $0x1fa] sm:$0xff]
    %v5194 = vld [vmem:[%s708 + $0x202] sm:$0xff]
    %v5195 = vld [vmem:[%s708 + $0x212] sm:$0xff]
    %v5196 = vld [vmem:[%s708 + $0x21a] sm:$0xff]
    %v5197 = vld [vmem:[%s708 + $0x22a] sm:$0xff]
    %v5198 = vld [vmem:[%s708 + $0x232] sm:$0xff]
    %v5199 = vld [vmem:[%s708 + $0x242] sm:$0xff]
    %v5200 = vld [vmem:[%s708 + $0x24a] sm:$0xff]
    %v5201 = vld [vmem:[%s708 + $0x25a] sm:$0xff]
    %v5202 = vld [vmem:[%s708 + $0x262] sm:$0xff]
    %v5203 = vld [vmem:[%s708 + $0x272] sm:$0xff]
    %v5204 = vld [vmem:[%s708 + $0x27a] sm:$0xff]
    %v5205 = vld [vmem:[%s708 + $0x28a] sm:$0xff]
    %v5206 = vld [vmem:[%s708 + $0x292] sm:$0xff]
    %v5207 = vld [vmem:[%s708 + $0x2a2] sm:$0xff]
    %v5208 = vld [vmem:[%s708 + $0x2aa] sm:$0xff]
    %v5209 = vld [vmem:[%s708 + $0x2ba] sm:$0xff]
    %v5210 = vld [vmem:[%s708 + $0x2c2] sm:$0xff]
    %v5211 = vld [vmem:[%s708 + $0x2d2] sm:$0xff]
    %v5212 = vld [vmem:[%s708 + $0x2da] sm:$0xff]
    %v5213 = vld [vmem:[%s708 + $0x2ea] sm:$0xff]
    %v5214 = vld [vmem:[%s708 + $0x2f2] sm:$0xff]
    %v5215 = vld [vmem:[%s708 + $0x302] sm:$0xff]
    %v5216 = vld [vmem:[%s708 + $0x30a] sm:$0xff]
    %v5217 = vld [vmem:[%s708 + $0x31a] sm:$0xff]
    %v5218 = vld [vmem:[%s708 + $0x322] sm:$0xff]
    %5283 = vrot.lane.b32.xlu0 %v4707, 64
    %v5284 = vpop.permute.xlu0 %5283
    %5285 = vrot.lane.b32.xlu0 %v4708, 64
    %v5286 = vpop.permute.xlu0 %5285
    %5287 = vrot.lane.b32.xlu0 %v4709, 64
    %v5288 = vpop.permute.xlu0 %5287
    %5289 = vrot.lane.b32.xlu0 %v4710, 64
    %v5290 = vpop.permute.xlu0 %5289
    %5291 = vrot.lane.b32.xlu0 %v4711, 64
    %v5292 = vpop.permute.xlu0 %5291
    %5293 = vrot.lane.b32.xlu0 %v4712, 64
    %v5294 = vpop.permute.xlu0 %5293
    %5295 = vrot.lane.b32.xlu0 %v4713, 64
    %v5296 = vpop.permute.xlu0 %5295
    %5297 = vrot.lane.b32.xlu0 %v4714, 64
    %v5298 = vpop.permute.xlu0 %5297
    %5299 = vrot.lane.b32.xlu0 %v4715, 64
    %v5300 = vpop.permute.xlu0 %5299
    %5301 = vrot.lane.b32.xlu0 %v4716, 64
    %v5302 = vpop.permute.xlu0 %5301
    %5303 = vrot.lane.b32.xlu0 %v4717, 64
    %v5304 = vpop.permute.xlu0 %5303
    %5305 = vrot.lane.b32.xlu0 %v4718, 64
    %v5306 = vpop.permute.xlu0 %5305
    %5307 = vrot.lane.b32.xlu0 %v4719, 64
    %v5308 = vpop.permute.xlu0 %5307
    %5309 = vrot.lane.b32.xlu0 %v4720, 64
    %v5310 = vpop.permute.xlu0 %5309
    %5311 = vrot.lane.b32.xlu0 %v4721, 64
    %v5312 = vpop.permute.xlu0 %5311
    %5313 = vrot.lane.b32.xlu0 %v4722, 64
    %v5314 = vpop.permute.xlu0 %5313
    %5315 = vrot.lane.b32.xlu0 %v4723, 64
    %v5316 = vpop.permute.xlu0 %5315
    %5317 = vrot.lane.b32.xlu0 %v4724, 64
    %v5318 = vpop.permute.xlu0 %5317
    %5319 = vrot.lane.b32.xlu0 %v4725, 64
    %v5320 = vpop.permute.xlu0 %5319
    %5321 = vrot.lane.b32.xlu0 %v4726, 64
    %v5322 = vpop.permute.xlu0 %5321
    %5323 = vrot.lane.b32.xlu0 %v4727, 64
    %v5324 = vpop.permute.xlu0 %5323
    %5325 = vrot.lane.b32.xlu0 %v4728, 64
    %v5326 = vpop.permute.xlu0 %5325
    %5327 = vrot.lane.b32.xlu0 %v4729, 64
    %v5328 = vpop.permute.xlu0 %5327
    %5329 = vrot.lane.b32.xlu0 %v4730, 64
    %v5330 = vpop.permute.xlu0 %5329
    %5331 = vrot.lane.b32.xlu0 %v4731, 64
    %v5332 = vpop.permute.xlu0 %5331
    %5333 = vrot.lane.b32.xlu0 %v4732, 64
    %v5334 = vpop.permute.xlu0 %5333
    %5335 = vrot.lane.b32.xlu0 %v4733, 64
    %v5336 = vpop.permute.xlu0 %5335
    %5337 = vrot.lane.b32.xlu0 %v4734, 64
    %v5338 = vpop.permute.xlu0 %5337
    %5339 = vrot.lane.b32.xlu0 %v4735, 64
    %v5340 = vpop.permute.xlu0 %5339
    %5341 = vrot.lane.b32.xlu0 %v4736, 64
    %v5342 = vpop.permute.xlu0 %5341
    %5343 = vrot.lane.b32.xlu0 %v4737, 64
    %v5344 = vpop.permute.xlu0 %5343
    %5345 = vrot.lane.b32.xlu0 %v4738, 64
    %v5346 = vpop.permute.xlu0 %5345
    %5347 = vrot.lane.b32.xlu0 %v4739, 64
    %v5348 = vpop.permute.xlu0 %5347
    %5349 = vrot.lane.b32.xlu0 %v4740, 64
    %v5350 = vpop.permute.xlu0 %5349
    %5351 = vrot.lane.b32.xlu0 %v4741, 64
    %v5352 = vpop.permute.xlu0 %5351
    %5353 = vrot.lane.b32.xlu0 %v4742, 64
    %v5354 = vpop.permute.xlu0 %5353
    %5355 = vrot.lane.b32.xlu0 %v4743, 64
    %v5356 = vpop.permute.xlu0 %5355
    %5357 = vrot.lane.b32.xlu0 %v4744, 64
    %v5358 = vpop.permute.xlu0 %5357
    %5359 = vrot.lane.b32.xlu0 %v4745, 64
    %v5360 = vpop.permute.xlu0 %5359
    %5361 = vrot.lane.b32.xlu0 %v4746, 64
    %v5362 = vpop.permute.xlu0 %5361
    %5363 = vrot.lane.b32.xlu0 %v4747, 64
    %v5364 = vpop.permute.xlu0 %5363
    %5365 = vrot.lane.b32.xlu0 %v4748, 64
    %v5366 = vpop.permute.xlu0 %5365
    %5367 = vrot.lane.b32.xlu0 %v4749, 64
    %v5368 = vpop.permute.xlu0 %5367
    %5369 = vrot.lane.b32.xlu0 %v4750, 64
    %v5370 = vpop.permute.xlu0 %5369
    %5371 = vrot.lane.b32.xlu0 %v4751, 64
    %v5372 = vpop.permute.xlu0 %5371
    %5373 = vrot.lane.b32.xlu0 %v4752, 64
    %v5374 = vpop.permute.xlu0 %5373
    %5375 = vrot.lane.b32.xlu0 %v4753, 64
    %v5376 = vpop.permute.xlu0 %5375
    %5377 = vrot.lane.b32.xlu0 %v4754, 64
    %v5378 = vpop.permute.xlu0 %5377
    %5379 = vrot.lane.b32.xlu0 %v4755, 64
    %v5380 = vpop.permute.xlu0 %5379
    %5381 = vrot.lane.b32.xlu0 %v4756, 64
    %v5382 = vpop.permute.xlu0 %5381
    %5383 = vrot.lane.b32.xlu0 %v4757, 64
    %v5384 = vpop.permute.xlu0 %5383
    %5385 = vrot.lane.b32.xlu0 %v4758, 64
    %v5386 = vpop.permute.xlu0 %5385
    %5387 = vrot.lane.b32.xlu0 %v4759, 64
    %v5388 = vpop.permute.xlu0 %5387
    %5389 = vrot.lane.b32.xlu0 %v4760, 64
    %v5390 = vpop.permute.xlu0 %5389
    %5391 = vrot.lane.b32.xlu0 %v4761, 64
    %v5392 = vpop.permute.xlu0 %5391
    %5393 = vrot.lane.b32.xlu0 %v4762, 64
    %v5394 = vpop.permute.xlu0 %5393
    %5395 = vrot.lane.b32.xlu0 %v4763, 64
    %v5396 = vpop.permute.xlu0 %5395
    %5397 = vrot.lane.b32.xlu0 %v4764, 64
    %v5398 = vpop.permute.xlu0 %5397
    %5399 = vrot.lane.b32.xlu0 %v4765, 64
    %v5400 = vpop.permute.xlu0 %5399
    %5401 = vrot.lane.b32.xlu0 %v4766, 64
    %v5402 = vpop.permute.xlu0 %5401
    %5403 = vrot.lane.b32.xlu0 %v4767, 64
    %v5404 = vpop.permute.xlu0 %5403
    %5405 = vrot.lane.b32.xlu0 %v4768, 64
    %v5406 = vpop.permute.xlu0 %5405
    %5407 = vrot.lane.b32.xlu0 %v4769, 64
    %v5408 = vpop.permute.xlu0 %5407
    %5409 = vrot.lane.b32.xlu0 %v4770, 64
    %v5410 = vpop.permute.xlu0 %5409
    %5539 = vrot.lane.b32.xlu0 %v4835, 64
    %v5540 = vpop.permute.xlu0 %5539
    %5541 = vrot.lane.b32.xlu0 %v4836, 64
    %v5542 = vpop.permute.xlu0 %5541
    %5543 = vrot.lane.b32.xlu0 %v4837, 64
    %v5544 = vpop.permute.xlu0 %5543
    %5545 = vrot.lane.b32.xlu0 %v4838, 64
    %v5546 = vpop.permute.xlu0 %5545
    %5547 = vrot.lane.b32.xlu0 %v4839, 64
    %v5548 = vpop.permute.xlu0 %5547
    %5549 = vrot.lane.b32.xlu0 %v4840, 64
    %v5550 = vpop.permute.xlu0 %5549
    %5551 = vrot.lane.b32.xlu0 %v4841, 64
    %v5552 = vpop.permute.xlu0 %5551
    %5553 = vrot.lane.b32.xlu0 %v4842, 64
    %v5554 = vpop.permute.xlu0 %5553
    %5555 = vrot.lane.b32.xlu0 %v4843, 64
    %v5556 = vpop.permute.xlu0 %5555
    %5557 = vrot.lane.b32.xlu0 %v4844, 64
    %v5558 = vpop.permute.xlu0 %5557
    %5559 = vrot.lane.b32.xlu0 %v4845, 64
    %v5560 = vpop.permute.xlu0 %5559
    %5561 = vrot.lane.b32.xlu0 %v4846, 64
    %v5562 = vpop.permute.xlu0 %5561
    %5563 = vrot.lane.b32.xlu0 %v4847, 64
    %v5564 = vpop.permute.xlu0 %5563
    %5565 = vrot.lane.b32.xlu0 %v4848, 64
    %v5566 = vpop.permute.xlu0 %5565
    %5567 = vrot.lane.b32.xlu0 %v4849, 64
    %v5568 = vpop.permute.xlu0 %5567
    %5569 = vrot.lane.b32.xlu0 %v4850, 64
    %v5570 = vpop.permute.xlu0 %5569
    %5571 = vrot.lane.b32.xlu0 %v4851, 64
    %v5572 = vpop.permute.xlu0 %5571
    %5573 = vrot.lane.b32.xlu0 %v4852, 64
    %v5574 = vpop.permute.xlu0 %5573
    %5575 = vrot.lane.b32.xlu0 %v4853, 64
    %v5576 = vpop.permute.xlu0 %5575
    %5577 = vrot.lane.b32.xlu0 %v4854, 64
    %v5578 = vpop.permute.xlu0 %5577
    %5579 = vrot.lane.b32.xlu0 %v4855, 64
    %v5580 = vpop.permute.xlu0 %5579
    %5581 = vrot.lane.b32.xlu0 %v4856, 64
    %v5582 = vpop.permute.xlu0 %5581
    %5583 = vrot.lane.b32.xlu0 %v4857, 64
    %v5584 = vpop.permute.xlu0 %5583
    %5585 = vrot.lane.b32.xlu0 %v4858, 64
    %v5586 = vpop.permute.xlu0 %5585
    %5587 = vrot.lane.b32.xlu0 %v4859, 64
    %v5588 = vpop.permute.xlu0 %5587
    %5589 = vrot.lane.b32.xlu0 %v4860, 64
    %v5590 = vpop.permute.xlu0 %5589
    %5591 = vrot.lane.b32.xlu0 %v4861, 64
    %v5592 = vpop.permute.xlu0 %5591
    %5593 = vrot.lane.b32.xlu0 %v4862, 64
    %v5594 = vpop.permute.xlu0 %5593
    %5595 = vrot.lane.b32.xlu0 %v4863, 64
    %v5596 = vpop.permute.xlu0 %5595
    %5597 = vrot.lane.b32.xlu0 %v4864, 64
    %v5598 = vpop.permute.xlu0 %5597
    %5599 = vrot.lane.b32.xlu0 %v4865, 64
    %v5600 = vpop.permute.xlu0 %5599
    %5601 = vrot.lane.b32.xlu0 %v4866, 64
    %v5602 = vpop.permute.xlu0 %5601
    %5603 = vrot.lane.b32.xlu0 %v4867, 64
    %v5604 = vpop.permute.xlu0 %5603
    %5605 = vrot.lane.b32.xlu0 %v4868, 64
    %v5606 = vpop.permute.xlu0 %5605
    %5607 = vrot.lane.b32.xlu0 %v4869, 64
    %v5608 = vpop.permute.xlu0 %5607
    %5609 = vrot.lane.b32.xlu0 %v4870, 64
    %v5610 = vpop.permute.xlu0 %5609
    %5611 = vrot.lane.b32.xlu0 %v4871, 64
    %v5612 = vpop.permute.xlu0 %5611
    %5613 = vrot.lane.b32.xlu0 %v4872, 64
    %v5614 = vpop.permute.xlu0 %5613
    %5615 = vrot.lane.b32.xlu0 %v4873, 64
    %v5616 = vpop.permute.xlu0 %5615
    %5617 = vrot.lane.b32.xlu0 %v4874, 64
    %v5618 = vpop.permute.xlu0 %5617
    %5619 = vrot.lane.b32.xlu0 %v4875, 64
    %v5620 = vpop.permute.xlu0 %5619
    %5621 = vrot.lane.b32.xlu0 %v4876, 64
    %v5622 = vpop.permute.xlu0 %5621
    %5623 = vrot.lane.b32.xlu0 %v4877, 64
    %v5624 = vpop.permute.xlu0 %5623
    %5625 = vrot.lane.b32.xlu0 %v4878, 64
    %v5626 = vpop.permute.xlu0 %5625
    %5627 = vrot.lane.b32.xlu0 %v4879, 64
    %v5628 = vpop.permute.xlu0 %5627
    %5629 = vrot.lane.b32.xlu0 %v4880, 64
    %v5630 = vpop.permute.xlu0 %5629
    %5631 = vrot.lane.b32.xlu0 %v4881, 64
    %v5632 = vpop.permute.xlu0 %5631
    %5633 = vrot.lane.b32.xlu0 %v4882, 64
    %v5634 = vpop.permute.xlu0 %5633
    %5635 = vrot.lane.b32.xlu0 %v4883, 64
    %v5636 = vpop.permute.xlu0 %5635
    %5637 = vrot.lane.b32.xlu0 %v4884, 64
    %v5638 = vpop.permute.xlu0 %5637
    %5639 = vrot.lane.b32.xlu0 %v4885, 64
    %v5640 = vpop.permute.xlu0 %5639
    %5641 = vrot.lane.b32.xlu0 %v4886, 64
    %v5642 = vpop.permute.xlu0 %5641
    %5643 = vrot.lane.b32.xlu0 %v4887, 64
    %v5644 = vpop.permute.xlu0 %5643
    %5645 = vrot.lane.b32.xlu0 %v4888, 64
    %v5646 = vpop.permute.xlu0 %5645
    %5647 = vrot.lane.b32.xlu0 %v4889, 64
    %v5648 = vpop.permute.xlu0 %5647
    %5649 = vrot.lane.b32.xlu0 %v4890, 64
    %v5650 = vpop.permute.xlu0 %5649
    %5651 = vrot.lane.b32.xlu0 %v4891, 64
    %v5652 = vpop.permute.xlu0 %5651
    %5653 = vrot.lane.b32.xlu0 %v4892, 64
    %v5654 = vpop.permute.xlu0 %5653
    %5655 = vrot.lane.b32.xlu0 %v4893, 64
    %v5656 = vpop.permute.xlu0 %5655
    %5657 = vrot.lane.b32.xlu0 %v4894, 64
    %v5658 = vpop.permute.xlu0 %5657
    %5659 = vrot.lane.b32.xlu0 %v4895, 64
    %v5660 = vpop.permute.xlu0 %5659
    %5661 = vrot.lane.b32.xlu0 %v4896, 64
    %v5662 = vpop.permute.xlu0 %5661
    %5663 = vrot.lane.b32.xlu0 %v4897, 64
    %v5664 = vpop.permute.xlu0 %5663
    %5665 = vrot.lane.b32.xlu0 %v4898, 64
    %v5666 = vpop.permute.xlu0 %5665
    %5795 = vrot.lane.b32.xlu0 %v4963, 64
    %v5796 = vpop.permute.xlu0 %5795
    %5797 = vrot.lane.b32.xlu0 %v4964, 64
    %v5798 = vpop.permute.xlu0 %5797
    %5799 = vrot.lane.b32.xlu0 %v4965, 64
    %v5800 = vpop.permute.xlu0 %5799
    %5801 = vrot.lane.b32.xlu0 %v4966, 64
    %v5802 = vpop.permute.xlu0 %5801
    %5803 = vrot.lane.b32.xlu0 %v4967, 64
    %v5804 = vpop.permute.xlu0 %5803
    %5805 = vrot.lane.b32.xlu0 %v4968, 64
    %v5806 = vpop.permute.xlu0 %5805
    %5807 = vrot.lane.b32.xlu0 %v4969, 64
    %v5808 = vpop.permute.xlu0 %5807
    %5809 = vrot.lane.b32.xlu0 %v4970, 64
    %v5810 = vpop.permute.xlu0 %5809
    %5811 = vrot.lane.b32.xlu0 %v4971, 64
    %v5812 = vpop.permute.xlu0 %5811
    %5813 = vrot.lane.b32.xlu0 %v4972, 64
    %v5814 = vpop.permute.xlu0 %5813
    %5815 = vrot.lane.b32.xlu0 %v4973, 64
    %v5816 = vpop.permute.xlu0 %5815
    %5817 = vrot.lane.b32.xlu0 %v4974, 64
    %v5818 = vpop.permute.xlu0 %5817
    %5819 = vrot.lane.b32.xlu0 %v4975, 64
    %v5820 = vpop.permute.xlu0 %5819
    %5821 = vrot.lane.b32.xlu0 %v4976, 64
    %v5822 = vpop.permute.xlu0 %5821
    %5823 = vrot.lane.b32.xlu0 %v4977, 64
    %v5824 = vpop.permute.xlu0 %5823
    %5825 = vrot.lane.b32.xlu0 %v4978, 64
    %v5826 = vpop.permute.xlu0 %5825
    %5827 = vrot.lane.b32.xlu0 %v4979, 64
    %v5828 = vpop.permute.xlu0 %5827
    %5829 = vrot.lane.b32.xlu0 %v4980, 64
    %v5830 = vpop.permute.xlu0 %5829
    %5831 = vrot.lane.b32.xlu0 %v4981, 64
    %v5832 = vpop.permute.xlu0 %5831
    %5833 = vrot.lane.b32.xlu0 %v4982, 64
    %v5834 = vpop.permute.xlu0 %5833
    %5835 = vrot.lane.b32.xlu0 %v4983, 64
    %v5836 = vpop.permute.xlu0 %5835
    %5837 = vrot.lane.b32.xlu0 %v4984, 64
    %v5838 = vpop.permute.xlu0 %5837
    %5839 = vrot.lane.b32.xlu0 %v4985, 64
    %v5840 = vpop.permute.xlu0 %5839
    %5841 = vrot.lane.b32.xlu0 %v4986, 64
    %v5842 = vpop.permute.xlu0 %5841
    %5843 = vrot.lane.b32.xlu0 %v4987, 64
    %v5844 = vpop.permute.xlu0 %5843
    %5845 = vrot.lane.b32.xlu0 %v4988, 64
    %v5846 = vpop.permute.xlu0 %5845
    %5847 = vrot.lane.b32.xlu0 %v4989, 64
    %v5848 = vpop.permute.xlu0 %5847
    %5849 = vrot.lane.b32.xlu0 %v4990, 64
    %v5850 = vpop.permute.xlu0 %5849
    %5851 = vrot.lane.b32.xlu0 %v4991, 64
    %v5852 = vpop.permute.xlu0 %5851
    %5853 = vrot.lane.b32.xlu0 %v4992, 64
    %v5854 = vpop.permute.xlu0 %5853
    %5855 = vrot.lane.b32.xlu0 %v4993, 64
    %v5856 = vpop.permute.xlu0 %5855
    %5857 = vrot.lane.b32.xlu0 %v4994, 64
    %v5858 = vpop.permute.xlu0 %5857
    %5859 = vrot.lane.b32.xlu0 %v4995, 64
    %v5860 = vpop.permute.xlu0 %5859
    %5861 = vrot.lane.b32.xlu0 %v4996, 64
    %v5862 = vpop.permute.xlu0 %5861
    %5863 = vrot.lane.b32.xlu0 %v4997, 64
    %v5864 = vpop.permute.xlu0 %5863
    %5865 = vrot.lane.b32.xlu0 %v4998, 64
    %v5866 = vpop.permute.xlu0 %5865
    %5867 = vrot.lane.b32.xlu0 %v4999, 64
    %v5868 = vpop.permute.xlu0 %5867
    %5869 = vrot.lane.b32.xlu0 %v5000, 64
    %v5870 = vpop.permute.xlu0 %5869
    %5871 = vrot.lane.b32.xlu0 %v5001, 64
    %v5872 = vpop.permute.xlu0 %5871
    %5873 = vrot.lane.b32.xlu0 %v5002, 64
    %v5874 = vpop.permute.xlu0 %5873
    %5875 = vrot.lane.b32.xlu0 %v5003, 64
    %v5876 = vpop.permute.xlu0 %5875
    %5877 = vrot.lane.b32.xlu0 %v5004, 64
    %v5878 = vpop.permute.xlu0 %5877
    %5879 = vrot.lane.b32.xlu0 %v5005, 64
    %v5880 = vpop.permute.xlu0 %5879
    %5881 = vrot.lane.b32.xlu0 %v5006, 64
    %v5882 = vpop.permute.xlu0 %5881
    %5883 = vrot.lane.b32.xlu0 %v5007, 64
    %v5884 = vpop.permute.xlu0 %5883
    %5885 = vrot.lane.b32.xlu0 %v5008, 64
    %v5886 = vpop.permute.xlu0 %5885
    %5887 = vrot.lane.b32.xlu0 %v5009, 64
    %v5888 = vpop.permute.xlu0 %5887
    %5889 = vrot.lane.b32.xlu0 %v5010, 64
    %v5890 = vpop.permute.xlu0 %5889
    %5891 = vrot.lane.b32.xlu0 %v5011, 64
    %v5892 = vpop.permute.xlu0 %5891
    %5893 = vrot.lane.b32.xlu0 %v5012, 64
    %v5894 = vpop.permute.xlu0 %5893
    %5895 = vrot.lane.b32.xlu0 %v5013, 64
    %v5896 = vpop.permute.xlu0 %5895
    %5897 = vrot.lane.b32.xlu0 %v5014, 64
    %v5898 = vpop.permute.xlu0 %5897
    %5899 = vrot.lane.b32.xlu0 %v5015, 64
    %v5900 = vpop.permute.xlu0 %5899
    %5901 = vrot.lane.b32.xlu0 %v5016, 64
    %v5902 = vpop.permute.xlu0 %5901
    %5903 = vrot.lane.b32.xlu0 %v5017, 64
    %v5904 = vpop.permute.xlu0 %5903
    %5905 = vrot.lane.b32.xlu0 %v5018, 64
    %v5906 = vpop.permute.xlu0 %5905
    %5907 = vrot.lane.b32.xlu0 %v5019, 64
    %v5908 = vpop.permute.xlu0 %5907
    %5909 = vrot.lane.b32.xlu0 %v5020, 64
    %v5910 = vpop.permute.xlu0 %5909
    %5911 = vrot.lane.b32.xlu0 %v5021, 64
    %v5912 = vpop.permute.xlu0 %5911
    %5913 = vrot.lane.b32.xlu0 %v5022, 64
    %v5914 = vpop.permute.xlu0 %5913
    %5915 = vrot.lane.b32.xlu0 %v5023, 64
    %v5916 = vpop.permute.xlu0 %5915
    %5917 = vrot.lane.b32.xlu0 %v5024, 64
    %v5918 = vpop.permute.xlu0 %5917
    %5919 = vrot.lane.b32.xlu0 %v5025, 64
    %v5920 = vpop.permute.xlu0 %5919
    %5921 = vrot.lane.b32.xlu0 %v5026, 64
    %v5922 = vpop.permute.xlu0 %5921
    %6051 = vrot.lane.b32.xlu0 %v5091, 64
    %v6052 = vpop.permute.xlu0 %6051
    %6053 = vrot.lane.b32.xlu0 %v5092, 64
    %v6054 = vpop.permute.xlu0 %6053
    %6055 = vrot.lane.b32.xlu0 %v5093, 64
    %v6056 = vpop.permute.xlu0 %6055
    %6057 = vrot.lane.b32.xlu0 %v5094, 64
    %v6058 = vpop.permute.xlu0 %6057
    %6059 = vrot.lane.b32.xlu0 %v5095, 64
    %v6060 = vpop.permute.xlu0 %6059
    %6061 = vrot.lane.b32.xlu0 %v5096, 64
    %v6062 = vpop.permute.xlu0 %6061
    %6063 = vrot.lane.b32.xlu0 %v5097, 64
    %v6064 = vpop.permute.xlu0 %6063
    %6065 = vrot.lane.b32.xlu0 %v5098, 64
    %v6066 = vpop.permute.xlu0 %6065
    %6067 = vrot.lane.b32.xlu0 %v5099, 64
    %v6068 = vpop.permute.xlu0 %6067
    %6069 = vrot.lane.b32.xlu0 %v5100, 64
    %v6070 = vpop.permute.xlu0 %6069
    %6071 = vrot.lane.b32.xlu0 %v5101, 64
    %v6072 = vpop.permute.xlu0 %6071
    %6073 = vrot.lane.b32.xlu0 %v5102, 64
    %v6074 = vpop.permute.xlu0 %6073
    %6075 = vrot.lane.b32.xlu0 %v5103, 64
    %v6076 = vpop.permute.xlu0 %6075
    %6077 = vrot.lane.b32.xlu0 %v5104, 64
    %v6078 = vpop.permute.xlu0 %6077
    %6079 = vrot.lane.b32.xlu0 %v5105, 64
    %v6080 = vpop.permute.xlu0 %6079
    %6081 = vrot.lane.b32.xlu0 %v5106, 64
    %v6082 = vpop.permute.xlu0 %6081
    %6083 = vrot.lane.b32.xlu0 %v5107, 64
    %v6084 = vpop.permute.xlu0 %6083
    %6085 = vrot.lane.b32.xlu0 %v5108, 64
    %v6086 = vpop.permute.xlu0 %6085
    %6087 = vrot.lane.b32.xlu0 %v5109, 64
    %v6088 = vpop.permute.xlu0 %6087
    %6089 = vrot.lane.b32.xlu0 %v5110, 64
    %v6090 = vpop.permute.xlu0 %6089
    %6091 = vrot.lane.b32.xlu0 %v5111, 64
    %v6092 = vpop.permute.xlu0 %6091
    %6093 = vrot.lane.b32.xlu0 %v5112, 64
    %v6094 = vpop.permute.xlu0 %6093
    %6095 = vrot.lane.b32.xlu0 %v5113, 64
    %v6096 = vpop.permute.xlu0 %6095
    %6097 = vrot.lane.b32.xlu0 %v5114, 64
    %v6098 = vpop.permute.xlu0 %6097
    %6099 = vrot.lane.b32.xlu0 %v5115, 64
    %v6100 = vpop.permute.xlu0 %6099
    %6101 = vrot.lane.b32.xlu0 %v5116, 64
    %v6102 = vpop.permute.xlu0 %6101
    %6103 = vrot.lane.b32.xlu0 %v5117, 64
    %v6104 = vpop.permute.xlu0 %6103
    %6105 = vrot.lane.b32.xlu0 %v5118, 64
    %v6106 = vpop.permute.xlu0 %6105
    %6107 = vrot.lane.b32.xlu0 %v5119, 64
    %v6108 = vpop.permute.xlu0 %6107
    %6109 = vrot.lane.b32.xlu0 %v5120, 64
    %v6110 = vpop.permute.xlu0 %6109
    %6111 = vrot.lane.b32.xlu0 %v5121, 64
    %v6112 = vpop.permute.xlu0 %6111
    %6113 = vrot.lane.b32.xlu0 %v5122, 64
    %v6114 = vpop.permute.xlu0 %6113
    %6115 = vrot.lane.b32.xlu0 %v5123, 64
    %v6116 = vpop.permute.xlu0 %6115
    %6117 = vrot.lane.b32.xlu0 %v5124, 64
    %v6118 = vpop.permute.xlu0 %6117
    %6119 = vrot.lane.b32.xlu0 %v5125, 64
    %v6120 = vpop.permute.xlu0 %6119
    %6121 = vrot.lane.b32.xlu0 %v5126, 64
    %v6122 = vpop.permute.xlu0 %6121
    %6123 = vrot.lane.b32.xlu0 %v5127, 64
    %v6124 = vpop.permute.xlu0 %6123
    %6125 = vrot.lane.b32.xlu0 %v5128, 64
    %v6126 = vpop.permute.xlu0 %6125
    %6127 = vrot.lane.b32.xlu0 %v5129, 64
    %v6128 = vpop.permute.xlu0 %6127
    %6129 = vrot.lane.b32.xlu0 %v5130, 64
    %v6130 = vpop.permute.xlu0 %6129
    %6131 = vrot.lane.b32.xlu0 %v5131, 64
    %v6132 = vpop.permute.xlu0 %6131
    %6133 = vrot.lane.b32.xlu0 %v5132, 64
    %v6134 = vpop.permute.xlu0 %6133
    %6135 = vrot.lane.b32.xlu0 %v5133, 64
    %v6136 = vpop.permute.xlu0 %6135
    %6137 = vrot.lane.b32.xlu0 %v5134, 64
    %v6138 = vpop.permute.xlu0 %6137
    %6139 = vrot.lane.b32.xlu0 %v5135, 64
    %v6140 = vpop.permute.xlu0 %6139
    %6141 = vrot.lane.b32.xlu0 %v5136, 64
    %v6142 = vpop.permute.xlu0 %6141
    %6143 = vrot.lane.b32.xlu0 %v5137, 64
    %v6144 = vpop.permute.xlu0 %6143
    %6145 = vrot.lane.b32.xlu0 %v5138, 64
    %v6146 = vpop.permute.xlu0 %6145
    %6147 = vrot.lane.b32.xlu0 %v5139, 64
    %v6148 = vpop.permute.xlu0 %6147
    %6149 = vrot.lane.b32.xlu0 %v5140, 64
    %v6150 = vpop.permute.xlu0 %6149
    %6151 = vrot.lane.b32.xlu0 %v5141, 64
    %v6152 = vpop.permute.xlu0 %6151
    %6153 = vrot.lane.b32.xlu0 %v5142, 64
    %v6154 = vpop.permute.xlu0 %6153
    %6155 = vrot.lane.b32.xlu0 %v5143, 64
    %v6156 = vpop.permute.xlu0 %6155
    %6157 = vrot.lane.b32.xlu0 %v5144, 64
    %v6158 = vpop.permute.xlu0 %6157
    %6159 = vrot.lane.b32.xlu0 %v5145, 64
    %v6160 = vpop.permute.xlu0 %6159
    %6161 = vrot.lane.b32.xlu0 %v5146, 64
    %v6162 = vpop.permute.xlu0 %6161
    %6163 = vrot.lane.b32.xlu0 %v5147, 64
    %v6164 = vpop.permute.xlu0 %6163
    %6165 = vrot.lane.b32.xlu0 %v5148, 64
    %v6166 = vpop.permute.xlu0 %6165
    %6167 = vrot.lane.b32.xlu0 %v5149, 64
    %v6168 = vpop.permute.xlu0 %6167
    %6169 = vrot.lane.b32.xlu0 %v5150, 64
    %v6170 = vpop.permute.xlu0 %6169
    %6171 = vrot.lane.b32.xlu0 %v5151, 64
    %v6172 = vpop.permute.xlu0 %6171
    %6173 = vrot.lane.b32.xlu0 %v5152, 64
    %v6174 = vpop.permute.xlu0 %6173
    %6175 = vrot.lane.b32.xlu0 %v5153, 64
    %v6176 = vpop.permute.xlu0 %6175
    %6177 = vrot.lane.b32.xlu0 %v5154, 64
    %v6178 = vpop.permute.xlu0 %6177
    %v6243 = vsel %vm96, %v4643, %v5284
    %v6244 = vsel %vm96, %v4644, %v5286
    %v6245 = vsel %vm96, %v4645, %v5288
    %v6246 = vsel %vm96, %v4646, %v5290
    %v6247 = vsel %vm96, %v4647, %v5292
    %v6248 = vsel %vm96, %v4648, %v5294
    %v6249 = vsel %vm96, %v4649, %v5296
    %v6250 = vsel %vm96, %v4650, %v5298
    %v6251 = vsel %vm96, %v4651, %v5300
    %v6252 = vsel %vm96, %v4652, %v5302
    %v6253 = vsel %vm96, %v4653, %v5304
    %v6254 = vsel %vm96, %v4654, %v5306
    %v6255 = vsel %vm96, %v4655, %v5308
    %v6256 = vsel %vm96, %v4656, %v5310
    %v6257 = vsel %vm96, %v4657, %v5312
    %v6258 = vsel %vm96, %v4658, %v5314
    %v6259 = vsel %vm96, %v4659, %v5316
    %v6260 = vsel %vm96, %v4660, %v5318
    %v6261 = vsel %vm96, %v4661, %v5320
    %v6262 = vsel %vm96, %v4662, %v5322
    %v6263 = vsel %vm96, %v4663, %v5324
    %v6264 = vsel %vm96, %v4664, %v5326
    %v6265 = vsel %vm96, %v4665, %v5328
    %v6266 = vsel %vm96, %v4666, %v5330
    %v6267 = vsel %vm96, %v4667, %v5332
    %v6268 = vsel %vm96, %v4668, %v5334
    %v6269 = vsel %vm96, %v4669, %v5336
    %v6270 = vsel %vm96, %v4670, %v5338
    %v6271 = vsel %vm96, %v4671, %v5340
    %v6272 = vsel %vm96, %v4672, %v5342
    %v6273 = vsel %vm96, %v4673, %v5344
    %v6274 = vsel %vm96, %v4674, %v5346
    %v6275 = vsel %vm96, %v4675, %v5348
    %v6276 = vsel %vm96, %v4676, %v5350
    %v6277 = vsel %vm96, %v4677, %v5352
    %v6278 = vsel %vm96, %v4678, %v5354
    %v6279 = vsel %vm96, %v4679, %v5356
    %v6280 = vsel %vm96, %v4680, %v5358
    %v6281 = vsel %vm96, %v4681, %v5360
    %v6282 = vsel %vm96, %v4682, %v5362
    %v6283 = vsel %vm96, %v4683, %v5364
    %v6284 = vsel %vm96, %v4684, %v5366
    %v6285 = vsel %vm96, %v4685, %v5368
    %v6286 = vsel %vm96, %v4686, %v5370
    %v6287 = vsel %vm96, %v4687, %v5372
    %v6288 = vsel %vm96, %v4688, %v5374
    %v6289 = vsel %vm96, %v4689, %v5376
    %v6290 = vsel %vm96, %v4690, %v5378
    %v6291 = vsel %vm96, %v4691, %v5380
    %v6292 = vsel %vm96, %v4692, %v5382
    %v6293 = vsel %vm96, %v4693, %v5384
    %v6294 = vsel %vm96, %v4694, %v5386
    %v6295 = vsel %vm96, %v4695, %v5388
    %v6296 = vsel %vm96, %v4696, %v5390
    %v6297 = vsel %vm96, %v4697, %v5392
    %v6298 = vsel %vm96, %v4698, %v5394
    %v6299 = vsel %vm96, %v4699, %v5396
    %v6300 = vsel %vm96, %v4700, %v5398
    %v6301 = vsel %vm96, %v4701, %v5400
    %v6302 = vsel %vm96, %v4702, %v5402
    %v6303 = vsel %vm96, %v4703, %v5404
    %v6304 = vsel %vm96, %v4704, %v5406
    %v6305 = vsel %vm96, %v4705, %v5408
    %v6306 = vsel %vm96, %v4706, %v5410
    %v6307 = vsel %vm96, %v4771, %v5540
    %v6308 = vsel %vm96, %v4772, %v5542
    %v6309 = vsel %vm96, %v4773, %v5544
    %v6310 = vsel %vm96, %v4774, %v5546
    %v6311 = vsel %vm96, %v4775, %v5548
    %v6312 = vsel %vm96, %v4776, %v5550
    %v6313 = vsel %vm96, %v4777, %v5552
    %v6314 = vsel %vm96, %v4778, %v5554
    %v6315 = vsel %vm96, %v4779, %v5556
    %v6316 = vsel %vm96, %v4780, %v5558
    %v6317 = vsel %vm96, %v4781, %v5560
    %v6318 = vsel %vm96, %v4782, %v5562
    %v6319 = vsel %vm96, %v4783, %v5564
    %v6320 = vsel %vm96, %v4784, %v5566
    %v6321 = vsel %vm96, %v4785, %v5568
    %v6322 = vsel %vm96, %v4786, %v5570
    %v6323 = vsel %vm96, %v4787, %v5572
    %v6324 = vsel %vm96, %v4788, %v5574
    %v6325 = vsel %vm96, %v4789, %v5576
    %v6326 = vsel %vm96, %v4790, %v5578
    %v6327 = vsel %vm96, %v4791, %v5580
    %v6328 = vsel %vm96, %v4792, %v5582
    %v6329 = vsel %vm96, %v4793, %v5584
    %v6330 = vsel %vm96, %v4794, %v5586
    %v6331 = vsel %vm96, %v4795, %v5588
    %v6332 = vsel %vm96, %v4796, %v5590
    %v6333 = vsel %vm96, %v4797, %v5592
    %v6334 = vsel %vm96, %v4798, %v5594
    %v6335 = vsel %vm96, %v4799, %v5596
    %v6336 = vsel %vm96, %v4800, %v5598
    %v6337 = vsel %vm96, %v4801, %v5600
    %v6338 = vsel %vm96, %v4802, %v5602
    %v6339 = vsel %vm96, %v4803, %v5604
    %v6340 = vsel %vm96, %v4804, %v5606
    %v6341 = vsel %vm96, %v4805, %v5608
    %v6342 = vsel %vm96, %v4806, %v5610
    %v6343 = vsel %vm96, %v4807, %v5612
    %v6344 = vsel %vm96, %v4808, %v5614
    %v6345 = vsel %vm96, %v4809, %v5616
    %v6346 = vsel %vm96, %v4810, %v5618
    %v6347 = vsel %vm96, %v4811, %v5620
    %v6348 = vsel %vm96, %v4812, %v5622
    %v6349 = vsel %vm96, %v4813, %v5624
    %v6350 = vsel %vm96, %v4814, %v5626
    %v6351 = vsel %vm96, %v4815, %v5628
    %v6352 = vsel %vm96, %v4816, %v5630
    %v6353 = vsel %vm96, %v4817, %v5632
    %v6354 = vsel %vm96, %v4818, %v5634
    %v6355 = vsel %vm96, %v4819, %v5636
    %v6356 = vsel %vm96, %v4820, %v5638
    %v6357 = vsel %vm96, %v4821, %v5640
    %v6358 = vsel %vm96, %v4822, %v5642
    %v6359 = vsel %vm96, %v4823, %v5644
    %v6360 = vsel %vm96, %v4824, %v5646
    %v6361 = vsel %vm96, %v4825, %v5648
    %v6362 = vsel %vm96, %v4826, %v5650
    %v6363 = vsel %vm96, %v4827, %v5652
    %v6364 = vsel %vm96, %v4828, %v5654
    %v6365 = vsel %vm96, %v4829, %v5656
    %v6366 = vsel %vm96, %v4830, %v5658
    %v6367 = vsel %vm96, %v4831, %v5660
    %v6368 = vsel %vm96, %v4832, %v5662
    %v6369 = vsel %vm96, %v4833, %v5664
    %v6370 = vsel %vm96, %v4834, %v5666
    %v6371 = vsel %vm96, %v4899, %v5796
    %v6372 = vsel %vm96, %v4900, %v5798
    %v6373 = vsel %vm96, %v4901, %v5800
    %v6374 = vsel %vm96, %v4902, %v5802
    %v6375 = vsel %vm96, %v4903, %v5804
    %v6376 = vsel %vm96, %v4904, %v5806
    %v6377 = vsel %vm96, %v4905, %v5808
    %v6378 = vsel %vm96, %v4906, %v5810
    %v6379 = vsel %vm96, %v4907, %v5812
    %v6380 = vsel %vm96, %v4908, %v5814
    %v6381 = vsel %vm96, %v4909, %v5816
    %v6382 = vsel %vm96, %v4910, %v5818
    %v6383 = vsel %vm96, %v4911, %v5820
    %v6384 = vsel %vm96, %v4912, %v5822
    %v6385 = vsel %vm96, %v4913, %v5824
    %v6386 = vsel %vm96, %v4914, %v5826
    %v6387 = vsel %vm96, %v4915, %v5828
    %v6388 = vsel %vm96, %v4916, %v5830
    %v6389 = vsel %vm96, %v4917, %v5832
    %v6390 = vsel %vm96, %v4918, %v5834
    %v6391 = vsel %vm96, %v4919, %v5836
    %v6392 = vsel %vm96, %v4920, %v5838
    %v6393 = vsel %vm96, %v4921, %v5840
    %v6394 = vsel %vm96, %v4922, %v5842
    %v6395 = vsel %vm96, %v4923, %v5844
    %v6396 = vsel %vm96, %v4924, %v5846
    %v6397 = vsel %vm96, %v4925, %v5848
    %v6398 = vsel %vm96, %v4926, %v5850
    %v6399 = vsel %vm96, %v4927, %v5852
    %v6400 = vsel %vm96, %v4928, %v5854
    %v6401 = vsel %vm96, %v4929, %v5856
    %v6402 = vsel %vm96, %v4930, %v5858
    %v6403 = vsel %vm96, %v4931, %v5860
    %v6404 = vsel %vm96, %v4932, %v5862
    %v6405 = vsel %vm96, %v4933, %v5864
    %v6406 = vsel %vm96, %v4934, %v5866
    %v6407 = vsel %vm96, %v4935, %v5868
    %v6408 = vsel %vm96, %v4936, %v5870
    %v6409 = vsel %vm96, %v4937, %v5872
    %v6410 = vsel %vm96, %v4938, %v5874
    %v6411 = vsel %vm96, %v4939, %v5876
    %v6412 = vsel %vm96, %v4940, %v5878
    %v6413 = vsel %vm96, %v4941, %v5880
    %v6414 = vsel %vm96, %v4942, %v5882
    %v6415 = vsel %vm96, %v4943, %v5884
    %v6416 = vsel %vm96, %v4944, %v5886
    %v6417 = vsel %vm96, %v4945, %v5888
    %v6418 = vsel %vm96, %v4946, %v5890
    %v6419 = vsel %vm96, %v4947, %v5892
    %v6420 = vsel %vm96, %v4948, %v5894
    %v6421 = vsel %vm96, %v4949, %v5896
    %v6422 = vsel %vm96, %v4950, %v5898
    %v6423 = vsel %vm96, %v4951, %v5900
    %v6424 = vsel %vm96, %v4952, %v5902
    %v6425 = vsel %vm96, %v4953, %v5904
    %v6426 = vsel %vm96, %v4954, %v5906
    %v6427 = vsel %vm96, %v4955, %v5908
    %v6428 = vsel %vm96, %v4956, %v5910
    %v6429 = vsel %vm96, %v4957, %v5912
    %v6430 = vsel %vm96, %v4958, %v5914
    %v6431 = vsel %vm96, %v4959, %v5916
    %v6432 = vsel %vm96, %v4960, %v5918
    %v6433 = vsel %vm96, %v4961, %v5920
    %v6434 = vsel %vm96, %v4962, %v5922
    %v6435 = vsel %vm96, %v5027, %v6052
    %v6436 = vsel %vm96, %v5028, %v6054
    %v6437 = vsel %vm96, %v5029, %v6056
    %v6438 = vsel %vm96, %v5030, %v6058
    %v6439 = vsel %vm96, %v5031, %v6060
    %v6440 = vsel %vm96, %v5032, %v6062
    %v6441 = vsel %vm96, %v5033, %v6064
    %v6442 = vsel %vm96, %v5034, %v6066
    %v6443 = vsel %vm96, %v5035, %v6068
    %v6444 = vsel %vm96, %v5036, %v6070
    %v6445 = vsel %vm96, %v5037, %v6072
    %v6446 = vsel %vm96, %v5038, %v6074
    %v6447 = vsel %vm96, %v5039, %v6076
    %v6448 = vsel %vm96, %v5040, %v6078
    %v6449 = vsel %vm96, %v5041, %v6080
    %v6450 = vsel %vm96, %v5042, %v6082
    %v6451 = vsel %vm96, %v5043, %v6084
    %v6452 = vsel %vm96, %v5044, %v6086
    %v6453 = vsel %vm96, %v5045, %v6088
    %v6454 = vsel %vm96, %v5046, %v6090
    %v6455 = vsel %vm96, %v5047, %v6092
    %v6456 = vsel %vm96, %v5048, %v6094
    %v6457 = vsel %vm96, %v5049, %v6096
    %v6458 = vsel %vm96, %v5050, %v6098
    %v6459 = vsel %vm96, %v5051, %v6100
    %v6460 = vsel %vm96, %v5052, %v6102
    %v6461 = vsel %vm96, %v5053, %v6104
    %v6462 = vsel %vm96, %v5054, %v6106
    %v6463 = vsel %vm96, %v5055, %v6108
    %v6464 = vsel %vm96, %v5056, %v6110
    %v6465 = vsel %vm96, %v5057, %v6112
    %v6466 = vsel %vm96, %v5058, %v6114
    %v6467 = vsel %vm96, %v5059, %v6116
    %v6468 = vsel %vm96, %v5060, %v6118
    %v6469 = vsel %vm96, %v5061, %v6120
    %v6470 = vsel %vm96, %v5062, %v6122
    %v6471 = vsel %vm96, %v5063, %v6124
    %v6472 = vsel %vm96, %v5064, %v6126
    %v6473 = vsel %vm96, %v5065, %v6128
    %v6474 = vsel %vm96, %v5066, %v6130
    %v6475 = vsel %vm96, %v5067, %v6132
    %v6476 = vsel %vm96, %v5068, %v6134
    %v6477 = vsel %vm96, %v5069, %v6136
    %v6478 = vsel %vm96, %v5070, %v6138
    %v6479 = vsel %vm96, %v5071, %v6140
    %v6480 = vsel %vm96, %v5072, %v6142
    %v6481 = vsel %vm96, %v5073, %v6144
    %v6482 = vsel %vm96, %v5074, %v6146
    %v6483 = vsel %vm96, %v5075, %v6148
    %v6484 = vsel %vm96, %v5076, %v6150
    %v6485 = vsel %vm96, %v5077, %v6152
    %v6486 = vsel %vm96, %v5078, %v6154
    %v6487 = vsel %vm96, %v5079, %v6156
    %v6488 = vsel %vm96, %v5080, %v6158
    %v6489 = vsel %vm96, %v5081, %v6160
    %v6490 = vsel %vm96, %v5082, %v6162
    %v6491 = vsel %vm96, %v5083, %v6164
    %v6492 = vsel %vm96, %v5084, %v6166
    %v6493 = vsel %vm96, %v5085, %v6168
    %v6494 = vsel %vm96, %v5086, %v6170
    %v6495 = vsel %vm96, %v5087, %v6172
    %v6496 = vsel %vm96, %v5088, %v6174
    %v6497 = vsel %vm96, %v5089, %v6176
    %v6498 = vsel %vm96, %v5090, %v6178
    %v6499 = vld [vmem:[%s2] sm:$0xff]
    %v6500 = vld [vmem:[%s2 + $0x8] sm:$0xff]
    %v6501 = vld [vmem:[%s2 + $0x10] sm:$0xff]
    %v6502 = vld [vmem:[%s2 + $0x18] sm:$0xff]
    %v6503 = vld [vmem:[%s2 + $0x20] sm:$0xff]
    %v6504 = vld [vmem:[%s2 + $0x28] sm:$0xff]
    %v6505 = vld [vmem:[%s2 + $0x30] sm:$0xff]
    %v6506 = vld [vmem:[%s2 + $0x38] sm:$0xff]
    %v6507 = vld [vmem:[%s2 + $0x40] sm:$0xff]
    %v6508 = vld [vmem:[%s2 + $0x48] sm:$0xff]
    %v6509 = vld [vmem:[%s2 + $0x50] sm:$0xff]
    %v6510 = vld [vmem:[%s2 + $0x58] sm:$0xff]
    %v6511 = vld [vmem:[%s2 + $0x60] sm:$0xff]
    %v6512 = vld [vmem:[%s2 + $0x68] sm:$0xff]
    %v6513 = vld [vmem:[%s2 + $0x70] sm:$0xff]
    %v6514 = vld [vmem:[%s2 + $0x78] sm:$0xff]
    %v6515 = vld [vmem:[%s2 + $0x80] sm:$0xff]
    %v6516 = vld [vmem:[%s2 + $0x88] sm:$0xff]
    %v6517 = vld [vmem:[%s2 + $0x90] sm:$0xff]
    %v6518 = vld [vmem:[%s2 + $0x98] sm:$0xff]
    %v6519 = vld [vmem:[%s2 + $0xa0] sm:$0xff]
    %v6520 = vld [vmem:[%s2 + $0xa8] sm:$0xff]
    %v6521 = vld [vmem:[%s2 + $0xb0] sm:$0xff]
    %v6522 = vld [vmem:[%s2 + $0xb8] sm:$0xff]
    %v6523 = vld [vmem:[%s2 + $0xc0] sm:$0xff]
    %v6524 = vld [vmem:[%s2 + $0xc8] sm:$0xff]
    %v6525 = vld [vmem:[%s2 + $0xd0] sm:$0xff]
    %v6526 = vld [vmem:[%s2 + $0xd8] sm:$0xff]
    %v6527 = vld [vmem:[%s2 + $0xe0] sm:$0xff]
    %v6528 = vld [vmem:[%s2 + $0xe8] sm:$0xff]
    %v6529 = vld [vmem:[%s2 + $0xf0] sm:$0xff]
    %v6530 = vld [vmem:[%s2 + $0xf8] sm:$0xff]
    %v6531 = vld [vmem:[%s2 + $0x100] sm:$0xff]
    %v6532 = vld [vmem:[%s2 + $0x108] sm:$0xff]
    %v6533 = vld [vmem:[%s2 + $0x110] sm:$0xff]
    %v6534 = vld [vmem:[%s2 + $0x118] sm:$0xff]
    %v6535 = vld [vmem:[%s2 + $0x120] sm:$0xff]
    %v6536 = vld [vmem:[%s2 + $0x128] sm:$0xff]
    %v6537 = vld [vmem:[%s2 + $0x130] sm:$0xff]
    %v6538 = vld [vmem:[%s2 + $0x138] sm:$0xff]
    %v6539 = vld [vmem:[%s2 + $0x140] sm:$0xff]
    %v6540 = vld [vmem:[%s2 + $0x148] sm:$0xff]
    %v6541 = vld [vmem:[%s2 + $0x150] sm:$0xff]
    %v6542 = vld [vmem:[%s2 + $0x158] sm:$0xff]
    %v6543 = vld [vmem:[%s2 + $0x160] sm:$0xff]
    %v6544 = vld [vmem:[%s2 + $0x168] sm:$0xff]
    %v6545 = vld [vmem:[%s2 + $0x170] sm:$0xff]
    %v6546 = vld [vmem:[%s2 + $0x178] sm:$0xff]
    %v6547 = vld [vmem:[%s2 + $0x180] sm:$0xff]
    %v6548 = vld [vmem:[%s2 + $0x188] sm:$0xff]
    %v6549 = vld [vmem:[%s2 + $0x190] sm:$0xff]
    %v6550 = vld [vmem:[%s2 + $0x198] sm:$0xff]
    %v6551 = vld [vmem:[%s2 + $0x1a0] sm:$0xff]
    %v6552 = vld [vmem:[%s2 + $0x1a8] sm:$0xff]
    %v6553 = vld [vmem:[%s2 + $0x1b0] sm:$0xff]
    %v6554 = vld [vmem:[%s2 + $0x1b8] sm:$0xff]
    %v6555 = vld [vmem:[%s2 + $0x1c0] sm:$0xff]
    %v6556 = vld [vmem:[%s2 + $0x1c8] sm:$0xff]
    %v6557 = vld [vmem:[%s2 + $0x1d0] sm:$0xff]
    %v6558 = vld [vmem:[%s2 + $0x1d8] sm:$0xff]
    %v6559 = vld [vmem:[%s2 + $0x1e0] sm:$0xff]
    %v6560 = vld [vmem:[%s2 + $0x1e8] sm:$0xff]
    %v6561 = vld [vmem:[%s2 + $0x1f0] sm:$0xff]
    %v6562 = vld [vmem:[%s2 + $0x1f8] sm:$0xff]
    %v6563 = vld [vmem:[%s2 + $0x200] sm:$0xff]
    %v6564 = vld [vmem:[%s2 + $0x208] sm:$0xff]
    %v6565 = vld [vmem:[%s2 + $0x210] sm:$0xff]
    %v6566 = vld [vmem:[%s2 + $0x218] sm:$0xff]
    %v6567 = vld [vmem:[%s2 + $0x220] sm:$0xff]
    %v6568 = vld [vmem:[%s2 + $0x228] sm:$0xff]
    %v6569 = vld [vmem:[%s2 + $0x230] sm:$0xff]
    %v6570 = vld [vmem:[%s2 + $0x238] sm:$0xff]
    %v6572 = vsel %vm96, %v5155, 0
    %v6575 = vsel %vm96, %v5156, 0
    %v6578 = vsel %vm96, %v5157, 0
    %v6581 = vsel %vm96, %v5158, 0
    %v6584 = vsel %vm96, %v5159, 0
    %v6587 = vsel %vm96, %v5160, 0
    %v6590 = vsel %vm96, %v5161, 0
    %v6593 = vsel %vm96, %v5162, 0
    %v6596 = vsel %vm96, %v5163, 0
    %v6599 = vsel %vm96, %v5164, 0
    %v6602 = vsel %vm96, %v5165, 0
    %v6605 = vsel %vm96, %v5166, 0
    %v6608 = vsel %vm96, %v5167, 0
    %v6611 = vsel %vm96, %v5168, 0
    %v6614 = vsel %vm96, %v5169, 0
    %v6617 = vsel %vm96, %v5170, 0
    %v6620 = vsel %vm96, %v5171, 0
    %v6623 = vsel %vm96, %v5172, 0
    %v6626 = vsel %vm96, %v5173, 0
    %v6629 = vsel %vm96, %v5174, 0
    %v6632 = vsel %vm96, %v5175, 0
    %v6635 = vsel %vm96, %v5176, 0
    %v6638 = vsel %vm96, %v5177, 0
    %v6641 = vsel %vm96, %v5178, 0
    %v6644 = vsel %vm96, %v5179, 0
    %v6647 = vsel %vm96, %v5180, 0
    %v6650 = vsel %vm96, %v5181, 0
    %v6653 = vsel %vm96, %v5182, 0
    %v6656 = vsel %vm96, %v5183, 0
    %v6659 = vsel %vm96, %v5184, 0
    %v6662 = vsel %vm96, %v5185, 0
    %v6665 = vsel %vm96, %v5186, 0
    %v6668 = vsel %vm96, %v5187, 0
    %v6671 = vsel %vm96, %v5188, 0
    %v6674 = vsel %vm96, %v5189, 0
    %v6677 = vsel %vm96, %v5190, 0
    %v6680 = vsel %vm96, %v5191, 0
    %v6683 = vsel %vm96, %v5192, 0
    %v6686 = vsel %vm96, %v5193, 0
    %v6689 = vsel %vm96, %v5194, 0
    %v6692 = vsel %vm96, %v5195, 0
    %v6695 = vsel %vm96, %v5196, 0
    %v6698 = vsel %vm96, %v5197, 0
    %v6701 = vsel %vm96, %v5198, 0
    %v6704 = vsel %vm96, %v5199, 0
    %v6707 = vsel %vm96, %v5200, 0
    %v6710 = vsel %vm96, %v5201, 0
    %v6713 = vsel %vm96, %v5202, 0
    %v6716 = vsel %vm96, %v5203, 0
    %v6719 = vsel %vm96, %v5204, 0
    %v6722 = vsel %vm96, %v5205, 0
    %v6725 = vsel %vm96, %v5206, 0
    %v6728 = vsel %vm96, %v5207, 0
    %v6731 = vsel %vm96, %v5208, 0
    %v6734 = vsel %vm96, %v5209, 0
    %v6737 = vsel %vm96, %v5210, 0
    %v6740 = vsel %vm96, %v5211, 0
    %v6743 = vsel %vm96, %v5212, 0
    %v6746 = vsel %vm96, %v5213, 0
    %v6749 = vsel %vm96, %v5214, 0
    %v6752 = vsel %vm96, %v5215, 0
    %v6755 = vsel %vm96, %v5216, 0
    %v6758 = vsel %vm96, %v5217, 0
    %v6761 = vsel %vm96, %v5218, 0
    %6763 = vmatprep.subr.mxu0 0.0
    %6764 = vmatpush1.msra.mxu0 %v6499
    %6765 = vmatprep.subr.mxu0 0.0
    %6766 = vmatpush1.msra.mxu0 %v6500
    %6767 = vmatprep.subr.mxu0 0.0
    %6768 = vmatpush1.msra.mxu0 %v6501
    %6769 = vmatprep.subr.mxu0 0.0
    %6770 = vmatpush1.msra.mxu0 %v6502
    %6771 = vmatprep.subr.mxu0 0.0
    %6772 = vmatpush1.msra.mxu0 %v6503
    %6773 = vmatprep.subr.mxu0 0.0
    %6774 = vmatpush1.msra.mxu0 %v6504
    %6775 = vmatprep.subr.mxu0 0.0
    %6776 = vmatpush1.msra.mxu0 %v6505
    %6777 = vmatprep.subr.mxu0 0.0
    %6778 = vmatpush1.msra.mxu0 %v6506
    %6779 = vmatprep.subr.mxu0 0.0
    %6780 = vmatpush1.msra.mxu0 %v6507
    %6781 = vmatprep.subr.mxu0 0.0
    %6782 = vmatpush1.msra.mxu0 %v6508
    %6783 = vmatprep.subr.mxu0 0.0
    %6784 = vmatpush1.msra.mxu0 %v6509
    %6785 = vmatprep.subr.mxu0 0.0
    %6786 = vmatpush1.msra.mxu0 %v6510
    %6787 = vmatprep.subr.mxu0 0.0
    %6788 = vmatpush1.msra.mxu0 %v6511
    %6789 = vmatprep.subr.mxu0 0.0
    %6790 = vmatpush1.msra.mxu0 %v6512
    %6791 = vmatprep.subr.mxu0 0.0
    %6792 = vmatpush1.msra.mxu0 %v6513
    %6793 = vmatprep.subr.mxu0 0.0
    %6794 = vmatpush1.msra.mxu0 %v6514
    %6795 = vmatprep.subr.mxu0 0.0
    %6796 = vmatpush1.msra.mxu0 %v6515
    %6797 = vmatprep.subr.mxu0 0.0
    %6798 = vmatpush1.msra.mxu0 %v6516
    %6799 = vmatprep.subr.mxu0 0.0
    %6800 = vmatpush1.msra.mxu0 %v6517
    %6801 = vmatprep.subr.mxu0 0.0
    %6802 = vmatpush1.msra.mxu0 %v6518
    %6803 = vmatprep.subr.mxu0 0.0
    %6804 = vmatpush1.msra.mxu0 %v6519
    %6805 = vmatprep.subr.mxu0 0.0
    %6806 = vmatpush1.msra.mxu0 %v6520
    %6807 = vmatprep.subr.mxu0 0.0
    %6808 = vmatpush1.msra.mxu0 %v6521
    %6809 = vmatprep.subr.mxu0 0.0
    %6810 = vmatpush1.msra.mxu0 %v6522
    %6811 = vmatprep.subr.mxu0 0.0
    %6812 = vmatpush1.msra.mxu0 %v6523
    %6813 = vmatprep.subr.mxu0 0.0
    %6814 = vmatpush1.msra.mxu0 %v6524
    %6815 = vmatprep.subr.mxu0 0.0
    %6816 = vmatpush1.msra.mxu0 %v6525
    %6817 = vmatprep.subr.mxu0 0.0
    %6818 = vmatpush1.msra.mxu0 %v6526
    %6819 = vmatprep.subr.mxu0 0.0
    %6820 = vmatpush1.msra.mxu0 %v6527
    %6821 = vmatprep.subr.mxu0 0.0
    %6822 = vmatpush1.msra.mxu0 %v6528
    %6823 = vmatprep.subr.mxu0 0.0
    %6824 = vmatpush1.msra.mxu0 %v6529
    %6825 = vmatprep.subr.mxu0 0.0
    %6826 = vmatpush1.msra.mxu0 %v6530
    %6827 = vmatprep.mubr.f32.mxu0 %v6307
    %6828 = vmatmul.mubr.f32.gmra.mrb[0].mxu0 %v6243
    %v6829 = vpop.f32.mrb[0].mxu0
    %v6830 = vadd.f32 0.0, %v6829
    %v6831 = vpop.f32.mrb[0].mxu0
    %6832 = vmatprep.mubr.f32.mxu0 %v6308
    %6833 = vmatmul.mubr.f32.gmra.mrb[0].mxu0 %v6244
    %v6834 = vpop.f32.mrb[0].mxu0
    %v6835 = vadd.f32 0.0, %v6834
    %v6836 = vpop.f32.mrb[0].mxu0
    %6837 = vmatprep.mubr.f32.mxu0 %v6309
    %6838 = vmatmul.mubr.f32.gmra.mrb[0].mxu0 %v6245
    %v6839 = vpop.f32.mrb[0].mxu0
    %v6840 = vadd.f32 0.0, %v6839
    %v6841 = vpop.f32.mrb[0].mxu0
    %6842 = vmatprep.mubr.f32.mxu0 %v6310
    %6843 = vmatmul.mubr.f32.gmra.mrb[0].mxu0 %v6246
    %v6844 = vpop.f32.mrb[0].mxu0
    %v6845 = vadd.f32 0.0, %v6844
    %v6846 = vpop.f32.mrb[0].mxu0
    %6847 = vmatprep.mubr.f32.mxu0 %v6311
    %6848 = vmatmul.mubr.f32.gmra.mrb[0].mxu0 %v6247
    %v6849 = vpop.f32.mrb[0].mxu0
    %v6850 = vadd.f32 0.0, %v6849
    %v6851 = vpop.f32.mrb[0].mxu0
    %6852 = vmatprep.mubr.f32.mxu0 %v6312
    %6853 = vmatmul.mubr.f32.gmra.mrb[0].mxu0 %v6248
    %v6854 = vpop.f32.mrb[0].mxu0
    %v6855 = vadd.f32 0.0, %v6854
    %v6856 = vpop.f32.mrb[0].mxu0
    %6857 = vmatprep.mubr.f32.mxu0 %v6313
    %6858 = vmatmul.mubr.f32.gmra.mrb[0].mxu0 %v6249
    %v6859 = vpop.f32.mrb[0].mxu0
    %v6860 = vadd.f32 0.0, %v6859
    %v6861 = vpop.f32.mrb[0].mxu0
    %6862 = vmatprep.mubr.f32.mxu0 %v6314
    %6863 = vmatmul.mubr.f32.gmra.mrb[0].mxu0 %v6250
    %v6864 = vpop.f32.mrb[0].mxu0
    %v6865 = vadd.f32 0.0, %v6864
    %v6866 = vpop.f32.mrb[0].mxu0
    %6867 = vmatprep.mubr.f32.mxu0 %v6315
    %6868 = vmatmul.mubr.f32.gmra.mrb[0].mxu0 %v6251
    %v6869 = vpop.f32.mrb[0].mxu0
    %v6870 = vadd.f32 0.0, %v6869
    %v6871 = vpop.f32.mrb[0].mxu0
    %6872 = vmatprep.mubr.f32.mxu0 %v6316
    %6873 = vmatmul.mubr.f32.gmra.mrb[0].mxu0 %v6252
    %v6874 = vpop.f32.mrb[0].mxu0
    %v6875 = vadd.f32 0.0, %v6874
    %v6876 = vpop.f32.mrb[0].mxu0
    %6877 = vmatprep.mubr.f32.mxu0 %v6317
    %6878 = vmatmul.mubr.f32.gmra.mrb[0].mxu0 %v6253
    %v6879 = vpop.f32.mrb[0].mxu0
    %v6880 = vadd.f32 0.0, %v6879
    %v6881 = vpop.f32.mrb[0].mxu0
    %6882 = vmatprep.mubr.f32.mxu0 %v6318
    %6883 = vmatmul.mubr.f32.gmra.mrb[0].mxu0 %v6254
    %v6884 = vpop.f32.mrb[0].mxu0
    %v6885 = vadd.f32 0.0, %v6884
    %v6886 = vpop.f32.mrb[0].mxu0
    %6887 = vmatprep.mubr.f32.mxu0 %v6319
    %6888 = vmatmul.mubr.f32.gmra.mrb[0].mxu0 %v6255
    %v6889 = vpop.f32.mrb[0].mxu0
    %v6890 = vadd.f32 0.0, %v6889
    %v6891 = vpop.f32.mrb[0].mxu0
    %6892 = vmatprep.mubr.f32.mxu0 %v6320
    %6893 = vmatmul.mubr.f32.gmra.mrb[0].mxu0 %v6256
    %v6894 = vpop.f32.mrb[0].mxu0
    %v6895 = vadd.f32 0.0, %v6894
    %v6896 = vpop.f32.mrb[0].mxu0
    %6897 = vmatprep.mubr.f32.mxu0 %v6321
    %6898 = vmatmul.mubr.f32.gmra.mrb[0].mxu0 %v6257
    %v6899 = vpop.f32.mrb[0].mxu0
    %v6900 = vadd.f32 0.0, %v6899
    %v6901 = vpop.f32.mrb[0].mxu0
    %6902 = vmatprep.mubr.f32.mxu0 %v6322
    %6903 = vmatmul.mubr.f32.gmra.mrb[0].mxu0 %v6258
    %v6904 = vpop.f32.mrb[0].mxu0
    %v6905 = vadd.f32 0.0, %v6904
    %v6906 = vpop.f32.mrb[0].mxu0
    %6907 = vmatprep.mubr.f32.mxu0 %v6323
    %6908 = vmatmul.mubr.f32.gmra.mrb[0].mxu0 %v6259
    %v6909 = vpop.f32.mrb[0].mxu0
    %v6910 = vadd.f32 0.0, %v6909
    %v6911 = vpop.f32.mrb[0].mxu0
    %6912 = vmatprep.mubr.f32.mxu0 %v6324
    %6913 = vmatmul.mubr.f32.gmra.mrb[0].mxu0 %v6260
    %v6914 = vpop.f32.mrb[0].mxu0
    %v6915 = vadd.f32 0.0, %v6914
    %v6916 = vpop.f32.mrb[0].mxu0
    %6917 = vmatprep.mubr.f32.mxu0 %v6325
    %6918 = vmatmul.mubr.f32.gmra.mrb[0].mxu0 %v6261
    %v6919 = vpop.f32.mrb[0].mxu0
    %v6920 = vadd.f32 0.0, %v6919
    %v6921 = vpop.f32.mrb[0].mxu0
    %6922 = vmatprep.mubr.f32.mxu0 %v6326
    %6923 = vmatmul.mubr.f32.gmra.mrb[0].mxu0 %v6262
    %v6924 = vpop.f32.mrb[0].mxu0
    %v6925 = vadd.f32 0.0, %v6924
    %v6926 = vpop.f32.mrb[0].mxu0
    %6927 = vmatprep.mubr.f32.mxu0 %v6327
    %6928 = vmatmul.mubr.f32.gmra.mrb[0].mxu0 %v6263
    %v6929 = vpop.f32.mrb[0].mxu0
    %v6930 = vadd.f32 0.0, %v6929
    %v6931 = vpop.f32.mrb[0].mxu0
    %6932 = vmatprep.mubr.f32.mxu0 %v6328
    %6933 = vmatmul.mubr.f32.gmra.mrb[0].mxu0 %v6264
    %v6934 = vpop.f32.mrb[0].mxu0
    %v6935 = vadd.f32 0.0, %v6934
    %v6936 = vpop.f32.mrb[0].mxu0
    %6937 = vmatprep.mubr.f32.mxu0 %v6329
    %6938 = vmatmul.mubr.f32.gmra.mrb[0].mxu0 %v6265
    %v6939 = vpop.f32.mrb[0].mxu0
    %v6940 = vadd.f32 0.0, %v6939
    %v6941 = vpop.f32.mrb[0].mxu0
    %6942 = vmatprep.mubr.f32.mxu0 %v6330
    %6943 = vmatmul.mubr.f32.gmra.mrb[0].mxu0 %v6266
    %v6944 = vpop.f32.mrb[0].mxu0
    %v6945 = vadd.f32 0.0, %v6944
    %v6946 = vpop.f32.mrb[0].mxu0
    %6947 = vmatprep.mubr.f32.mxu0 %v6331
    %6948 = vmatmul.mubr.f32.gmra.mrb[0].mxu0 %v6267
    %v6949 = vpop.f32.mrb[0].mxu0
    %v6950 = vadd.f32 0.0, %v6949
    %v6951 = vpop.f32.mrb[0].mxu0
    %6952 = vmatprep.mubr.f32.mxu0 %v6332
    %6953 = vmatmul.mubr.f32.gmra.mrb[0].mxu0 %v6268
    %v6954 = vpop.f32.mrb[0].mxu0
    %v6955 = vadd.f32 0.0, %v6954
    %v6956 = vpop.f32.mrb[0].mxu0
    %6957 = vmatprep.mubr.f32.mxu0 %v6333
    %6958 = vmatmul.mubr.f32.gmra.mrb[0].mxu0 %v6269
    %v6959 = vpop.f32.mrb[0].mxu0
    %v6960 = vadd.f32 0.0, %v6959
    %v6961 = vpop.f32.mrb[0].mxu0
    %6962 = vmatprep.mubr.f32.mxu0 %v6334
    %6963 = vmatmul.mubr.f32.gmra.mrb[0].mxu0 %v6270
    %v6964 = vpop.f32.mrb[0].mxu0
    %v6965 = vadd.f32 0.0, %v6964
    %v6966 = vpop.f32.mrb[0].mxu0
    %6967 = vmatprep.mubr.f32.mxu0 %v6335
    %6968 = vmatmul.mubr.f32.gmra.mrb[0].mxu0 %v6271
    %v6969 = vpop.f32.mrb[0].mxu0
    %v6970 = vadd.f32 0.0, %v6969
    %v6971 = vpop.f32.mrb[0].mxu0
    %6972 = vmatprep.mubr.f32.mxu0 %v6336
    %6973 = vmatmul.mubr.f32.gmra.mrb[0].mxu0 %v6272
    %v6974 = vpop.f32.mrb[0].mxu0
    %v6975 = vadd.f32 0.0, %v6974
    %v6976 = vpop.f32.mrb[0].mxu0
    %6977 = vmatprep.mubr.f32.mxu0 %v6337
    %6978 = vmatmul.mubr.f32.gmra.mrb[0].mxu0 %v6273
    %v6979 = vpop.f32.mrb[0].mxu0
    %v6980 = vadd.f32 0.0, %v6979
    %v6981 = vpop.f32.mrb[0].mxu0
    %6982 = vmatprep.mubr.f32.mxu0 %v6338
    %6983 = vmatmul.mubr.f32.gmra.mrb[0].mxu0 %v6274
    %v6984 = vpop.f32.mrb[0].mxu0
    %v6985 = vadd.f32 0.0, %v6984
    %v6986 = vpop.f32.mrb[0].mxu0
    %6987 = vmatprep.mubr.f32.mxu0 %v6339
    %6988 = vmatmul.mubr.f32.gmra.mrb[0].mxu0 %v6275
    %v6989 = vpop.f32.mrb[0].mxu0
    %v6990 = vadd.f32 0.0, %v6989
    %v6991 = vpop.f32.mrb[0].mxu0
    %6992 = vmatprep.mubr.f32.mxu0 %v6340
    %6993 = vmatmul.mubr.f32.gmra.mrb[0].mxu0 %v6276
    %v6994 = vpop.f32.mrb[0].mxu0
    %v6995 = vadd.f32 0.0, %v6994
    %v6996 = vpop.f32.mrb[0].mxu0
    %6997 = vmatprep.mubr.f32.mxu0 %v6341
    %6998 = vmatmul.mubr.f32.gmra.mrb[0].mxu0 %v6277
    %v6999 = vpop.f32.mrb[0].mxu0
    %v7000 = vadd.f32 0.0, %v6999
    %v7001 = vpop.f32.mrb[0].mxu0
    %7002 = vmatprep.mubr.f32.mxu0 %v6342
    %7003 = vmatmul.mubr.f32.gmra.mrb[0].mxu0 %v6278
    %v7004 = vpop.f32.mrb[0].mxu0
    %v7005 = vadd.f32 0.0, %v7004
    %v7006 = vpop.f32.mrb[0].mxu0
    %7007 = vmatprep.mubr.f32.mxu0 %v6343
    %7008 = vmatmul.mubr.f32.gmra.mrb[0].mxu0 %v6279
    %v7009 = vpop.f32.mrb[0].mxu0
    %v7010 = vadd.f32 0.0, %v7009
    %v7011 = vpop.f32.mrb[0].mxu0
    %7012 = vmatprep.mubr.f32.mxu0 %v6344
    %7013 = vmatmul.mubr.f32.gmra.mrb[0].mxu0 %v6280
    %v7014 = vpop.f32.mrb[0].mxu0
    %v7015 = vadd.f32 0.0, %v7014
    %v7016 = vpop.f32.mrb[0].mxu0
    %7017 = vmatprep.mubr.f32.mxu0 %v6345
    %7018 = vmatmul.mubr.f32.gmra.mrb[0].mxu0 %v6281
    %v7019 = vpop.f32.mrb[0].mxu0
    %v7020 = vadd.f32 0.0, %v7019
    %v7021 = vpop.f32.mrb[0].mxu0
    %7022 = vmatprep.mubr.f32.mxu0 %v6346
    %7023 = vmatmul.mubr.f32.gmra.mrb[0].mxu0 %v6282
    %v7024 = vpop.f32.mrb[0].mxu0
    %v7025 = vadd.f32 0.0, %v7024
    %v7026 = vpop.f32.mrb[0].mxu0
    %7027 = vmatprep.mubr.f32.mxu0 %v6347
    %7028 = vmatmul.mubr.f32.gmra.mrb[0].mxu0 %v6283
    %v7029 = vpop.f32.mrb[0].mxu0
    %v7030 = vadd.f32 0.0, %v7029
    %v7031 = vpop.f32.mrb[0].mxu0
    %7032 = vmatprep.mubr.f32.mxu0 %v6348
    %7033 = vmatmul.mubr.f32.gmra.mrb[0].mxu0 %v6284
    %v7034 = vpop.f32.mrb[0].mxu0
    %v7035 = vadd.f32 0.0, %v7034
    %v7036 = vpop.f32.mrb[0].mxu0
    %7037 = vmatprep.mubr.f32.mxu0 %v6349
    %7038 = vmatmul.mubr.f32.gmra.mrb[0].mxu0 %v6285
    %v7039 = vpop.f32.mrb[0].mxu0
    %v7040 = vadd.f32 0.0, %v7039
    %v7041 = vpop.f32.mrb[0].mxu0
    %7042 = vmatprep.mubr.f32.mxu0 %v6350
    %7043 = vmatmul.mubr.f32.gmra.mrb[0].mxu0 %v6286
    %v7044 = vpop.f32.mrb[0].mxu0
    %v7045 = vadd.f32 0.0, %v7044
    %v7046 = vpop.f32.mrb[0].mxu0
    %7047 = vmatprep.mubr.f32.mxu0 %v6351
    %7048 = vmatmul.mubr.f32.gmra.mrb[0].mxu0 %v6287
    %v7049 = vpop.f32.mrb[0].mxu0
    %v7050 = vadd.f32 0.0, %v7049
    %v7051 = vpop.f32.mrb[0].mxu0
    %7052 = vmatprep.mubr.f32.mxu0 %v6352
    %7053 = vmatmul.mubr.f32.gmra.mrb[0].mxu0 %v6288
    %v7054 = vpop.f32.mrb[0].mxu0
    %v7055 = vadd.f32 0.0, %v7054
    %v7056 = vpop.f32.mrb[0].mxu0
    %7057 = vmatprep.mubr.f32.mxu0 %v6353
    %7058 = vmatmul.mubr.f32.gmra.mrb[0].mxu0 %v6289
    %v7059 = vpop.f32.mrb[0].mxu0
    %v7060 = vadd.f32 0.0, %v7059
    %v7061 = vpop.f32.mrb[0].mxu0
    %7062 = vmatprep.mubr.f32.mxu0 %v6354
    %7063 = vmatmul.mubr.f32.gmra.mrb[0].mxu0 %v6290
    %v7064 = vpop.f32.mrb[0].mxu0
    %v7065 = vadd.f32 0.0, %v7064
    %v7066 = vpop.f32.mrb[0].mxu0
    %7067 = vmatprep.mubr.f32.mxu0 %v6355
    %7068 = vmatmul.mubr.f32.gmra.mrb[0].mxu0 %v6291
    %v7069 = vpop.f32.mrb[0].mxu0
    %v7070 = vadd.f32 0.0, %v7069
    %v7071 = vpop.f32.mrb[0].mxu0
    %7072 = vmatprep.mubr.f32.mxu0 %v6356
    %7073 = vmatmul.mubr.f32.gmra.mrb[0].mxu0 %v6292
    %v7074 = vpop.f32.mrb[0].mxu0
    %v7075 = vadd.f32 0.0, %v7074
    %v7076 = vpop.f32.mrb[0].mxu0
    %7077 = vmatprep.mubr.f32.mxu0 %v6357
    %7078 = vmatmul.mubr.f32.gmra.mrb[0].mxu0 %v6293
    %v7079 = vpop.f32.mrb[0].mxu0
    %v7080 = vadd.f32 0.0, %v7079
    %v7081 = vpop.f32.mrb[0].mxu0
    %7082 = vmatprep.mubr.f32.mxu0 %v6358
    %7083 = vmatmul.mubr.f32.gmra.mrb[0].mxu0 %v6294
    %v7084 = vpop.f32.mrb[0].mxu0
    %v7085 = vadd.f32 0.0, %v7084
    %v7086 = vpop.f32.mrb[0].mxu0
    %7087 = vmatprep.mubr.f32.mxu0 %v6359
    %7088 = vmatmul.mubr.f32.gmra.mrb[0].mxu0 %v6295
    %v7089 = vpop.f32.mrb[0].mxu0
    %v7090 = vadd.f32 0.0, %v7089
    %v7091 = vpop.f32.mrb[0].mxu0
    %7092 = vmatprep.mubr.f32.mxu0 %v6360
    %7093 = vmatmul.mubr.f32.gmra.mrb[0].mxu0 %v6296
    %v7094 = vpop.f32.mrb[0].mxu0
    %v7095 = vadd.f32 0.0, %v7094
    %v7096 = vpop.f32.mrb[0].mxu0
    %7097 = vmatprep.mubr.f32.mxu0 %v6361
    %7098 = vmatmul.mubr.f32.gmra.mrb[0].mxu0 %v6297
    %v7099 = vpop.f32.mrb[0].mxu0
    %v7100 = vadd.f32 0.0, %v7099
    %v7101 = vpop.f32.mrb[0].mxu0
    %7102 = vmatprep.mubr.f32.mxu0 %v6362
    %7103 = vmatmul.mubr.f32.gmra.mrb[0].mxu0 %v6298
    %v7104 = vpop.f32.mrb[0].mxu0
    %v7105 = vadd.f32 0.0, %v7104
    %v7106 = vpop.f32.mrb[0].mxu0
    %7107 = vmatprep.mubr.f32.mxu0 %v6363
    %7108 = vmatmul.mubr.f32.gmra.mrb[0].mxu0 %v6299
    %v7109 = vpop.f32.mrb[0].mxu0
    %v7110 = vadd.f32 0.0, %v7109
    %v7111 = vpop.f32.mrb[0].mxu0
    %7112 = vmatprep.mubr.f32.mxu0 %v6364
    %7113 = vmatmul.mubr.f32.gmra.mrb[0].mxu0 %v6300
    %v7114 = vpop.f32.mrb[0].mxu0
    %v7115 = vadd.f32 0.0, %v7114
    %v7116 = vpop.f32.mrb[0].mxu0
    %7117 = vmatprep.mubr.f32.mxu0 %v6365
    %7118 = vmatmul.mubr.f32.gmra.mrb[0].mxu0 %v6301
    %v7119 = vpop.f32.mrb[0].mxu0
    %v7120 = vadd.f32 0.0, %v7119
    %v7121 = vpop.f32.mrb[0].mxu0
    %7122 = vmatprep.mubr.f32.mxu0 %v6366
    %7123 = vmatmul.mubr.f32.gmra.mrb[0].mxu0 %v6302
    %v7124 = vpop.f32.mrb[0].mxu0
    %v7125 = vadd.f32 0.0, %v7124
    %v7126 = vpop.f32.mrb[0].mxu0
    %7127 = vmatprep.mubr.f32.mxu0 %v6367
    %7128 = vmatmul.mubr.f32.gmra.mrb[0].mxu0 %v6303
    %v7129 = vpop.f32.mrb[0].mxu0
    %v7130 = vadd.f32 0.0, %v7129
    %v7131 = vpop.f32.mrb[0].mxu0
    %7132 = vmatprep.mubr.f32.mxu0 %v6368
    %7133 = vmatmul.mubr.f32.gmra.mrb[0].mxu0 %v6304
    %v7134 = vpop.f32.mrb[0].mxu0
    %v7135 = vadd.f32 0.0, %v7134
    %v7136 = vpop.f32.mrb[0].mxu0
    %7137 = vmatprep.mubr.f32.mxu0 %v6369
    %7138 = vmatmul.mubr.f32.gmra.mrb[0].mxu0 %v6305
    %v7139 = vpop.f32.mrb[0].mxu0
    %v7140 = vadd.f32 0.0, %v7139
    %v7141 = vpop.f32.mrb[0].mxu0
    %7142 = vmatprep.mubr.f32.mxu0 %v6370
    %7143 = vmatmul.mubr.f32.gmra.mrb[0].mxu0 %v6306
    %v7144 = vpop.f32.mrb[0].mxu0
    %v7145 = vadd.f32 0.0, %v7144
    %v7146 = vpop.f32.mrb[0].mxu0
    %7147 = vdwg.mxu0
    %7148 = vmatprep.subr.mxu0 0.0
    %7149 = vmatpush1.msra.mxu0 %v6531
    %7150 = vmatprep.subr.mxu0 0.0
    %7151 = vmatpush1.msra.mxu0 %v6532
    %7152 = vmatprep.subr.mxu0 0.0
    %7153 = vmatpush1.msra.mxu0 %v6533
    %7154 = vmatprep.subr.mxu0 0.0
    %7155 = vmatpush1.msra.mxu0 %v6534
    %7156 = vmatprep.subr.mxu0 0.0
    %7157 = vmatpush1.msra.mxu0 %v6535
    %7158 = vmatprep.subr.mxu0 0.0
    %7159 = vmatpush1.msra.mxu0 %v6536
    %7160 = vmatprep.subr.mxu0 0.0
    %7161 = vmatpush1.msra.mxu0 %v6537
    %7162 = vmatprep.subr.mxu0 0.0
    %7163 = vmatpush1.msra.mxu0 %v6538
    %7164 = vmatprep.subr.mxu0 0.0
    %7165 = vmatpush1.msra.mxu0 %v6539
    %7166 = vmatprep.subr.mxu0 0.0
    %7167 = vmatpush1.msra.mxu0 %v6540
    %7168 = vmatprep.subr.mxu0 0.0
    %7169 = vmatpush1.msra.mxu0 %v6541
    %7170 = vmatprep.subr.mxu0 0.0
    %7171 = vmatpush1.msra.mxu0 %v6542
    %7172 = vmatprep.subr.mxu0 0.0
    %7173 = vmatpush1.msra.mxu0 %v6543
    %7174 = vmatprep.subr.mxu0 0.0
    %7175 = vmatpush1.msra.mxu0 %v6544
    %7176 = vmatprep.subr.mxu0 0.0
    %7177 = vmatpush1.msra.mxu0 %v6545
    %7178 = vmatprep.subr.mxu0 0.0
    %7179 = vmatpush1.msra.mxu0 %v6546
    %7180 = vmatprep.subr.mxu0 0.0
    %7181 = vmatpush1.msra.mxu0 %v6547
    %7182 = vmatprep.subr.mxu0 0.0
    %7183 = vmatpush1.msra.mxu0 %v6548
    %7184 = vmatprep.subr.mxu0 0.0
    %7185 = vmatpush1.msra.mxu0 %v6549
    %7186 = vmatprep.subr.mxu0 0.0
    %7187 = vmatpush1.msra.mxu0 %v6550
    %7188 = vmatprep.subr.mxu0 0.0
    %7189 = vmatpush1.msra.mxu0 %v6551
    %7190 = vmatprep.subr.mxu0 0.0
    %7191 = vmatpush1.msra.mxu0 %v6552
    %7192 = vmatprep.subr.mxu0 0.0
    %7193 = vmatpush1.msra.mxu0 %v6553
    %7194 = vmatprep.subr.mxu0 0.0
    %7195 = vmatpush1.msra.mxu0 %v6554
    %7196 = vmatprep.subr.mxu0 0.0
    %7197 = vmatpush1.msra.mxu0 %v6555
    %7198 = vmatprep.subr.mxu0 0.0
    %7199 = vmatpush1.msra.mxu0 %v6556
    %7200 = vmatprep.subr.mxu0 0.0
    %7201 = vmatpush1.msra.mxu0 %v6557
    %7202 = vmatprep.subr.mxu0 0.0
    %7203 = vmatpush1.msra.mxu0 %v6558
    %7204 = vmatprep.subr.mxu0 0.0
    %7205 = vmatpush1.msra.mxu0 %v6559
    %7206 = vmatprep.subr.mxu0 0.0
    %7207 = vmatpush1.msra.mxu0 %v6560
    %7208 = vmatprep.subr.mxu0 0.0
    %7209 = vmatpush1.msra.mxu0 %v6561
    %7210 = vmatprep.subr.mxu0 0.0
    %7211 = vmatpush1.msra.mxu0 %v6562
    %7212 = vmatprep.mubr.f32.mxu0 %v6435
    %7213 = vmatmul.mubr.f32.gmra.mrb[0].mxu0 %v6371
    %v7214 = vpop.f32.mrb[0].mxu0
    %v7215 = vadd.f32 %v6830, %v7214
    %v7216 = vpop.f32.mrb[0].mxu0
    %7217 = vmatprep.mubr.f32.mxu0 %v6436
    %7218 = vmatmul.mubr.f32.gmra.mrb[0].mxu0 %v6372
    %v7219 = vpop.f32.mrb[0].mxu0
    %v7220 = vadd.f32 %v6835, %v7219
    %v7221 = vpop.f32.mrb[0].mxu0
    %7222 = vmatprep.mubr.f32.mxu0 %v6437
    %7223 = vmatmul.mubr.f32.gmra.mrb[0].mxu0 %v6373
    %v7224 = vpop.f32.mrb[0].mxu0
    %v7225 = vadd.f32 %v6840, %v7224
    %v7226 = vpop.f32.mrb[0].mxu0
    %7227 = vmatprep.mubr.f32.mxu0 %v6438
    %7228 = vmatmul.mubr.f32.gmra.mrb[0].mxu0 %v6374
    %v7229 = vpop.f32.mrb[0].mxu0
    %v7230 = vadd.f32 %v6845, %v7229
    %v7231 = vpop.f32.mrb[0].mxu0
    %7232 = vmatprep.mubr.f32.mxu0 %v6439
    %7233 = vmatmul.mubr.f32.gmra.mrb[0].mxu0 %v6375
    %v7234 = vpop.f32.mrb[0].mxu0
    %v7235 = vadd.f32 %v6850, %v7234
    %v7236 = vpop.f32.mrb[0].mxu0
    %7237 = vmatprep.mubr.f32.mxu0 %v6440
    %7238 = vmatmul.mubr.f32.gmra.mrb[0].mxu0 %v6376
    %v7239 = vpop.f32.mrb[0].mxu0
    %v7240 = vadd.f32 %v6855, %v7239
    %v7241 = vpop.f32.mrb[0].mxu0
    %7242 = vmatprep.mubr.f32.mxu0 %v6441
    %7243 = vmatmul.mubr.f32.gmra.mrb[0].mxu0 %v6377
    %v7244 = vpop.f32.mrb[0].mxu0
    %v7245 = vadd.f32 %v6860, %v7244
    %v7246 = vpop.f32.mrb[0].mxu0
    %7247 = vmatprep.mubr.f32.mxu0 %v6442
    %7248 = vmatmul.mubr.f32.gmra.mrb[0].mxu0 %v6378
    %v7249 = vpop.f32.mrb[0].mxu0
    %v7250 = vadd.f32 %v6865, %v7249
    %v7251 = vpop.f32.mrb[0].mxu0
    %7252 = vmatprep.mubr.f32.mxu0 %v6443
    %7253 = vmatmul.mubr.f32.gmra.mrb[0].mxu0 %v6379
    %v7254 = vpop.f32.mrb[0].mxu0
    %v7255 = vadd.f32 %v6870, %v7254
    %v7256 = vpop.f32.mrb[0].mxu0
    %7257 = vmatprep.mubr.f32.mxu0 %v6444
    %7258 = vmatmul.mubr.f32.gmra.mrb[0].mxu0 %v6380
    %v7259 = vpop.f32.mrb[0].mxu0
    %v7260 = vadd.f32 %v6875, %v7259
    %v7261 = vpop.f32.mrb[0].mxu0
    %7262 = vmatprep.mubr.f32.mxu0 %v6445
    %7263 = vmatmul.mubr.f32.gmra.mrb[0].mxu0 %v6381
    %v7264 = vpop.f32.mrb[0].mxu0
    %v7265 = vadd.f32 %v6880, %v7264
    %v7266 = vpop.f32.mrb[0].mxu0
    %7267 = vmatprep.mubr.f32.mxu0 %v6446
    %7268 = vmatmul.mubr.f32.gmra.mrb[0].mxu0 %v6382
    %v7269 = vpop.f32.mrb[0].mxu0
    %v7270 = vadd.f32 %v6885, %v7269
    %v7271 = vpop.f32.mrb[0].mxu0
    %7272 = vmatprep.mubr.f32.mxu0 %v6447
    %7273 = vmatmul.mubr.f32.gmra.mrb[0].mxu0 %v6383
    %v7274 = vpop.f32.mrb[0].mxu0
    %v7275 = vadd.f32 %v6890, %v7274
    %v7276 = vpop.f32.mrb[0].mxu0
    %7277 = vmatprep.mubr.f32.mxu0 %v6448
    %7278 = vmatmul.mubr.f32.gmra.mrb[0].mxu0 %v6384
    %v7279 = vpop.f32.mrb[0].mxu0
    %v7280 = vadd.f32 %v6895, %v7279
    %v7281 = vpop.f32.mrb[0].mxu0
    %7282 = vmatprep.mubr.f32.mxu0 %v6449
    %7283 = vmatmul.mubr.f32.gmra.mrb[0].mxu0 %v6385
    %v7284 = vpop.f32.mrb[0].mxu0
    %v7285 = vadd.f32 %v6900, %v7284
    %v7286 = vpop.f32.mrb[0].mxu0
    %7287 = vmatprep.mubr.f32.mxu0 %v6450
    %7288 = vmatmul.mubr.f32.gmra.mrb[0].mxu0 %v6386
    %v7289 = vpop.f32.mrb[0].mxu0
    %v7290 = vadd.f32 %v6905, %v7289
    %v7291 = vpop.f32.mrb[0].mxu0
    %7292 = vmatprep.mubr.f32.mxu0 %v6451
    %7293 = vmatmul.mubr.f32.gmra.mrb[0].mxu0 %v6387
    %v7294 = vpop.f32.mrb[0].mxu0
    %v7295 = vadd.f32 %v6910, %v7294
    %v7296 = vpop.f32.mrb[0].mxu0
    %7297 = vmatprep.mubr.f32.mxu0 %v6452
    %7298 = vmatmul.mubr.f32.gmra.mrb[0].mxu0 %v6388
    %v7299 = vpop.f32.mrb[0].mxu0
    %v7300 = vadd.f32 %v6915, %v7299
    %v7301 = vpop.f32.mrb[0].mxu0
    %7302 = vmatprep.mubr.f32.mxu0 %v6453
    %7303 = vmatmul.mubr.f32.gmra.mrb[0].mxu0 %v6389
    %v7304 = vpop.f32.mrb[0].mxu0
    %v7305 = vadd.f32 %v6920, %v7304
    %v7306 = vpop.f32.mrb[0].mxu0
    %7307 = vmatprep.mubr.f32.mxu0 %v6454
    %7308 = vmatmul.mubr.f32.gmra.mrb[0].mxu0 %v6390
    %v7309 = vpop.f32.mrb[0].mxu0
    %v7310 = vadd.f32 %v6925, %v7309
    %v7311 = vpop.f32.mrb[0].mxu0
    %7312 = vmatprep.mubr.f32.mxu0 %v6455
    %7313 = vmatmul.mubr.f32.gmra.mrb[0].mxu0 %v6391
    %v7314 = vpop.f32.mrb[0].mxu0
    %v7315 = vadd.f32 %v6930, %v7314
    %v7316 = vpop.f32.mrb[0].mxu0
    %7317 = vmatprep.mubr.f32.mxu0 %v6456
    %7318 = vmatmul.mubr.f32.gmra.mrb[0].mxu0 %v6392
    %v7319 = vpop.f32.mrb[0].mxu0
    %v7320 = vadd.f32 %v6935, %v7319
    %v7321 = vpop.f32.mrb[0].mxu0
    %7322 = vmatprep.mubr.f32.mxu0 %v6457
    %7323 = vmatmul.mubr.f32.gmra.mrb[0].mxu0 %v6393
    %v7324 = vpop.f32.mrb[0].mxu0
    %v7325 = vadd.f32 %v6940, %v7324
    %v7326 = vpop.f32.mrb[0].mxu0
    %7327 = vmatprep.mubr.f32.mxu0 %v6458
    %7328 = vmatmul.mubr.f32.gmra.mrb[0].mxu0 %v6394
    %v7329 = vpop.f32.mrb[0].mxu0
    %v7330 = vadd.f32 %v6945, %v7329
    %v7331 = vpop.f32.mrb[0].mxu0
    %7332 = vmatprep.mubr.f32.mxu0 %v6459
    %7333 = vmatmul.mubr.f32.gmra.mrb[0].mxu0 %v6395
    %v7334 = vpop.f32.mrb[0].mxu0
    %v7335 = vadd.f32 %v6950, %v7334
    %v7336 = vpop.f32.mrb[0].mxu0
    %7337 = vmatprep.mubr.f32.mxu0 %v6460
    %7338 = vmatmul.mubr.f32.gmra.mrb[0].mxu0 %v6396
    %v7339 = vpop.f32.mrb[0].mxu0
    %v7340 = vadd.f32 %v6955, %v7339
    %v7341 = vpop.f32.mrb[0].mxu0
    %7342 = vmatprep.mubr.f32.mxu0 %v6461
    %7343 = vmatmul.mubr.f32.gmra.mrb[0].mxu0 %v6397
    %v7344 = vpop.f32.mrb[0].mxu0
    %v7345 = vadd.f32 %v6960, %v7344
    %v7346 = vpop.f32.mrb[0].mxu0
    %7347 = vmatprep.mubr.f32.mxu0 %v6462
    %7348 = vmatmul.mubr.f32.gmra.mrb[0].mxu0 %v6398
    %v7349 = vpop.f32.mrb[0].mxu0
    %v7350 = vadd.f32 %v6965, %v7349
    %v7351 = vpop.f32.mrb[0].mxu0
    %7352 = vmatprep.mubr.f32.mxu0 %v6463
    %7353 = vmatmul.mubr.f32.gmra.mrb[0].mxu0 %v6399
    %v7354 = vpop.f32.mrb[0].mxu0
    %v7355 = vadd.f32 %v6970, %v7354
    %v7356 = vpop.f32.mrb[0].mxu0
    %7357 = vmatprep.mubr.f32.mxu0 %v6464
    %7358 = vmatmul.mubr.f32.gmra.mrb[0].mxu0 %v6400
    %v7359 = vpop.f32.mrb[0].mxu0
    %v7360 = vadd.f32 %v6975, %v7359
    %v7361 = vpop.f32.mrb[0].mxu0
    %7362 = vmatprep.mubr.f32.mxu0 %v6465
    %7363 = vmatmul.mubr.f32.gmra.mrb[0].mxu0 %v6401
    %v7364 = vpop.f32.mrb[0].mxu0
    %v7365 = vadd.f32 %v6980, %v7364
    %v7366 = vpop.f32.mrb[0].mxu0
    %7367 = vmatprep.mubr.f32.mxu0 %v6466
    %7368 = vmatmul.mubr.f32.gmra.mrb[0].mxu0 %v6402
    %v7369 = vpop.f32.mrb[0].mxu0
    %v7370 = vadd.f32 %v6985, %v7369
    %v7371 = vpop.f32.mrb[0].mxu0
    %7372 = vmatprep.mubr.f32.mxu0 %v6467
    %7373 = vmatmul.mubr.f32.gmra.mrb[0].mxu0 %v6403
    %v7374 = vpop.f32.mrb[0].mxu0
    %v7375 = vadd.f32 %v6990, %v7374
    %v7376 = vpop.f32.mrb[0].mxu0
    %7377 = vmatprep.mubr.f32.mxu0 %v6468
    %7378 = vmatmul.mubr.f32.gmra.mrb[0].mxu0 %v6404
    %v7379 = vpop.f32.mrb[0].mxu0
    %v7380 = vadd.f32 %v6995, %v7379
    %v7381 = vpop.f32.mrb[0].mxu0
    %7382 = vmatprep.mubr.f32.mxu0 %v6469
    %7383 = vmatmul.mubr.f32.gmra.mrb[0].mxu0 %v6405
    %v7384 = vpop.f32.mrb[0].mxu0
    %v7385 = vadd.f32 %v7000, %v7384
    %v7386 = vpop.f32.mrb[0].mxu0
    %7387 = vmatprep.mubr.f32.mxu0 %v6470
    %7388 = vmatmul.mubr.f32.gmra.mrb[0].mxu0 %v6406
    %v7389 = vpop.f32.mrb[0].mxu0
    %v7390 = vadd.f32 %v7005, %v7389
    %v7391 = vpop.f32.mrb[0].mxu0
    %7392 = vmatprep.mubr.f32.mxu0 %v6471
    %7393 = vmatmul.mubr.f32.gmra.mrb[0].mxu0 %v6407
    %v7394 = vpop.f32.mrb[0].mxu0
    %v7395 = vadd.f32 %v7010, %v7394
    %v7396 = vpop.f32.mrb[0].mxu0
    %7397 = vmatprep.mubr.f32.mxu0 %v6472
    %7398 = vmatmul.mubr.f32.gmra.mrb[0].mxu0 %v6408
    %v7399 = vpop.f32.mrb[0].mxu0
    %v7400 = vadd.f32 %v7015, %v7399
    %v7401 = vpop.f32.mrb[0].mxu0
    %7402 = vmatprep.mubr.f32.mxu0 %v6473
    %7403 = vmatmul.mubr.f32.gmra.mrb[0].mxu0 %v6409
    %v7404 = vpop.f32.mrb[0].mxu0
    %v7405 = vadd.f32 %v7020, %v7404
    %v7406 = vpop.f32.mrb[0].mxu0
    %7407 = vmatprep.mubr.f32.mxu0 %v6474
    %7408 = vmatmul.mubr.f32.gmra.mrb[0].mxu0 %v6410
    %v7409 = vpop.f32.mrb[0].mxu0
    %v7410 = vadd.f32 %v7025, %v7409
    %v7411 = vpop.f32.mrb[0].mxu0
    %7412 = vmatprep.mubr.f32.mxu0 %v6475
    %7413 = vmatmul.mubr.f32.gmra.mrb[0].mxu0 %v6411
    %v7414 = vpop.f32.mrb[0].mxu0
    %v7415 = vadd.f32 %v7030, %v7414
    %v7416 = vpop.f32.mrb[0].mxu0
    %7417 = vmatprep.mubr.f32.mxu0 %v6476
    %7418 = vmatmul.mubr.f32.gmra.mrb[0].mxu0 %v6412
    %v7419 = vpop.f32.mrb[0].mxu0
    %v7420 = vadd.f32 %v7035, %v7419
    %v7421 = vpop.f32.mrb[0].mxu0
    %7422 = vmatprep.mubr.f32.mxu0 %v6477
    %7423 = vmatmul.mubr.f32.gmra.mrb[0].mxu0 %v6413
    %v7424 = vpop.f32.mrb[0].mxu0
    %v7425 = vadd.f32 %v7040, %v7424
    %v7426 = vpop.f32.mrb[0].mxu0
    %7427 = vmatprep.mubr.f32.mxu0 %v6478
    %7428 = vmatmul.mubr.f32.gmra.mrb[0].mxu0 %v6414
    %v7429 = vpop.f32.mrb[0].mxu0
    %v7430 = vadd.f32 %v7045, %v7429
    %v7431 = vpop.f32.mrb[0].mxu0
    %7432 = vmatprep.mubr.f32.mxu0 %v6479
    %7433 = vmatmul.mubr.f32.gmra.mrb[0].mxu0 %v6415
    %v7434 = vpop.f32.mrb[0].mxu0
    %v7435 = vadd.f32 %v7050, %v7434
    %v7436 = vpop.f32.mrb[0].mxu0
    %7437 = vmatprep.mubr.f32.mxu0 %v6480
    %7438 = vmatmul.mubr.f32.gmra.mrb[0].mxu0 %v6416
    %v7439 = vpop.f32.mrb[0].mxu0
    %v7440 = vadd.f32 %v7055, %v7439
    %v7441 = vpop.f32.mrb[0].mxu0
    %7442 = vmatprep.mubr.f32.mxu0 %v6481
    %7443 = vmatmul.mubr.f32.gmra.mrb[0].mxu0 %v6417
    %v7444 = vpop.f32.mrb[0].mxu0
    %v7445 = vadd.f32 %v7060, %v7444
    %v7446 = vpop.f32.mrb[0].mxu0
    %7447 = vmatprep.mubr.f32.mxu0 %v6482
    %7448 = vmatmul.mubr.f32.gmra.mrb[0].mxu0 %v6418
    %v7449 = vpop.f32.mrb[0].mxu0
    %v7450 = vadd.f32 %v7065, %v7449
    %v7451 = vpop.f32.mrb[0].mxu0
    %7452 = vmatprep.mubr.f32.mxu0 %v6483
    %7453 = vmatmul.mubr.f32.gmra.mrb[0].mxu0 %v6419
    %v7454 = vpop.f32.mrb[0].mxu0
    %v7455 = vadd.f32 %v7070, %v7454
    %v7456 = vpop.f32.mrb[0].mxu0
    %7457 = vmatprep.mubr.f32.mxu0 %v6484
    %7458 = vmatmul.mubr.f32.gmra.mrb[0].mxu0 %v6420
    %v7459 = vpop.f32.mrb[0].mxu0
    %v7460 = vadd.f32 %v7075, %v7459
    %v7461 = vpop.f32.mrb[0].mxu0
    %7462 = vmatprep.mubr.f32.mxu0 %v6485
    %7463 = vmatmul.mubr.f32.gmra.mrb[0].mxu0 %v6421
    %v7464 = vpop.f32.mrb[0].mxu0
    %v7465 = vadd.f32 %v7080, %v7464
    %v7466 = vpop.f32.mrb[0].mxu0
    %7467 = vmatprep.mubr.f32.mxu0 %v6486
    %7468 = vmatmul.mubr.f32.gmra.mrb[0].mxu0 %v6422
    %v7469 = vpop.f32.mrb[0].mxu0
    %v7470 = vadd.f32 %v7085, %v7469
    %v7471 = vpop.f32.mrb[0].mxu0
    %7472 = vmatprep.mubr.f32.mxu0 %v6487
    %7473 = vmatmul.mubr.f32.gmra.mrb[0].mxu0 %v6423
    %v7474 = vpop.f32.mrb[0].mxu0
    %v7475 = vadd.f32 %v7090, %v7474
    %v7476 = vpop.f32.mrb[0].mxu0
    %7477 = vmatprep.mubr.f32.mxu0 %v6488
    %7478 = vmatmul.mubr.f32.gmra.mrb[0].mxu0 %v6424
    %v7479 = vpop.f32.mrb[0].mxu0
    %v7480 = vadd.f32 %v7095, %v7479
    %v7481 = vpop.f32.mrb[0].mxu0
    %7482 = vmatprep.mubr.f32.mxu0 %v6489
    %7483 = vmatmul.mubr.f32.gmra.mrb[0].mxu0 %v6425
    %v7484 = vpop.f32.mrb[0].mxu0
    %v7485 = vadd.f32 %v7100, %v7484
    %v7486 = vpop.f32.mrb[0].mxu0
    %7487 = vmatprep.mubr.f32.mxu0 %v6490
    %7488 = vmatmul.mubr.f32.gmra.mrb[0].mxu0 %v6426
    %v7489 = vpop.f32.mrb[0].mxu0
    %v7490 = vadd.f32 %v7105, %v7489
    %v7491 = vpop.f32.mrb[0].mxu0
    %7492 = vmatprep.mubr.f32.mxu0 %v6491
    %7493 = vmatmul.mubr.f32.gmra.mrb[0].mxu0 %v6427
    %v7494 = vpop.f32.mrb[0].mxu0
    %v7495 = vadd.f32 %v7110, %v7494
    %v7496 = vpop.f32.mrb[0].mxu0
    %7497 = vmatprep.mubr.f32.mxu0 %v6492
    %7498 = vmatmul.mubr.f32.gmra.mrb[0].mxu0 %v6428
    %v7499 = vpop.f32.mrb[0].mxu0
    %v7500 = vadd.f32 %v7115, %v7499
    %v7501 = vpop.f32.mrb[0].mxu0
    %7502 = vmatprep.mubr.f32.mxu0 %v6493
    %7503 = vmatmul.mubr.f32.gmra.mrb[0].mxu0 %v6429
    %v7504 = vpop.f32.mrb[0].mxu0
    %v7505 = vadd.f32 %v7120, %v7504
    %v7506 = vpop.f32.mrb[0].mxu0
    %7507 = vmatprep.mubr.f32.mxu0 %v6494
    %7508 = vmatmul.mubr.f32.gmra.mrb[0].mxu0 %v6430
    %v7509 = vpop.f32.mrb[0].mxu0
    %v7510 = vadd.f32 %v7125, %v7509
    %v7511 = vpop.f32.mrb[0].mxu0
    %7512 = vmatprep.mubr.f32.mxu0 %v6495
    %7513 = vmatmul.mubr.f32.gmra.mrb[0].mxu0 %v6431
    %v7514 = vpop.f32.mrb[0].mxu0
    %v7515 = vadd.f32 %v7130, %v7514
    %v7516 = vpop.f32.mrb[0].mxu0
    %7517 = vmatprep.mubr.f32.mxu0 %v6496
    %7518 = vmatmul.mubr.f32.gmra.mrb[0].mxu0 %v6432
    %v7519 = vpop.f32.mrb[0].mxu0
    %v7520 = vadd.f32 %v7135, %v7519
    %v7521 = vpop.f32.mrb[0].mxu0
    %7522 = vmatprep.mubr.f32.mxu0 %v6497
    %7523 = vmatmul.mubr.f32.gmra.mrb[0].mxu0 %v6433
    %v7524 = vpop.f32.mrb[0].mxu0
    %v7525 = vadd.f32 %v7140, %v7524
    %v7526 = vpop.f32.mrb[0].mxu0
    %7527 = vmatprep.mubr.f32.mxu0 %v6498
    %7528 = vmatmul.mubr.f32.gmra.mrb[0].mxu0 %v6434
    %v7529 = vpop.f32.mrb[0].mxu0
    %v7530 = vadd.f32 %v7145, %v7529
    %v7531 = vpop.f32.mrb[0].mxu0
    %7532 = vdwg.mxu0
    %7533 = vmatprep.subr.mxu0 0.0
    %7534 = vmatpush1.msra.mxu0 %v6563
    %7535 = vmatprep.subr.mxu0 0.0
    %7536 = vmatpush1.msra.mxu0 %v6564
    %7537 = vmatprep.subr.mxu0 0.0
    %7538 = vmatpush1.msra.mxu0 %v6565
    %7539 = vmatprep.subr.mxu0 0.0
    %7540 = vmatpush1.msra.mxu0 %v6566
    %7541 = vmatprep.subr.mxu0 0.0
    %7542 = vmatpush1.msra.mxu0 %v6567
    %7543 = vmatprep.subr.mxu0 0.0
    %7544 = vmatpush1.msra.mxu0 %v6568
    %7545 = vmatprep.subr.mxu0 0.0
    %7546 = vmatpush1.msra.mxu0 %v6569
    %7547 = vmatprep.subr.mxu0 0.0
    %7548 = vmatpush1.msra.mxu0 %v6570
    %7549 = vmatprep.subr.mxu0 0.0
    %7550 = vmatpush1.msra.mxu0 0.0
    %7551 = vmatprep.subr.mxu0 0.0
    %7552 = vmatpush1.msra.mxu0 0.0
    %7553 = vmatprep.subr.mxu0 0.0
    %7554 = vmatpush1.msra.mxu0 0.0
    %7555 = vmatprep.subr.mxu0 0.0
    %7556 = vmatpush1.msra.mxu0 0.0
    %7557 = vmatprep.subr.mxu0 0.0
    %7558 = vmatpush1.msra.mxu0 0.0
    %7559 = vmatprep.subr.mxu0 0.0
    %7560 = vmatpush1.msra.mxu0 0.0
    %7561 = vmatprep.subr.mxu0 0.0
    %7562 = vmatpush1.msra.mxu0 0.0
    %7563 = vmatprep.subr.mxu0 0.0
    %7564 = vmatpush1.msra.mxu0 0.0
    %7565 = vmatprep.subr.mxu0 0.0
    %7566 = vmatpush1.msra.mxu0 0.0
    %7567 = vmatprep.subr.mxu0 0.0
    %7568 = vmatpush1.msra.mxu0 0.0
    %7569 = vmatprep.subr.mxu0 0.0
    %7570 = vmatpush1.msra.mxu0 0.0
    %7571 = vmatprep.subr.mxu0 0.0
    %7572 = vmatpush1.msra.mxu0 0.0
    %7573 = vmatprep.subr.mxu0 0.0
    %7574 = vmatpush1.msra.mxu0 0.0
    %7575 = vmatprep.subr.mxu0 0.0
    %7576 = vmatpush1.msra.mxu0 0.0
    %7577 = vmatprep.subr.mxu0 0.0
    %7578 = vmatpush1.msra.mxu0 0.0
    %7579 = vmatprep.subr.mxu0 0.0
    %7580 = vmatpush1.msra.mxu0 0.0
    %7581 = vmatprep.subr.mxu0 0.0
    %7582 = vmatpush1.msra.mxu0 0.0
    %7583 = vmatprep.subr.mxu0 0.0
    %7584 = vmatpush1.msra.mxu0 0.0
    %7585 = vmatprep.subr.mxu0 0.0
    %7586 = vmatpush1.msra.mxu0 0.0
    %7587 = vmatprep.subr.mxu0 0.0
    %7588 = vmatpush1.msra.mxu0 0.0
    %7589 = vmatprep.subr.mxu0 0.0
    %7590 = vmatpush1.msra.mxu0 0.0
    %7591 = vmatprep.subr.mxu0 0.0
    %7592 = vmatpush1.msra.mxu0 0.0
    %7593 = vmatprep.subr.mxu0 0.0
    %7594 = vmatpush1.msra.mxu0 0.0
    %7595 = vmatprep.subr.mxu0 0.0
    %7596 = vmatpush1.msra.mxu0 0.0
    %7597 = vmatprep.mubr.f32.mxu0 0.0
    %7598 = vmatmul.mubr.f32.gmra.mrb[0].mxu0 %v6572
    %v7599 = vpop.f32.mrb[0].mxu0
    %v7600 = vadd.f32 %v7215, %v7599
    %v7601 = vpop.f32.mrb[0].mxu0
    %7602 = vmatprep.mubr.f32.mxu0 0.0
    %7603 = vmatmul.mubr.f32.gmra.mrb[0].mxu0 %v6575
    %v7604 = vpop.f32.mrb[0].mxu0
    %v7605 = vadd.f32 %v7220, %v7604
    %v7606 = vpop.f32.mrb[0].mxu0
    %7607 = vmatprep.mubr.f32.mxu0 0.0
    %7608 = vmatmul.mubr.f32.gmra.mrb[0].mxu0 %v6578
    %v7609 = vpop.f32.mrb[0].mxu0
    %v7610 = vadd.f32 %v7225, %v7609
    %v7611 = vpop.f32.mrb[0].mxu0
    %7612 = vmatprep.mubr.f32.mxu0 0.0
    %7613 = vmatmul.mubr.f32.gmra.mrb[0].mxu0 %v6581
    %v7614 = vpop.f32.mrb[0].mxu0
    %v7615 = vadd.f32 %v7230, %v7614
    %v7616 = vpop.f32.mrb[0].mxu0
    %7617 = vmatprep.mubr.f32.mxu0 0.0
    %7618 = vmatmul.mubr.f32.gmra.mrb[0].mxu0 %v6584
    %v7619 = vpop.f32.mrb[0].mxu0
    %v7620 = vadd.f32 %v7235, %v7619
    %v7621 = vpop.f32.mrb[0].mxu0
    %7622 = vmatprep.mubr.f32.mxu0 0.0
    %7623 = vmatmul.mubr.f32.gmra.mrb[0].mxu0 %v6587
    %v7624 = vpop.f32.mrb[0].mxu0
    %v7625 = vadd.f32 %v7240, %v7624
    %v7626 = vpop.f32.mrb[0].mxu0
    %7627 = vmatprep.mubr.f32.mxu0 0.0
    %7628 = vmatmul.mubr.f32.gmra.mrb[0].mxu0 %v6590
    %v7629 = vpop.f32.mrb[0].mxu0
    %v7630 = vadd.f32 %v7245, %v7629
    %v7631 = vpop.f32.mrb[0].mxu0
    %7632 = vmatprep.mubr.f32.mxu0 0.0
    %7633 = vmatmul.mubr.f32.gmra.mrb[0].mxu0 %v6593
    %v7634 = vpop.f32.mrb[0].mxu0
    %v7635 = vadd.f32 %v7250, %v7634
    %v7636 = vpop.f32.mrb[0].mxu0
    %7637 = vmatprep.mubr.f32.mxu0 0.0
    %7638 = vmatmul.mubr.f32.gmra.mrb[0].mxu0 %v6596
    %v7639 = vpop.f32.mrb[0].mxu0
    %v7640 = vadd.f32 %v7255, %v7639
    %v7641 = vpop.f32.mrb[0].mxu0
    %7642 = vmatprep.mubr.f32.mxu0 0.0
    %7643 = vmatmul.mubr.f32.gmra.mrb[0].mxu0 %v6599
    %v7644 = vpop.f32.mrb[0].mxu0
    %v7645 = vadd.f32 %v7260, %v7644
    %v7646 = vpop.f32.mrb[0].mxu0
    %7647 = vmatprep.mubr.f32.mxu0 0.0
    %7648 = vmatmul.mubr.f32.gmra.mrb[0].mxu0 %v6602
    %v7649 = vpop.f32.mrb[0].mxu0
    %v7650 = vadd.f32 %v7265, %v7649
    %v7651 = vpop.f32.mrb[0].mxu0
    %7652 = vmatprep.mubr.f32.mxu0 0.0
    %7653 = vmatmul.mubr.f32.gmra.mrb[0].mxu0 %v6605
    %v7654 = vpop.f32.mrb[0].mxu0
    %v7655 = vadd.f32 %v7270, %v7654
    %v7656 = vpop.f32.mrb[0].mxu0
    %7657 = vmatprep.mubr.f32.mxu0 0.0
    %7658 = vmatmul.mubr.f32.gmra.mrb[0].mxu0 %v6608
    %v7659 = vpop.f32.mrb[0].mxu0
    %v7660 = vadd.f32 %v7275, %v7659
    %v7661 = vpop.f32.mrb[0].mxu0
    %7662 = vmatprep.mubr.f32.mxu0 0.0
    %7663 = vmatmul.mubr.f32.gmra.mrb[0].mxu0 %v6611
    %v7664 = vpop.f32.mrb[0].mxu0
    %v7665 = vadd.f32 %v7280, %v7664
    %v7666 = vpop.f32.mrb[0].mxu0
    %7667 = vmatprep.mubr.f32.mxu0 0.0
    %7668 = vmatmul.mubr.f32.gmra.mrb[0].mxu0 %v6614
    %v7669 = vpop.f32.mrb[0].mxu0
    %v7670 = vadd.f32 %v7285, %v7669
    %v7671 = vpop.f32.mrb[0].mxu0
    %7672 = vmatprep.mubr.f32.mxu0 0.0
    %7673 = vmatmul.mubr.f32.gmra.mrb[0].mxu0 %v6617
    %v7674 = vpop.f32.mrb[0].mxu0
    %v7675 = vadd.f32 %v7290, %v7674
    %v7676 = vpop.f32.mrb[0].mxu0
    %7677 = vmatprep.mubr.f32.mxu0 0.0
    %7678 = vmatmul.mubr.f32.gmra.mrb[0].mxu0 %v6620
    %v7679 = vpop.f32.mrb[0].mxu0
    %v7680 = vadd.f32 %v7295, %v7679
    %v7681 = vpop.f32.mrb[0].mxu0
    %7682 = vmatprep.mubr.f32.mxu0 0.0
    %7683 = vmatmul.mubr.f32.gmra.mrb[0].mxu0 %v6623
    %v7684 = vpop.f32.mrb[0].mxu0
    %v7685 = vadd.f32 %v7300, %v7684
    %v7686 = vpop.f32.mrb[0].mxu0
    %7687 = vmatprep.mubr.f32.mxu0 0.0
    %7688 = vmatmul.mubr.f32.gmra.mrb[0].mxu0 %v6626
    %v7689 = vpop.f32.mrb[0].mxu0
    %v7690 = vadd.f32 %v7305, %v7689
    %v7691 = vpop.f32.mrb[0].mxu0
    %7692 = vmatprep.mubr.f32.mxu0 0.0
    %7693 = vmatmul.mubr.f32.gmra.mrb[0].mxu0 %v6629
    %v7694 = vpop.f32.mrb[0].mxu0
    %v7695 = vadd.f32 %v7310, %v7694
    %v7696 = vpop.f32.mrb[0].mxu0
    %7697 = vmatprep.mubr.f32.mxu0 0.0
    %7698 = vmatmul.mubr.f32.gmra.mrb[0].mxu0 %v6632
    %v7699 = vpop.f32.mrb[0].mxu0
    %v7700 = vadd.f32 %v7315, %v7699
    %v7701 = vpop.f32.mrb[0].mxu0
    %7702 = vmatprep.mubr.f32.mxu0 0.0
    %7703 = vmatmul.mubr.f32.gmra.mrb[0].mxu0 %v6635
    %v7704 = vpop.f32.mrb[0].mxu0
    %v7705 = vadd.f32 %v7320, %v7704
    %v7706 = vpop.f32.mrb[0].mxu0
    %7707 = vmatprep.mubr.f32.mxu0 0.0
    %7708 = vmatmul.mubr.f32.gmra.mrb[0].mxu0 %v6638
    %v7709 = vpop.f32.mrb[0].mxu0
    %v7710 = vadd.f32 %v7325, %v7709
    %v7711 = vpop.f32.mrb[0].mxu0
    %7712 = vmatprep.mubr.f32.mxu0 0.0
    %7713 = vmatmul.mubr.f32.gmra.mrb[0].mxu0 %v6641
    %v7714 = vpop.f32.mrb[0].mxu0
    %v7715 = vadd.f32 %v7330, %v7714
    %v7716 = vpop.f32.mrb[0].mxu0
    %7717 = vmatprep.mubr.f32.mxu0 0.0
    %7718 = vmatmul.mubr.f32.gmra.mrb[0].mxu0 %v6644
    %v7719 = vpop.f32.mrb[0].mxu0
    %v7720 = vadd.f32 %v7335, %v7719
    %v7721 = vpop.f32.mrb[0].mxu0
    %7722 = vmatprep.mubr.f32.mxu0 0.0
    %7723 = vmatmul.mubr.f32.gmra.mrb[0].mxu0 %v6647
    %v7724 = vpop.f32.mrb[0].mxu0
    %v7725 = vadd.f32 %v7340, %v7724
    %v7726 = vpop.f32.mrb[0].mxu0
    %7727 = vmatprep.mubr.f32.mxu0 0.0
    %7728 = vmatmul.mubr.f32.gmra.mrb[0].mxu0 %v6650
    %v7729 = vpop.f32.mrb[0].mxu0
    %v7730 = vadd.f32 %v7345, %v7729
    %v7731 = vpop.f32.mrb[0].mxu0
    %7732 = vmatprep.mubr.f32.mxu0 0.0
    %7733 = vmatmul.mubr.f32.gmra.mrb[0].mxu0 %v6653
    %v7734 = vpop.f32.mrb[0].mxu0
    %v7735 = vadd.f32 %v7350, %v7734
    %v7736 = vpop.f32.mrb[0].mxu0
    %7737 = vmatprep.mubr.f32.mxu0 0.0
    %7738 = vmatmul.mubr.f32.gmra.mrb[0].mxu0 %v6656
    %v7739 = vpop.f32.mrb[0].mxu0
    %v7740 = vadd.f32 %v7355, %v7739
    %v7741 = vpop.f32.mrb[0].mxu0
    %7742 = vmatprep.mubr.f32.mxu0 0.0
    %7743 = vmatmul.mubr.f32.gmra.mrb[0].mxu0 %v6659
    %v7744 = vpop.f32.mrb[0].mxu0
    %v7745 = vadd.f32 %v7360, %v7744
    %v7746 = vpop.f32.mrb[0].mxu0
    %7747 = vmatprep.mubr.f32.mxu0 0.0
    %7748 = vmatmul.mubr.f32.gmra.mrb[0].mxu0 %v6662
    %v7749 = vpop.f32.mrb[0].mxu0
    %v7750 = vadd.f32 %v7365, %v7749
    %v7751 = vpop.f32.mrb[0].mxu0
    %7752 = vmatprep.mubr.f32.mxu0 0.0
    %7753 = vmatmul.mubr.f32.gmra.mrb[0].mxu0 %v6665
    %v7754 = vpop.f32.mrb[0].mxu0
    %v7755 = vadd.f32 %v7370, %v7754
    %v7756 = vpop.f32.mrb[0].mxu0
    %7757 = vmatprep.mubr.f32.mxu0 0.0
    %7758 = vmatmul.mubr.f32.gmra.mrb[0].mxu0 %v6668
    %v7759 = vpop.f32.mrb[0].mxu0
    %v7760 = vadd.f32 %v7375, %v7759
    %v7761 = vpop.f32.mrb[0].mxu0
    %7762 = vmatprep.mubr.f32.mxu0 0.0
    %7763 = vmatmul.mubr.f32.gmra.mrb[0].mxu0 %v6671
    %v7764 = vpop.f32.mrb[0].mxu0
    %v7765 = vadd.f32 %v7380, %v7764
    %v7766 = vpop.f32.mrb[0].mxu0
    %7767 = vmatprep.mubr.f32.mxu0 0.0
    %7768 = vmatmul.mubr.f32.gmra.mrb[0].mxu0 %v6674
    %v7769 = vpop.f32.mrb[0].mxu0
    %v7770 = vadd.f32 %v7385, %v7769
    %v7771 = vpop.f32.mrb[0].mxu0
    %7772 = vmatprep.mubr.f32.mxu0 0.0
    %7773 = vmatmul.mubr.f32.gmra.mrb[0].mxu0 %v6677
    %v7774 = vpop.f32.mrb[0].mxu0
    %v7775 = vadd.f32 %v7390, %v7774
    %v7776 = vpop.f32.mrb[0].mxu0
    %7777 = vmatprep.mubr.f32.mxu0 0.0
    %7778 = vmatmul.mubr.f32.gmra.mrb[0].mxu0 %v6680
    %v7779 = vpop.f32.mrb[0].mxu0
    %v7780 = vadd.f32 %v7395, %v7779
    %v7781 = vpop.f32.mrb[0].mxu0
    %7782 = vmatprep.mubr.f32.mxu0 0.0
    %7783 = vmatmul.mubr.f32.gmra.mrb[0].mxu0 %v6683
    %v7784 = vpop.f32.mrb[0].mxu0
    %v7785 = vadd.f32 %v7400, %v7784
    %v7786 = vpop.f32.mrb[0].mxu0
    %7787 = vmatprep.mubr.f32.mxu0 0.0
    %7788 = vmatmul.mubr.f32.gmra.mrb[0].mxu0 %v6686
    %v7789 = vpop.f32.mrb[0].mxu0
    %v7790 = vadd.f32 %v7405, %v7789
    %v7791 = vpop.f32.mrb[0].mxu0
    %7792 = vmatprep.mubr.f32.mxu0 0.0
    %7793 = vmatmul.mubr.f32.gmra.mrb[0].mxu0 %v6689
    %v7794 = vpop.f32.mrb[0].mxu0
    %v7795 = vadd.f32 %v7410, %v7794
    %v7796 = vpop.f32.mrb[0].mxu0
    %7797 = vmatprep.mubr.f32.mxu0 0.0
    %7798 = vmatmul.mubr.f32.gmra.mrb[0].mxu0 %v6692
    %v7799 = vpop.f32.mrb[0].mxu0
    %v7800 = vadd.f32 %v7415, %v7799
    %v7801 = vpop.f32.mrb[0].mxu0
    %7802 = vmatprep.mubr.f32.mxu0 0.0
    %7803 = vmatmul.mubr.f32.gmra.mrb[0].mxu0 %v6695
    %v7804 = vpop.f32.mrb[0].mxu0
    %v7805 = vadd.f32 %v7420, %v7804
    %v7806 = vpop.f32.mrb[0].mxu0
    %7807 = vmatprep.mubr.f32.mxu0 0.0
    %7808 = vmatmul.mubr.f32.gmra.mrb[0].mxu0 %v6698
    %v7809 = vpop.f32.mrb[0].mxu0
    %v7810 = vadd.f32 %v7425, %v7809
    %v7811 = vpop.f32.mrb[0].mxu0
    %7812 = vmatprep.mubr.f32.mxu0 0.0
    %7813 = vmatmul.mubr.f32.gmra.mrb[0].mxu0 %v6701
    %v7814 = vpop.f32.mrb[0].mxu0
    %v7815 = vadd.f32 %v7430, %v7814
    %v7816 = vpop.f32.mrb[0].mxu0
    %7817 = vmatprep.mubr.f32.mxu0 0.0
    %7818 = vmatmul.mubr.f32.gmra.mrb[0].mxu0 %v6704
    %v7819 = vpop.f32.mrb[0].mxu0
    %v7820 = vadd.f32 %v7435, %v7819
    %v7821 = vpop.f32.mrb[0].mxu0
    %7822 = vmatprep.mubr.f32.mxu0 0.0
    %7823 = vmatmul.mubr.f32.gmra.mrb[0].mxu0 %v6707
    %v7824 = vpop.f32.mrb[0].mxu0
    %v7825 = vadd.f32 %v7440, %v7824
    %v7826 = vpop.f32.mrb[0].mxu0
    %7827 = vmatprep.mubr.f32.mxu0 0.0
    %7828 = vmatmul.mubr.f32.gmra.mrb[0].mxu0 %v6710
    %v7829 = vpop.f32.mrb[0].mxu0
    %v7830 = vadd.f32 %v7445, %v7829
    %v7831 = vpop.f32.mrb[0].mxu0
    %7832 = vmatprep.mubr.f32.mxu0 0.0
    %7833 = vmatmul.mubr.f32.gmra.mrb[0].mxu0 %v6713
    %v7834 = vpop.f32.mrb[0].mxu0
    %v7835 = vadd.f32 %v7450, %v7834
    %v7836 = vpop.f32.mrb[0].mxu0
    %7837 = vmatprep.mubr.f32.mxu0 0.0
    %7838 = vmatmul.mubr.f32.gmra.mrb[0].mxu0 %v6716
    %v7839 = vpop.f32.mrb[0].mxu0
    %v7840 = vadd.f32 %v7455, %v7839
    %v7841 = vpop.f32.mrb[0].mxu0
    %7842 = vmatprep.mubr.f32.mxu0 0.0
    %7843 = vmatmul.mubr.f32.gmra.mrb[0].mxu0 %v6719
    %v7844 = vpop.f32.mrb[0].mxu0
    %v7845 = vadd.f32 %v7460, %v7844
    %v7846 = vpop.f32.mrb[0].mxu0
    %7847 = vmatprep.mubr.f32.mxu0 0.0
    %7848 = vmatmul.mubr.f32.gmra.mrb[0].mxu0 %v6722
    %v7849 = vpop.f32.mrb[0].mxu0
    %v7850 = vadd.f32 %v7465, %v7849
    %v7851 = vpop.f32.mrb[0].mxu0
    %7852 = vmatprep.mubr.f32.mxu0 0.0
    %7853 = vmatmul.mubr.f32.gmra.mrb[0].mxu0 %v6725
    %v7854 = vpop.f32.mrb[0].mxu0
    %v7855 = vadd.f32 %v7470, %v7854
    %v7856 = vpop.f32.mrb[0].mxu0
    %7857 = vmatprep.mubr.f32.mxu0 0.0
    %7858 = vmatmul.mubr.f32.gmra.mrb[0].mxu0 %v6728
    %v7859 = vpop.f32.mrb[0].mxu0
    %v7860 = vadd.f32 %v7475, %v7859
    %v7861 = vpop.f32.mrb[0].mxu0
    %7862 = vmatprep.mubr.f32.mxu0 0.0
    %7863 = vmatmul.mubr.f32.gmra.mrb[0].mxu0 %v6731
    %v7864 = vpop.f32.mrb[0].mxu0
    %v7865 = vadd.f32 %v7480, %v7864
    %v7866 = vpop.f32.mrb[0].mxu0
    %7867 = vmatprep.mubr.f32.mxu0 0.0
    %7868 = vmatmul.mubr.f32.gmra.mrb[0].mxu0 %v6734
    %v7869 = vpop.f32.mrb[0].mxu0
    %v7870 = vadd.f32 %v7485, %v7869
    %v7871 = vpop.f32.mrb[0].mxu0
    %7872 = vmatprep.mubr.f32.mxu0 0.0
    %7873 = vmatmul.mubr.f32.gmra.mrb[0].mxu0 %v6737
    %v7874 = vpop.f32.mrb[0].mxu0
    %v7875 = vadd.f32 %v7490, %v7874
    %v7876 = vpop.f32.mrb[0].mxu0
    %7877 = vmatprep.mubr.f32.mxu0 0.0
    %7878 = vmatmul.mubr.f32.gmra.mrb[0].mxu0 %v6740
    %v7879 = vpop.f32.mrb[0].mxu0
    %v7880 = vadd.f32 %v7495, %v7879
    %v7881 = vpop.f32.mrb[0].mxu0
    %7882 = vmatprep.mubr.f32.mxu0 0.0
    %7883 = vmatmul.mubr.f32.gmra.mrb[0].mxu0 %v6743
    %v7884 = vpop.f32.mrb[0].mxu0
    %v7885 = vadd.f32 %v7500, %v7884
    %v7886 = vpop.f32.mrb[0].mxu0
    %7887 = vmatprep.mubr.f32.mxu0 0.0
    %7888 = vmatmul.mubr.f32.gmra.mrb[0].mxu0 %v6746
    %v7889 = vpop.f32.mrb[0].mxu0
    %v7890 = vadd.f32 %v7505, %v7889
    %v7891 = vpop.f32.mrb[0].mxu0
    %7892 = vmatprep.mubr.f32.mxu0 0.0
    %7893 = vmatmul.mubr.f32.gmra.mrb[0].mxu0 %v6749
    %v7894 = vpop.f32.mrb[0].mxu0
    %v7895 = vadd.f32 %v7510, %v7894
    %v7896 = vpop.f32.mrb[0].mxu0
    %7897 = vmatprep.mubr.f32.mxu0 0.0
    %7898 = vmatmul.mubr.f32.gmra.mrb[0].mxu0 %v6752
    %v7899 = vpop.f32.mrb[0].mxu0
    %v7900 = vadd.f32 %v7515, %v7899
    %v7901 = vpop.f32.mrb[0].mxu0
    %7902 = vmatprep.mubr.f32.mxu0 0.0
    %7903 = vmatmul.mubr.f32.gmra.mrb[0].mxu0 %v6755
    %v7904 = vpop.f32.mrb[0].mxu0
    %v7905 = vadd.f32 %v7520, %v7904
    %v7906 = vpop.f32.mrb[0].mxu0
    %7907 = vmatprep.mubr.f32.mxu0 0.0
    %7908 = vmatmul.mubr.f32.gmra.mrb[0].mxu0 %v6758
    %v7909 = vpop.f32.mrb[0].mxu0
    %v7910 = vadd.f32 %v7525, %v7909
    %v7911 = vpop.f32.mrb[0].mxu0
    %7912 = vmatprep.mubr.f32.mxu0 0.0
    %7913 = vmatmul.mubr.f32.gmra.mrb[0].mxu0 %v6761
    %v7914 = vpop.f32.mrb[0].mxu0
    %v7915 = vadd.f32 %v7530, %v7914
    %v7916 = vpop.f32.mrb[0].mxu0
    %7917 = vdwg.mxu0
    %v7918 = vmul.f32 %v7600, %v7600
    %v7919 = vmul.f32 %v7605, %v7605
    %v7920 = vmul.f32 %v7610, %v7610
    %v7921 = vmul.f32 %v7615, %v7615
    %v7922 = vmul.f32 %v7620, %v7620
    %v7923 = vmul.f32 %v7625, %v7625
    %v7924 = vmul.f32 %v7630, %v7630
    %v7925 = vmul.f32 %v7635, %v7635
    %v7926 = vmul.f32 %v7640, %v7640
    %v7927 = vmul.f32 %v7645, %v7645
    %v7928 = vmul.f32 %v7650, %v7650
    %v7929 = vmul.f32 %v7655, %v7655
    %v7930 = vmul.f32 %v7660, %v7660
    %v7931 = vmul.f32 %v7665, %v7665
    %v7932 = vmul.f32 %v7670, %v7670
    %v7933 = vmul.f32 %v7675, %v7675
    %v7934 = vmul.f32 %v7680, %v7680
    %v7935 = vmul.f32 %v7685, %v7685
    %v7936 = vmul.f32 %v7690, %v7690
    %v7937 = vmul.f32 %v7695, %v7695
    %v7938 = vmul.f32 %v7700, %v7700
    %v7939 = vmul.f32 %v7705, %v7705
    %v7940 = vmul.f32 %v7710, %v7710
    %v7941 = vmul.f32 %v7715, %v7715
    %v7942 = vmul.f32 %v7720, %v7720
    %v7943 = vmul.f32 %v7725, %v7725
    %v7944 = vmul.f32 %v7730, %v7730
    %v7945 = vmul.f32 %v7735, %v7735
    %v7946 = vmul.f32 %v7740, %v7740
    %v7947 = vmul.f32 %v7745, %v7745
    %v7948 = vmul.f32 %v7750, %v7750
    %v7949 = vmul.f32 %v7755, %v7755
    %v7950 = vmul.f32 %v7760, %v7760
    %v7951 = vmul.f32 %v7765, %v7765
    %v7952 = vmul.f32 %v7770, %v7770
    %v7953 = vmul.f32 %v7775, %v7775
    %v7954 = vmul.f32 %v7780, %v7780
    %v7955 = vmul.f32 %v7785, %v7785
    %v7956 = vmul.f32 %v7790, %v7790
    %v7957 = vmul.f32 %v7795, %v7795
    %v7958 = vmul.f32 %v7800, %v7800
    %v7959 = vmul.f32 %v7805, %v7805
    %v7960 = vmul.f32 %v7810, %v7810
    %v7961 = vmul.f32 %v7815, %v7815
    %v7962 = vmul.f32 %v7820, %v7820
    %v7963 = vmul.f32 %v7825, %v7825
    %v7964 = vmul.f32 %v7830, %v7830
    %v7965 = vmul.f32 %v7835, %v7835
    %v7966 = vmul.f32 %v7840, %v7840
    %v7967 = vmul.f32 %v7845, %v7845
    %v7968 = vmul.f32 %v7850, %v7850
    %v7969 = vmul.f32 %v7855, %v7855
    %v7970 = vmul.f32 %v7860, %v7860
    %v7971 = vmul.f32 %v7865, %v7865
    %v7972 = vmul.f32 %v7870, %v7870
    %v7973 = vmul.f32 %v7875, %v7875
    %v7974 = vmul.f32 %v7880, %v7880
    %v7975 = vmul.f32 %v7885, %v7885
    %v7976 = vmul.f32 %v7890, %v7890
    %v7977 = vmul.f32 %v7895, %v7895
    %v7978 = vmul.f32 %v7900, %v7900
    %v7979 = vmul.f32 %v7905, %v7905
    %v7980 = vmul.f32 %v7910, %v7910
    %v7981 = vmul.f32 %v7915, %v7915
    %8046 = vrot.lane.b32.xlu0 %v7918, 64
    %v8047 = vpop.permute.xlu0 %8046
    %8048 = vrot.lane.b32.xlu0 %v7919, 64
    %v8049 = vpop.permute.xlu0 %8048
    %8050 = vrot.lane.b32.xlu0 %v7920, 64
    %v8051 = vpop.permute.xlu0 %8050
    %8052 = vrot.lane.b32.xlu0 %v7921, 64
    %v8053 = vpop.permute.xlu0 %8052
    %8054 = vrot.lane.b32.xlu0 %v7922, 64
    %v8055 = vpop.permute.xlu0 %8054
    %8056 = vrot.lane.b32.xlu0 %v7923, 64
    %v8057 = vpop.permute.xlu0 %8056
    %8058 = vrot.lane.b32.xlu0 %v7924, 64
    %v8059 = vpop.permute.xlu0 %8058
    %8060 = vrot.lane.b32.xlu0 %v7925, 64
    %v8061 = vpop.permute.xlu0 %8060
    %8062 = vrot.lane.b32.xlu0 %v7926, 64
    %v8063 = vpop.permute.xlu0 %8062
    %8064 = vrot.lane.b32.xlu0 %v7927, 64
    %v8065 = vpop.permute.xlu0 %8064
    %8066 = vrot.lane.b32.xlu0 %v7928, 64
    %v8067 = vpop.permute.xlu0 %8066
    %8068 = vrot.lane.b32.xlu0 %v7929, 64
    %v8069 = vpop.permute.xlu0 %8068
    %8070 = vrot.lane.b32.xlu0 %v7930, 64
    %v8071 = vpop.permute.xlu0 %8070
    %8072 = vrot.lane.b32.xlu0 %v7931, 64
    %v8073 = vpop.permute.xlu0 %8072
    %8074 = vrot.lane.b32.xlu0 %v7932, 64
    %v8075 = vpop.permute.xlu0 %8074
    %8076 = vrot.lane.b32.xlu0 %v7933, 64
    %v8077 = vpop.permute.xlu0 %8076
    %8078 = vrot.lane.b32.xlu0 %v7934, 64
    %v8079 = vpop.permute.xlu0 %8078
    %8080 = vrot.lane.b32.xlu0 %v7935, 64
    %v8081 = vpop.permute.xlu0 %8080
    %8082 = vrot.lane.b32.xlu0 %v7936, 64
    %v8083 = vpop.permute.xlu0 %8082
    %8084 = vrot.lane.b32.xlu0 %v7937, 64
    %v8085 = vpop.permute.xlu0 %8084
    %8086 = vrot.lane.b32.xlu0 %v7938, 64
    %v8087 = vpop.permute.xlu0 %8086
    %8088 = vrot.lane.b32.xlu0 %v7939, 64
    %v8089 = vpop.permute.xlu0 %8088
    %8090 = vrot.lane.b32.xlu0 %v7940, 64
    %v8091 = vpop.permute.xlu0 %8090
    %8092 = vrot.lane.b32.xlu0 %v7941, 64
    %v8093 = vpop.permute.xlu0 %8092
    %8094 = vrot.lane.b32.xlu0 %v7942, 64
    %v8095 = vpop.permute.xlu0 %8094
    %8096 = vrot.lane.b32.xlu0 %v7943, 64
    %v8097 = vpop.permute.xlu0 %8096
    %8098 = vrot.lane.b32.xlu0 %v7944, 64
    %v8099 = vpop.permute.xlu0 %8098
    %8100 = vrot.lane.b32.xlu0 %v7945, 64
    %v8101 = vpop.permute.xlu0 %8100
    %8102 = vrot.lane.b32.xlu0 %v7946, 64
    %v8103 = vpop.permute.xlu0 %8102
    %8104 = vrot.lane.b32.xlu0 %v7947, 64
    %v8105 = vpop.permute.xlu0 %8104
    %8106 = vrot.lane.b32.xlu0 %v7948, 64
    %v8107 = vpop.permute.xlu0 %8106
    %8108 = vrot.lane.b32.xlu0 %v7949, 64
    %v8109 = vpop.permute.xlu0 %8108
    %8110 = vrot.lane.b32.xlu0 %v7950, 64
    %v8111 = vpop.permute.xlu0 %8110
    %8112 = vrot.lane.b32.xlu0 %v7951, 64
    %v8113 = vpop.permute.xlu0 %8112
    %8114 = vrot.lane.b32.xlu0 %v7952, 64
    %v8115 = vpop.permute.xlu0 %8114
    %8116 = vrot.lane.b32.xlu0 %v7953, 64
    %v8117 = vpop.permute.xlu0 %8116
    %8118 = vrot.lane.b32.xlu0 %v7954, 64
    %v8119 = vpop.permute.xlu0 %8118
    %8120 = vrot.lane.b32.xlu0 %v7955, 64
    %v8121 = vpop.permute.xlu0 %8120
    %8122 = vrot.lane.b32.xlu0 %v7956, 64
    %v8123 = vpop.permute.xlu0 %8122
    %8124 = vrot.lane.b32.xlu0 %v7957, 64
    %v8125 = vpop.permute.xlu0 %8124
    %8126 = vrot.lane.b32.xlu0 %v7958, 64
    %v8127 = vpop.permute.xlu0 %8126
    %8128 = vrot.lane.b32.xlu0 %v7959, 64
    %v8129 = vpop.permute.xlu0 %8128
    %8130 = vrot.lane.b32.xlu0 %v7960, 64
    %v8131 = vpop.permute.xlu0 %8130
    %8132 = vrot.lane.b32.xlu0 %v7961, 64
    %v8133 = vpop.permute.xlu0 %8132
    %8134 = vrot.lane.b32.xlu0 %v7962, 64
    %v8135 = vpop.permute.xlu0 %8134
    %8136 = vrot.lane.b32.xlu0 %v7963, 64
    %v8137 = vpop.permute.xlu0 %8136
    %8138 = vrot.lane.b32.xlu0 %v7964, 64
    %v8139 = vpop.permute.xlu0 %8138
    %8140 = vrot.lane.b32.xlu0 %v7965, 64
    %v8141 = vpop.permute.xlu0 %8140
    %8142 = vrot.lane.b32.xlu0 %v7966, 64
    %v8143 = vpop.permute.xlu0 %8142
    %8144 = vrot.lane.b32.xlu0 %v7967, 64
    %v8145 = vpop.permute.xlu0 %8144
    %8146 = vrot.lane.b32.xlu0 %v7968, 64
    %v8147 = vpop.permute.xlu0 %8146
    %8148 = vrot.lane.b32.xlu0 %v7969, 64
    %v8149 = vpop.permute.xlu0 %8148
    %8150 = vrot.lane.b32.xlu0 %v7970, 64
    %v8151 = vpop.permute.xlu0 %8150
    %8152 = vrot.lane.b32.xlu0 %v7971, 64
    %v8153 = vpop.permute.xlu0 %8152
    %8154 = vrot.lane.b32.xlu0 %v7972, 64
    %v8155 = vpop.permute.xlu0 %8154
    %8156 = vrot.lane.b32.xlu0 %v7973, 64
    %v8157 = vpop.permute.xlu0 %8156
    %8158 = vrot.lane.b32.xlu0 %v7974, 64
    %v8159 = vpop.permute.xlu0 %8158
    %8160 = vrot.lane.b32.xlu0 %v7975, 64
    %v8161 = vpop.permute.xlu0 %8160
    %8162 = vrot.lane.b32.xlu0 %v7976, 64
    %v8163 = vpop.permute.xlu0 %8162
    %8164 = vrot.lane.b32.xlu0 %v7977, 64
    %v8165 = vpop.permute.xlu0 %8164
    %8166 = vrot.lane.b32.xlu0 %v7978, 64
    %v8167 = vpop.permute.xlu0 %8166
    %8168 = vrot.lane.b32.xlu0 %v7979, 64
    %v8169 = vpop.permute.xlu0 %8168
    %8170 = vrot.lane.b32.xlu0 %v7980, 64
    %v8171 = vpop.permute.xlu0 %8170
    %8172 = vrot.lane.b32.xlu0 %v7981, 64
    %v8173 = vpop.permute.xlu0 %8172
    %v8238 = vsel %vm96, %v7600, %v8047
    %v8239 = vsel %vm96, %v7605, %v8049
    %v8240 = vsel %vm96, %v7610, %v8051
    %v8241 = vsel %vm96, %v7615, %v8053
    %v8242 = vsel %vm96, %v7620, %v8055
    %v8243 = vsel %vm96, %v7625, %v8057
    %v8244 = vsel %vm96, %v7630, %v8059
    %v8245 = vsel %vm96, %v7635, %v8061
    %v8246 = vsel %vm96, %v7640, %v8063
    %v8247 = vsel %vm96, %v7645, %v8065
    %v8248 = vsel %vm96, %v7650, %v8067
    %v8249 = vsel %vm96, %v7655, %v8069
    %v8250 = vsel %vm96, %v7660, %v8071
    %v8251 = vsel %vm96, %v7665, %v8073
    %v8252 = vsel %vm96, %v7670, %v8075
    %v8253 = vsel %vm96, %v7675, %v8077
    %v8254 = vsel %vm96, %v7680, %v8079
    %v8255 = vsel %vm96, %v7685, %v8081
    %v8256 = vsel %vm96, %v7690, %v8083
    %v8257 = vsel %vm96, %v7695, %v8085
    %v8258 = vsel %vm96, %v7700, %v8087
    %v8259 = vsel %vm96, %v7705, %v8089
    %v8260 = vsel %vm96, %v7710, %v8091
    %v8261 = vsel %vm96, %v7715, %v8093
    %v8262 = vsel %vm96, %v7720, %v8095
    %v8263 = vsel %vm96, %v7725, %v8097
    %v8264 = vsel %vm96, %v7730, %v8099
    %v8265 = vsel %vm96, %v7735, %v8101
    %v8266 = vsel %vm96, %v7740, %v8103
    %v8267 = vsel %vm96, %v7745, %v8105
    %v8268 = vsel %vm96, %v7750, %v8107
    %v8269 = vsel %vm96, %v7755, %v8109
    %v8270 = vsel %vm96, %v7760, %v8111
    %v8271 = vsel %vm96, %v7765, %v8113
    %v8272 = vsel %vm96, %v7770, %v8115
    %v8273 = vsel %vm96, %v7775, %v8117
    %v8274 = vsel %vm96, %v7780, %v8119
    %v8275 = vsel %vm96, %v7785, %v8121
    %v8276 = vsel %vm96, %v7790, %v8123
    %v8277 = vsel %vm96, %v7795, %v8125
    %v8278 = vsel %vm96, %v7800, %v8127
    %v8279 = vsel %vm96, %v7805, %v8129
    %v8280 = vsel %vm96, %v7810, %v8131
    %v8281 = vsel %vm96, %v7815, %v8133
    %v8282 = vsel %vm96, %v7820, %v8135
    %v8283 = vsel %vm96, %v7825, %v8137
    %v8284 = vsel %vm96, %v7830, %v8139
    %v8285 = vsel %vm96, %v7835, %v8141
    %v8286 = vsel %vm96, %v7840, %v8143
    %v8287 = vsel %vm96, %v7845, %v8145
    %v8288 = vsel %vm96, %v7850, %v8147
    %v8289 = vsel %vm96, %v7855, %v8149
    %v8290 = vsel %vm96, %v7860, %v8151
    %v8291 = vsel %vm96, %v7865, %v8153
    %v8292 = vsel %vm96, %v7870, %v8155
    %v8293 = vsel %vm96, %v7875, %v8157
    %v8294 = vsel %vm96, %v7880, %v8159
    %v8295 = vsel %vm96, %v7885, %v8161
    %v8296 = vsel %vm96, %v7890, %v8163
    %v8297 = vsel %vm96, %v7895, %v8165
    %v8298 = vsel %vm96, %v7900, %v8167
    %v8299 = vsel %vm96, %v7905, %v8169
    %v8300 = vsel %vm96, %v7910, %v8171
    %v8301 = vsel %vm96, %v7915, %v8173
    %v8302 = vadd.f32 %v8238, %v8239
    %v8303 = vadd.f32 %v8302, %v8240
    %v8304 = vadd.f32 %v8303, %v8241
    %v8305 = vadd.f32 %v8304, %v8242
    %v8306 = vadd.f32 %v8305, %v8243
    %v8307 = vadd.f32 %v8306, %v8244
    %v8308 = vadd.f32 %v8307, %v8245
    %v8309 = vadd.f32 %v8308, %v8246
    %v8310 = vadd.f32 %v8309, %v8247
    %v8311 = vadd.f32 %v8310, %v8248
    %v8312 = vadd.f32 %v8311, %v8249
    %v8313 = vadd.f32 %v8312, %v8250
    %v8314 = vadd.f32 %v8313, %v8251
    %v8315 = vadd.f32 %v8314, %v8252
    %v8316 = vadd.f32 %v8315, %v8253
    %v8317 = vadd.f32 %v8316, %v8254
    %v8318 = vadd.f32 %v8317, %v8255
    %v8319 = vadd.f32 %v8318, %v8256
    %v8320 = vadd.f32 %v8319, %v8257
    %v8321 = vadd.f32 %v8320, %v8258
    %v8322 = vadd.f32 %v8321, %v8259
    %v8323 = vadd.f32 %v8322, %v8260
    %v8324 = vadd.f32 %v8323, %v8261
    %v8325 = vadd.f32 %v8324, %v8262
    %v8326 = vadd.f32 %v8325, %v8263
    %v8327 = vadd.f32 %v8326, %v8264
    %v8328 = vadd.f32 %v8327, %v8265
    %v8329 = vadd.f32 %v8328, %v8266
    %v8330 = vadd.f32 %v8329, %v8267
    %v8331 = vadd.f32 %v8330, %v8268
    %v8332 = vadd.f32 %v8331, %v8269
    %v8333 = vadd.f32 %v8332, %v8270
    %v8334 = vadd.f32 %v8333, %v8271
    %v8335 = vadd.f32 %v8334, %v8272
    %v8336 = vadd.f32 %v8335, %v8273
    %v8337 = vadd.f32 %v8336, %v8274
    %v8338 = vadd.f32 %v8337, %v8275
    %v8339 = vadd.f32 %v8338, %v8276
    %v8340 = vadd.f32 %v8339, %v8277
    %v8341 = vadd.f32 %v8340, %v8278
    %v8342 = vadd.f32 %v8341, %v8279
    %v8343 = vadd.f32 %v8342, %v8280
    %v8344 = vadd.f32 %v8343, %v8281
    %v8345 = vadd.f32 %v8344, %v8282
    %v8346 = vadd.f32 %v8345, %v8283
    %v8347 = vadd.f32 %v8346, %v8284
    %v8348 = vadd.f32 %v8347, %v8285
    %v8349 = vadd.f32 %v8348, %v8286
    %v8350 = vadd.f32 %v8349, %v8287
    %v8351 = vadd.f32 %v8350, %v8288
    %v8352 = vadd.f32 %v8351, %v8289
    %v8353 = vadd.f32 %v8352, %v8290
    %v8354 = vadd.f32 %v8353, %v8291
    %v8355 = vadd.f32 %v8354, %v8292
    %v8356 = vadd.f32 %v8355, %v8293
    %v8357 = vadd.f32 %v8356, %v8294
    %v8358 = vadd.f32 %v8357, %v8295
    %v8359 = vadd.f32 %v8358, %v8296
    %v8360 = vadd.f32 %v8359, %v8297
    %v8361 = vadd.f32 %v8360, %v8298
    %v8362 = vadd.f32 %v8361, %v8299
    %v8363 = vadd.f32 %v8362, %v8300
    %v8364 = vadd.f32 %v8363, %v8301
    %v8365 = vrot.slane %v8364, 4
    %v8366 = vadd.f32 %v8364, %v8365
    %v8367 = vrot.slane %v8366, 2
    %v8368 = vadd.f32 %v8366, %v8367
    %v8369 = vrot.slane %v8368, 1
    %v8370 = vadd.f32 %v8368, %v8369
    %v8371 = vmul.f32 %v8370, 0.001953125
    %v8372 = vmul.f32 %v8371, %v8371
    %8374 = vrot.lane.b32.xlu0 %v8372, 64
    %v8375 = vpop.permute.xlu0 %8374
    %v8377 = vsub.f32 %v8371, %v8375
    %v8378 = vld [vmem:[%s5] sm:$0x1]
    %v8379 = vadd.f32 %v8377, 1e-05
    %v8380 = vrsqrt.pop %v8379
    %v8383 = vunpack.c.l.s4 1966171168
    %v8384 = vunpack.c.0.s8 %v8383
    %v8385 = vlaneseq
    %v8386 = vshrl.u32 %v8385, 7
    %v8387 = vsub.s32 %v8384, %v8386
    %v8388 = vrot.slane %v8380, %v8387
    %v8390 = vunpack.c.l.s4 1966171168
    %v8391 = vunpack.c.0.s8 %v8390
    %v8392 = vlaneseq
    %v8393 = vshrl.u32 %v8392, 7
    %v8394 = vsub.s32 %v8391, %v8393
    %v8395 = vrot.slane %v8388, %v8394
    %8396 = vrot.lane.b32.xlu0 %v8395, 64
    %v8397 = vpop.permute.xlu0 %8396
    %v8399 = vmul.f32 %v8378, %v8397
    %v8400 = vld [vmem:[%s6] sm:$0x1]
    %v8401 = vmul.f32 %v8371, %v8399
    %v8402 = vsub.f32 %v8400, %v8401
    %v8404 = vlaneseq
    %v8405 = vshrl.u32 %v8404, 7
    %v8406 = vsub.s32 0, %v8405
    %v8407 = vrot.slane %v8399, %v8406
    %v8409 = vmul.f32 %v7600, %v8407
    %v8410 = vmul.f32 %v7605, %v8407
    %v8411 = vmul.f32 %v7610, %v8407
    %v8412 = vmul.f32 %v7615, %v8407
    %v8413 = vmul.f32 %v7620, %v8407
    %v8414 = vmul.f32 %v7625, %v8407
    %v8415 = vmul.f32 %v7630, %v8407
    %v8416 = vmul.f32 %v7635, %v8407
    %v8417 = vmul.f32 %v7640, %v8407
    %v8418 = vmul.f32 %v7645, %v8407
    %v8419 = vmul.f32 %v7650, %v8407
    %v8420 = vmul.f32 %v7655, %v8407
    %v8421 = vmul.f32 %v7660, %v8407
    %v8422 = vmul.f32 %v7665, %v8407
    %v8423 = vmul.f32 %v7670, %v8407
    %v8424 = vmul.f32 %v7675, %v8407
    %v8425 = vmul.f32 %v7680, %v8407
    %v8426 = vmul.f32 %v7685, %v8407
    %v8427 = vmul.f32 %v7690, %v8407
    %v8428 = vmul.f32 %v7695, %v8407
    %v8429 = vmul.f32 %v7700, %v8407
    %v8430 = vmul.f32 %v7705, %v8407
    %v8431 = vmul.f32 %v7710, %v8407
    %v8432 = vmul.f32 %v7715, %v8407
    %v8433 = vmul.f32 %v7720, %v8407
    %v8434 = vmul.f32 %v7725, %v8407
    %v8435 = vmul.f32 %v7730, %v8407
    %v8436 = vmul.f32 %v7735, %v8407
    %v8437 = vmul.f32 %v7740, %v8407
    %v8438 = vmul.f32 %v7745, %v8407
    %v8439 = vmul.f32 %v7750, %v8407
    %v8440 = vmul.f32 %v7755, %v8407
    %v8441 = vmul.f32 %v7760, %v8407
    %v8442 = vmul.f32 %v7765, %v8407
    %v8443 = vmul.f32 %v7770, %v8407
    %v8444 = vmul.f32 %v7775, %v8407
    %v8445 = vmul.f32 %v7780, %v8407
    %v8446 = vmul.f32 %v7785, %v8407
    %v8447 = vmul.f32 %v7790, %v8407
    %v8448 = vmul.f32 %v7795, %v8407
    %v8449 = vmul.f32 %v7800, %v8407
    %v8450 = vmul.f32 %v7805, %v8407
    %v8451 = vmul.f32 %v7810, %v8407
    %v8452 = vmul.f32 %v7815, %v8407
    %v8453 = vmul.f32 %v7820, %v8407
    %v8454 = vmul.f32 %v7825, %v8407
    %v8455 = vmul.f32 %v7830, %v8407
    %v8456 = vmul.f32 %v7835, %v8407
    %v8457 = vmul.f32 %v7840, %v8407
    %v8458 = vmul.f32 %v7845, %v8407
    %v8459 = vmul.f32 %v7850, %v8407
    %v8460 = vmul.f32 %v7855, %v8407
    %v8461 = vmul.f32 %v7860, %v8407
    %v8462 = vmul.f32 %v7865, %v8407
    %v8463 = vmul.f32 %v7870, %v8407
    %v8464 = vmul.f32 %v7875, %v8407
    %v8465 = vmul.f32 %v7880, %v8407
    %v8466 = vmul.f32 %v7885, %v8407
    %v8467 = vmul.f32 %v7890, %v8407
    %v8468 = vmul.f32 %v7895, %v8407
    %v8469 = vmul.f32 %v7900, %v8407
    %v8470 = vmul.f32 %v7905, %v8407
    %v8471 = vmul.f32 %v7910, %v8407
    %v8472 = vmul.f32 %v7915, %v8407
    %v8474 = vlaneseq
    %v8475 = vshrl.u32 %v8474, 7
    %v8476 = vsub.s32 0, %v8475
    %v8477 = vrot.slane %v8402, %v8476
    %v8479 = vadd.f32 %v8409, %v8477
    %v8480 = vadd.f32 %v8410, %v8477
    %v8481 = vadd.f32 %v8411, %v8477
    %v8482 = vadd.f32 %v8412, %v8477
    %v8483 = vadd.f32 %v8413, %v8477
    %v8484 = vadd.f32 %v8414, %v8477
    %v8485 = vadd.f32 %v8415, %v8477
    %v8486 = vadd.f32 %v8416, %v8477
    %v8487 = vadd.f32 %v8417, %v8477
    %v8488 = vadd.f32 %v8418, %v8477
    %v8489 = vadd.f32 %v8419, %v8477
    %v8490 = vadd.f32 %v8420, %v8477
    %v8491 = vadd.f32 %v8421, %v8477
    %v8492 = vadd.f32 %v8422, %v8477
    %v8493 = vadd.f32 %v8423, %v8477
    %v8494 = vadd.f32 %v8424, %v8477
    %v8495 = vadd.f32 %v8425, %v8477
    %v8496 = vadd.f32 %v8426, %v8477
    %v8497 = vadd.f32 %v8427, %v8477
    %v8498 = vadd.f32 %v8428, %v8477
    %v8499 = vadd.f32 %v8429, %v8477
    %v8500 = vadd.f32 %v8430, %v8477
    %v8501 = vadd.f32 %v8431, %v8477
    %v8502 = vadd.f32 %v8432, %v8477
    %v8503 = vadd.f32 %v8433, %v8477
    %v8504 = vadd.f32 %v8434, %v8477
    %v8505 = vadd.f32 %v8435, %v8477
    %v8506 = vadd.f32 %v8436, %v8477
    %v8507 = vadd.f32 %v8437, %v8477
    %v8508 = vadd.f32 %v8438, %v8477
    %v8509 = vadd.f32 %v8439, %v8477
    %v8510 = vadd.f32 %v8440, %v8477
    %v8511 = vadd.f32 %v8441, %v8477
    %v8512 = vadd.f32 %v8442, %v8477
    %v8513 = vadd.f32 %v8443, %v8477
    %v8514 = vadd.f32 %v8444, %v8477
    %v8515 = vadd.f32 %v8445, %v8477
    %v8516 = vadd.f32 %v8446, %v8477
    %v8517 = vadd.f32 %v8447, %v8477
    %v8518 = vadd.f32 %v8448, %v8477
    %v8519 = vadd.f32 %v8449, %v8477
    %v8520 = vadd.f32 %v8450, %v8477
    %v8521 = vadd.f32 %v8451, %v8477
    %v8522 = vadd.f32 %v8452, %v8477
    %v8523 = vadd.f32 %v8453, %v8477
    %v8524 = vadd.f32 %v8454, %v8477
    %v8525 = vadd.f32 %v8455, %v8477
    %v8526 = vadd.f32 %v8456, %v8477
    %v8527 = vadd.f32 %v8457, %v8477
    %v8528 = vadd.f32 %v8458, %v8477
    %v8529 = vadd.f32 %v8459, %v8477
    %v8530 = vadd.f32 %v8460, %v8477
    %v8531 = vadd.f32 %v8461, %v8477
    %v8532 = vadd.f32 %v8462, %v8477
    %v8533 = vadd.f32 %v8463, %v8477
    %v8534 = vadd.f32 %v8464, %v8477
    %v8535 = vadd.f32 %v8465, %v8477
    %v8536 = vadd.f32 %v8466, %v8477
    %v8537 = vadd.f32 %v8467, %v8477
    %v8538 = vadd.f32 %v8468, %v8477
    %v8539 = vadd.f32 %v8469, %v8477
    %v8540 = vadd.f32 %v8470, %v8477
    %v8541 = vadd.f32 %v8471, %v8477
    %v8542 = vadd.f32 %v8472, %v8477
    %v8543 = vld [vmem:[%s0] sm:$0xff]
    %v8544 = vld [vmem:[%s0 + $0x8] sm:$0xff]
    %v8545 = vld [vmem:[%s0 + $0x10] sm:$0xff]
    %v8546 = vld [vmem:[%s0 + $0x18] sm:$0xff]
    %v8547 = vld [vmem:[%s0 + $0x20] sm:$0xff]
    %v8548 = vld [vmem:[%s0 + $0x28] sm:$0xff]
    %v8549 = vld [vmem:[%s0 + $0x30] sm:$0xff]
    %v8550 = vld [vmem:[%s0 + $0x38] sm:$0xff]
    %v8551 = vld [vmem:[%s0 + $0x40] sm:$0xff]
    %v8552 = vld [vmem:[%s0 + $0x48] sm:$0xff]
    %v8553 = vld [vmem:[%s0 + $0x50] sm:$0xff]
    %v8554 = vld [vmem:[%s0 + $0x58] sm:$0xff]
    %v8555 = vld [vmem:[%s0 + $0x60] sm:$0xff]
    %v8556 = vld [vmem:[%s0 + $0x68] sm:$0xff]
    %v8557 = vld [vmem:[%s0 + $0x70] sm:$0xff]
    %v8558 = vld [vmem:[%s0 + $0x78] sm:$0xff]
    %v8559 = vld [vmem:[%s0 + $0x80] sm:$0xff]
    %v8560 = vld [vmem:[%s0 + $0x88] sm:$0xff]
    %v8561 = vld [vmem:[%s0 + $0x90] sm:$0xff]
    %v8562 = vld [vmem:[%s0 + $0x98] sm:$0xff]
    %v8563 = vld [vmem:[%s0 + $0xa0] sm:$0xff]
    %v8564 = vld [vmem:[%s0 + $0xa8] sm:$0xff]
    %v8565 = vld [vmem:[%s0 + $0xb0] sm:$0xff]
    %v8566 = vld [vmem:[%s0 + $0xb8] sm:$0xff]
    %v8567 = vld [vmem:[%s0 + $0xc0] sm:$0xff]
    %v8568 = vld [vmem:[%s0 + $0xc8] sm:$0xff]
    %v8569 = vld [vmem:[%s0 + $0xd0] sm:$0xff]
    %v8570 = vld [vmem:[%s0 + $0xd8] sm:$0xff]
    %v8571 = vld [vmem:[%s0 + $0xe0] sm:$0xff]
    %v8572 = vld [vmem:[%s0 + $0xe8] sm:$0xff]
    %v8573 = vld [vmem:[%s0 + $0xf0] sm:$0xff]
    %v8574 = vld [vmem:[%s0 + $0xf8] sm:$0xff]
    %v8575 = vld [vmem:[%s0 + $0x100] sm:$0xff]
    %v8576 = vld [vmem:[%s0 + $0x108] sm:$0xff]
    %v8577 = vld [vmem:[%s0 + $0x110] sm:$0xff]
    %v8578 = vld [vmem:[%s0 + $0x118] sm:$0xff]
    %v8579 = vld [vmem:[%s0 + $0x120] sm:$0xff]
    %v8580 = vld [vmem:[%s0 + $0x128] sm:$0xff]
    %v8581 = vld [vmem:[%s0 + $0x130] sm:$0xff]
    %v8582 = vld [vmem:[%s0 + $0x138] sm:$0xff]
    %v8583 = vld [vmem:[%s0 + $0x140] sm:$0xff]
    %v8584 = vld [vmem:[%s0 + $0x148] sm:$0xff]
    %v8585 = vld [vmem:[%s0 + $0x150] sm:$0xff]
    %v8586 = vld [vmem:[%s0 + $0x158] sm:$0xff]
    %v8587 = vld [vmem:[%s0 + $0x160] sm:$0xff]
    %v8588 = vld [vmem:[%s0 + $0x168] sm:$0xff]
    %v8589 = vld [vmem:[%s0 + $0x170] sm:$0xff]
    %v8590 = vld [vmem:[%s0 + $0x178] sm:$0xff]
    %v8591 = vld [vmem:[%s0 + $0x180] sm:$0xff]
    %v8592 = vld [vmem:[%s0 + $0x188] sm:$0xff]
    %v8593 = vld [vmem:[%s0 + $0x190] sm:$0xff]
    %v8594 = vld [vmem:[%s0 + $0x198] sm:$0xff]
    %v8595 = vld [vmem:[%s0 + $0x1a0] sm:$0xff]
    %v8596 = vld [vmem:[%s0 + $0x1a8] sm:$0xff]
    %v8597 = vld [vmem:[%s0 + $0x1b0] sm:$0xff]
    %v8598 = vld [vmem:[%s0 + $0x1b8] sm:$0xff]
    %v8599 = vld [vmem:[%s0 + $0x1c0] sm:$0xff]
    %v8600 = vld [vmem:[%s0 + $0x1c8] sm:$0xff]
    %v8601 = vld [vmem:[%s0 + $0x1d0] sm:$0xff]
    %v8602 = vld [vmem:[%s0 + $0x1d8] sm:$0xff]
    %v8603 = vld [vmem:[%s0 + $0x1e0] sm:$0xff]
    %v8604 = vld [vmem:[%s0 + $0x1e8] sm:$0xff]
    %v8605 = vld [vmem:[%s0 + $0x1f0] sm:$0xff]
    %v8606 = vld [vmem:[%s0 + $0x1f8] sm:$0xff]
    %v8607 = vadd.f32 %v8543, %v8479
    %v8608 = vadd.f32 %v8544, %v8480
    %v8609 = vadd.f32 %v8545, %v8481
    %v8610 = vadd.f32 %v8546, %v8482
    %v8611 = vadd.f32 %v8547, %v8483
    %v8612 = vadd.f32 %v8548, %v8484
    %v8613 = vadd.f32 %v8549, %v8485
    %v8614 = vadd.f32 %v8550, %v8486
    %v8615 = vadd.f32 %v8551, %v8487
    %v8616 = vadd.f32 %v8552, %v8488
    %v8617 = vadd.f32 %v8553, %v8489
    %v8618 = vadd.f32 %v8554, %v8490
    %v8619 = vadd.f32 %v8555, %v8491
    %v8620 = vadd.f32 %v8556, %v8492
    %v8621 = vadd.f32 %v8557, %v8493
    %v8622 = vadd.f32 %v8558, %v8494
    %v8623 = vadd.f32 %v8559, %v8495
    %v8624 = vadd.f32 %v8560, %v8496
    %v8625 = vadd.f32 %v8561, %v8497
    %v8626 = vadd.f32 %v8562, %v8498
    %v8627 = vadd.f32 %v8563, %v8499
    %v8628 = vadd.f32 %v8564, %v8500
    %v8629 = vadd.f32 %v8565, %v8501
    %v8630 = vadd.f32 %v8566, %v8502
    %v8631 = vadd.f32 %v8567, %v8503
    %v8632 = vadd.f32 %v8568, %v8504
    %v8633 = vadd.f32 %v8569, %v8505
    %v8634 = vadd.f32 %v8570, %v8506
    %v8635 = vadd.f32 %v8571, %v8507
    %v8636 = vadd.f32 %v8572, %v8508
    %v8637 = vadd.f32 %v8573, %v8509
    %v8638 = vadd.f32 %v8574, %v8510
    %v8639 = vadd.f32 %v8575, %v8511
    %v8640 = vadd.f32 %v8576, %v8512
    %v8641 = vadd.f32 %v8577, %v8513
    %v8642 = vadd.f32 %v8578, %v8514
    %v8643 = vadd.f32 %v8579, %v8515
    %v8644 = vadd.f32 %v8580, %v8516
    %v8645 = vadd.f32 %v8581, %v8517
    %v8646 = vadd.f32 %v8582, %v8518
    %v8647 = vadd.f32 %v8583, %v8519
    %v8648 = vadd.f32 %v8584, %v8520
    %v8649 = vadd.f32 %v8585, %v8521
    %v8650 = vadd.f32 %v8586, %v8522
    %v8651 = vadd.f32 %v8587, %v8523
    %v8652 = vadd.f32 %v8588, %v8524
    %v8653 = vadd.f32 %v8589, %v8525
    %v8654 = vadd.f32 %v8590, %v8526
    %v8655 = vadd.f32 %v8591, %v8527
    %v8656 = vadd.f32 %v8592, %v8528
    %v8657 = vadd.f32 %v8593, %v8529
    %v8658 = vadd.f32 %v8594, %v8530
    %v8659 = vadd.f32 %v8595, %v8531
    %v8660 = vadd.f32 %v8596, %v8532
    %v8661 = vadd.f32 %v8597, %v8533
    %v8662 = vadd.f32 %v8598, %v8534
    %v8663 = vadd.f32 %v8599, %v8535
    %v8664 = vadd.f32 %v8600, %v8536
    %v8665 = vadd.f32 %v8601, %v8537
    %v8666 = vadd.f32 %v8602, %v8538
    %v8667 = vadd.f32 %v8603, %v8539
    %v8668 = vadd.f32 %v8604, %v8540
    %v8669 = vadd.f32 %v8605, %v8541
    %v8670 = vadd.f32 %v8606, %v8542
    %8671 = vst.msk [vmem:[#allocation4] sm:$0xff] %vm96, %v8607
    %8672 = vst.msk [vmem:[#allocation4 + $0x8] sm:$0xff] %vm96, %v8608
    %8673 = vst.msk [vmem:[#allocation4 + $0x10] sm:$0xff] %vm96, %v8609
    %8674 = vst.msk [vmem:[#allocation4 + $0x18] sm:$0xff] %vm96, %v8610
    %8675 = vst.msk [vmem:[#allocation4 + $0x20] sm:$0xff] %vm96, %v8611
    %8676 = vst.msk [vmem:[#allocation4 + $0x28] sm:$0xff] %vm96, %v8612
    %8677 = vst.msk [vmem:[#allocation4 + $0x30] sm:$0xff] %vm96, %v8613
    %8678 = vst.msk [vmem:[#allocation4 + $0x38] sm:$0xff] %vm96, %v8614
    %8679 = vst.msk [vmem:[#allocation4 + $0x40] sm:$0xff] %vm96, %v8615
    %8680 = vst.msk [vmem:[#allocation4 + $0x48] sm:$0xff] %vm96, %v8616
    %8681 = vst.msk [vmem:[#allocation4 + $0x50] sm:$0xff] %vm96, %v8617
    %8682 = vst.msk [vmem:[#allocation4 + $0x58] sm:$0xff] %vm96, %v8618
    %8683 = vst.msk [vmem:[#allocation4 + $0x60] sm:$0xff] %vm96, %v8619
    %8684 = vst.msk [vmem:[#allocation4 + $0x68] sm:$0xff] %vm96, %v8620
    %8685 = vst.msk [vmem:[#allocation4 + $0x70] sm:$0xff] %vm96, %v8621
    %8686 = vst.msk [vmem:[#allocation4 + $0x78] sm:$0xff] %vm96, %v8622
    %8687 = vst.msk [vmem:[#allocation4 + $0x80] sm:$0xff] %vm96, %v8623
    %8688 = vst.msk [vmem:[#allocation4 + $0x88] sm:$0xff] %vm96, %v8624
    %8689 = vst.msk [vmem:[#allocation4 + $0x90] sm:$0xff] %vm96, %v8625
    %8690 = vst.msk [vmem:[#allocation4 + $0x98] sm:$0xff] %vm96, %v8626
    %8691 = vst.msk [vmem:[#allocation4 + $0xa0] sm:$0xff] %vm96, %v8627
    %8692 = vst.msk [vmem:[#allocation4 + $0xa8] sm:$0xff] %vm96, %v8628
    %8693 = vst.msk [vmem:[#allocation4 + $0xb0] sm:$0xff] %vm96, %v8629
    %8694 = vst.msk [vmem:[#allocation4 + $0xb8] sm:$0xff] %vm96, %v8630
    %8695 = vst.msk [vmem:[#allocation4 + $0xc0] sm:$0xff] %vm96, %v8631
    %8696 = vst.msk [vmem:[#allocation4 + $0xc8] sm:$0xff] %vm96, %v8632
    %8697 = vst.msk [vmem:[#allocation4 + $0xd0] sm:$0xff] %vm96, %v8633
    %8698 = vst.msk [vmem:[#allocation4 + $0xd8] sm:$0xff] %vm96, %v8634
    %8699 = vst.msk [vmem:[#allocation4 + $0xe0] sm:$0xff] %vm96, %v8635
    %8700 = vst.msk [vmem:[#allocation4 + $0xe8] sm:$0xff] %vm96, %v8636
    %8701 = vst.msk [vmem:[#allocation4 + $0xf0] sm:$0xff] %vm96, %v8637
    %8702 = vst.msk [vmem:[#allocation4 + $0xf8] sm:$0xff] %vm96, %v8638
    %8703 = vst.msk [vmem:[#allocation4 + $0x100] sm:$0xff] %vm96, %v8639
    %8704 = vst.msk [vmem:[#allocation4 + $0x108] sm:$0xff] %vm96, %v8640
    %8705 = vst.msk [vmem:[#allocation4 + $0x110] sm:$0xff] %vm96, %v8641
    %8706 = vst.msk [vmem:[#allocation4 + $0x118] sm:$0xff] %vm96, %v8642
    %8707 = vst.msk [vmem:[#allocation4 + $0x120] sm:$0xff] %vm96, %v8643
    %8708 = vst.msk [vmem:[#allocation4 + $0x128] sm:$0xff] %vm96, %v8644
    %8709 = vst.msk [vmem:[#allocation4 + $0x130] sm:$0xff] %vm96, %v8645
    %8710 = vst.msk [vmem:[#allocation4 + $0x138] sm:$0xff] %vm96, %v8646
    %8711 = vst.msk [vmem:[#allocation4 + $0x140] sm:$0xff] %vm96, %v8647
    %8712 = vst.msk [vmem:[#allocation4 + $0x148] sm:$0xff] %vm96, %v8648
    %8713 = vst.msk [vmem:[#allocation4 + $0x150] sm:$0xff] %vm96, %v8649
    %8714 = vst.msk [vmem:[#allocation4 + $0x158] sm:$0xff] %vm96, %v8650
    %8715 = vst.msk [vmem:[#allocation4 + $0x160] sm:$0xff] %vm96, %v8651
    %8716 = vst.msk [vmem:[#allocation4 + $0x168] sm:$0xff] %vm96, %v8652
    %8717 = vst.msk [vmem:[#allocation4 + $0x170] sm:$0xff] %vm96, %v8653
    %8718 = vst.msk [vmem:[#allocation4 + $0x178] sm:$0xff] %vm96, %v8654
    %8719 = vst.msk [vmem:[#allocation4 + $0x180] sm:$0xff] %vm96, %v8655
    %8720 = vst.msk [vmem:[#allocation4 + $0x188] sm:$0xff] %vm96, %v8656
    %8721 = vst.msk [vmem:[#allocation4 + $0x190] sm:$0xff] %vm96, %v8657
    %8722 = vst.msk [vmem:[#allocation4 + $0x198] sm:$0xff] %vm96, %v8658
    %8723 = vst.msk [vmem:[#allocation4 + $0x1a0] sm:$0xff] %vm96, %v8659
    %8724 = vst.msk [vmem:[#allocation4 + $0x1a8] sm:$0xff] %vm96, %v8660
    %8725 = vst.msk [vmem:[#allocation4 + $0x1b0] sm:$0xff] %vm96, %v8661
    %8726 = vst.msk [vmem:[#allocation4 + $0x1b8] sm:$0xff] %vm96, %v8662
    %8727 = vst.msk [vmem:[#allocation4 + $0x1c0] sm:$0xff] %vm96, %v8663
    %8728 = vst.msk [vmem:[#allocation4 + $0x1c8] sm:$0xff] %vm96, %v8664
    %8729 = vst.msk [vmem:[#allocation4 + $0x1d0] sm:$0xff] %vm96, %v8665
    %8730 = vst.msk [vmem:[#allocation4 + $0x1d8] sm:$0xff] %vm96, %v8666
    %8731 = vst.msk [vmem:[#allocation4 + $0x1e0] sm:$0xff] %vm96, %v8667
    %8732 = vst.msk [vmem:[#allocation4 + $0x1e8] sm:$0xff] %vm96, %v8668
    %8733 = vst.msk [vmem:[#allocation4 + $0x1f0] sm:$0xff] %vm96, %v8669
    %8734 = vst.msk [vmem:[#allocation4 + $0x1f8] sm:$0xff] %vm96, %v8670
    // Predicated region
    $region34: #{residual_block.1} parent=1 // pred_check
      _
    $region35: #{residual_block.1} parent=1 // pred_check_branch
      %8736 = sbr.rel (0) target = $region37
    $region36: #{residual_block.1} parent=1 // pred_region
      %s8738 = ssub.s32 8192, 8192
      %8739 = vsyncadd [#allocation5], %s8738
      %s8740 = sshll.u32 [#allocation4], 4
      %s8741 = int_to_ptr.vmem [resolvable:$true] %s8740
      %8746 = dma.vmem_to_hbm [thread:$0]  %s8741, 8192, %s8, [#allocation5], 128, 128, 8
    $region37: #{residual_block.1} parent=1 // pred_fallthru
      _
    // Predicated region
    $region38: #{residual_block.1} parent=1 // pred_check
      _
    $region39: #{residual_block.1} parent=1 // pred_check_branch
      %8748 = sbr.rel (0) target = $region41
    $region40: #{residual_block.1} parent=1 // pred_region
      %8749 = dma.done [#allocation5], 8192
    $region41: #{residual_block.1} parent=1 // pred_fallthru
      _
    %8750 = vsyncpa [#allocation5], 1

</llo_original>
